<compile_context>
chip_gen: v6e
topology: v6e:2x2x1
jax: 0.10.0
libtpu: 0.0.40
codegen_flags: <defaults>
</compile_context>

<pallas_src>
import functools

import numpy as np
import jax
import jax.numpy as jnp
from jax.experimental import pallas as pl
from jax.experimental.pallas import tpu as pltpu


def _conv_out_size(size, k, stride, pad):
    return (size + 2 * pad - k) // stride + 1


# ----------------------------------------------------------------------------
# Fused forward kernel.
#
# Ref layout (all full-array VMEM blocks, no grid):
#   layer 0 : patches (taps, Cin, M1) bf16, weights (taps, Cout, Cin) bf16,
#             bias (Cout, 1) f32
#   layer k : gather  (taps, M_k, M_{k+1}) bf16 one-hot, weights, [bias]
#   out_ref : (Cout_last, M_last) f32
#
# Activations stay feature-major (C, N*H*W) in VMEM; each layer is
#   A_{k+1} = LeakyReLU( sum_t W_t @ (A_k @ G_t) + b )
# i.e. a chain of small 2-D MXU matmuls with f32 accumulation.
# ----------------------------------------------------------------------------
def _fused_forward_kernel(metas, *refs):
    out_ref = refs[-1]
    in_refs = refs[:-1]
    idx = 0
    act = None          # previous layer output, (C_k, N*H_k*W_k), bf16
    acc = None
    for li, (taps, cout, m_out, has_bias, apply_act) in enumerate(metas):
        src_ref = in_refs[idx]          # layer-0 patches or one-hot gather op
        idx += 1
        w_ref = in_refs[idx]            # (taps, Cout, Cin) bf16
        idx += 1
        acc = jnp.zeros((cout, m_out), jnp.float32)
        for t in range(taps):
            if li == 0:
                p_t = src_ref[t]        # (Cin, M1) bf16 input patches
            else:
                # In-kernel im2col: one-hot gather of the previous layer's
                # VMEM-resident activation for tap t (exact in bf16; zero
                # columns of the gather operator realise the zero padding).
                p_t = jnp.dot(act, src_ref[t],
                              preferred_element_type=jnp.float32
                              ).astype(jnp.bfloat16)
            acc = acc + jnp.dot(w_ref[t], p_t,
                                preferred_element_type=jnp.float32)
        if has_bias:
            acc = acc + in_refs[idx][...]       # (Cout, 1) f32, lane-broadcast
            idx += 1
        if apply_act:
            acc = jnp.where(acc >= 0.0, acc, 0.01 * acc)   # LeakyReLU(0.01)
        act = acc.astype(jnp.bfloat16)
    out_ref[...] = acc.astype(out_ref.dtype)


# ----------------------------------------------------------------------------
# Host-side (one-time) preparation: gather operators + packed weights.
# ----------------------------------------------------------------------------
def _gather_operator(batch, h, w, kh, kw, stride, pad):
    """One-hot gather: g[t, (n*h+y)*w+x, (n*ho+r)*wo+s] = 1 iff input pixel
    (y, x) is tap t=(i, j) of output pixel (r, s).  Zero columns encode the
    implicit zero padding.  Pure geometry — precomputed once with numpy."""
    ho = _conv_out_size(h, kh, stride, pad)
    wo = _conv_out_size(w, kw, stride, pad)
    g = np.zeros((kh * kw, batch * h * w, batch * ho * wo), np.float32)
    for i in range(kh):
        for j in range(kw):
            t = i * kw + j
            for n in range(batch):
                for r in range(ho):
                    y = r * stride + i - pad
                    if y < 0 or y >= h:
                        continue
                    for s in range(wo):
                        x = s * stride + j - pad
                        if x < 0 or x >= w:
                            continue
                        g[t, (n * h + y) * w + x, (n * ho + r) * wo + s] = 1.0
    return g, ho, wo


def _pack_weight(w_oihw):
    """(Cout, Cin, kh, kw) OIHW -> (kh*kw, Cout, Cin) bf16, tap-major (i, j)."""
    cout, cin, kh, kw = w_oihw.shape
    return jnp.transpose(w_oihw, (2, 3, 0, 1)).reshape(
        kh * kw, cout, cin).astype(jnp.bfloat16)


def _input_patches(x_nchw, kh, kw, stride, pad):
    """NCHW input -> per-tap transposed patches (kh*kw, Cin, N*Ho*Wo), bf16.
    This is the only XLA-side im2col (the raw network input, a few KB)."""
    n, c, h, w = x_nchw.shape
    ho = _conv_out_size(h, kh, stride, pad)
    wo = _conv_out_size(w, kw, stride, pad)
    xp = jnp.pad(x_nchw, ((0, 0), (0, 0), (pad, pad), (pad, pad)))
    taps = []
    for i in range(kh):
        for j in range(kw):
            v = xp[:, :, i:i + stride * ho:stride, j:j + stride * wo:stride]
            taps.append(jnp.transpose(v, (1, 0, 2, 3)).reshape(c, n * ho * wo))
    return jnp.stack(taps, axis=0).astype(jnp.bfloat16)


def make_forward(params, conv1_w, *, batch, image_size):
    """Builds the fused forward.  All weight packing and gather operators are
    precomputed here, hoisted out of the per-call path (review item)."""
    convs = [(w, b, 2, 1, True) for (w, b) in params]     # k=4, stride 2, pad 1
    convs.append((conv1_w, None, 1, 1, False))            # k=3, stride 1, pad 1

    h = w_sp = image_size
    metas = []
    const_inputs = []
    first_geom = None
    for li, (w, b, stride, pad, apply_act) in enumerate(convs):
        cout, cin, kh, kw = w.shape
        if li == 0:
            first_geom = (kh, kw, stride, pad)
            ho = _conv_out_size(h, kh, stride, pad)
            wo = _conv_out_size(w_sp, kw, stride, pad)
        else:
            g, ho, wo = _gather_operator(batch, h, w_sp, kh, kw, stride, pad)
            const_inputs.append(jnp.asarray(g, jnp.bfloat16))
        const_inputs.append(_pack_weight(w))
        has_bias = b is not None
        if has_bias:
            const_inputs.append(b.reshape(cout, 1).astype(jnp.float32))
        metas.append((kh * kw, cout, batch * ho * wo, has_bias, apply_act))
        h, w_sp = ho, wo

    out_cout = convs[-1][0].shape[0]
    m_final = batch * h * w_sp
    n_inputs = 1 + len(const_inputs)

    # The fused path is for configs whose operands comfortably fit VMEM.
    total_bytes = sum(int(np.prod(a.shape)) * a.dtype.itemsize
                      for a in const_inputs)
    if total_bytes > 8 * 1024 * 1024:
        raise NotImplementedError(
            "fused path targets VMEM-resident configs; large image_size / "
            "conv_dim needs the tiled per-layer GEMM path (see TODO).")

    fused_call = pl.pallas_call(
        functools.partial(_fused_forward_kernel, tuple(metas)),
        out_shape=jax.ShapeDtypeStruct((out_cout, m_final), jnp.float32),
        in_specs=[pl.BlockSpec(memory_space=pltpu.MemorySpace.VMEM)] * n_inputs,
        out_specs=pl.BlockSpec(memory_space=pltpu.MemorySpace.VMEM),
    )

    kh0, kw0, s0, p0 = first_geom
    ho_f, wo_f = h, w_sp

    def forward(x_nchw):
        patches0 = _input_patches(x_nchw, kh0, kw0, s0, p0)
        out = fused_call(patches0, *const_inputs)          # (1, N*Ho*Wo) f32
        return out.reshape(out_cout, batch, ho_f, wo_f).transpose(1, 0, 2, 3)

    return forward


# ----------------------------------------------------------------------------
# Parameters + pure-JAX reference (f32 XLA convs) for correctness checking.
# ----------------------------------------------------------------------------
def init_params(key, conv_dim=8, repeat_num=3):
    params = []
    cin, cout = 3, conv_dim
    for _ in range(repeat_num):
        key, kw_, kb_ = jax.random.split(key, 3)
        w = 0.05 * jax.random.normal(kw_, (cout, cin, 4, 4), jnp.float32)
        b = 0.05 * jax.random.normal(kb_, (cout,), jnp.float32)
        params.append((w, b))
        cin, cout = cout, cout * 2
    key, kw_ = jax.random.split(key)
    conv1_w = 0.05 * jax.random.normal(kw_, (1, cin, 3, 3), jnp.float32)
    return params, conv1_w


def reference_forward(x, params, conv1_w):
    h = x
    for (w, b) in params:
        h = jax.lax.conv_general_dilated(
            h, w, (2, 2), [(1, 1), (1, 1)],
            dimension_numbers=("NCHW", "OIHW", "NCHW"))
        h = h + b[None, :, None, None]
        h = jnp.where(h >= 0, h, 0.01 * h)
    return jax.lax.conv_general_dilated(
        h, conv1_w, (1, 1), [(1, 1), (1, 1)],
        dimension_numbers=("NCHW", "OIHW", "NCHW"))


if __name__ == "__main__":
    # Small config consistent with the module: image_size=16, conv_dim=8,
    # repeat_num=3 (scaled down from 256/64/6); c_dim is unused in forward.
    key = jax.random.PRNGKey(0)
    key, kx = jax.random.split(key)
    batch, image_size = 2, 16
    x = jax.random.normal(kx, (batch, 3, image_size, image_size), jnp.float32)

    params, conv1_w = init_params(key, conv_dim=8, repeat_num=3)

    forward = jax.jit(make_forward(params, conv1_w,
                                   batch=batch, image_size=image_size))
    out_src = jax.block_until_ready(forward(x))

    # Spatial halved repeat_num times, 1 output channel -> (2, 1, 2, 2).
    assert out_src.shape == (batch, 1, image_size // 8, image_size // 8), \
        out_src.shape

    ref = jax.block_until_ready(reference_forward(x, params, conv1_w))
    # Tolerance accounts for bf16 MXU operands / bf16 inter-layer activations
    # with f32 accumulation and f32 epilogue (intentional).
    np.testing.assert_allclose(np.asarray(out_src), np.asarray(ref),
                               rtol=5e-2, atol=5e-3)

    print("KERNEL_OK")
</pallas_src>

<mosaic_0001>
module attributes {stable_mosaic.version = 11 : i64} {
  func.func @_fused_forward_kernel(%arg0: memref<16x3x128xbf16, #tpu.memory_space<vmem>>, %arg1: memref<16x8x3xbf16, #tpu.memory_space<vmem>>, %arg2: memref<8x1xf32, #tpu.memory_space<vmem>>, %arg3: memref<16x128x32xbf16, #tpu.memory_space<vmem>>, %arg4: memref<16x16x8xbf16, #tpu.memory_space<vmem>>, %arg5: memref<16x1xf32, #tpu.memory_space<vmem>>, %arg6: memref<16x32x8xbf16, #tpu.memory_space<vmem>>, %arg7: memref<16x32x16xbf16, #tpu.memory_space<vmem>>, %arg8: memref<32x1xf32, #tpu.memory_space<vmem>>, %arg9: memref<9x8x8xbf16, #tpu.memory_space<vmem>>, %arg10: memref<9x1x32xbf16, #tpu.memory_space<vmem>>, %arg11: memref<1x8xf32, #tpu.memory_space<vmem>>) attributes {dimension_semantics = [], scalar_prefetch = 0 : i64, scratch_operands = 0 : i64, tpu.core_type = #tpu.core_type<tc>} {
    %cst = arith.constant 0.000000e+00 : f32
    %0 = vector.broadcast %cst : f32 to vector<8x128xf32>
    %c0 = arith.constant 0 : index
    %c0_0 = arith.constant 0 : index
    %c0_1 = arith.constant 0 : index
    %1 = vector.load %arg0[%c0, %c0_0, %c0_1] : memref<16x3x128xbf16, #tpu.memory_space<vmem>>, vector<1x3x128xbf16>
    %2 = vector.shape_cast %1 : vector<1x3x128xbf16> to vector<3x128xbf16>
    %c0_2 = arith.constant 0 : index
    %c0_3 = arith.constant 0 : index
    %c0_4 = arith.constant 0 : index
    %3 = vector.load %arg1[%c0_2, %c0_3, %c0_4] : memref<16x8x3xbf16, #tpu.memory_space<vmem>>, vector<1x8x3xbf16>
    %4 = vector.shape_cast %3 : vector<1x8x3xbf16> to vector<8x3xbf16>
    %cst_5 = arith.constant dense<0.000000e+00> : vector<8x128xf32>
    %5 = tpu.matmul %4, %2, %cst_5 {dimension_numbers = #tpu.dot_dimension_numbers<[1], [0], [0], [1], [0, 0, 1, 1], [], []>} : vector<8x3xbf16>, vector<3x128xbf16>, vector<8x128xf32> -> vector<8x128xf32>
    %6 = arith.addf %0, %5 : vector<8x128xf32>
    %c1 = arith.constant 1 : index
    %c0_6 = arith.constant 0 : index
    %c0_7 = arith.constant 0 : index
    %7 = vector.load %arg0[%c1, %c0_6, %c0_7] : memref<16x3x128xbf16, #tpu.memory_space<vmem>>, vector<1x3x128xbf16>
    %8 = vector.shape_cast %7 : vector<1x3x128xbf16> to vector<3x128xbf16>
    %c1_8 = arith.constant 1 : index
    %c0_9 = arith.constant 0 : index
    %c0_10 = arith.constant 0 : index
    %9 = vector.load %arg1[%c1_8, %c0_9, %c0_10] : memref<16x8x3xbf16, #tpu.memory_space<vmem>>, vector<1x8x3xbf16>
    %10 = vector.shape_cast %9 : vector<1x8x3xbf16> to vector<8x3xbf16>
    %cst_11 = arith.constant dense<0.000000e+00> : vector<8x128xf32>
    %11 = tpu.matmul %10, %8, %cst_11 {dimension_numbers = #tpu.dot_dimension_numbers<[1], [0], [0], [1], [0, 0, 1, 1], [], []>} : vector<8x3xbf16>, vector<3x128xbf16>, vector<8x128xf32> -> vector<8x128xf32>
    %12 = arith.addf %6, %11 : vector<8x128xf32>
    %c2 = arith.constant 2 : index
    %c0_12 = arith.constant 0 : index
    %c0_13 = arith.constant 0 : index
    %13 = vector.load %arg0[%c2, %c0_12, %c0_13] : memref<16x3x128xbf16, #tpu.memory_space<vmem>>, vector<1x3x128xbf16>
    %14 = vector.shape_cast %13 : vector<1x3x128xbf16> to vector<3x128xbf16>
    %c2_14 = arith.constant 2 : index
    %c0_15 = arith.constant 0 : index
    %c0_16 = arith.constant 0 : index
    %15 = vector.load %arg1[%c2_14, %c0_15, %c0_16] : memref<16x8x3xbf16, #tpu.memory_space<vmem>>, vector<1x8x3xbf16>
    %16 = vector.shape_cast %15 : vector<1x8x3xbf16> to vector<8x3xbf16>
    %cst_17 = arith.constant dense<0.000000e+00> : vector<8x128xf32>
    %17 = tpu.matmul %16, %14, %cst_17 {dimension_numbers = #tpu.dot_dimension_numbers<[1], [0], [0], [1], [0, 0, 1, 1], [], []>} : vector<8x3xbf16>, vector<3x128xbf16>, vector<8x128xf32> -> vector<8x128xf32>
    %18 = arith.addf %12, %17 : vector<8x128xf32>
    %c3 = arith.constant 3 : index
    %c0_18 = arith.constant 0 : index
    %c0_19 = arith.constant 0 : index
    %19 = vector.load %arg0[%c3, %c0_18, %c0_19] : memref<16x3x128xbf16, #tpu.memory_space<vmem>>, vector<1x3x128xbf16>
    %20 = vector.shape_cast %19 : vector<1x3x128xbf16> to vector<3x128xbf16>
    %c3_20 = arith.constant 3 : index
    %c0_21 = arith.constant 0 : index
    %c0_22 = arith.constant 0 : index
    %21 = vector.load %arg1[%c3_20, %c0_21, %c0_22] : memref<16x8x3xbf16, #tpu.memory_space<vmem>>, vector<1x8x3xbf16>
    %22 = vector.shape_cast %21 : vector<1x8x3xbf16> to vector<8x3xbf16>
    %cst_23 = arith.constant dense<0.000000e+00> : vector<8x128xf32>
    %23 = tpu.matmul %22, %20, %cst_23 {dimension_numbers = #tpu.dot_dimension_numbers<[1], [0], [0], [1], [0, 0, 1, 1], [], []>} : vector<8x3xbf16>, vector<3x128xbf16>, vector<8x128xf32> -> vector<8x128xf32>
    %24 = arith.addf %18, %23 : vector<8x128xf32>
    %c4 = arith.constant 4 : index
    %c0_24 = arith.constant 0 : index
    %c0_25 = arith.constant 0 : index
    %25 = vector.load %arg0[%c4, %c0_24, %c0_25] : memref<16x3x128xbf16, #tpu.memory_space<vmem>>, vector<1x3x128xbf16>
    %26 = vector.shape_cast %25 : vector<1x3x128xbf16> to vector<3x128xbf16>
    %c4_26 = arith.constant 4 : index
    %c0_27 = arith.constant 0 : index
    %c0_28 = arith.constant 0 : index
    %27 = vector.load %arg1[%c4_26, %c0_27, %c0_28] : memref<16x8x3xbf16, #tpu.memory_space<vmem>>, vector<1x8x3xbf16>
    %28 = vector.shape_cast %27 : vector<1x8x3xbf16> to vector<8x3xbf16>
    %cst_29 = arith.constant dense<0.000000e+00> : vector<8x128xf32>
    %29 = tpu.matmul %28, %26, %cst_29 {dimension_numbers = #tpu.dot_dimension_numbers<[1], [0], [0], [1], [0, 0, 1, 1], [], []>} : vector<8x3xbf16>, vector<3x128xbf16>, vector<8x128xf32> -> vector<8x128xf32>
    %30 = arith.addf %24, %29 : vector<8x128xf32>
    %c5 = arith.constant 5 : index
    %c0_30 = arith.constant 0 : index
    %c0_31 = arith.constant 0 : index
    %31 = vector.load %arg0[%c5, %c0_30, %c0_31] : memref<16x3x128xbf16, #tpu.memory_space<vmem>>, vector<1x3x128xbf16>
    %32 = vector.shape_cast %31 : vector<1x3x128xbf16> to vector<3x128xbf16>
    %c5_32 = arith.constant 5 : index
    %c0_33 = arith.constant 0 : index
    %c0_34 = arith.constant 0 : index
    %33 = vector.load %arg1[%c5_32, %c0_33, %c0_34] : memref<16x8x3xbf16, #tpu.memory_space<vmem>>, vector<1x8x3xbf16>
    %34 = vector.shape_cast %33 : vector<1x8x3xbf16> to vector<8x3xbf16>
    %cst_35 = arith.constant dense<0.000000e+00> : vector<8x128xf32>
    %35 = tpu.matmul %34, %32, %cst_35 {dimension_numbers = #tpu.dot_dimension_numbers<[1], [0], [0], [1], [0, 0, 1, 1], [], []>} : vector<8x3xbf16>, vector<3x128xbf16>, vector<8x128xf32> -> vector<8x128xf32>
    %36 = arith.addf %30, %35 : vector<8x128xf32>
    %c6 = arith.constant 6 : index
    %c0_36 = arith.constant 0 : index
    %c0_37 = arith.constant 0 : index
    %37 = vector.load %arg0[%c6, %c0_36, %c0_37] : memref<16x3x128xbf16, #tpu.memory_space<vmem>>, vector<1x3x128xbf16>
    %38 = vector.shape_cast %37 : vector<1x3x128xbf16> to vector<3x128xbf16>
    %c6_38 = arith.constant 6 : index
    %c0_39 = arith.constant 0 : index
    %c0_40 = arith.constant 0 : index
    %39 = vector.load %arg1[%c6_38, %c0_39, %c0_40] : memref<16x8x3xbf16, #tpu.memory_space<vmem>>, vector<1x8x3xbf16>
    %40 = vector.shape_cast %39 : vector<1x8x3xbf16> to vector<8x3xbf16>
    %cst_41 = arith.constant dense<0.000000e+00> : vector<8x128xf32>
    %41 = tpu.matmul %40, %38, %cst_41 {dimension_numbers = #tpu.dot_dimension_numbers<[1], [0], [0], [1], [0, 0, 1, 1], [], []>} : vector<8x3xbf16>, vector<3x128xbf16>, vector<8x128xf32> -> vector<8x128xf32>
    %42 = arith.addf %36, %41 : vector<8x128xf32>
    %c7 = arith.constant 7 : index
    %c0_42 = arith.constant 0 : index
    %c0_43 = arith.constant 0 : index
    %43 = vector.load %arg0[%c7, %c0_42, %c0_43] : memref<16x3x128xbf16, #tpu.memory_space<vmem>>, vector<1x3x128xbf16>
    %44 = vector.shape_cast %43 : vector<1x3x128xbf16> to vector<3x128xbf16>
    %c7_44 = arith.constant 7 : index
    %c0_45 = arith.constant 0 : index
    %c0_46 = arith.constant 0 : index
    %45 = vector.load %arg1[%c7_44, %c0_45, %c0_46] : memref<16x8x3xbf16, #tpu.memory_space<vmem>>, vector<1x8x3xbf16>
    %46 = vector.shape_cast %45 : vector<1x8x3xbf16> to vector<8x3xbf16>
    %cst_47 = arith.constant dense<0.000000e+00> : vector<8x128xf32>
    %47 = tpu.matmul %46, %44, %cst_47 {dimension_numbers = #tpu.dot_dimension_numbers<[1], [0], [0], [1], [0, 0, 1, 1], [], []>} : vector<8x3xbf16>, vector<3x128xbf16>, vector<8x128xf32> -> vector<8x128xf32>
    %48 = arith.addf %42, %47 : vector<8x128xf32>
    %c8 = arith.constant 8 : index
    %c0_48 = arith.constant 0 : index
    %c0_49 = arith.constant 0 : index
    %49 = vector.load %arg0[%c8, %c0_48, %c0_49] : memref<16x3x128xbf16, #tpu.memory_space<vmem>>, vector<1x3x128xbf16>
    %50 = vector.shape_cast %49 : vector<1x3x128xbf16> to vector<3x128xbf16>
    %c8_50 = arith.constant 8 : index
    %c0_51 = arith.constant 0 : index
    %c0_52 = arith.constant 0 : index
    %51 = vector.load %arg1[%c8_50, %c0_51, %c0_52] : memref<16x8x3xbf16, #tpu.memory_space<vmem>>, vector<1x8x3xbf16>
    %52 = vector.shape_cast %51 : vector<1x8x3xbf16> to vector<8x3xbf16>
    %cst_53 = arith.constant dense<0.000000e+00> : vector<8x128xf32>
    %53 = tpu.matmul %52, %50, %cst_53 {dimension_numbers = #tpu.dot_dimension_numbers<[1], [0], [0], [1], [0, 0, 1, 1], [], []>} : vector<8x3xbf16>, vector<3x128xbf16>, vector<8x128xf32> -> vector<8x128xf32>
    %54 = arith.addf %48, %53 : vector<8x128xf32>
    %c9 = arith.constant 9 : index
    %c0_54 = arith.constant 0 : index
    %c0_55 = arith.constant 0 : index
    %55 = vector.load %arg0[%c9, %c0_54, %c0_55] : memref<16x3x128xbf16, #tpu.memory_space<vmem>>, vector<1x3x128xbf16>
    %56 = vector.shape_cast %55 : vector<1x3x128xbf16> to vector<3x128xbf16>
    %c9_56 = arith.constant 9 : index
    %c0_57 = arith.constant 0 : index
    %c0_58 = arith.constant 0 : index
    %57 = vector.load %arg1[%c9_56, %c0_57, %c0_58] : memref<16x8x3xbf16, #tpu.memory_space<vmem>>, vector<1x8x3xbf16>
    %58 = vector.shape_cast %57 : vector<1x8x3xbf16> to vector<8x3xbf16>
    %cst_59 = arith.constant dense<0.000000e+00> : vector<8x128xf32>
    %59 = tpu.matmul %58, %56, %cst_59 {dimension_numbers = #tpu.dot_dimension_numbers<[1], [0], [0], [1], [0, 0, 1, 1], [], []>} : vector<8x3xbf16>, vector<3x128xbf16>, vector<8x128xf32> -> vector<8x128xf32>
    %60 = arith.addf %54, %59 : vector<8x128xf32>
    %c10 = arith.constant 10 : index
    %c0_60 = arith.constant 0 : index
    %c0_61 = arith.constant 0 : index
    %61 = vector.load %arg0[%c10, %c0_60, %c0_61] : memref<16x3x128xbf16, #tpu.memory_space<vmem>>, vector<1x3x128xbf16>
    %62 = vector.shape_cast %61 : vector<1x3x128xbf16> to vector<3x128xbf16>
    %c10_62 = arith.constant 10 : index
    %c0_63 = arith.constant 0 : index
    %c0_64 = arith.constant 0 : index
    %63 = vector.load %arg1[%c10_62, %c0_63, %c0_64] : memref<16x8x3xbf16, #tpu.memory_space<vmem>>, vector<1x8x3xbf16>
    %64 = vector.shape_cast %63 : vector<1x8x3xbf16> to vector<8x3xbf16>
    %cst_65 = arith.constant dense<0.000000e+00> : vector<8x128xf32>
    %65 = tpu.matmul %64, %62, %cst_65 {dimension_numbers = #tpu.dot_dimension_numbers<[1], [0], [0], [1], [0, 0, 1, 1], [], []>} : vector<8x3xbf16>, vector<3x128xbf16>, vector<8x128xf32> -> vector<8x128xf32>
    %66 = arith.addf %60, %65 : vector<8x128xf32>
    %c11 = arith.constant 11 : index
    %c0_66 = arith.constant 0 : index
    %c0_67 = arith.constant 0 : index
    %67 = vector.load %arg0[%c11, %c0_66, %c0_67] : memref<16x3x128xbf16, #tpu.memory_space<vmem>>, vector<1x3x128xbf16>
    %68 = vector.shape_cast %67 : vector<1x3x128xbf16> to vector<3x128xbf16>
    %c11_68 = arith.constant 11 : index
    %c0_69 = arith.constant 0 : index
    %c0_70 = arith.constant 0 : index
    %69 = vector.load %arg1[%c11_68, %c0_69, %c0_70] : memref<16x8x3xbf16, #tpu.memory_space<vmem>>, vector<1x8x3xbf16>
    %70 = vector.shape_cast %69 : vector<1x8x3xbf16> to vector<8x3xbf16>
    %cst_71 = arith.constant dense<0.000000e+00> : vector<8x128xf32>
    %71 = tpu.matmul %70, %68, %cst_71 {dimension_numbers = #tpu.dot_dimension_numbers<[1], [0], [0], [1], [0, 0, 1, 1], [], []>} : vector<8x3xbf16>, vector<3x128xbf16>, vector<8x128xf32> -> vector<8x128xf32>
    %72 = arith.addf %66, %71 : vector<8x128xf32>
    %c12 = arith.constant 12 : index
    %c0_72 = arith.constant 0 : index
    %c0_73 = arith.constant 0 : index
    %73 = vector.load %arg0[%c12, %c0_72, %c0_73] : memref<16x3x128xbf16, #tpu.memory_space<vmem>>, vector<1x3x128xbf16>
    %74 = vector.shape_cast %73 : vector<1x3x128xbf16> to vector<3x128xbf16>
    %c12_74 = arith.constant 12 : index
    %c0_75 = arith.constant 0 : index
    %c0_76 = arith.constant 0 : index
    %75 = vector.load %arg1[%c12_74, %c0_75, %c0_76] : memref<16x8x3xbf16, #tpu.memory_space<vmem>>, vector<1x8x3xbf16>
    %76 = vector.shape_cast %75 : vector<1x8x3xbf16> to vector<8x3xbf16>
    %cst_77 = arith.constant dense<0.000000e+00> : vector<8x128xf32>
    %77 = tpu.matmul %76, %74, %cst_77 {dimension_numbers = #tpu.dot_dimension_numbers<[1], [0], [0], [1], [0, 0, 1, 1], [], []>} : vector<8x3xbf16>, vector<3x128xbf16>, vector<8x128xf32> -> vector<8x128xf32>
    %78 = arith.addf %72, %77 : vector<8x128xf32>
    %c13 = arith.constant 13 : index
    %c0_78 = arith.constant 0 : index
    %c0_79 = arith.constant 0 : index
    %79 = vector.load %arg0[%c13, %c0_78, %c0_79] : memref<16x3x128xbf16, #tpu.memory_space<vmem>>, vector<1x3x128xbf16>
    %80 = vector.shape_cast %79 : vector<1x3x128xbf16> to vector<3x128xbf16>
    %c13_80 = arith.constant 13 : index
    %c0_81 = arith.constant 0 : index
    %c0_82 = arith.constant 0 : index
    %81 = vector.load %arg1[%c13_80, %c0_81, %c0_82] : memref<16x8x3xbf16, #tpu.memory_space<vmem>>, vector<1x8x3xbf16>
    %82 = vector.shape_cast %81 : vector<1x8x3xbf16> to vector<8x3xbf16>
    %cst_83 = arith.constant dense<0.000000e+00> : vector<8x128xf32>
    %83 = tpu.matmul %82, %80, %cst_83 {dimension_numbers = #tpu.dot_dimension_numbers<[1], [0], [0], [1], [0, 0, 1, 1], [], []>} : vector<8x3xbf16>, vector<3x128xbf16>, vector<8x128xf32> -> vector<8x128xf32>
    %84 = arith.addf %78, %83 : vector<8x128xf32>
    %c14 = arith.constant 14 : index
    %c0_84 = arith.constant 0 : index
    %c0_85 = arith.constant 0 : index
    %85 = vector.load %arg0[%c14, %c0_84, %c0_85] : memref<16x3x128xbf16, #tpu.memory_space<vmem>>, vector<1x3x128xbf16>
    %86 = vector.shape_cast %85 : vector<1x3x128xbf16> to vector<3x128xbf16>
    %c14_86 = arith.constant 14 : index
    %c0_87 = arith.constant 0 : index
    %c0_88 = arith.constant 0 : index
    %87 = vector.load %arg1[%c14_86, %c0_87, %c0_88] : memref<16x8x3xbf16, #tpu.memory_space<vmem>>, vector<1x8x3xbf16>
    %88 = vector.shape_cast %87 : vector<1x8x3xbf16> to vector<8x3xbf16>
    %cst_89 = arith.constant dense<0.000000e+00> : vector<8x128xf32>
    %89 = tpu.matmul %88, %86, %cst_89 {dimension_numbers = #tpu.dot_dimension_numbers<[1], [0], [0], [1], [0, 0, 1, 1], [], []>} : vector<8x3xbf16>, vector<3x128xbf16>, vector<8x128xf32> -> vector<8x128xf32>
    %90 = arith.addf %84, %89 : vector<8x128xf32>
    %c15 = arith.constant 15 : index
    %c0_90 = arith.constant 0 : index
    %c0_91 = arith.constant 0 : index
    %91 = vector.load %arg0[%c15, %c0_90, %c0_91] : memref<16x3x128xbf16, #tpu.memory_space<vmem>>, vector<1x3x128xbf16>
    %92 = vector.shape_cast %91 : vector<1x3x128xbf16> to vector<3x128xbf16>
    %c15_92 = arith.constant 15 : index
    %c0_93 = arith.constant 0 : index
    %c0_94 = arith.constant 0 : index
    %93 = vector.load %arg1[%c15_92, %c0_93, %c0_94] : memref<16x8x3xbf16, #tpu.memory_space<vmem>>, vector<1x8x3xbf16>
    %94 = vector.shape_cast %93 : vector<1x8x3xbf16> to vector<8x3xbf16>
    %cst_95 = arith.constant dense<0.000000e+00> : vector<8x128xf32>
    %95 = tpu.matmul %94, %92, %cst_95 {dimension_numbers = #tpu.dot_dimension_numbers<[1], [0], [0], [1], [0, 0, 1, 1], [], []>} : vector<8x3xbf16>, vector<3x128xbf16>, vector<8x128xf32> -> vector<8x128xf32>
    %96 = arith.addf %90, %95 : vector<8x128xf32>
    %c0_96 = arith.constant 0 : index
    %c0_97 = arith.constant 0 : index
    %97 = vector.load %arg2[%c0_96, %c0_97] : memref<8x1xf32, #tpu.memory_space<vmem>>, vector<8x1xf32>
    %98 = vector.broadcast %97 : vector<8x1xf32> to vector<8x128xf32>
    %99 = arith.addf %96, %98 : vector<8x128xf32>
    %cst_98 = arith.constant 0.000000e+00 : f32
    %100 = vector.broadcast %cst_98 : f32 to vector<8x128xf32>
    %101 = arith.cmpf oge, %99, %100 : vector<8x128xf32>
    %cst_99 = arith.constant 0.00999999977 : f32
    %102 = vector.broadcast %cst_99 : f32 to vector<8x128xf32>
    %103 = arith.mulf %102, %99 : vector<8x128xf32>
    %104 = arith.select %101, %99, %103 : vector<8x128xi1>, vector<8x128xf32>
    %105 = arith.truncf %104 : vector<8x128xf32> to vector<8x128xbf16>
    %cst_100 = arith.constant 0.000000e+00 : f32
    %106 = vector.broadcast %cst_100 : f32 to vector<16x32xf32>
    %c0_101 = arith.constant 0 : index
    %c0_102 = arith.constant 0 : index
    %c0_103 = arith.constant 0 : index
    %107 = vector.load %arg3[%c0_101, %c0_102, %c0_103] : memref<16x128x32xbf16, #tpu.memory_space<vmem>>, vector<1x128x32xbf16>
    %108 = vector.shape_cast %107 : vector<1x128x32xbf16> to vector<128x32xbf16>
    %cst_104 = arith.constant dense<0.000000e+00> : vector<8x32xf32>
    %109 = tpu.matmul %105, %108, %cst_104 {dimension_numbers = #tpu.dot_dimension_numbers<[1], [0], [0], [1], [0, 0, 1, 1], [], []>} : vector<8x128xbf16>, vector<128x32xbf16>, vector<8x32xf32> -> vector<8x32xf32>
    %110 = arith.truncf %109 : vector<8x32xf32> to vector<8x32xbf16>
    %c0_105 = arith.constant 0 : index
    %c0_106 = arith.constant 0 : index
    %c0_107 = arith.constant 0 : index
    %111 = vector.load %arg4[%c0_105, %c0_106, %c0_107] : memref<16x16x8xbf16, #tpu.memory_space<vmem>>, vector<1x16x8xbf16>
    %112 = vector.shape_cast %111 : vector<1x16x8xbf16> to vector<16x8xbf16>
    %cst_108 = arith.constant dense<0.000000e+00> : vector<16x32xf32>
    %113 = tpu.matmul %112, %110, %cst_108 {dimension_numbers = #tpu.dot_dimension_numbers<[1], [0], [0], [1], [0, 0, 1, 1], [], []>} : vector<16x8xbf16>, vector<8x32xbf16>, vector<16x32xf32> -> vector<16x32xf32>
    %114 = arith.addf %106, %113 : vector<16x32xf32>
    %c1_109 = arith.constant 1 : index
    %c0_110 = arith.constant 0 : index
    %c0_111 = arith.constant 0 : index
    %115 = vector.load %arg3[%c1_109, %c0_110, %c0_111] : memref<16x128x32xbf16, #tpu.memory_space<vmem>>, vector<1x128x32xbf16>
    %116 = vector.shape_cast %115 : vector<1x128x32xbf16> to vector<128x32xbf16>
    %cst_112 = arith.constant dense<0.000000e+00> : vector<8x32xf32>
    %117 = tpu.matmul %105, %116, %cst_112 {dimension_numbers = #tpu.dot_dimension_numbers<[1], [0], [0], [1], [0, 0, 1, 1], [], []>} : vector<8x128xbf16>, vector<128x32xbf16>, vector<8x32xf32> -> vector<8x32xf32>
    %118 = arith.truncf %117 : vector<8x32xf32> to vector<8x32xbf16>
    %c1_113 = arith.constant 1 : index
    %c0_114 = arith.constant 0 : index
    %c0_115 = arith.constant 0 : index
    %119 = vector.load %arg4[%c1_113, %c0_114, %c0_115] : memref<16x16x8xbf16, #tpu.memory_space<vmem>>, vector<1x16x8xbf16>
    %120 = vector.shape_cast %119 : vector<1x16x8xbf16> to vector<16x8xbf16>
    %cst_116 = arith.constant dense<0.000000e+00> : vector<16x32xf32>
    %121 = tpu.matmul %120, %118, %cst_116 {dimension_numbers = #tpu.dot_dimension_numbers<[1], [0], [0], [1], [0, 0, 1, 1], [], []>} : vector<16x8xbf16>, vector<8x32xbf16>, vector<16x32xf32> -> vector<16x32xf32>
    %122 = arith.addf %114, %121 : vector<16x32xf32>
    %c2_117 = arith.constant 2 : index
    %c0_118 = arith.constant 0 : index
    %c0_119 = arith.constant 0 : index
    %123 = vector.load %arg3[%c2_117, %c0_118, %c0_119] : memref<16x128x32xbf16, #tpu.memory_space<vmem>>, vector<1x128x32xbf16>
    %124 = vector.shape_cast %123 : vector<1x128x32xbf16> to vector<128x32xbf16>
    %cst_120 = arith.constant dense<0.000000e+00> : vector<8x32xf32>
    %125 = tpu.matmul %105, %124, %cst_120 {dimension_numbers = #tpu.dot_dimension_numbers<[1], [0], [0], [1], [0, 0, 1, 1], [], []>} : vector<8x128xbf16>, vector<128x32xbf16>, vector<8x32xf32> -> vector<8x32xf32>
    %126 = arith.truncf %125 : vector<8x32xf32> to vector<8x32xbf16>
    %c2_121 = arith.constant 2 : index
    %c0_122 = arith.constant 0 : index
    %c0_123 = arith.constant 0 : index
    %127 = vector.load %arg4[%c2_121, %c0_122, %c0_123] : memref<16x16x8xbf16, #tpu.memory_space<vmem>>, vector<1x16x8xbf16>
    %128 = vector.shape_cast %127 : vector<1x16x8xbf16> to vector<16x8xbf16>
    %cst_124 = arith.constant dense<0.000000e+00> : vector<16x32xf32>
    %129 = tpu.matmul %128, %126, %cst_124 {dimension_numbers = #tpu.dot_dimension_numbers<[1], [0], [0], [1], [0, 0, 1, 1], [], []>} : vector<16x8xbf16>, vector<8x32xbf16>, vector<16x32xf32> -> vector<16x32xf32>
    %130 = arith.addf %122, %129 : vector<16x32xf32>
    %c3_125 = arith.constant 3 : index
    %c0_126 = arith.constant 0 : index
    %c0_127 = arith.constant 0 : index
    %131 = vector.load %arg3[%c3_125, %c0_126, %c0_127] : memref<16x128x32xbf16, #tpu.memory_space<vmem>>, vector<1x128x32xbf16>
    %132 = vector.shape_cast %131 : vector<1x128x32xbf16> to vector<128x32xbf16>
    %cst_128 = arith.constant dense<0.000000e+00> : vector<8x32xf32>
    %133 = tpu.matmul %105, %132, %cst_128 {dimension_numbers = #tpu.dot_dimension_numbers<[1], [0], [0], [1], [0, 0, 1, 1], [], []>} : vector<8x128xbf16>, vector<128x32xbf16>, vector<8x32xf32> -> vector<8x32xf32>
    %134 = arith.truncf %133 : vector<8x32xf32> to vector<8x32xbf16>
    %c3_129 = arith.constant 3 : index
    %c0_130 = arith.constant 0 : index
    %c0_131 = arith.constant 0 : index
    %135 = vector.load %arg4[%c3_129, %c0_130, %c0_131] : memref<16x16x8xbf16, #tpu.memory_space<vmem>>, vector<1x16x8xbf16>
    %136 = vector.shape_cast %135 : vector<1x16x8xbf16> to vector<16x8xbf16>
    %cst_132 = arith.constant dense<0.000000e+00> : vector<16x32xf32>
    %137 = tpu.matmul %136, %134, %cst_132 {dimension_numbers = #tpu.dot_dimension_numbers<[1], [0], [0], [1], [0, 0, 1, 1], [], []>} : vector<16x8xbf16>, vector<8x32xbf16>, vector<16x32xf32> -> vector<16x32xf32>
    %138 = arith.addf %130, %137 : vector<16x32xf32>
    %c4_133 = arith.constant 4 : index
    %c0_134 = arith.constant 0 : index
    %c0_135 = arith.constant 0 : index
    %139 = vector.load %arg3[%c4_133, %c0_134, %c0_135] : memref<16x128x32xbf16, #tpu.memory_space<vmem>>, vector<1x128x32xbf16>
    %140 = vector.shape_cast %139 : vector<1x128x32xbf16> to vector<128x32xbf16>
    %cst_136 = arith.constant dense<0.000000e+00> : vector<8x32xf32>
    %141 = tpu.matmul %105, %140, %cst_136 {dimension_numbers = #tpu.dot_dimension_numbers<[1], [0], [0], [1], [0, 0, 1, 1], [], []>} : vector<8x128xbf16>, vector<128x32xbf16>, vector<8x32xf32> -> vector<8x32xf32>
    %142 = arith.truncf %141 : vector<8x32xf32> to vector<8x32xbf16>
    %c4_137 = arith.constant 4 : index
    %c0_138 = arith.constant 0 : index
    %c0_139 = arith.constant 0 : index
    %143 = vector.load %arg4[%c4_137, %c0_138, %c0_139] : memref<16x16x8xbf16, #tpu.memory_space<vmem>>, vector<1x16x8xbf16>
    %144 = vector.shape_cast %143 : vector<1x16x8xbf16> to vector<16x8xbf16>
    %cst_140 = arith.constant dense<0.000000e+00> : vector<16x32xf32>
    %145 = tpu.matmul %144, %142, %cst_140 {dimension_numbers = #tpu.dot_dimension_numbers<[1], [0], [0], [1], [0, 0, 1, 1], [], []>} : vector<16x8xbf16>, vector<8x32xbf16>, vector<16x32xf32> -> vector<16x32xf32>
    %146 = arith.addf %138, %145 : vector<16x32xf32>
    %c5_141 = arith.constant 5 : index
    %c0_142 = arith.constant 0 : index
    %c0_143 = arith.constant 0 : index
    %147 = vector.load %arg3[%c5_141, %c0_142, %c0_143] : memref<16x128x32xbf16, #tpu.memory_space<vmem>>, vector<1x128x32xbf16>
    %148 = vector.shape_cast %147 : vector<1x128x32xbf16> to vector<128x32xbf16>
    %cst_144 = arith.constant dense<0.000000e+00> : vector<8x32xf32>
    %149 = tpu.matmul %105, %148, %cst_144 {dimension_numbers = #tpu.dot_dimension_numbers<[1], [0], [0], [1], [0, 0, 1, 1], [], []>} : vector<8x128xbf16>, vector<128x32xbf16>, vector<8x32xf32> -> vector<8x32xf32>
    %150 = arith.truncf %149 : vector<8x32xf32> to vector<8x32xbf16>
    %c5_145 = arith.constant 5 : index
    %c0_146 = arith.constant 0 : index
    %c0_147 = arith.constant 0 : index
    %151 = vector.load %arg4[%c5_145, %c0_146, %c0_147] : memref<16x16x8xbf16, #tpu.memory_space<vmem>>, vector<1x16x8xbf16>
    %152 = vector.shape_cast %151 : vector<1x16x8xbf16> to vector<16x8xbf16>
    %cst_148 = arith.constant dense<0.000000e+00> : vector<16x32xf32>
    %153 = tpu.matmul %152, %150, %cst_148 {dimension_numbers = #tpu.dot_dimension_numbers<[1], [0], [0], [1], [0, 0, 1, 1], [], []>} : vector<16x8xbf16>, vector<8x32xbf16>, vector<16x32xf32> -> vector<16x32xf32>
    %154 = arith.addf %146, %153 : vector<16x32xf32>
    %c6_149 = arith.constant 6 : index
    %c0_150 = arith.constant 0 : index
    %c0_151 = arith.constant 0 : index
    %155 = vector.load %arg3[%c6_149, %c0_150, %c0_151] : memref<16x128x32xbf16, #tpu.memory_space<vmem>>, vector<1x128x32xbf16>
    %156 = vector.shape_cast %155 : vector<1x128x32xbf16> to vector<128x32xbf16>
    %cst_152 = arith.constant dense<0.000000e+00> : vector<8x32xf32>
    %157 = tpu.matmul %105, %156, %cst_152 {dimension_numbers = #tpu.dot_dimension_numbers<[1], [0], [0], [1], [0, 0, 1, 1], [], []>} : vector<8x128xbf16>, vector<128x32xbf16>, vector<8x32xf32> -> vector<8x32xf32>
    %158 = arith.truncf %157 : vector<8x32xf32> to vector<8x32xbf16>
    %c6_153 = arith.constant 6 : index
    %c0_154 = arith.constant 0 : index
    %c0_155 = arith.constant 0 : index
    %159 = vector.load %arg4[%c6_153, %c0_154, %c0_155] : memref<16x16x8xbf16, #tpu.memory_space<vmem>>, vector<1x16x8xbf16>
    %160 = vector.shape_cast %159 : vector<1x16x8xbf16> to vector<16x8xbf16>
    %cst_156 = arith.constant dense<0.000000e+00> : vector<16x32xf32>
    %161 = tpu.matmul %160, %158, %cst_156 {dimension_numbers = #tpu.dot_dimension_numbers<[1], [0], [0], [1], [0, 0, 1, 1], [], []>} : vector<16x8xbf16>, vector<8x32xbf16>, vector<16x32xf32> -> vector<16x32xf32>
    %162 = arith.addf %154, %161 : vector<16x32xf32>
    %c7_157 = arith.constant 7 : index
    %c0_158 = arith.constant 0 : index
    %c0_159 = arith.constant 0 : index
    %163 = vector.load %arg3[%c7_157, %c0_158, %c0_159] : memref<16x128x32xbf16, #tpu.memory_space<vmem>>, vector<1x128x32xbf16>
    %164 = vector.shape_cast %163 : vector<1x128x32xbf16> to vector<128x32xbf16>
    %cst_160 = arith.constant dense<0.000000e+00> : vector<8x32xf32>
    %165 = tpu.matmul %105, %164, %cst_160 {dimension_numbers = #tpu.dot_dimension_numbers<[1], [0], [0], [1], [0, 0, 1, 1], [], []>} : vector<8x128xbf16>, vector<128x32xbf16>, vector<8x32xf32> -> vector<8x32xf32>
    %166 = arith.truncf %165 : vector<8x32xf32> to vector<8x32xbf16>
    %c7_161 = arith.constant 7 : index
    %c0_162 = arith.constant 0 : index
    %c0_163 = arith.constant 0 : index
    %167 = vector.load %arg4[%c7_161, %c0_162, %c0_163] : memref<16x16x8xbf16, #tpu.memory_space<vmem>>, vector<1x16x8xbf16>
    %168 = vector.shape_cast %167 : vector<1x16x8xbf16> to vector<16x8xbf16>
    %cst_164 = arith.constant dense<0.000000e+00> : vector<16x32xf32>
    %169 = tpu.matmul %168, %166, %cst_164 {dimension_numbers = #tpu.dot_dimension_numbers<[1], [0], [0], [1], [0, 0, 1, 1], [], []>} : vector<16x8xbf16>, vector<8x32xbf16>, vector<16x32xf32> -> vector<16x32xf32>
    %170 = arith.addf %162, %169 : vector<16x32xf32>
    %c8_165 = arith.constant 8 : index
    %c0_166 = arith.constant 0 : index
    %c0_167 = arith.constant 0 : index
    %171 = vector.load %arg3[%c8_165, %c0_166, %c0_167] : memref<16x128x32xbf16, #tpu.memory_space<vmem>>, vector<1x128x32xbf16>
    %172 = vector.shape_cast %171 : vector<1x128x32xbf16> to vector<128x32xbf16>
    %cst_168 = arith.constant dense<0.000000e+00> : vector<8x32xf32>
    %173 = tpu.matmul %105, %172, %cst_168 {dimension_numbers = #tpu.dot_dimension_numbers<[1], [0], [0], [1], [0, 0, 1, 1], [], []>} : vector<8x128xbf16>, vector<128x32xbf16>, vector<8x32xf32> -> vector<8x32xf32>
    %174 = arith.truncf %173 : vector<8x32xf32> to vector<8x32xbf16>
    %c8_169 = arith.constant 8 : index
    %c0_170 = arith.constant 0 : index
    %c0_171 = arith.constant 0 : index
    %175 = vector.load %arg4[%c8_169, %c0_170, %c0_171] : memref<16x16x8xbf16, #tpu.memory_space<vmem>>, vector<1x16x8xbf16>
    %176 = vector.shape_cast %175 : vector<1x16x8xbf16> to vector<16x8xbf16>
    %cst_172 = arith.constant dense<0.000000e+00> : vector<16x32xf32>
    %177 = tpu.matmul %176, %174, %cst_172 {dimension_numbers = #tpu.dot_dimension_numbers<[1], [0], [0], [1], [0, 0, 1, 1], [], []>} : vector<16x8xbf16>, vector<8x32xbf16>, vector<16x32xf32> -> vector<16x32xf32>
    %178 = arith.addf %170, %177 : vector<16x32xf32>
    %c9_173 = arith.constant 9 : index
    %c0_174 = arith.constant 0 : index
    %c0_175 = arith.constant 0 : index
    %179 = vector.load %arg3[%c9_173, %c0_174, %c0_175] : memref<16x128x32xbf16, #tpu.memory_space<vmem>>, vector<1x128x32xbf16>
    %180 = vector.shape_cast %179 : vector<1x128x32xbf16> to vector<128x32xbf16>
    %cst_176 = arith.constant dense<0.000000e+00> : vector<8x32xf32>
    %181 = tpu.matmul %105, %180, %cst_176 {dimension_numbers = #tpu.dot_dimension_numbers<[1], [0], [0], [1], [0, 0, 1, 1], [], []>} : vector<8x128xbf16>, vector<128x32xbf16>, vector<8x32xf32> -> vector<8x32xf32>
    %182 = arith.truncf %181 : vector<8x32xf32> to vector<8x32xbf16>
    %c9_177 = arith.constant 9 : index
    %c0_178 = arith.constant 0 : index
    %c0_179 = arith.constant 0 : index
    %183 = vector.load %arg4[%c9_177, %c0_178, %c0_179] : memref<16x16x8xbf16, #tpu.memory_space<vmem>>, vector<1x16x8xbf16>
    %184 = vector.shape_cast %183 : vector<1x16x8xbf16> to vector<16x8xbf16>
    %cst_180 = arith.constant dense<0.000000e+00> : vector<16x32xf32>
    %185 = tpu.matmul %184, %182, %cst_180 {dimension_numbers = #tpu.dot_dimension_numbers<[1], [0], [0], [1], [0, 0, 1, 1], [], []>} : vector<16x8xbf16>, vector<8x32xbf16>, vector<16x32xf32> -> vector<16x32xf32>
    %186 = arith.addf %178, %185 : vector<16x32xf32>
    %c10_181 = arith.constant 10 : index
    %c0_182 = arith.constant 0 : index
    %c0_183 = arith.constant 0 : index
    %187 = vector.load %arg3[%c10_181, %c0_182, %c0_183] : memref<16x128x32xbf16, #tpu.memory_space<vmem>>, vector<1x128x32xbf16>
    %188 = vector.shape_cast %187 : vector<1x128x32xbf16> to vector<128x32xbf16>
    %cst_184 = arith.constant dense<0.000000e+00> : vector<8x32xf32>
    %189 = tpu.matmul %105, %188, %cst_184 {dimension_numbers = #tpu.dot_dimension_numbers<[1], [0], [0], [1], [0, 0, 1, 1], [], []>} : vector<8x128xbf16>, vector<128x32xbf16>, vector<8x32xf32> -> vector<8x32xf32>
    %190 = arith.truncf %189 : vector<8x32xf32> to vector<8x32xbf16>
    %c10_185 = arith.constant 10 : index
    %c0_186 = arith.constant 0 : index
    %c0_187 = arith.constant 0 : index
    %191 = vector.load %arg4[%c10_185, %c0_186, %c0_187] : memref<16x16x8xbf16, #tpu.memory_space<vmem>>, vector<1x16x8xbf16>
    %192 = vector.shape_cast %191 : vector<1x16x8xbf16> to vector<16x8xbf16>
    %cst_188 = arith.constant dense<0.000000e+00> : vector<16x32xf32>
    %193 = tpu.matmul %192, %190, %cst_188 {dimension_numbers = #tpu.dot_dimension_numbers<[1], [0], [0], [1], [0, 0, 1, 1], [], []>} : vector<16x8xbf16>, vector<8x32xbf16>, vector<16x32xf32> -> vector<16x32xf32>
    %194 = arith.addf %186, %193 : vector<16x32xf32>
    %c11_189 = arith.constant 11 : index
    %c0_190 = arith.constant 0 : index
    %c0_191 = arith.constant 0 : index
    %195 = vector.load %arg3[%c11_189, %c0_190, %c0_191] : memref<16x128x32xbf16, #tpu.memory_space<vmem>>, vector<1x128x32xbf16>
    %196 = vector.shape_cast %195 : vector<1x128x32xbf16> to vector<128x32xbf16>
    %cst_192 = arith.constant dense<0.000000e+00> : vector<8x32xf32>
    %197 = tpu.matmul %105, %196, %cst_192 {dimension_numbers = #tpu.dot_dimension_numbers<[1], [0], [0], [1], [0, 0, 1, 1], [], []>} : vector<8x128xbf16>, vector<128x32xbf16>, vector<8x32xf32> -> vector<8x32xf32>
    %198 = arith.truncf %197 : vector<8x32xf32> to vector<8x32xbf16>
    %c11_193 = arith.constant 11 : index
    %c0_194 = arith.constant 0 : index
    %c0_195 = arith.constant 0 : index
    %199 = vector.load %arg4[%c11_193, %c0_194, %c0_195] : memref<16x16x8xbf16, #tpu.memory_space<vmem>>, vector<1x16x8xbf16>
    %200 = vector.shape_cast %199 : vector<1x16x8xbf16> to vector<16x8xbf16>
    %cst_196 = arith.constant dense<0.000000e+00> : vector<16x32xf32>
    %201 = tpu.matmul %200, %198, %cst_196 {dimension_numbers = #tpu.dot_dimension_numbers<[1], [0], [0], [1], [0, 0, 1, 1], [], []>} : vector<16x8xbf16>, vector<8x32xbf16>, vector<16x32xf32> -> vector<16x32xf32>
    %202 = arith.addf %194, %201 : vector<16x32xf32>
    %c12_197 = arith.constant 12 : index
    %c0_198 = arith.constant 0 : index
    %c0_199 = arith.constant 0 : index
    %203 = vector.load %arg3[%c12_197, %c0_198, %c0_199] : memref<16x128x32xbf16, #tpu.memory_space<vmem>>, vector<1x128x32xbf16>
    %204 = vector.shape_cast %203 : vector<1x128x32xbf16> to vector<128x32xbf16>
    %cst_200 = arith.constant dense<0.000000e+00> : vector<8x32xf32>
    %205 = tpu.matmul %105, %204, %cst_200 {dimension_numbers = #tpu.dot_dimension_numbers<[1], [0], [0], [1], [0, 0, 1, 1], [], []>} : vector<8x128xbf16>, vector<128x32xbf16>, vector<8x32xf32> -> vector<8x32xf32>
    %206 = arith.truncf %205 : vector<8x32xf32> to vector<8x32xbf16>
    %c12_201 = arith.constant 12 : index
    %c0_202 = arith.constant 0 : index
    %c0_203 = arith.constant 0 : index
    %207 = vector.load %arg4[%c12_201, %c0_202, %c0_203] : memref<16x16x8xbf16, #tpu.memory_space<vmem>>, vector<1x16x8xbf16>
    %208 = vector.shape_cast %207 : vector<1x16x8xbf16> to vector<16x8xbf16>
    %cst_204 = arith.constant dense<0.000000e+00> : vector<16x32xf32>
    %209 = tpu.matmul %208, %206, %cst_204 {dimension_numbers = #tpu.dot_dimension_numbers<[1], [0], [0], [1], [0, 0, 1, 1], [], []>} : vector<16x8xbf16>, vector<8x32xbf16>, vector<16x32xf32> -> vector<16x32xf32>
    %210 = arith.addf %202, %209 : vector<16x32xf32>
    %c13_205 = arith.constant 13 : index
    %c0_206 = arith.constant 0 : index
    %c0_207 = arith.constant 0 : index
    %211 = vector.load %arg3[%c13_205, %c0_206, %c0_207] : memref<16x128x32xbf16, #tpu.memory_space<vmem>>, vector<1x128x32xbf16>
    %212 = vector.shape_cast %211 : vector<1x128x32xbf16> to vector<128x32xbf16>
    %cst_208 = arith.constant dense<0.000000e+00> : vector<8x32xf32>
    %213 = tpu.matmul %105, %212, %cst_208 {dimension_numbers = #tpu.dot_dimension_numbers<[1], [0], [0], [1], [0, 0, 1, 1], [], []>} : vector<8x128xbf16>, vector<128x32xbf16>, vector<8x32xf32> -> vector<8x32xf32>
    %214 = arith.truncf %213 : vector<8x32xf32> to vector<8x32xbf16>
    %c13_209 = arith.constant 13 : index
    %c0_210 = arith.constant 0 : index
    %c0_211 = arith.constant 0 : index
    %215 = vector.load %arg4[%c13_209, %c0_210, %c0_211] : memref<16x16x8xbf16, #tpu.memory_space<vmem>>, vector<1x16x8xbf16>
    %216 = vector.shape_cast %215 : vector<1x16x8xbf16> to vector<16x8xbf16>
    %cst_212 = arith.constant dense<0.000000e+00> : vector<16x32xf32>
    %217 = tpu.matmul %216, %214, %cst_212 {dimension_numbers = #tpu.dot_dimension_numbers<[1], [0], [0], [1], [0, 0, 1, 1], [], []>} : vector<16x8xbf16>, vector<8x32xbf16>, vector<16x32xf32> -> vector<16x32xf32>
    %218 = arith.addf %210, %217 : vector<16x32xf32>
    %c14_213 = arith.constant 14 : index
    %c0_214 = arith.constant 0 : index
    %c0_215 = arith.constant 0 : index
    %219 = vector.load %arg3[%c14_213, %c0_214, %c0_215] : memref<16x128x32xbf16, #tpu.memory_space<vmem>>, vector<1x128x32xbf16>
    %220 = vector.shape_cast %219 : vector<1x128x32xbf16> to vector<128x32xbf16>
    %cst_216 = arith.constant dense<0.000000e+00> : vector<8x32xf32>
    %221 = tpu.matmul %105, %220, %cst_216 {dimension_numbers = #tpu.dot_dimension_numbers<[1], [0], [0], [1], [0, 0, 1, 1], [], []>} : vector<8x128xbf16>, vector<128x32xbf16>, vector<8x32xf32> -> vector<8x32xf32>
    %222 = arith.truncf %221 : vector<8x32xf32> to vector<8x32xbf16>
    %c14_217 = arith.constant 14 : index
    %c0_218 = arith.constant 0 : index
    %c0_219 = arith.constant 0 : index
    %223 = vector.load %arg4[%c14_217, %c0_218, %c0_219] : memref<16x16x8xbf16, #tpu.memory_space<vmem>>, vector<1x16x8xbf16>
    %224 = vector.shape_cast %223 : vector<1x16x8xbf16> to vector<16x8xbf16>
    %cst_220 = arith.constant dense<0.000000e+00> : vector<16x32xf32>
    %225 = tpu.matmul %224, %222, %cst_220 {dimension_numbers = #tpu.dot_dimension_numbers<[1], [0], [0], [1], [0, 0, 1, 1], [], []>} : vector<16x8xbf16>, vector<8x32xbf16>, vector<16x32xf32> -> vector<16x32xf32>
    %226 = arith.addf %218, %225 : vector<16x32xf32>
    %c15_221 = arith.constant 15 : index
    %c0_222 = arith.constant 0 : index
    %c0_223 = arith.constant 0 : index
    %227 = vector.load %arg3[%c15_221, %c0_222, %c0_223] : memref<16x128x32xbf16, #tpu.memory_space<vmem>>, vector<1x128x32xbf16>
    %228 = vector.shape_cast %227 : vector<1x128x32xbf16> to vector<128x32xbf16>
    %cst_224 = arith.constant dense<0.000000e+00> : vector<8x32xf32>
    %229 = tpu.matmul %105, %228, %cst_224 {dimension_numbers = #tpu.dot_dimension_numbers<[1], [0], [0], [1], [0, 0, 1, 1], [], []>} : vector<8x128xbf16>, vector<128x32xbf16>, vector<8x32xf32> -> vector<8x32xf32>
    %230 = arith.truncf %229 : vector<8x32xf32> to vector<8x32xbf16>
    %c15_225 = arith.constant 15 : index
    %c0_226 = arith.constant 0 : index
    %c0_227 = arith.constant 0 : index
    %231 = vector.load %arg4[%c15_225, %c0_226, %c0_227] : memref<16x16x8xbf16, #tpu.memory_space<vmem>>, vector<1x16x8xbf16>
    %232 = vector.shape_cast %231 : vector<1x16x8xbf16> to vector<16x8xbf16>
    %cst_228 = arith.constant dense<0.000000e+00> : vector<16x32xf32>
    %233 = tpu.matmul %232, %230, %cst_228 {dimension_numbers = #tpu.dot_dimension_numbers<[1], [0], [0], [1], [0, 0, 1, 1], [], []>} : vector<16x8xbf16>, vector<8x32xbf16>, vector<16x32xf32> -> vector<16x32xf32>
    %234 = arith.addf %226, %233 : vector<16x32xf32>
    %c0_229 = arith.constant 0 : index
    %c0_230 = arith.constant 0 : index
    %235 = vector.load %arg5[%c0_229, %c0_230] : memref<16x1xf32, #tpu.memory_space<vmem>>, vector<16x1xf32>
    %236 = vector.broadcast %235 : vector<16x1xf32> to vector<16x32xf32>
    %237 = arith.addf %234, %236 : vector<16x32xf32>
    %cst_231 = arith.constant 0.000000e+00 : f32
    %238 = vector.broadcast %cst_231 : f32 to vector<16x32xf32>
    %239 = arith.cmpf oge, %237, %238 : vector<16x32xf32>
    %cst_232 = arith.constant 0.00999999977 : f32
    %240 = vector.broadcast %cst_232 : f32 to vector<16x32xf32>
    %241 = arith.mulf %240, %237 : vector<16x32xf32>
    %242 = arith.select %239, %237, %241 : vector<16x32xi1>, vector<16x32xf32>
    %243 = arith.truncf %242 : vector<16x32xf32> to vector<16x32xbf16>
    %cst_233 = arith.constant 0.000000e+00 : f32
    %244 = vector.broadcast %cst_233 : f32 to vector<32x8xf32>
    %c0_234 = arith.constant 0 : index
    %c0_235 = arith.constant 0 : index
    %c0_236 = arith.constant 0 : index
    %245 = vector.load %arg6[%c0_234, %c0_235, %c0_236] : memref<16x32x8xbf16, #tpu.memory_space<vmem>>, vector<1x32x8xbf16>
    %246 = vector.shape_cast %245 : vector<1x32x8xbf16> to vector<32x8xbf16>
    %cst_237 = arith.constant dense<0.000000e+00> : vector<16x8xf32>
    %247 = tpu.matmul %243, %246, %cst_237 {dimension_numbers = #tpu.dot_dimension_numbers<[1], [0], [0], [1], [0, 0, 1, 1], [], []>} : vector<16x32xbf16>, vector<32x8xbf16>, vector<16x8xf32> -> vector<16x8xf32>
    %248 = arith.truncf %247 : vector<16x8xf32> to vector<16x8xbf16>
    %c0_238 = arith.constant 0 : index
    %c0_239 = arith.constant 0 : index
    %c0_240 = arith.constant 0 : index
    %249 = vector.load %arg7[%c0_238, %c0_239, %c0_240] : memref<16x32x16xbf16, #tpu.memory_space<vmem>>, vector<1x32x16xbf16>
    %250 = vector.shape_cast %249 : vector<1x32x16xbf16> to vector<32x16xbf16>
    %cst_241 = arith.constant dense<0.000000e+00> : vector<32x8xf32>
    %251 = tpu.matmul %250, %248, %cst_241 {dimension_numbers = #tpu.dot_dimension_numbers<[1], [0], [0], [1], [0, 0, 1, 1], [], []>} : vector<32x16xbf16>, vector<16x8xbf16>, vector<32x8xf32> -> vector<32x8xf32>
    %252 = arith.addf %244, %251 : vector<32x8xf32>
    %c1_242 = arith.constant 1 : index
    %c0_243 = arith.constant 0 : index
    %c0_244 = arith.constant 0 : index
    %253 = vector.load %arg6[%c1_242, %c0_243, %c0_244] : memref<16x32x8xbf16, #tpu.memory_space<vmem>>, vector<1x32x8xbf16>
    %254 = vector.shape_cast %253 : vector<1x32x8xbf16> to vector<32x8xbf16>
    %cst_245 = arith.constant dense<0.000000e+00> : vector<16x8xf32>
    %255 = tpu.matmul %243, %254, %cst_245 {dimension_numbers = #tpu.dot_dimension_numbers<[1], [0], [0], [1], [0, 0, 1, 1], [], []>} : vector<16x32xbf16>, vector<32x8xbf16>, vector<16x8xf32> -> vector<16x8xf32>
    %256 = arith.truncf %255 : vector<16x8xf32> to vector<16x8xbf16>
    %c1_246 = arith.constant 1 : index
    %c0_247 = arith.constant 0 : index
    %c0_248 = arith.constant 0 : index
    %257 = vector.load %arg7[%c1_246, %c0_247, %c0_248] : memref<16x32x16xbf16, #tpu.memory_space<vmem>>, vector<1x32x16xbf16>
    %258 = vector.shape_cast %257 : vector<1x32x16xbf16> to vector<32x16xbf16>
    %cst_249 = arith.constant dense<0.000000e+00> : vector<32x8xf32>
    %259 = tpu.matmul %258, %256, %cst_249 {dimension_numbers = #tpu.dot_dimension_numbers<[1], [0], [0], [1], [0, 0, 1, 1], [], []>} : vector<32x16xbf16>, vector<16x8xbf16>, vector<32x8xf32> -> vector<32x8xf32>
    %260 = arith.addf %252, %259 : vector<32x8xf32>
    %c2_250 = arith.constant 2 : index
    %c0_251 = arith.constant 0 : index
    %c0_252 = arith.constant 0 : index
    %261 = vector.load %arg6[%c2_250, %c0_251, %c0_252] : memref<16x32x8xbf16, #tpu.memory_space<vmem>>, vector<1x32x8xbf16>
    %262 = vector.shape_cast %261 : vector<1x32x8xbf16> to vector<32x8xbf16>
    %cst_253 = arith.constant dense<0.000000e+00> : vector<16x8xf32>
    %263 = tpu.matmul %243, %262, %cst_253 {dimension_numbers = #tpu.dot_dimension_numbers<[1], [0], [0], [1], [0, 0, 1, 1], [], []>} : vector<16x32xbf16>, vector<32x8xbf16>, vector<16x8xf32> -> vector<16x8xf32>
    %264 = arith.truncf %263 : vector<16x8xf32> to vector<16x8xbf16>
    %c2_254 = arith.constant 2 : index
    %c0_255 = arith.constant 0 : index
    %c0_256 = arith.constant 0 : index
    %265 = vector.load %arg7[%c2_254, %c0_255, %c0_256] : memref<16x32x16xbf16, #tpu.memory_space<vmem>>, vector<1x32x16xbf16>
    %266 = vector.shape_cast %265 : vector<1x32x16xbf16> to vector<32x16xbf16>
    %cst_257 = arith.constant dense<0.000000e+00> : vector<32x8xf32>
    %267 = tpu.matmul %266, %264, %cst_257 {dimension_numbers = #tpu.dot_dimension_numbers<[1], [0], [0], [1], [0, 0, 1, 1], [], []>} : vector<32x16xbf16>, vector<16x8xbf16>, vector<32x8xf32> -> vector<32x8xf32>
    %268 = arith.addf %260, %267 : vector<32x8xf32>
    %c3_258 = arith.constant 3 : index
    %c0_259 = arith.constant 0 : index
    %c0_260 = arith.constant 0 : index
    %269 = vector.load %arg6[%c3_258, %c0_259, %c0_260] : memref<16x32x8xbf16, #tpu.memory_space<vmem>>, vector<1x32x8xbf16>
    %270 = vector.shape_cast %269 : vector<1x32x8xbf16> to vector<32x8xbf16>
    %cst_261 = arith.constant dense<0.000000e+00> : vector<16x8xf32>
    %271 = tpu.matmul %243, %270, %cst_261 {dimension_numbers = #tpu.dot_dimension_numbers<[1], [0], [0], [1], [0, 0, 1, 1], [], []>} : vector<16x32xbf16>, vector<32x8xbf16>, vector<16x8xf32> -> vector<16x8xf32>
    %272 = arith.truncf %271 : vector<16x8xf32> to vector<16x8xbf16>
    %c3_262 = arith.constant 3 : index
    %c0_263 = arith.constant 0 : index
    %c0_264 = arith.constant 0 : index
    %273 = vector.load %arg7[%c3_262, %c0_263, %c0_264] : memref<16x32x16xbf16, #tpu.memory_space<vmem>>, vector<1x32x16xbf16>
    %274 = vector.shape_cast %273 : vector<1x32x16xbf16> to vector<32x16xbf16>
    %cst_265 = arith.constant dense<0.000000e+00> : vector<32x8xf32>
    %275 = tpu.matmul %274, %272, %cst_265 {dimension_numbers = #tpu.dot_dimension_numbers<[1], [0], [0], [1], [0, 0, 1, 1], [], []>} : vector<32x16xbf16>, vector<16x8xbf16>, vector<32x8xf32> -> vector<32x8xf32>
    %276 = arith.addf %268, %275 : vector<32x8xf32>
    %c4_266 = arith.constant 4 : index
    %c0_267 = arith.constant 0 : index
    %c0_268 = arith.constant 0 : index
    %277 = vector.load %arg6[%c4_266, %c0_267, %c0_268] : memref<16x32x8xbf16, #tpu.memory_space<vmem>>, vector<1x32x8xbf16>
    %278 = vector.shape_cast %277 : vector<1x32x8xbf16> to vector<32x8xbf16>
    %cst_269 = arith.constant dense<0.000000e+00> : vector<16x8xf32>
    %279 = tpu.matmul %243, %278, %cst_269 {dimension_numbers = #tpu.dot_dimension_numbers<[1], [0], [0], [1], [0, 0, 1, 1], [], []>} : vector<16x32xbf16>, vector<32x8xbf16>, vector<16x8xf32> -> vector<16x8xf32>
    %280 = arith.truncf %279 : vector<16x8xf32> to vector<16x8xbf16>
    %c4_270 = arith.constant 4 : index
    %c0_271 = arith.constant 0 : index
    %c0_272 = arith.constant 0 : index
    %281 = vector.load %arg7[%c4_270, %c0_271, %c0_272] : memref<16x32x16xbf16, #tpu.memory_space<vmem>>, vector<1x32x16xbf16>
    %282 = vector.shape_cast %281 : vector<1x32x16xbf16> to vector<32x16xbf16>
    %cst_273 = arith.constant dense<0.000000e+00> : vector<32x8xf32>
    %283 = tpu.matmul %282, %280, %cst_273 {dimension_numbers = #tpu.dot_dimension_numbers<[1], [0], [0], [1], [0, 0, 1, 1], [], []>} : vector<32x16xbf16>, vector<16x8xbf16>, vector<32x8xf32> -> vector<32x8xf32>
    %284 = arith.addf %276, %283 : vector<32x8xf32>
    %c5_274 = arith.constant 5 : index
    %c0_275 = arith.constant 0 : index
    %c0_276 = arith.constant 0 : index
    %285 = vector.load %arg6[%c5_274, %c0_275, %c0_276] : memref<16x32x8xbf16, #tpu.memory_space<vmem>>, vector<1x32x8xbf16>
    %286 = vector.shape_cast %285 : vector<1x32x8xbf16> to vector<32x8xbf16>
    %cst_277 = arith.constant dense<0.000000e+00> : vector<16x8xf32>
    %287 = tpu.matmul %243, %286, %cst_277 {dimension_numbers = #tpu.dot_dimension_numbers<[1], [0], [0], [1], [0, 0, 1, 1], [], []>} : vector<16x32xbf16>, vector<32x8xbf16>, vector<16x8xf32> -> vector<16x8xf32>
    %288 = arith.truncf %287 : vector<16x8xf32> to vector<16x8xbf16>
    %c5_278 = arith.constant 5 : index
    %c0_279 = arith.constant 0 : index
    %c0_280 = arith.constant 0 : index
    %289 = vector.load %arg7[%c5_278, %c0_279, %c0_280] : memref<16x32x16xbf16, #tpu.memory_space<vmem>>, vector<1x32x16xbf16>
    %290 = vector.shape_cast %289 : vector<1x32x16xbf16> to vector<32x16xbf16>
    %cst_281 = arith.constant dense<0.000000e+00> : vector<32x8xf32>
    %291 = tpu.matmul %290, %288, %cst_281 {dimension_numbers = #tpu.dot_dimension_numbers<[1], [0], [0], [1], [0, 0, 1, 1], [], []>} : vector<32x16xbf16>, vector<16x8xbf16>, vector<32x8xf32> -> vector<32x8xf32>
    %292 = arith.addf %284, %291 : vector<32x8xf32>
    %c6_282 = arith.constant 6 : index
    %c0_283 = arith.constant 0 : index
    %c0_284 = arith.constant 0 : index
    %293 = vector.load %arg6[%c6_282, %c0_283, %c0_284] : memref<16x32x8xbf16, #tpu.memory_space<vmem>>, vector<1x32x8xbf16>
    %294 = vector.shape_cast %293 : vector<1x32x8xbf16> to vector<32x8xbf16>
    %cst_285 = arith.constant dense<0.000000e+00> : vector<16x8xf32>
    %295 = tpu.matmul %243, %294, %cst_285 {dimension_numbers = #tpu.dot_dimension_numbers<[1], [0], [0], [1], [0, 0, 1, 1], [], []>} : vector<16x32xbf16>, vector<32x8xbf16>, vector<16x8xf32> -> vector<16x8xf32>
    %296 = arith.truncf %295 : vector<16x8xf32> to vector<16x8xbf16>
    %c6_286 = arith.constant 6 : index
    %c0_287 = arith.constant 0 : index
    %c0_288 = arith.constant 0 : index
    %297 = vector.load %arg7[%c6_286, %c0_287, %c0_288] : memref<16x32x16xbf16, #tpu.memory_space<vmem>>, vector<1x32x16xbf16>
    %298 = vector.shape_cast %297 : vector<1x32x16xbf16> to vector<32x16xbf16>
    %cst_289 = arith.constant dense<0.000000e+00> : vector<32x8xf32>
    %299 = tpu.matmul %298, %296, %cst_289 {dimension_numbers = #tpu.dot_dimension_numbers<[1], [0], [0], [1], [0, 0, 1, 1], [], []>} : vector<32x16xbf16>, vector<16x8xbf16>, vector<32x8xf32> -> vector<32x8xf32>
    %300 = arith.addf %292, %299 : vector<32x8xf32>
    %c7_290 = arith.constant 7 : index
    %c0_291 = arith.constant 0 : index
    %c0_292 = arith.constant 0 : index
    %301 = vector.load %arg6[%c7_290, %c0_291, %c0_292] : memref<16x32x8xbf16, #tpu.memory_space<vmem>>, vector<1x32x8xbf16>
    %302 = vector.shape_cast %301 : vector<1x32x8xbf16> to vector<32x8xbf16>
    %cst_293 = arith.constant dense<0.000000e+00> : vector<16x8xf32>
    %303 = tpu.matmul %243, %302, %cst_293 {dimension_numbers = #tpu.dot_dimension_numbers<[1], [0], [0], [1], [0, 0, 1, 1], [], []>} : vector<16x32xbf16>, vector<32x8xbf16>, vector<16x8xf32> -> vector<16x8xf32>
    %304 = arith.truncf %303 : vector<16x8xf32> to vector<16x8xbf16>
    %c7_294 = arith.constant 7 : index
    %c0_295 = arith.constant 0 : index
    %c0_296 = arith.constant 0 : index
    %305 = vector.load %arg7[%c7_294, %c0_295, %c0_296] : memref<16x32x16xbf16, #tpu.memory_space<vmem>>, vector<1x32x16xbf16>
    %306 = vector.shape_cast %305 : vector<1x32x16xbf16> to vector<32x16xbf16>
    %cst_297 = arith.constant dense<0.000000e+00> : vector<32x8xf32>
    %307 = tpu.matmul %306, %304, %cst_297 {dimension_numbers = #tpu.dot_dimension_numbers<[1], [0], [0], [1], [0, 0, 1, 1], [], []>} : vector<32x16xbf16>, vector<16x8xbf16>, vector<32x8xf32> -> vector<32x8xf32>
    %308 = arith.addf %300, %307 : vector<32x8xf32>
    %c8_298 = arith.constant 8 : index
    %c0_299 = arith.constant 0 : index
    %c0_300 = arith.constant 0 : index
    %309 = vector.load %arg6[%c8_298, %c0_299, %c0_300] : memref<16x32x8xbf16, #tpu.memory_space<vmem>>, vector<1x32x8xbf16>
    %310 = vector.shape_cast %309 : vector<1x32x8xbf16> to vector<32x8xbf16>
    %cst_301 = arith.constant dense<0.000000e+00> : vector<16x8xf32>
    %311 = tpu.matmul %243, %310, %cst_301 {dimension_numbers = #tpu.dot_dimension_numbers<[1], [0], [0], [1], [0, 0, 1, 1], [], []>} : vector<16x32xbf16>, vector<32x8xbf16>, vector<16x8xf32> -> vector<16x8xf32>
    %312 = arith.truncf %311 : vector<16x8xf32> to vector<16x8xbf16>
    %c8_302 = arith.constant 8 : index
    %c0_303 = arith.constant 0 : index
    %c0_304 = arith.constant 0 : index
    %313 = vector.load %arg7[%c8_302, %c0_303, %c0_304] : memref<16x32x16xbf16, #tpu.memory_space<vmem>>, vector<1x32x16xbf16>
    %314 = vector.shape_cast %313 : vector<1x32x16xbf16> to vector<32x16xbf16>
    %cst_305 = arith.constant dense<0.000000e+00> : vector<32x8xf32>
    %315 = tpu.matmul %314, %312, %cst_305 {dimension_numbers = #tpu.dot_dimension_numbers<[1], [0], [0], [1], [0, 0, 1, 1], [], []>} : vector<32x16xbf16>, vector<16x8xbf16>, vector<32x8xf32> -> vector<32x8xf32>
    %316 = arith.addf %308, %315 : vector<32x8xf32>
    %c9_306 = arith.constant 9 : index
    %c0_307 = arith.constant 0 : index
    %c0_308 = arith.constant 0 : index
    %317 = vector.load %arg6[%c9_306, %c0_307, %c0_308] : memref<16x32x8xbf16, #tpu.memory_space<vmem>>, vector<1x32x8xbf16>
    %318 = vector.shape_cast %317 : vector<1x32x8xbf16> to vector<32x8xbf16>
    %cst_309 = arith.constant dense<0.000000e+00> : vector<16x8xf32>
    %319 = tpu.matmul %243, %318, %cst_309 {dimension_numbers = #tpu.dot_dimension_numbers<[1], [0], [0], [1], [0, 0, 1, 1], [], []>} : vector<16x32xbf16>, vector<32x8xbf16>, vector<16x8xf32> -> vector<16x8xf32>
    %320 = arith.truncf %319 : vector<16x8xf32> to vector<16x8xbf16>
    %c9_310 = arith.constant 9 : index
    %c0_311 = arith.constant 0 : index
    %c0_312 = arith.constant 0 : index
    %321 = vector.load %arg7[%c9_310, %c0_311, %c0_312] : memref<16x32x16xbf16, #tpu.memory_space<vmem>>, vector<1x32x16xbf16>
    %322 = vector.shape_cast %321 : vector<1x32x16xbf16> to vector<32x16xbf16>
    %cst_313 = arith.constant dense<0.000000e+00> : vector<32x8xf32>
    %323 = tpu.matmul %322, %320, %cst_313 {dimension_numbers = #tpu.dot_dimension_numbers<[1], [0], [0], [1], [0, 0, 1, 1], [], []>} : vector<32x16xbf16>, vector<16x8xbf16>, vector<32x8xf32> -> vector<32x8xf32>
    %324 = arith.addf %316, %323 : vector<32x8xf32>
    %c10_314 = arith.constant 10 : index
    %c0_315 = arith.constant 0 : index
    %c0_316 = arith.constant 0 : index
    %325 = vector.load %arg6[%c10_314, %c0_315, %c0_316] : memref<16x32x8xbf16, #tpu.memory_space<vmem>>, vector<1x32x8xbf16>
    %326 = vector.shape_cast %325 : vector<1x32x8xbf16> to vector<32x8xbf16>
    %cst_317 = arith.constant dense<0.000000e+00> : vector<16x8xf32>
    %327 = tpu.matmul %243, %326, %cst_317 {dimension_numbers = #tpu.dot_dimension_numbers<[1], [0], [0], [1], [0, 0, 1, 1], [], []>} : vector<16x32xbf16>, vector<32x8xbf16>, vector<16x8xf32> -> vector<16x8xf32>
    %328 = arith.truncf %327 : vector<16x8xf32> to vector<16x8xbf16>
    %c10_318 = arith.constant 10 : index
    %c0_319 = arith.constant 0 : index
    %c0_320 = arith.constant 0 : index
    %329 = vector.load %arg7[%c10_318, %c0_319, %c0_320] : memref<16x32x16xbf16, #tpu.memory_space<vmem>>, vector<1x32x16xbf16>
    %330 = vector.shape_cast %329 : vector<1x32x16xbf16> to vector<32x16xbf16>
    %cst_321 = arith.constant dense<0.000000e+00> : vector<32x8xf32>
    %331 = tpu.matmul %330, %328, %cst_321 {dimension_numbers = #tpu.dot_dimension_numbers<[1], [0], [0], [1], [0, 0, 1, 1], [], []>} : vector<32x16xbf16>, vector<16x8xbf16>, vector<32x8xf32> -> vector<32x8xf32>
    %332 = arith.addf %324, %331 : vector<32x8xf32>
    %c11_322 = arith.constant 11 : index
    %c0_323 = arith.constant 0 : index
    %c0_324 = arith.constant 0 : index
    %333 = vector.load %arg6[%c11_322, %c0_323, %c0_324] : memref<16x32x8xbf16, #tpu.memory_space<vmem>>, vector<1x32x8xbf16>
    %334 = vector.shape_cast %333 : vector<1x32x8xbf16> to vector<32x8xbf16>
    %cst_325 = arith.constant dense<0.000000e+00> : vector<16x8xf32>
    %335 = tpu.matmul %243, %334, %cst_325 {dimension_numbers = #tpu.dot_dimension_numbers<[1], [0], [0], [1], [0, 0, 1, 1], [], []>} : vector<16x32xbf16>, vector<32x8xbf16>, vector<16x8xf32> -> vector<16x8xf32>
    %336 = arith.truncf %335 : vector<16x8xf32> to vector<16x8xbf16>
    %c11_326 = arith.constant 11 : index
    %c0_327 = arith.constant 0 : index
    %c0_328 = arith.constant 0 : index
    %337 = vector.load %arg7[%c11_326, %c0_327, %c0_328] : memref<16x32x16xbf16, #tpu.memory_space<vmem>>, vector<1x32x16xbf16>
    %338 = vector.shape_cast %337 : vector<1x32x16xbf16> to vector<32x16xbf16>
    %cst_329 = arith.constant dense<0.000000e+00> : vector<32x8xf32>
    %339 = tpu.matmul %338, %336, %cst_329 {dimension_numbers = #tpu.dot_dimension_numbers<[1], [0], [0], [1], [0, 0, 1, 1], [], []>} : vector<32x16xbf16>, vector<16x8xbf16>, vector<32x8xf32> -> vector<32x8xf32>
    %340 = arith.addf %332, %339 : vector<32x8xf32>
    %c12_330 = arith.constant 12 : index
    %c0_331 = arith.constant 0 : index
    %c0_332 = arith.constant 0 : index
    %341 = vector.load %arg6[%c12_330, %c0_331, %c0_332] : memref<16x32x8xbf16, #tpu.memory_space<vmem>>, vector<1x32x8xbf16>
    %342 = vector.shape_cast %341 : vector<1x32x8xbf16> to vector<32x8xbf16>
    %cst_333 = arith.constant dense<0.000000e+00> : vector<16x8xf32>
    %343 = tpu.matmul %243, %342, %cst_333 {dimension_numbers = #tpu.dot_dimension_numbers<[1], [0], [0], [1], [0, 0, 1, 1], [], []>} : vector<16x32xbf16>, vector<32x8xbf16>, vector<16x8xf32> -> vector<16x8xf32>
    %344 = arith.truncf %343 : vector<16x8xf32> to vector<16x8xbf16>
    %c12_334 = arith.constant 12 : index
    %c0_335 = arith.constant 0 : index
    %c0_336 = arith.constant 0 : index
    %345 = vector.load %arg7[%c12_334, %c0_335, %c0_336] : memref<16x32x16xbf16, #tpu.memory_space<vmem>>, vector<1x32x16xbf16>
    %346 = vector.shape_cast %345 : vector<1x32x16xbf16> to vector<32x16xbf16>
    %cst_337 = arith.constant dense<0.000000e+00> : vector<32x8xf32>
    %347 = tpu.matmul %346, %344, %cst_337 {dimension_numbers = #tpu.dot_dimension_numbers<[1], [0], [0], [1], [0, 0, 1, 1], [], []>} : vector<32x16xbf16>, vector<16x8xbf16>, vector<32x8xf32> -> vector<32x8xf32>
    %348 = arith.addf %340, %347 : vector<32x8xf32>
    %c13_338 = arith.constant 13 : index
    %c0_339 = arith.constant 0 : index
    %c0_340 = arith.constant 0 : index
    %349 = vector.load %arg6[%c13_338, %c0_339, %c0_340] : memref<16x32x8xbf16, #tpu.memory_space<vmem>>, vector<1x32x8xbf16>
    %350 = vector.shape_cast %349 : vector<1x32x8xbf16> to vector<32x8xbf16>
    %cst_341 = arith.constant dense<0.000000e+00> : vector<16x8xf32>
    %351 = tpu.matmul %243, %350, %cst_341 {dimension_numbers = #tpu.dot_dimension_numbers<[1], [0], [0], [1], [0, 0, 1, 1], [], []>} : vector<16x32xbf16>, vector<32x8xbf16>, vector<16x8xf32> -> vector<16x8xf32>
    %352 = arith.truncf %351 : vector<16x8xf32> to vector<16x8xbf16>
    %c13_342 = arith.constant 13 : index
    %c0_343 = arith.constant 0 : index
    %c0_344 = arith.constant 0 : index
    %353 = vector.load %arg7[%c13_342, %c0_343, %c0_344] : memref<16x32x16xbf16, #tpu.memory_space<vmem>>, vector<1x32x16xbf16>
    %354 = vector.shape_cast %353 : vector<1x32x16xbf16> to vector<32x16xbf16>
    %cst_345 = arith.constant dense<0.000000e+00> : vector<32x8xf32>
    %355 = tpu.matmul %354, %352, %cst_345 {dimension_numbers = #tpu.dot_dimension_numbers<[1], [0], [0], [1], [0, 0, 1, 1], [], []>} : vector<32x16xbf16>, vector<16x8xbf16>, vector<32x8xf32> -> vector<32x8xf32>
    %356 = arith.addf %348, %355 : vector<32x8xf32>
    %c14_346 = arith.constant 14 : index
    %c0_347 = arith.constant 0 : index
    %c0_348 = arith.constant 0 : index
    %357 = vector.load %arg6[%c14_346, %c0_347, %c0_348] : memref<16x32x8xbf16, #tpu.memory_space<vmem>>, vector<1x32x8xbf16>
    %358 = vector.shape_cast %357 : vector<1x32x8xbf16> to vector<32x8xbf16>
    %cst_349 = arith.constant dense<0.000000e+00> : vector<16x8xf32>
    %359 = tpu.matmul %243, %358, %cst_349 {dimension_numbers = #tpu.dot_dimension_numbers<[1], [0], [0], [1], [0, 0, 1, 1], [], []>} : vector<16x32xbf16>, vector<32x8xbf16>, vector<16x8xf32> -> vector<16x8xf32>
    %360 = arith.truncf %359 : vector<16x8xf32> to vector<16x8xbf16>
    %c14_350 = arith.constant 14 : index
    %c0_351 = arith.constant 0 : index
    %c0_352 = arith.constant 0 : index
    %361 = vector.load %arg7[%c14_350, %c0_351, %c0_352] : memref<16x32x16xbf16, #tpu.memory_space<vmem>>, vector<1x32x16xbf16>
    %362 = vector.shape_cast %361 : vector<1x32x16xbf16> to vector<32x16xbf16>
    %cst_353 = arith.constant dense<0.000000e+00> : vector<32x8xf32>
    %363 = tpu.matmul %362, %360, %cst_353 {dimension_numbers = #tpu.dot_dimension_numbers<[1], [0], [0], [1], [0, 0, 1, 1], [], []>} : vector<32x16xbf16>, vector<16x8xbf16>, vector<32x8xf32> -> vector<32x8xf32>
    %364 = arith.addf %356, %363 : vector<32x8xf32>
    %c15_354 = arith.constant 15 : index
    %c0_355 = arith.constant 0 : index
    %c0_356 = arith.constant 0 : index
    %365 = vector.load %arg6[%c15_354, %c0_355, %c0_356] : memref<16x32x8xbf16, #tpu.memory_space<vmem>>, vector<1x32x8xbf16>
    %366 = vector.shape_cast %365 : vector<1x32x8xbf16> to vector<32x8xbf16>
    %cst_357 = arith.constant dense<0.000000e+00> : vector<16x8xf32>
    %367 = tpu.matmul %243, %366, %cst_357 {dimension_numbers = #tpu.dot_dimension_numbers<[1], [0], [0], [1], [0, 0, 1, 1], [], []>} : vector<16x32xbf16>, vector<32x8xbf16>, vector<16x8xf32> -> vector<16x8xf32>
    %368 = arith.truncf %367 : vector<16x8xf32> to vector<16x8xbf16>
    %c15_358 = arith.constant 15 : index
    %c0_359 = arith.constant 0 : index
    %c0_360 = arith.constant 0 : index
    %369 = vector.load %arg7[%c15_358, %c0_359, %c0_360] : memref<16x32x16xbf16, #tpu.memory_space<vmem>>, vector<1x32x16xbf16>
    %370 = vector.shape_cast %369 : vector<1x32x16xbf16> to vector<32x16xbf16>
    %cst_361 = arith.constant dense<0.000000e+00> : vector<32x8xf32>
    %371 = tpu.matmul %370, %368, %cst_361 {dimension_numbers = #tpu.dot_dimension_numbers<[1], [0], [0], [1], [0, 0, 1, 1], [], []>} : vector<32x16xbf16>, vector<16x8xbf16>, vector<32x8xf32> -> vector<32x8xf32>
    %372 = arith.addf %364, %371 : vector<32x8xf32>
    %c0_362 = arith.constant 0 : index
    %c0_363 = arith.constant 0 : index
    %373 = vector.load %arg8[%c0_362, %c0_363] : memref<32x1xf32, #tpu.memory_space<vmem>>, vector<32x1xf32>
    %374 = vector.broadcast %373 : vector<32x1xf32> to vector<32x8xf32>
    %375 = arith.addf %372, %374 : vector<32x8xf32>
    %cst_364 = arith.constant 0.000000e+00 : f32
    %376 = vector.broadcast %cst_364 : f32 to vector<32x8xf32>
    %377 = arith.cmpf oge, %375, %376 : vector<32x8xf32>
    %cst_365 = arith.constant 0.00999999977 : f32
    %378 = vector.broadcast %cst_365 : f32 to vector<32x8xf32>
    %379 = arith.mulf %378, %375 : vector<32x8xf32>
    %380 = arith.select %377, %375, %379 : vector<32x8xi1>, vector<32x8xf32>
    %381 = arith.truncf %380 : vector<32x8xf32> to vector<32x8xbf16>
    %cst_366 = arith.constant 0.000000e+00 : f32
    %382 = vector.broadcast %cst_366 : f32 to vector<1x8xf32>
    %c0_367 = arith.constant 0 : index
    %c0_368 = arith.constant 0 : index
    %c0_369 = arith.constant 0 : index
    %383 = vector.load %arg9[%c0_367, %c0_368, %c0_369] : memref<9x8x8xbf16, #tpu.memory_space<vmem>>, vector<1x8x8xbf16>
    %384 = vector.shape_cast %383 : vector<1x8x8xbf16> to vector<8x8xbf16>
    %cst_370 = arith.constant dense<0.000000e+00> : vector<32x8xf32>
    %385 = tpu.matmul %381, %384, %cst_370 {dimension_numbers = #tpu.dot_dimension_numbers<[1], [0], [0], [1], [0, 0, 1, 1], [], []>} : vector<32x8xbf16>, vector<8x8xbf16>, vector<32x8xf32> -> vector<32x8xf32>
    %386 = arith.truncf %385 : vector<32x8xf32> to vector<32x8xbf16>
    %c0_371 = arith.constant 0 : index
    %c0_372 = arith.constant 0 : index
    %c0_373 = arith.constant 0 : index
    %387 = vector.load %arg10[%c0_371, %c0_372, %c0_373] : memref<9x1x32xbf16, #tpu.memory_space<vmem>>, vector<1x1x32xbf16>
    %388 = vector.shape_cast %387 : vector<1x1x32xbf16> to vector<1x32xbf16>
    %cst_374 = arith.constant dense<0.000000e+00> : vector<1x8xf32>
    %389 = tpu.matmul %388, %386, %cst_374 {dimension_numbers = #tpu.dot_dimension_numbers<[1], [0], [0], [1], [0, 0, 1, 1], [], []>} : vector<1x32xbf16>, vector<32x8xbf16>, vector<1x8xf32> -> vector<1x8xf32>
    %390 = arith.addf %382, %389 : vector<1x8xf32>
    %c1_375 = arith.constant 1 : index
    %c0_376 = arith.constant 0 : index
    %c0_377 = arith.constant 0 : index
    %391 = vector.load %arg9[%c1_375, %c0_376, %c0_377] : memref<9x8x8xbf16, #tpu.memory_space<vmem>>, vector<1x8x8xbf16>
    %392 = vector.shape_cast %391 : vector<1x8x8xbf16> to vector<8x8xbf16>
    %cst_378 = arith.constant dense<0.000000e+00> : vector<32x8xf32>
    %393 = tpu.matmul %381, %392, %cst_378 {dimension_numbers = #tpu.dot_dimension_numbers<[1], [0], [0], [1], [0, 0, 1, 1], [], []>} : vector<32x8xbf16>, vector<8x8xbf16>, vector<32x8xf32> -> vector<32x8xf32>
    %394 = arith.truncf %393 : vector<32x8xf32> to vector<32x8xbf16>
    %c1_379 = arith.constant 1 : index
    %c0_380 = arith.constant 0 : index
    %c0_381 = arith.constant 0 : index
    %395 = vector.load %arg10[%c1_379, %c0_380, %c0_381] : memref<9x1x32xbf16, #tpu.memory_space<vmem>>, vector<1x1x32xbf16>
    %396 = vector.shape_cast %395 : vector<1x1x32xbf16> to vector<1x32xbf16>
    %cst_382 = arith.constant dense<0.000000e+00> : vector<1x8xf32>
    %397 = tpu.matmul %396, %394, %cst_382 {dimension_numbers = #tpu.dot_dimension_numbers<[1], [0], [0], [1], [0, 0, 1, 1], [], []>} : vector<1x32xbf16>, vector<32x8xbf16>, vector<1x8xf32> -> vector<1x8xf32>
    %398 = arith.addf %390, %397 : vector<1x8xf32>
    %c2_383 = arith.constant 2 : index
    %c0_384 = arith.constant 0 : index
    %c0_385 = arith.constant 0 : index
    %399 = vector.load %arg9[%c2_383, %c0_384, %c0_385] : memref<9x8x8xbf16, #tpu.memory_space<vmem>>, vector<1x8x8xbf16>
    %400 = vector.shape_cast %399 : vector<1x8x8xbf16> to vector<8x8xbf16>
    %cst_386 = arith.constant dense<0.000000e+00> : vector<32x8xf32>
    %401 = tpu.matmul %381, %400, %cst_386 {dimension_numbers = #tpu.dot_dimension_numbers<[1], [0], [0], [1], [0, 0, 1, 1], [], []>} : vector<32x8xbf16>, vector<8x8xbf16>, vector<32x8xf32> -> vector<32x8xf32>
    %402 = arith.truncf %401 : vector<32x8xf32> to vector<32x8xbf16>
    %c2_387 = arith.constant 2 : index
    %c0_388 = arith.constant 0 : index
    %c0_389 = arith.constant 0 : index
    %403 = vector.load %arg10[%c2_387, %c0_388, %c0_389] : memref<9x1x32xbf16, #tpu.memory_space<vmem>>, vector<1x1x32xbf16>
    %404 = vector.shape_cast %403 : vector<1x1x32xbf16> to vector<1x32xbf16>
    %cst_390 = arith.constant dense<0.000000e+00> : vector<1x8xf32>
    %405 = tpu.matmul %404, %402, %cst_390 {dimension_numbers = #tpu.dot_dimension_numbers<[1], [0], [0], [1], [0, 0, 1, 1], [], []>} : vector<1x32xbf16>, vector<32x8xbf16>, vector<1x8xf32> -> vector<1x8xf32>
    %406 = arith.addf %398, %405 : vector<1x8xf32>
    %c3_391 = arith.constant 3 : index
    %c0_392 = arith.constant 0 : index
    %c0_393 = arith.constant 0 : index
    %407 = vector.load %arg9[%c3_391, %c0_392, %c0_393] : memref<9x8x8xbf16, #tpu.memory_space<vmem>>, vector<1x8x8xbf16>
    %408 = vector.shape_cast %407 : vector<1x8x8xbf16> to vector<8x8xbf16>
    %cst_394 = arith.constant dense<0.000000e+00> : vector<32x8xf32>
    %409 = tpu.matmul %381, %408, %cst_394 {dimension_numbers = #tpu.dot_dimension_numbers<[1], [0], [0], [1], [0, 0, 1, 1], [], []>} : vector<32x8xbf16>, vector<8x8xbf16>, vector<32x8xf32> -> vector<32x8xf32>
    %410 = arith.truncf %409 : vector<32x8xf32> to vector<32x8xbf16>
    %c3_395 = arith.constant 3 : index
    %c0_396 = arith.constant 0 : index
    %c0_397 = arith.constant 0 : index
    %411 = vector.load %arg10[%c3_395, %c0_396, %c0_397] : memref<9x1x32xbf16, #tpu.memory_space<vmem>>, vector<1x1x32xbf16>
    %412 = vector.shape_cast %411 : vector<1x1x32xbf16> to vector<1x32xbf16>
    %cst_398 = arith.constant dense<0.000000e+00> : vector<1x8xf32>
    %413 = tpu.matmul %412, %410, %cst_398 {dimension_numbers = #tpu.dot_dimension_numbers<[1], [0], [0], [1], [0, 0, 1, 1], [], []>} : vector<1x32xbf16>, vector<32x8xbf16>, vector<1x8xf32> -> vector<1x8xf32>
    %414 = arith.addf %406, %413 : vector<1x8xf32>
    %c4_399 = arith.constant 4 : index
    %c0_400 = arith.constant 0 : index
    %c0_401 = arith.constant 0 : index
    %415 = vector.load %arg9[%c4_399, %c0_400, %c0_401] : memref<9x8x8xbf16, #tpu.memory_space<vmem>>, vector<1x8x8xbf16>
    %416 = vector.shape_cast %415 : vector<1x8x8xbf16> to vector<8x8xbf16>
    %cst_402 = arith.constant dense<0.000000e+00> : vector<32x8xf32>
    %417 = tpu.matmul %381, %416, %cst_402 {dimension_numbers = #tpu.dot_dimension_numbers<[1], [0], [0], [1], [0, 0, 1, 1], [], []>} : vector<32x8xbf16>, vector<8x8xbf16>, vector<32x8xf32> -> vector<32x8xf32>
    %418 = arith.truncf %417 : vector<32x8xf32> to vector<32x8xbf16>
    %c4_403 = arith.constant 4 : index
    %c0_404 = arith.constant 0 : index
    %c0_405 = arith.constant 0 : index
    %419 = vector.load %arg10[%c4_403, %c0_404, %c0_405] : memref<9x1x32xbf16, #tpu.memory_space<vmem>>, vector<1x1x32xbf16>
    %420 = vector.shape_cast %419 : vector<1x1x32xbf16> to vector<1x32xbf16>
    %cst_406 = arith.constant dense<0.000000e+00> : vector<1x8xf32>
    %421 = tpu.matmul %420, %418, %cst_406 {dimension_numbers = #tpu.dot_dimension_numbers<[1], [0], [0], [1], [0, 0, 1, 1], [], []>} : vector<1x32xbf16>, vector<32x8xbf16>, vector<1x8xf32> -> vector<1x8xf32>
    %422 = arith.addf %414, %421 : vector<1x8xf32>
    %c5_407 = arith.constant 5 : index
    %c0_408 = arith.constant 0 : index
    %c0_409 = arith.constant 0 : index
    %423 = vector.load %arg9[%c5_407, %c0_408, %c0_409] : memref<9x8x8xbf16, #tpu.memory_space<vmem>>, vector<1x8x8xbf16>
    %424 = vector.shape_cast %423 : vector<1x8x8xbf16> to vector<8x8xbf16>
    %cst_410 = arith.constant dense<0.000000e+00> : vector<32x8xf32>
    %425 = tpu.matmul %381, %424, %cst_410 {dimension_numbers = #tpu.dot_dimension_numbers<[1], [0], [0], [1], [0, 0, 1, 1], [], []>} : vector<32x8xbf16>, vector<8x8xbf16>, vector<32x8xf32> -> vector<32x8xf32>
    %426 = arith.truncf %425 : vector<32x8xf32> to vector<32x8xbf16>
    %c5_411 = arith.constant 5 : index
    %c0_412 = arith.constant 0 : index
    %c0_413 = arith.constant 0 : index
    %427 = vector.load %arg10[%c5_411, %c0_412, %c0_413] : memref<9x1x32xbf16, #tpu.memory_space<vmem>>, vector<1x1x32xbf16>
    %428 = vector.shape_cast %427 : vector<1x1x32xbf16> to vector<1x32xbf16>
    %cst_414 = arith.constant dense<0.000000e+00> : vector<1x8xf32>
    %429 = tpu.matmul %428, %426, %cst_414 {dimension_numbers = #tpu.dot_dimension_numbers<[1], [0], [0], [1], [0, 0, 1, 1], [], []>} : vector<1x32xbf16>, vector<32x8xbf16>, vector<1x8xf32> -> vector<1x8xf32>
    %430 = arith.addf %422, %429 : vector<1x8xf32>
    %c6_415 = arith.constant 6 : index
    %c0_416 = arith.constant 0 : index
    %c0_417 = arith.constant 0 : index
    %431 = vector.load %arg9[%c6_415, %c0_416, %c0_417] : memref<9x8x8xbf16, #tpu.memory_space<vmem>>, vector<1x8x8xbf16>
    %432 = vector.shape_cast %431 : vector<1x8x8xbf16> to vector<8x8xbf16>
    %cst_418 = arith.constant dense<0.000000e+00> : vector<32x8xf32>
    %433 = tpu.matmul %381, %432, %cst_418 {dimension_numbers = #tpu.dot_dimension_numbers<[1], [0], [0], [1], [0, 0, 1, 1], [], []>} : vector<32x8xbf16>, vector<8x8xbf16>, vector<32x8xf32> -> vector<32x8xf32>
    %434 = arith.truncf %433 : vector<32x8xf32> to vector<32x8xbf16>
    %c6_419 = arith.constant 6 : index
    %c0_420 = arith.constant 0 : index
    %c0_421 = arith.constant 0 : index
    %435 = vector.load %arg10[%c6_419, %c0_420, %c0_421] : memref<9x1x32xbf16, #tpu.memory_space<vmem>>, vector<1x1x32xbf16>
    %436 = vector.shape_cast %435 : vector<1x1x32xbf16> to vector<1x32xbf16>
    %cst_422 = arith.constant dense<0.000000e+00> : vector<1x8xf32>
    %437 = tpu.matmul %436, %434, %cst_422 {dimension_numbers = #tpu.dot_dimension_numbers<[1], [0], [0], [1], [0, 0, 1, 1], [], []>} : vector<1x32xbf16>, vector<32x8xbf16>, vector<1x8xf32> -> vector<1x8xf32>
    %438 = arith.addf %430, %437 : vector<1x8xf32>
    %c7_423 = arith.constant 7 : index
    %c0_424 = arith.constant 0 : index
    %c0_425 = arith.constant 0 : index
    %439 = vector.load %arg9[%c7_423, %c0_424, %c0_425] : memref<9x8x8xbf16, #tpu.memory_space<vmem>>, vector<1x8x8xbf16>
    %440 = vector.shape_cast %439 : vector<1x8x8xbf16> to vector<8x8xbf16>
    %cst_426 = arith.constant dense<0.000000e+00> : vector<32x8xf32>
    %441 = tpu.matmul %381, %440, %cst_426 {dimension_numbers = #tpu.dot_dimension_numbers<[1], [0], [0], [1], [0, 0, 1, 1], [], []>} : vector<32x8xbf16>, vector<8x8xbf16>, vector<32x8xf32> -> vector<32x8xf32>
    %442 = arith.truncf %441 : vector<32x8xf32> to vector<32x8xbf16>
    %c7_427 = arith.constant 7 : index
    %c0_428 = arith.constant 0 : index
    %c0_429 = arith.constant 0 : index
    %443 = vector.load %arg10[%c7_427, %c0_428, %c0_429] : memref<9x1x32xbf16, #tpu.memory_space<vmem>>, vector<1x1x32xbf16>
    %444 = vector.shape_cast %443 : vector<1x1x32xbf16> to vector<1x32xbf16>
    %cst_430 = arith.constant dense<0.000000e+00> : vector<1x8xf32>
    %445 = tpu.matmul %444, %442, %cst_430 {dimension_numbers = #tpu.dot_dimension_numbers<[1], [0], [0], [1], [0, 0, 1, 1], [], []>} : vector<1x32xbf16>, vector<32x8xbf16>, vector<1x8xf32> -> vector<1x8xf32>
    %446 = arith.addf %438, %445 : vector<1x8xf32>
    %c8_431 = arith.constant 8 : index
    %c0_432 = arith.constant 0 : index
    %c0_433 = arith.constant 0 : index
    %447 = vector.load %arg9[%c8_431, %c0_432, %c0_433] : memref<9x8x8xbf16, #tpu.memory_space<vmem>>, vector<1x8x8xbf16>
    %448 = vector.shape_cast %447 : vector<1x8x8xbf16> to vector<8x8xbf16>
    %cst_434 = arith.constant dense<0.000000e+00> : vector<32x8xf32>
    %449 = tpu.matmul %381, %448, %cst_434 {dimension_numbers = #tpu.dot_dimension_numbers<[1], [0], [0], [1], [0, 0, 1, 1], [], []>} : vector<32x8xbf16>, vector<8x8xbf16>, vector<32x8xf32> -> vector<32x8xf32>
    %450 = arith.truncf %449 : vector<32x8xf32> to vector<32x8xbf16>
    %c8_435 = arith.constant 8 : index
    %c0_436 = arith.constant 0 : index
    %c0_437 = arith.constant 0 : index
    %451 = vector.load %arg10[%c8_435, %c0_436, %c0_437] : memref<9x1x32xbf16, #tpu.memory_space<vmem>>, vector<1x1x32xbf16>
    %452 = vector.shape_cast %451 : vector<1x1x32xbf16> to vector<1x32xbf16>
    %cst_438 = arith.constant dense<0.000000e+00> : vector<1x8xf32>
    %453 = tpu.matmul %452, %450, %cst_438 {dimension_numbers = #tpu.dot_dimension_numbers<[1], [0], [0], [1], [0, 0, 1, 1], [], []>} : vector<1x32xbf16>, vector<32x8xbf16>, vector<1x8xf32> -> vector<1x8xf32>
    %454 = arith.addf %446, %453 : vector<1x8xf32>
    %c0_439 = arith.constant 0 : index
    %c0_440 = arith.constant 0 : index
    %455 = vector.load %arg11[%c0_439, %c0_440] : memref<1x8xf32, #tpu.memory_space<vmem>>, vector<1x8xf32>
    tpu.vector_store %arg11[%c0_439, %c0_440], %454 {strides = array<i32>} : memref<1x8xf32, #tpu.memory_space<vmem>>, vector<1x8xf32>,
    return
  }
}

</mosaic_0001>

<llo_original>
// kernel: forward.1
$region0: #{forward.1}
  #allocation0 [shape = 'u32[]', space=smem, size = 0x4, offset = 0x4, fixed_abs, tag = 'smem constant byte address 0x4 - core index']
  #allocation1 [shape = 'u32[144,128]{1,0:T(1,128)}', space=vmem, size = 0x12000, scoped, tag = 'internal scratch']
  %s0 = inlined_call_operand.vmem [shape: bf16[16,3,128], index: 0, kind: input, shape index: {}]
  %s1 = inlined_call_operand.vmem [shape: bf16[16,8,3], index: 1, kind: input, shape index: {}]
  %s2 = inlined_call_operand.vmem [shape: f32[8,1], index: 2, kind: input, shape index: {}]
  %s3 = inlined_call_operand.vmem [shape: bf16[16,128,32], index: 3, kind: input, shape index: {}]
  %s4 = inlined_call_operand.vmem [shape: bf16[16,16,8], index: 4, kind: input, shape index: {}]
  %s5 = inlined_call_operand.vmem [shape: f32[16,1], index: 5, kind: input, shape index: {}]
  %s6 = inlined_call_operand.vmem [shape: bf16[16,32,8], index: 6, kind: input, shape index: {}]
  %s7 = inlined_call_operand.vmem [shape: bf16[16,32,16], index: 7, kind: input, shape index: {}]
  %s8 = inlined_call_operand.vmem [shape: f32[32,1], index: 8, kind: input, shape index: {}]
  %s9 = inlined_call_operand.vmem [shape: bf16[9,8,8], index: 9, kind: input, shape index: {}]
  %s10 = inlined_call_operand.vmem [shape: bf16[9,1,32], index: 10, kind: input, shape index: {}]
  %s11 = inlined_call_operand.vmem [shape: f32[1,8], index: 11, kind: output, shape index: {}]
  %s12 = sld [smem:[#allocation0]]
  $region54: #{forward.1} parent=0
    _
  %s14 = ssub.s32 1, %s12
  %s15 = scalar_select 0, %s14, %s12
  // Predicated region
  $region2: #{forward.1} parent=0 // pred_check
    _
  $region3: #{forward.1} parent=0 // pred_check_branch
    %17 = sbr.rel (0) target = $region5
  $region4: #{forward.1} parent=0 // pred_region
    _
  $region5: #{forward.1} parent=0 // pred_fallthru
    _
  // Predicated region
  $region6: #{forward.1} parent=0 // pred_check
    _
  $region7: #{forward.1} parent=0 // pred_check_branch
    %19 = sbr.rel (0) target = $region9
  $region8: #{forward.1} parent=0 // pred_region
    _
  $region9: #{forward.1} parent=0 // pred_fallthru
    _
  // Predicated region
  $region10: #{forward.1} parent=0 // pred_check
    _
  $region11: #{forward.1} parent=0 // pred_check_branch
    %21 = sbr.rel (0) target = $region13
  $region12: #{forward.1} parent=0 // pred_region
    _
  $region13: #{forward.1} parent=0 // pred_fallthru
    _
  // Predicated region
  $region14: #{forward.1} parent=0 // pred_check
    _
  $region15: #{forward.1} parent=0 // pred_check_branch
    %23 = sbr.rel (0) target = $region17
  $region16: #{forward.1} parent=0 // pred_region
    _
  $region17: #{forward.1} parent=0 // pred_fallthru
    _
  // Predicated region
  $region18: #{forward.1} parent=0 // pred_check
    _
  $region19: #{forward.1} parent=0 // pred_check_branch
    %25 = sbr.rel (0) target = $region21
  $region20: #{forward.1} parent=0 // pred_region
    _
  $region21: #{forward.1} parent=0 // pred_fallthru
    _
  // Predicated region
  $region22: #{forward.1} parent=0 // pred_check
    _
  $region23: #{forward.1} parent=0 // pred_check_branch
    %27 = sbr.rel (0) target = $region25
  $region24: #{forward.1} parent=0 // pred_region
    _
  $region25: #{forward.1} parent=0 // pred_fallthru
    _
  // Predicated region
  $region26: #{forward.1} parent=0 // pred_check
    _
  $region27: #{forward.1} parent=0 // pred_check_branch
    %29 = sbr.rel (0) target = $region29
  $region28: #{forward.1} parent=0 // pred_region
    _
  $region29: #{forward.1} parent=0 // pred_fallthru
    _
  // Predicated region
  $region30: #{forward.1} parent=0 // pred_check
    _
  $region31: #{forward.1} parent=0 // pred_check_branch
    %31 = sbr.rel (0) target = $region33
  $region32: #{forward.1} parent=0 // pred_region
    _
  $region33: #{forward.1} parent=0 // pred_fallthru
    _
  // Predicated region
  $region34: #{forward.1} parent=0 // pred_check
    _
  $region35: #{forward.1} parent=0 // pred_check_branch
    %33 = sbr.rel (0) target = $region37
  $region36: #{forward.1} parent=0 // pred_region
    _
  $region37: #{forward.1} parent=0 // pred_fallthru
    _
  // Predicated region
  $region38: #{forward.1} parent=0 // pred_check
    _
  $region39: #{forward.1} parent=0 // pred_check_branch
    %35 = sbr.rel (0) target = $region41
  $region40: #{forward.1} parent=0 // pred_region
    _
  $region41: #{forward.1} parent=0 // pred_fallthru
    _
  // Predicated region
  $region42: #{forward.1} parent=0 // pred_check
    _
  $region43: #{forward.1} parent=0 // pred_check_branch
    %37 = sbr.rel (0) target = $region45
  $region44: #{forward.1} parent=0 // pred_region
    _
  $region45: #{forward.1} parent=0 // pred_fallthru
    _
  %v39 = vld [vmem:[%s0] sm:$0x3]
  %v40 = vld [vmem:[%s1] sm:$0xf]
  %s41 = scalar_lea.vmem %s0, 2
  %v42 = vld [vmem:[%s41] sm:$0x3]
  %s43 = scalar_lea.vmem %s1, 4
  %v44 = vld [vmem:[%s43] sm:$0xf]
  %vm45 = vcmask 23552
  %v47 = vsel %vm45, %v44, 0
  %vm49 = vcmask 1040384
  %vm50 = vcmask 1041408
  %v51 = vsel %vm49, 4294967295, 65535
  %v52 = vsel %vm50, %v51, 0
  %v54 = vand.u32 %v42, %v52
  %56 = vmatprep.subr.bf16.mxu0 0
  %57 = vmatpush1.bf16.msra.mxu0 0
  %58 = vmatprep.subr.bf16.mxu0 0
  %59 = vmatpush1.bf16.msra.mxu0 0
  %60 = vmatprep.subr.bf16.mxu0 0
  %61 = vmatpush1.bf16.msra.mxu0 0
  %62 = vmatprep.subr.bf16.mxu0 0
  %63 = vmatpush1.bf16.msra.mxu0 0
  %64 = vmatprep.subr.bf16.mxu0 0
  %65 = vmatpush1.bf16.msra.mxu0 0
  %66 = vmatprep.subr.bf16.mxu0 0
  %67 = vmatpush1.bf16.msra.mxu0 0
  %68 = vmatprep.subr.bf16.mxu0 0
  %69 = vmatpush1.bf16.msra.mxu0 0
  %70 = vmatprep.subr.bf16.mxu0 0
  %71 = vmatpush1.bf16.msra.mxu0 %v54
  %72 = vmatprep.subr.bf16.mxu0 0
  %73 = vmatpush2.bf16.msra.mxu0 0
  %74 = vmatprep.subr.bf16.mxu0 0
  %75 = vmatpush2.bf16.msra.mxu0 0
  %76 = vmatprep.subr.bf16.mxu0 0
  %77 = vmatpush2.bf16.msra.mxu0 0
  %78 = vmatprep.subr.bf16.mxu0 0
  %79 = vmatpush2.bf16.msra.mxu0 0
  %80 = vmatprep.subr.bf16.mxu0 0
  %81 = vmatpush2.bf16.msra.mxu0 0
  %82 = vmatprep.subr.bf16.mxu0 0
  %83 = vmatpush2.bf16.msra.mxu0 0
  %84 = vmatprep.subr.bf16.mxu0 0
  %85 = vmatpush2.bf16.msra.mxu0 0
  %86 = vmatprep.subr.bf16.mxu0 0
  %87 = vmatpush2.bf16.msra.mxu0 0
  %88 = vmatprep.mubr.bf16.mxu0 0
  %89 = vmatmul.mubr.bf16.gmra.mxu0 %v47
  %v90 = vpop.f32.mrf.mxu0
  %v91 = vadd.f32 0.0, %v90
  %v92 = vpop.f32.mrf.mxu0
  %v93 = vpop.f32.mrf.mxu0
  %v94 = vpop.f32.mrf.mxu0
  %95 = vdwg.mxu0
  %v97 = vsel %vm45, %v40, 0
  %v100 = vand.u32 %v39, %v52
  %102 = vmatprep.subr.bf16.mxu0 0
  %103 = vmatpush1.bf16.msra.mxu0 0
  %104 = vmatprep.subr.bf16.mxu0 0
  %105 = vmatpush1.bf16.msra.mxu0 0
  %106 = vmatprep.subr.bf16.mxu0 0
  %107 = vmatpush1.bf16.msra.mxu0 0
  %108 = vmatprep.subr.bf16.mxu0 0
  %109 = vmatpush1.bf16.msra.mxu0 0
  %110 = vmatprep.subr.bf16.mxu0 0
  %111 = vmatpush1.bf16.msra.mxu0 0
  %112 = vmatprep.subr.bf16.mxu0 0
  %113 = vmatpush1.bf16.msra.mxu0 0
  %114 = vmatprep.subr.bf16.mxu0 0
  %115 = vmatpush1.bf16.msra.mxu0 0
  %116 = vmatprep.subr.bf16.mxu0 0
  %117 = vmatpush1.bf16.msra.mxu0 %v100
  %118 = vmatprep.subr.bf16.mxu0 0
  %119 = vmatpush2.bf16.msra.mxu0 0
  %120 = vmatprep.subr.bf16.mxu0 0
  %121 = vmatpush2.bf16.msra.mxu0 0
  %122 = vmatprep.subr.bf16.mxu0 0
  %123 = vmatpush2.bf16.msra.mxu0 0
  %124 = vmatprep.subr.bf16.mxu0 0
  %125 = vmatpush2.bf16.msra.mxu0 0
  %126 = vmatprep.subr.bf16.mxu0 0
  %127 = vmatpush2.bf16.msra.mxu0 0
  %128 = vmatprep.subr.bf16.mxu0 0
  %129 = vmatpush2.bf16.msra.mxu0 0
  %130 = vmatprep.subr.bf16.mxu0 0
  %131 = vmatpush2.bf16.msra.mxu0 0
  %132 = vmatprep.subr.bf16.mxu0 0
  %133 = vmatpush2.bf16.msra.mxu0 0
  %134 = vmatprep.mubr.bf16.mxu0 0
  %135 = vmatmul.mubr.bf16.gmra.mxu0 %v97
  %v136 = vpop.f32.mrf.mxu0
  %v137 = vadd.f32 %v91, %v136
  %v138 = vpop.f32.mrf.mxu0
  %v139 = vpop.f32.mrf.mxu0
  %v140 = vpop.f32.mrf.mxu0
  %141 = vdwg.mxu0
  %s142 = scalar_lea.vmem %s0, 4
  %v143 = vld [vmem:[%s142] sm:$0x3]
  %s144 = scalar_lea.vmem %s1, 8
  %v145 = vld [vmem:[%s144] sm:$0xf]
  %v147 = vsel %vm45, %v145, 0
  %v150 = vand.u32 %v143, %v52
  %152 = vmatprep.subr.bf16.mxu0 0
  %153 = vmatpush1.bf16.msra.mxu0 0
  %154 = vmatprep.subr.bf16.mxu0 0
  %155 = vmatpush1.bf16.msra.mxu0 0
  %156 = vmatprep.subr.bf16.mxu0 0
  %157 = vmatpush1.bf16.msra.mxu0 0
  %158 = vmatprep.subr.bf16.mxu0 0
  %159 = vmatpush1.bf16.msra.mxu0 0
  %160 = vmatprep.subr.bf16.mxu0 0
  %161 = vmatpush1.bf16.msra.mxu0 0
  %162 = vmatprep.subr.bf16.mxu0 0
  %163 = vmatpush1.bf16.msra.mxu0 0
  %164 = vmatprep.subr.bf16.mxu0 0
  %165 = vmatpush1.bf16.msra.mxu0 0
  %166 = vmatprep.subr.bf16.mxu0 0
  %167 = vmatpush1.bf16.msra.mxu0 %v150
  %168 = vmatprep.subr.bf16.mxu0 0
  %169 = vmatpush2.bf16.msra.mxu0 0
  %170 = vmatprep.subr.bf16.mxu0 0
  %171 = vmatpush2.bf16.msra.mxu0 0
  %172 = vmatprep.subr.bf16.mxu0 0
  %173 = vmatpush2.bf16.msra.mxu0 0
  %174 = vmatprep.subr.bf16.mxu0 0
  %175 = vmatpush2.bf16.msra.mxu0 0
  %176 = vmatprep.subr.bf16.mxu0 0
  %177 = vmatpush2.bf16.msra.mxu0 0
  %178 = vmatprep.subr.bf16.mxu0 0
  %179 = vmatpush2.bf16.msra.mxu0 0
  %180 = vmatprep.subr.bf16.mxu0 0
  %181 = vmatpush2.bf16.msra.mxu0 0
  %182 = vmatprep.subr.bf16.mxu0 0
  %183 = vmatpush2.bf16.msra.mxu0 0
  %184 = vmatprep.mubr.bf16.mxu0 0
  %185 = vmatmul.mubr.bf16.gmra.mxu0 %v147
  %v186 = vpop.f32.mrf.mxu0
  %v187 = vadd.f32 0.0, %v186
  %v188 = vpop.f32.mrf.mxu0
  %v189 = vpop.f32.mrf.mxu0
  %v190 = vpop.f32.mrf.mxu0
  %191 = vdwg.mxu0
  %v192 = vadd.f32 %v137, %v187
  %s193 = scalar_lea.vmem %s0, 6
  %v194 = vld [vmem:[%s193] sm:$0x3]
  %s195 = scalar_lea.vmem %s1, 12
  %v196 = vld [vmem:[%s195] sm:$0xf]
  %v198 = vsel %vm45, %v196, 0
  %v201 = vand.u32 %v194, %v52
  %203 = vmatprep.subr.bf16.mxu0 0
  %204 = vmatpush1.bf16.msra.mxu0 0
  %205 = vmatprep.subr.bf16.mxu0 0
  %206 = vmatpush1.bf16.msra.mxu0 0
  %207 = vmatprep.subr.bf16.mxu0 0
  %208 = vmatpush1.bf16.msra.mxu0 0
  %209 = vmatprep.subr.bf16.mxu0 0
  %210 = vmatpush1.bf16.msra.mxu0 0
  %211 = vmatprep.subr.bf16.mxu0 0
  %212 = vmatpush1.bf16.msra.mxu0 0
  %213 = vmatprep.subr.bf16.mxu0 0
  %214 = vmatpush1.bf16.msra.mxu0 0
  %215 = vmatprep.subr.bf16.mxu0 0
  %216 = vmatpush1.bf16.msra.mxu0 0
  %217 = vmatprep.subr.bf16.mxu0 0
  %218 = vmatpush1.bf16.msra.mxu0 %v201
  %219 = vmatprep.subr.bf16.mxu0 0
  %220 = vmatpush2.bf16.msra.mxu0 0
  %221 = vmatprep.subr.bf16.mxu0 0
  %222 = vmatpush2.bf16.msra.mxu0 0
  %223 = vmatprep.subr.bf16.mxu0 0
  %224 = vmatpush2.bf16.msra.mxu0 0
  %225 = vmatprep.subr.bf16.mxu0 0
  %226 = vmatpush2.bf16.msra.mxu0 0
  %227 = vmatprep.subr.bf16.mxu0 0
  %228 = vmatpush2.bf16.msra.mxu0 0
  %229 = vmatprep.subr.bf16.mxu0 0
  %230 = vmatpush2.bf16.msra.mxu0 0
  %231 = vmatprep.subr.bf16.mxu0 0
  %232 = vmatpush2.bf16.msra.mxu0 0
  %233 = vmatprep.subr.bf16.mxu0 0
  %234 = vmatpush2.bf16.msra.mxu0 0
  %235 = vmatprep.mubr.bf16.mxu0 0
  %236 = vmatmul.mubr.bf16.gmra.mxu0 %v198
  %v237 = vpop.f32.mrf.mxu0
  %v238 = vadd.f32 0.0, %v237
  %v239 = vpop.f32.mrf.mxu0
  %v240 = vpop.f32.mrf.mxu0
  %v241 = vpop.f32.mrf.mxu0
  %242 = vdwg.mxu0
  %v243 = vadd.f32 %v192, %v238
  %s244 = scalar_lea.vmem %s0, 8
  %v245 = vld [vmem:[%s244] sm:$0x3]
  %s246 = scalar_lea.vmem %s1, 16
  %v247 = vld [vmem:[%s246] sm:$0xf]
  %v249 = vsel %vm45, %v247, 0
  %v252 = vand.u32 %v245, %v52
  %254 = vmatprep.subr.bf16.mxu0 0
  %255 = vmatpush1.bf16.msra.mxu0 0
  %256 = vmatprep.subr.bf16.mxu0 0
  %257 = vmatpush1.bf16.msra.mxu0 0
  %258 = vmatprep.subr.bf16.mxu0 0
  %259 = vmatpush1.bf16.msra.mxu0 0
  %260 = vmatprep.subr.bf16.mxu0 0
  %261 = vmatpush1.bf16.msra.mxu0 0
  %262 = vmatprep.subr.bf16.mxu0 0
  %263 = vmatpush1.bf16.msra.mxu0 0
  %264 = vmatprep.subr.bf16.mxu0 0
  %265 = vmatpush1.bf16.msra.mxu0 0
  %266 = vmatprep.subr.bf16.mxu0 0
  %267 = vmatpush1.bf16.msra.mxu0 0
  %268 = vmatprep.subr.bf16.mxu0 0
  %269 = vmatpush1.bf16.msra.mxu0 %v252
  %270 = vmatprep.subr.bf16.mxu0 0
  %271 = vmatpush2.bf16.msra.mxu0 0
  %272 = vmatprep.subr.bf16.mxu0 0
  %273 = vmatpush2.bf16.msra.mxu0 0
  %274 = vmatprep.subr.bf16.mxu0 0
  %275 = vmatpush2.bf16.msra.mxu0 0
  %276 = vmatprep.subr.bf16.mxu0 0
  %277 = vmatpush2.bf16.msra.mxu0 0
  %278 = vmatprep.subr.bf16.mxu0 0
  %279 = vmatpush2.bf16.msra.mxu0 0
  %280 = vmatprep.subr.bf16.mxu0 0
  %281 = vmatpush2.bf16.msra.mxu0 0
  %282 = vmatprep.subr.bf16.mxu0 0
  %283 = vmatpush2.bf16.msra.mxu0 0
  %284 = vmatprep.subr.bf16.mxu0 0
  %285 = vmatpush2.bf16.msra.mxu0 0
  %286 = vmatprep.mubr.bf16.mxu0 0
  %287 = vmatmul.mubr.bf16.gmra.mxu0 %v249
  %v288 = vpop.f32.mrf.mxu0
  %v289 = vadd.f32 0.0, %v288
  %v290 = vpop.f32.mrf.mxu0
  %v291 = vpop.f32.mrf.mxu0
  %v292 = vpop.f32.mrf.mxu0
  %293 = vdwg.mxu0
  %v294 = vadd.f32 %v243, %v289
  %s295 = scalar_lea.vmem %s0, 10
  %v296 = vld [vmem:[%s295] sm:$0x3]
  %s297 = scalar_lea.vmem %s1, 20
  %v298 = vld [vmem:[%s297] sm:$0xf]
  %v300 = vsel %vm45, %v298, 0
  %v303 = vand.u32 %v296, %v52
  %305 = vmatprep.subr.bf16.mxu0 0
  %306 = vmatpush1.bf16.msra.mxu0 0
  %307 = vmatprep.subr.bf16.mxu0 0
  %308 = vmatpush1.bf16.msra.mxu0 0
  %309 = vmatprep.subr.bf16.mxu0 0
  %310 = vmatpush1.bf16.msra.mxu0 0
  %311 = vmatprep.subr.bf16.mxu0 0
  %312 = vmatpush1.bf16.msra.mxu0 0
  %313 = vmatprep.subr.bf16.mxu0 0
  %314 = vmatpush1.bf16.msra.mxu0 0
  %315 = vmatprep.subr.bf16.mxu0 0
  %316 = vmatpush1.bf16.msra.mxu0 0
  %317 = vmatprep.subr.bf16.mxu0 0
  %318 = vmatpush1.bf16.msra.mxu0 0
  %319 = vmatprep.subr.bf16.mxu0 0
  %320 = vmatpush1.bf16.msra.mxu0 %v303
  %321 = vmatprep.subr.bf16.mxu0 0
  %322 = vmatpush2.bf16.msra.mxu0 0
  %323 = vmatprep.subr.bf16.mxu0 0
  %324 = vmatpush2.bf16.msra.mxu0 0
  %325 = vmatprep.subr.bf16.mxu0 0
  %326 = vmatpush2.bf16.msra.mxu0 0
  %327 = vmatprep.subr.bf16.mxu0 0
  %328 = vmatpush2.bf16.msra.mxu0 0
  %329 = vmatprep.subr.bf16.mxu0 0
  %330 = vmatpush2.bf16.msra.mxu0 0
  %331 = vmatprep.subr.bf16.mxu0 0
  %332 = vmatpush2.bf16.msra.mxu0 0
  %333 = vmatprep.subr.bf16.mxu0 0
  %334 = vmatpush2.bf16.msra.mxu0 0
  %335 = vmatprep.subr.bf16.mxu0 0
  %336 = vmatpush2.bf16.msra.mxu0 0
  %337 = vmatprep.mubr.bf16.mxu0 0
  %338 = vmatmul.mubr.bf16.gmra.mxu0 %v300
  %v339 = vpop.f32.mrf.mxu0
  %v340 = vadd.f32 0.0, %v339
  %v341 = vpop.f32.mrf.mxu0
  %v342 = vpop.f32.mrf.mxu0
  %v343 = vpop.f32.mrf.mxu0
  %344 = vdwg.mxu0
  %v345 = vadd.f32 %v294, %v340
  %s346 = scalar_lea.vmem %s0, 12
  %v347 = vld [vmem:[%s346] sm:$0x3]
  %s348 = scalar_lea.vmem %s1, 24
  %v349 = vld [vmem:[%s348] sm:$0xf]
  %v351 = vsel %vm45, %v349, 0
  %v354 = vand.u32 %v347, %v52
  %356 = vmatprep.subr.bf16.mxu0 0
  %357 = vmatpush1.bf16.msra.mxu0 0
  %358 = vmatprep.subr.bf16.mxu0 0
  %359 = vmatpush1.bf16.msra.mxu0 0
  %360 = vmatprep.subr.bf16.mxu0 0
  %361 = vmatpush1.bf16.msra.mxu0 0
  %362 = vmatprep.subr.bf16.mxu0 0
  %363 = vmatpush1.bf16.msra.mxu0 0
  %364 = vmatprep.subr.bf16.mxu0 0
  %365 = vmatpush1.bf16.msra.mxu0 0
  %366 = vmatprep.subr.bf16.mxu0 0
  %367 = vmatpush1.bf16.msra.mxu0 0
  %368 = vmatprep.subr.bf16.mxu0 0
  %369 = vmatpush1.bf16.msra.mxu0 0
  %370 = vmatprep.subr.bf16.mxu0 0
  %371 = vmatpush1.bf16.msra.mxu0 %v354
  %372 = vmatprep.subr.bf16.mxu0 0
  %373 = vmatpush2.bf16.msra.mxu0 0
  %374 = vmatprep.subr.bf16.mxu0 0
  %375 = vmatpush2.bf16.msra.mxu0 0
  %376 = vmatprep.subr.bf16.mxu0 0
  %377 = vmatpush2.bf16.msra.mxu0 0
  %378 = vmatprep.subr.bf16.mxu0 0
  %379 = vmatpush2.bf16.msra.mxu0 0
  %380 = vmatprep.subr.bf16.mxu0 0
  %381 = vmatpush2.bf16.msra.mxu0 0
  %382 = vmatprep.subr.bf16.mxu0 0
  %383 = vmatpush2.bf16.msra.mxu0 0
  %384 = vmatprep.subr.bf16.mxu0 0
  %385 = vmatpush2.bf16.msra.mxu0 0
  %386 = vmatprep.subr.bf16.mxu0 0
  %387 = vmatpush2.bf16.msra.mxu0 0
  %388 = vmatprep.mubr.bf16.mxu0 0
  %389 = vmatmul.mubr.bf16.gmra.mxu0 %v351
  %v390 = vpop.f32.mrf.mxu0
  %v391 = vadd.f32 0.0, %v390
  %v392 = vpop.f32.mrf.mxu0
  %v393 = vpop.f32.mrf.mxu0
  %v394 = vpop.f32.mrf.mxu0
  %395 = vdwg.mxu0
  %v396 = vadd.f32 %v345, %v391
  %s397 = scalar_lea.vmem %s0, 14
  %v398 = vld [vmem:[%s397] sm:$0x3]
  %s399 = scalar_lea.vmem %s1, 28
  %v400 = vld [vmem:[%s399] sm:$0xf]
  %v402 = vsel %vm45, %v400, 0
  %v405 = vand.u32 %v398, %v52
  %407 = vmatprep.subr.bf16.mxu0 0
  %408 = vmatpush1.bf16.msra.mxu0 0
  %409 = vmatprep.subr.bf16.mxu0 0
  %410 = vmatpush1.bf16.msra.mxu0 0
  %411 = vmatprep.subr.bf16.mxu0 0
  %412 = vmatpush1.bf16.msra.mxu0 0
  %413 = vmatprep.subr.bf16.mxu0 0
  %414 = vmatpush1.bf16.msra.mxu0 0
  %415 = vmatprep.subr.bf16.mxu0 0
  %416 = vmatpush1.bf16.msra.mxu0 0
  %417 = vmatprep.subr.bf16.mxu0 0
  %418 = vmatpush1.bf16.msra.mxu0 0
  %419 = vmatprep.subr.bf16.mxu0 0
  %420 = vmatpush1.bf16.msra.mxu0 0
  %421 = vmatprep.subr.bf16.mxu0 0
  %422 = vmatpush1.bf16.msra.mxu0 %v405
  %423 = vmatprep.subr.bf16.mxu0 0
  %424 = vmatpush2.bf16.msra.mxu0 0
  %425 = vmatprep.subr.bf16.mxu0 0
  %426 = vmatpush2.bf16.msra.mxu0 0
  %427 = vmatprep.subr.bf16.mxu0 0
  %428 = vmatpush2.bf16.msra.mxu0 0
  %429 = vmatprep.subr.bf16.mxu0 0
  %430 = vmatpush2.bf16.msra.mxu0 0
  %431 = vmatprep.subr.bf16.mxu0 0
  %432 = vmatpush2.bf16.msra.mxu0 0
  %433 = vmatprep.subr.bf16.mxu0 0
  %434 = vmatpush2.bf16.msra.mxu0 0
  %435 = vmatprep.subr.bf16.mxu0 0
  %436 = vmatpush2.bf16.msra.mxu0 0
  %437 = vmatprep.subr.bf16.mxu0 0
  %438 = vmatpush2.bf16.msra.mxu0 0
  %439 = vmatprep.mubr.bf16.mxu0 0
  %440 = vmatmul.mubr.bf16.gmra.mxu0 %v402
  %v441 = vpop.f32.mrf.mxu0
  %v442 = vadd.f32 0.0, %v441
  %v443 = vpop.f32.mrf.mxu0
  %v444 = vpop.f32.mrf.mxu0
  %v445 = vpop.f32.mrf.mxu0
  %446 = vdwg.mxu0
  %v447 = vadd.f32 %v396, %v442
  %s448 = scalar_lea.vmem %s0, 16
  %v449 = vld [vmem:[%s448] sm:$0x3]
  %s450 = scalar_lea.vmem %s1, 32
  %v451 = vld [vmem:[%s450] sm:$0xf]
  %v453 = vsel %vm45, %v451, 0
  %v456 = vand.u32 %v449, %v52
  %458 = vmatprep.subr.bf16.mxu0 0
  %459 = vmatpush1.bf16.msra.mxu0 0
  %460 = vmatprep.subr.bf16.mxu0 0
  %461 = vmatpush1.bf16.msra.mxu0 0
  %462 = vmatprep.subr.bf16.mxu0 0
  %463 = vmatpush1.bf16.msra.mxu0 0
  %464 = vmatprep.subr.bf16.mxu0 0
  %465 = vmatpush1.bf16.msra.mxu0 0
  %466 = vmatprep.subr.bf16.mxu0 0
  %467 = vmatpush1.bf16.msra.mxu0 0
  %468 = vmatprep.subr.bf16.mxu0 0
  %469 = vmatpush1.bf16.msra.mxu0 0
  %470 = vmatprep.subr.bf16.mxu0 0
  %471 = vmatpush1.bf16.msra.mxu0 0
  %472 = vmatprep.subr.bf16.mxu0 0
  %473 = vmatpush1.bf16.msra.mxu0 %v456
  %474 = vmatprep.subr.bf16.mxu0 0
  %475 = vmatpush2.bf16.msra.mxu0 0
  %476 = vmatprep.subr.bf16.mxu0 0
  %477 = vmatpush2.bf16.msra.mxu0 0
  %478 = vmatprep.subr.bf16.mxu0 0
  %479 = vmatpush2.bf16.msra.mxu0 0
  %480 = vmatprep.subr.bf16.mxu0 0
  %481 = vmatpush2.bf16.msra.mxu0 0
  %482 = vmatprep.subr.bf16.mxu0 0
  %483 = vmatpush2.bf16.msra.mxu0 0
  %484 = vmatprep.subr.bf16.mxu0 0
  %485 = vmatpush2.bf16.msra.mxu0 0
  %486 = vmatprep.subr.bf16.mxu0 0
  %487 = vmatpush2.bf16.msra.mxu0 0
  %488 = vmatprep.subr.bf16.mxu0 0
  %489 = vmatpush2.bf16.msra.mxu0 0
  %490 = vmatprep.mubr.bf16.mxu0 0
  %491 = vmatmul.mubr.bf16.gmra.mxu0 %v453
  %v492 = vpop.f32.mrf.mxu0
  %v493 = vadd.f32 0.0, %v492
  %v494 = vpop.f32.mrf.mxu0
  %v495 = vpop.f32.mrf.mxu0
  %v496 = vpop.f32.mrf.mxu0
  %497 = vdwg.mxu0
  %v498 = vadd.f32 %v447, %v493
  %s499 = scalar_lea.vmem %s0, 18
  %v500 = vld [vmem:[%s499] sm:$0x3]
  %s501 = scalar_lea.vmem %s1, 36
  %v502 = vld [vmem:[%s501] sm:$0xf]
  %v504 = vsel %vm45, %v502, 0
  %v507 = vand.u32 %v500, %v52
  %509 = vmatprep.subr.bf16.mxu0 0
  %510 = vmatpush1.bf16.msra.mxu0 0
  %511 = vmatprep.subr.bf16.mxu0 0
  %512 = vmatpush1.bf16.msra.mxu0 0
  %513 = vmatprep.subr.bf16.mxu0 0
  %514 = vmatpush1.bf16.msra.mxu0 0
  %515 = vmatprep.subr.bf16.mxu0 0
  %516 = vmatpush1.bf16.msra.mxu0 0
  %517 = vmatprep.subr.bf16.mxu0 0
  %518 = vmatpush1.bf16.msra.mxu0 0
  %519 = vmatprep.subr.bf16.mxu0 0
  %520 = vmatpush1.bf16.msra.mxu0 0
  %521 = vmatprep.subr.bf16.mxu0 0
  %522 = vmatpush1.bf16.msra.mxu0 0
  %523 = vmatprep.subr.bf16.mxu0 0
  %524 = vmatpush1.bf16.msra.mxu0 %v507
  %525 = vmatprep.subr.bf16.mxu0 0
  %526 = vmatpush2.bf16.msra.mxu0 0
  %527 = vmatprep.subr.bf16.mxu0 0
  %528 = vmatpush2.bf16.msra.mxu0 0
  %529 = vmatprep.subr.bf16.mxu0 0
  %530 = vmatpush2.bf16.msra.mxu0 0
  %531 = vmatprep.subr.bf16.mxu0 0
  %532 = vmatpush2.bf16.msra.mxu0 0
  %533 = vmatprep.subr.bf16.mxu0 0
  %534 = vmatpush2.bf16.msra.mxu0 0
  %535 = vmatprep.subr.bf16.mxu0 0
  %536 = vmatpush2.bf16.msra.mxu0 0
  %537 = vmatprep.subr.bf16.mxu0 0
  %538 = vmatpush2.bf16.msra.mxu0 0
  %539 = vmatprep.subr.bf16.mxu0 0
  %540 = vmatpush2.bf16.msra.mxu0 0
  %541 = vmatprep.mubr.bf16.mxu0 0
  %542 = vmatmul.mubr.bf16.gmra.mxu0 %v504
  %v543 = vpop.f32.mrf.mxu0
  %v544 = vadd.f32 0.0, %v543
  %v545 = vpop.f32.mrf.mxu0
  %v546 = vpop.f32.mrf.mxu0
  %v547 = vpop.f32.mrf.mxu0
  %548 = vdwg.mxu0
  %v549 = vadd.f32 %v498, %v544
  %s550 = scalar_lea.vmem %s0, 20
  %v551 = vld [vmem:[%s550] sm:$0x3]
  %s552 = scalar_lea.vmem %s1, 40
  %v553 = vld [vmem:[%s552] sm:$0xf]
  %v555 = vsel %vm45, %v553, 0
  %v558 = vand.u32 %v551, %v52
  %560 = vmatprep.subr.bf16.mxu0 0
  %561 = vmatpush1.bf16.msra.mxu0 0
  %562 = vmatprep.subr.bf16.mxu0 0
  %563 = vmatpush1.bf16.msra.mxu0 0
  %564 = vmatprep.subr.bf16.mxu0 0
  %565 = vmatpush1.bf16.msra.mxu0 0
  %566 = vmatprep.subr.bf16.mxu0 0
  %567 = vmatpush1.bf16.msra.mxu0 0
  %568 = vmatprep.subr.bf16.mxu0 0
  %569 = vmatpush1.bf16.msra.mxu0 0
  %570 = vmatprep.subr.bf16.mxu0 0
  %571 = vmatpush1.bf16.msra.mxu0 0
  %572 = vmatprep.subr.bf16.mxu0 0
  %573 = vmatpush1.bf16.msra.mxu0 0
  %574 = vmatprep.subr.bf16.mxu0 0
  %575 = vmatpush1.bf16.msra.mxu0 %v558
  %576 = vmatprep.subr.bf16.mxu0 0
  %577 = vmatpush2.bf16.msra.mxu0 0
  %578 = vmatprep.subr.bf16.mxu0 0
  %579 = vmatpush2.bf16.msra.mxu0 0
  %580 = vmatprep.subr.bf16.mxu0 0
  %581 = vmatpush2.bf16.msra.mxu0 0
  %582 = vmatprep.subr.bf16.mxu0 0
  %583 = vmatpush2.bf16.msra.mxu0 0
  %584 = vmatprep.subr.bf16.mxu0 0
  %585 = vmatpush2.bf16.msra.mxu0 0
  %586 = vmatprep.subr.bf16.mxu0 0
  %587 = vmatpush2.bf16.msra.mxu0 0
  %588 = vmatprep.subr.bf16.mxu0 0
  %589 = vmatpush2.bf16.msra.mxu0 0
  %590 = vmatprep.subr.bf16.mxu0 0
  %591 = vmatpush2.bf16.msra.mxu0 0
  %592 = vmatprep.mubr.bf16.mxu0 0
  %593 = vmatmul.mubr.bf16.gmra.mxu0 %v555
  %v594 = vpop.f32.mrf.mxu0
  %v595 = vadd.f32 0.0, %v594
  %v596 = vpop.f32.mrf.mxu0
  %v597 = vpop.f32.mrf.mxu0
  %v598 = vpop.f32.mrf.mxu0
  %599 = vdwg.mxu0
  %v600 = vadd.f32 %v549, %v595
  %s601 = scalar_lea.vmem %s0, 22
  %v602 = vld [vmem:[%s601] sm:$0x3]
  %s603 = scalar_lea.vmem %s1, 44
  %v604 = vld [vmem:[%s603] sm:$0xf]
  %v606 = vsel %vm45, %v604, 0
  %v609 = vand.u32 %v602, %v52
  %611 = vmatprep.subr.bf16.mxu0 0
  %612 = vmatpush1.bf16.msra.mxu0 0
  %613 = vmatprep.subr.bf16.mxu0 0
  %614 = vmatpush1.bf16.msra.mxu0 0
  %615 = vmatprep.subr.bf16.mxu0 0
  %616 = vmatpush1.bf16.msra.mxu0 0
  %617 = vmatprep.subr.bf16.mxu0 0
  %618 = vmatpush1.bf16.msra.mxu0 0
  %619 = vmatprep.subr.bf16.mxu0 0
  %620 = vmatpush1.bf16.msra.mxu0 0
  %621 = vmatprep.subr.bf16.mxu0 0
  %622 = vmatpush1.bf16.msra.mxu0 0
  %623 = vmatprep.subr.bf16.mxu0 0
  %624 = vmatpush1.bf16.msra.mxu0 0
  %625 = vmatprep.subr.bf16.mxu0 0
  %626 = vmatpush1.bf16.msra.mxu0 %v609
  %627 = vmatprep.subr.bf16.mxu0 0
  %628 = vmatpush2.bf16.msra.mxu0 0
  %629 = vmatprep.subr.bf16.mxu0 0
  %630 = vmatpush2.bf16.msra.mxu0 0
  %631 = vmatprep.subr.bf16.mxu0 0
  %632 = vmatpush2.bf16.msra.mxu0 0
  %633 = vmatprep.subr.bf16.mxu0 0
  %634 = vmatpush2.bf16.msra.mxu0 0
  %635 = vmatprep.subr.bf16.mxu0 0
  %636 = vmatpush2.bf16.msra.mxu0 0
  %637 = vmatprep.subr.bf16.mxu0 0
  %638 = vmatpush2.bf16.msra.mxu0 0
  %639 = vmatprep.subr.bf16.mxu0 0
  %640 = vmatpush2.bf16.msra.mxu0 0
  %641 = vmatprep.subr.bf16.mxu0 0
  %642 = vmatpush2.bf16.msra.mxu0 0
  %643 = vmatprep.mubr.bf16.mxu0 0
  %644 = vmatmul.mubr.bf16.gmra.mxu0 %v606
  %v645 = vpop.f32.mrf.mxu0
  %v646 = vadd.f32 0.0, %v645
  %v647 = vpop.f32.mrf.mxu0
  %v648 = vpop.f32.mrf.mxu0
  %v649 = vpop.f32.mrf.mxu0
  %650 = vdwg.mxu0
  %v651 = vadd.f32 %v600, %v646
  %s652 = scalar_lea.vmem %s0, 24
  %v653 = vld [vmem:[%s652] sm:$0x3]
  %s654 = scalar_lea.vmem %s1, 48
  %v655 = vld [vmem:[%s654] sm:$0xf]
  %v657 = vsel %vm45, %v655, 0
  %v660 = vand.u32 %v653, %v52
  %662 = vmatprep.subr.bf16.mxu0 0
  %663 = vmatpush1.bf16.msra.mxu0 0
  %664 = vmatprep.subr.bf16.mxu0 0
  %665 = vmatpush1.bf16.msra.mxu0 0
  %666 = vmatprep.subr.bf16.mxu0 0
  %667 = vmatpush1.bf16.msra.mxu0 0
  %668 = vmatprep.subr.bf16.mxu0 0
  %669 = vmatpush1.bf16.msra.mxu0 0
  %670 = vmatprep.subr.bf16.mxu0 0
  %671 = vmatpush1.bf16.msra.mxu0 0
  %672 = vmatprep.subr.bf16.mxu0 0
  %673 = vmatpush1.bf16.msra.mxu0 0
  %674 = vmatprep.subr.bf16.mxu0 0
  %675 = vmatpush1.bf16.msra.mxu0 0
  %676 = vmatprep.subr.bf16.mxu0 0
  %677 = vmatpush1.bf16.msra.mxu0 %v660
  %678 = vmatprep.subr.bf16.mxu0 0
  %679 = vmatpush2.bf16.msra.mxu0 0
  %680 = vmatprep.subr.bf16.mxu0 0
  %681 = vmatpush2.bf16.msra.mxu0 0
  %682 = vmatprep.subr.bf16.mxu0 0
  %683 = vmatpush2.bf16.msra.mxu0 0
  %684 = vmatprep.subr.bf16.mxu0 0
  %685 = vmatpush2.bf16.msra.mxu0 0
  %686 = vmatprep.subr.bf16.mxu0 0
  %687 = vmatpush2.bf16.msra.mxu0 0
  %688 = vmatprep.subr.bf16.mxu0 0
  %689 = vmatpush2.bf16.msra.mxu0 0
  %690 = vmatprep.subr.bf16.mxu0 0
  %691 = vmatpush2.bf16.msra.mxu0 0
  %692 = vmatprep.subr.bf16.mxu0 0
  %693 = vmatpush2.bf16.msra.mxu0 0
  %694 = vmatprep.mubr.bf16.mxu0 0
  %695 = vmatmul.mubr.bf16.gmra.mxu0 %v657
  %v696 = vpop.f32.mrf.mxu0
  %v697 = vadd.f32 0.0, %v696
  %v698 = vpop.f32.mrf.mxu0
  %v699 = vpop.f32.mrf.mxu0
  %v700 = vpop.f32.mrf.mxu0
  %701 = vdwg.mxu0
  %v702 = vadd.f32 %v651, %v697
  %s703 = scalar_lea.vmem %s0, 26
  %v704 = vld [vmem:[%s703] sm:$0x3]
  %s705 = scalar_lea.vmem %s1, 52
  %v706 = vld [vmem:[%s705] sm:$0xf]
  %v708 = vsel %vm45, %v706, 0
  %v711 = vand.u32 %v704, %v52
  %713 = vmatprep.subr.bf16.mxu0 0
  %714 = vmatpush1.bf16.msra.mxu0 0
  %715 = vmatprep.subr.bf16.mxu0 0
  %716 = vmatpush1.bf16.msra.mxu0 0
  %717 = vmatprep.subr.bf16.mxu0 0
  %718 = vmatpush1.bf16.msra.mxu0 0
  %719 = vmatprep.subr.bf16.mxu0 0
  %720 = vmatpush1.bf16.msra.mxu0 0
  %721 = vmatprep.subr.bf16.mxu0 0
  %722 = vmatpush1.bf16.msra.mxu0 0
  %723 = vmatprep.subr.bf16.mxu0 0
  %724 = vmatpush1.bf16.msra.mxu0 0
  %725 = vmatprep.subr.bf16.mxu0 0
  %726 = vmatpush1.bf16.msra.mxu0 0
  %727 = vmatprep.subr.bf16.mxu0 0
  %728 = vmatpush1.bf16.msra.mxu0 %v711
  %729 = vmatprep.subr.bf16.mxu0 0
  %730 = vmatpush2.bf16.msra.mxu0 0
  %731 = vmatprep.subr.bf16.mxu0 0
  %732 = vmatpush2.bf16.msra.mxu0 0
  %733 = vmatprep.subr.bf16.mxu0 0
  %734 = vmatpush2.bf16.msra.mxu0 0
  %735 = vmatprep.subr.bf16.mxu0 0
  %736 = vmatpush2.bf16.msra.mxu0 0
  %737 = vmatprep.subr.bf16.mxu0 0
  %738 = vmatpush2.bf16.msra.mxu0 0
  %739 = vmatprep.subr.bf16.mxu0 0
  %740 = vmatpush2.bf16.msra.mxu0 0
  %741 = vmatprep.subr.bf16.mxu0 0
  %742 = vmatpush2.bf16.msra.mxu0 0
  %743 = vmatprep.subr.bf16.mxu0 0
  %744 = vmatpush2.bf16.msra.mxu0 0
  %745 = vmatprep.mubr.bf16.mxu0 0
  %746 = vmatmul.mubr.bf16.gmra.mxu0 %v708
  %v747 = vpop.f32.mrf.mxu0
  %v748 = vadd.f32 0.0, %v747
  %v749 = vpop.f32.mrf.mxu0
  %v750 = vpop.f32.mrf.mxu0
  %v751 = vpop.f32.mrf.mxu0
  %752 = vdwg.mxu0
  %v753 = vadd.f32 %v702, %v748
  %s754 = scalar_lea.vmem %s0, 28
  %v755 = vld [vmem:[%s754] sm:$0x3]
  %s756 = scalar_lea.vmem %s1, 56
  %v757 = vld [vmem:[%s756] sm:$0xf]
  %v759 = vsel %vm45, %v757, 0
  %v762 = vand.u32 %v755, %v52
  %764 = vmatprep.subr.bf16.mxu0 0
  %765 = vmatpush1.bf16.msra.mxu0 0
  %766 = vmatprep.subr.bf16.mxu0 0
  %767 = vmatpush1.bf16.msra.mxu0 0
  %768 = vmatprep.subr.bf16.mxu0 0
  %769 = vmatpush1.bf16.msra.mxu0 0
  %770 = vmatprep.subr.bf16.mxu0 0
  %771 = vmatpush1.bf16.msra.mxu0 0
  %772 = vmatprep.subr.bf16.mxu0 0
  %773 = vmatpush1.bf16.msra.mxu0 0
  %774 = vmatprep.subr.bf16.mxu0 0
  %775 = vmatpush1.bf16.msra.mxu0 0
  %776 = vmatprep.subr.bf16.mxu0 0
  %777 = vmatpush1.bf16.msra.mxu0 0
  %778 = vmatprep.subr.bf16.mxu0 0
  %779 = vmatpush1.bf16.msra.mxu0 %v762
  %780 = vmatprep.subr.bf16.mxu0 0
  %781 = vmatpush2.bf16.msra.mxu0 0
  %782 = vmatprep.subr.bf16.mxu0 0
  %783 = vmatpush2.bf16.msra.mxu0 0
  %784 = vmatprep.subr.bf16.mxu0 0
  %785 = vmatpush2.bf16.msra.mxu0 0
  %786 = vmatprep.subr.bf16.mxu0 0
  %787 = vmatpush2.bf16.msra.mxu0 0
  %788 = vmatprep.subr.bf16.mxu0 0
  %789 = vmatpush2.bf16.msra.mxu0 0
  %790 = vmatprep.subr.bf16.mxu0 0
  %791 = vmatpush2.bf16.msra.mxu0 0
  %792 = vmatprep.subr.bf16.mxu0 0
  %793 = vmatpush2.bf16.msra.mxu0 0
  %794 = vmatprep.subr.bf16.mxu0 0
  %795 = vmatpush2.bf16.msra.mxu0 0
  %796 = vmatprep.mubr.bf16.mxu0 0
  %797 = vmatmul.mubr.bf16.gmra.mxu0 %v759
  %v798 = vpop.f32.mrf.mxu0
  %v799 = vadd.f32 0.0, %v798
  %v800 = vpop.f32.mrf.mxu0
  %v801 = vpop.f32.mrf.mxu0
  %v802 = vpop.f32.mrf.mxu0
  %803 = vdwg.mxu0
  %v804 = vadd.f32 %v753, %v799
  %s805 = scalar_lea.vmem %s0, 30
  %v806 = vld [vmem:[%s805] sm:$0x3]
  %s807 = scalar_lea.vmem %s1, 60
  %v808 = vld [vmem:[%s807] sm:$0xf]
  %v810 = vsel %vm45, %v808, 0
  %v813 = vand.u32 %v806, %v52
  %815 = vmatprep.subr.bf16.mxu0 0
  %816 = vmatpush1.bf16.msra.mxu0 0
  %817 = vmatprep.subr.bf16.mxu0 0
  %818 = vmatpush1.bf16.msra.mxu0 0
  %819 = vmatprep.subr.bf16.mxu0 0
  %820 = vmatpush1.bf16.msra.mxu0 0
  %821 = vmatprep.subr.bf16.mxu0 0
  %822 = vmatpush1.bf16.msra.mxu0 0
  %823 = vmatprep.subr.bf16.mxu0 0
  %824 = vmatpush1.bf16.msra.mxu0 0
  %825 = vmatprep.subr.bf16.mxu0 0
  %826 = vmatpush1.bf16.msra.mxu0 0
  %827 = vmatprep.subr.bf16.mxu0 0
  %828 = vmatpush1.bf16.msra.mxu0 0
  %829 = vmatprep.subr.bf16.mxu0 0
  %830 = vmatpush1.bf16.msra.mxu0 %v813
  %831 = vmatprep.subr.bf16.mxu0 0
  %832 = vmatpush2.bf16.msra.mxu0 0
  %833 = vmatprep.subr.bf16.mxu0 0
  %834 = vmatpush2.bf16.msra.mxu0 0
  %835 = vmatprep.subr.bf16.mxu0 0
  %836 = vmatpush2.bf16.msra.mxu0 0
  %837 = vmatprep.subr.bf16.mxu0 0
  %838 = vmatpush2.bf16.msra.mxu0 0
  %839 = vmatprep.subr.bf16.mxu0 0
  %840 = vmatpush2.bf16.msra.mxu0 0
  %841 = vmatprep.subr.bf16.mxu0 0
  %842 = vmatpush2.bf16.msra.mxu0 0
  %843 = vmatprep.subr.bf16.mxu0 0
  %844 = vmatpush2.bf16.msra.mxu0 0
  %845 = vmatprep.subr.bf16.mxu0 0
  %846 = vmatpush2.bf16.msra.mxu0 0
  %847 = vmatprep.mubr.bf16.mxu0 0
  %848 = vmatmul.mubr.bf16.gmra.mxu0 %v810
  %v849 = vpop.f32.mrf.mxu0
  %v850 = vadd.f32 0.0, %v849
  %v851 = vpop.f32.mrf.mxu0
  %v852 = vpop.f32.mrf.mxu0
  %v853 = vpop.f32.mrf.mxu0
  %854 = vdwg.mxu0
  %v855 = vadd.f32 %v804, %v850
  %v856 = vld [vmem:[%s2] sm:$0xff]
  %858 = vset.pattern.permute.xlu0 0
  %859 = vperm.xlu0 %858, %v856
  %v860 = vpop.permute.xlu0 %859
  %v862 = vadd.f32 %v855, %v860
  %vm863 = vcmp.ge.f32.partialorder %v862, 0.0
  %v864 = vmul.f32 %v862, 0.01
  %v865 = vsel %vm863, %v862, %v864
  %v866 = vpack.c.bf16 %v865, %v865
  %v867 = vld [vmem:[%s3] sm:$0xf]
  %v868 = vld [vmem:[%s3 + $0x4] sm:$0xf]
  %v869 = vld [vmem:[%s3 + $0x8] sm:$0xf]
  %v870 = vld [vmem:[%s3 + $0xc] sm:$0xf]
  %v871 = vld [vmem:[%s3 + $0x10] sm:$0xf]
  %v872 = vld [vmem:[%s3 + $0x14] sm:$0xf]
  %v873 = vld [vmem:[%s3 + $0x18] sm:$0xf]
  %v874 = vld [vmem:[%s3 + $0x1c] sm:$0xf]
  %v875 = vld [vmem:[%s3 + $0x20] sm:$0xf]
  %v876 = vld [vmem:[%s3 + $0x24] sm:$0xf]
  %v877 = vld [vmem:[%s3 + $0x28] sm:$0xf]
  %v878 = vld [vmem:[%s3 + $0x2c] sm:$0xf]
  %v879 = vld [vmem:[%s3 + $0x30] sm:$0xf]
  %v880 = vld [vmem:[%s3 + $0x34] sm:$0xf]
  %v881 = vld [vmem:[%s3 + $0x38] sm:$0xf]
  %v882 = vld [vmem:[%s3 + $0x3c] sm:$0xf]
  %v899 = vunpack.c.l.b16 %v867
  %v900 = vunpack.c.l.b16 %v868
  %v901 = vunpack.c.l.b16 %v869
  %v902 = vunpack.c.l.b16 %v870
  %v903 = vunpack.c.l.b16 %v871
  %v904 = vunpack.c.l.b16 %v872
  %v905 = vunpack.c.l.b16 %v873
  %v906 = vunpack.c.l.b16 %v874
  %v907 = vunpack.c.l.b16 %v875
  %v908 = vunpack.c.l.b16 %v876
  %v909 = vunpack.c.l.b16 %v877
  %v910 = vunpack.c.l.b16 %v878
  %v911 = vunpack.c.l.b16 %v879
  %v912 = vunpack.c.l.b16 %v880
  %v913 = vunpack.c.l.b16 %v881
  %v914 = vunpack.c.l.b16 %v882
  %v915 = vpack.c.b16 %v900, %v899
  %v916 = vpack.c.b16 %v902, %v901
  %v917 = vpack.c.b16 %v904, %v903
  %v918 = vpack.c.b16 %v906, %v905
  %v919 = vpack.c.b16 %v908, %v907
  %v920 = vpack.c.b16 %v910, %v909
  %v921 = vpack.c.b16 %v912, %v911
  %v922 = vpack.c.b16 %v914, %v913
  %931 = vmatprep.subr.bf16.mxu0 0
  %932 = vmatpush1.bf16.msra.mxu0 %v922
  %933 = vmatprep.subr.bf16.mxu0 0
  %934 = vmatpush1.bf16.msra.mxu0 %v921
  %935 = vmatprep.subr.bf16.mxu0 0
  %936 = vmatpush1.bf16.msra.mxu0 %v920
  %937 = vmatprep.subr.bf16.mxu0 0
  %938 = vmatpush1.bf16.msra.mxu0 %v919
  %939 = vmatprep.subr.bf16.mxu0 0
  %940 = vmatpush1.bf16.msra.mxu0 %v918
  %941 = vmatprep.subr.bf16.mxu0 0
  %942 = vmatpush1.bf16.msra.mxu0 %v917
  %943 = vmatprep.subr.bf16.mxu0 0
  %944 = vmatpush1.bf16.msra.mxu0 %v916
  %945 = vmatprep.subr.bf16.mxu0 0
  %946 = vmatpush1.bf16.msra.mxu0 %v915
  %947 = vmatprep.subr.bf16.mxu0 0
  %948 = vmatpush2.bf16.msra.mxu0 0
  %949 = vmatprep.subr.bf16.mxu0 0
  %950 = vmatpush2.bf16.msra.mxu0 0
  %951 = vmatprep.subr.bf16.mxu0 0
  %952 = vmatpush2.bf16.msra.mxu0 0
  %953 = vmatprep.subr.bf16.mxu0 0
  %954 = vmatpush2.bf16.msra.mxu0 0
  %955 = vmatprep.subr.bf16.mxu0 0
  %956 = vmatpush2.bf16.msra.mxu0 0
  %957 = vmatprep.subr.bf16.mxu0 0
  %958 = vmatpush2.bf16.msra.mxu0 0
  %959 = vmatprep.subr.bf16.mxu0 0
  %960 = vmatpush2.bf16.msra.mxu0 0
  %961 = vmatprep.subr.bf16.mxu0 0
  %962 = vmatpush2.bf16.msra.mxu0 0
  %963 = vmatprep.mubr.bf16.mxu0 0
  %964 = vmatmul.mubr.bf16.gmra.mxu0 %v866
  %v965 = vpop.f32.mrf.mxu0
  %v966 = vadd.f32 0.0, %v965
  %v967 = vpop.f32.mrf.mxu0
  %v968 = vpop.f32.mrf.mxu0
  %v969 = vpop.f32.mrf.mxu0
  %970 = vdwg.mxu0
  %v971 = vpack.c.bf16 %v966, %v966
  %v972 = vld [vmem:[%s4] sm:$0xf]
  %v973 = vld [vmem:[%s4 + $0x4] sm:$0xf]
  %s974 = scalar_lea.vmem %s3, 64
  %v975 = vld [vmem:[%s974] sm:$0xf]
  %v976 = vld [vmem:[%s974 + $0x4] sm:$0xf]
  %v977 = vld [vmem:[%s974 + $0x8] sm:$0xf]
  %v978 = vld [vmem:[%s974 + $0xc] sm:$0xf]
  %v979 = vld [vmem:[%s974 + $0x10] sm:$0xf]
  %v980 = vld [vmem:[%s974 + $0x14] sm:$0xf]
  %v981 = vld [vmem:[%s974 + $0x18] sm:$0xf]
  %v982 = vld [vmem:[%s974 + $0x1c] sm:$0xf]
  %v983 = vld [vmem:[%s974 + $0x20] sm:$0xf]
  %v984 = vld [vmem:[%s974 + $0x24] sm:$0xf]
  %v985 = vld [vmem:[%s974 + $0x28] sm:$0xf]
  %v986 = vld [vmem:[%s974 + $0x2c] sm:$0xf]
  %v987 = vld [vmem:[%s974 + $0x30] sm:$0xf]
  %v988 = vld [vmem:[%s974 + $0x34] sm:$0xf]
  %v989 = vld [vmem:[%s974 + $0x38] sm:$0xf]
  %v990 = vld [vmem:[%s974 + $0x3c] sm:$0xf]
  %v1007 = vunpack.c.l.b16 %v975
  %v1008 = vunpack.c.l.b16 %v976
  %v1009 = vunpack.c.l.b16 %v977
  %v1010 = vunpack.c.l.b16 %v978
  %v1011 = vunpack.c.l.b16 %v979
  %v1012 = vunpack.c.l.b16 %v980
  %v1013 = vunpack.c.l.b16 %v981
  %v1014 = vunpack.c.l.b16 %v982
  %v1015 = vunpack.c.l.b16 %v983
  %v1016 = vunpack.c.l.b16 %v984
  %v1017 = vunpack.c.l.b16 %v985
  %v1018 = vunpack.c.l.b16 %v986
  %v1019 = vunpack.c.l.b16 %v987
  %v1020 = vunpack.c.l.b16 %v988
  %v1021 = vunpack.c.l.b16 %v989
  %v1022 = vunpack.c.l.b16 %v990
  %v1023 = vpack.c.b16 %v1008, %v1007
  %v1024 = vpack.c.b16 %v1010, %v1009
  %v1025 = vpack.c.b16 %v1012, %v1011
  %v1026 = vpack.c.b16 %v1014, %v1013
  %v1027 = vpack.c.b16 %v1016, %v1015
  %v1028 = vpack.c.b16 %v1018, %v1017
  %v1029 = vpack.c.b16 %v1020, %v1019
  %v1030 = vpack.c.b16 %v1022, %v1021
  %1039 = vmatprep.subr.bf16.mxu0 0
  %1040 = vmatpush1.bf16.msra.mxu0 %v1030
  %1041 = vmatprep.subr.bf16.mxu0 0
  %1042 = vmatpush1.bf16.msra.mxu0 %v1029
  %1043 = vmatprep.subr.bf16.mxu0 0
  %1044 = vmatpush1.bf16.msra.mxu0 %v1028
  %1045 = vmatprep.subr.bf16.mxu0 0
  %1046 = vmatpush1.bf16.msra.mxu0 %v1027
  %1047 = vmatprep.subr.bf16.mxu0 0
  %1048 = vmatpush1.bf16.msra.mxu0 %v1026
  %1049 = vmatprep.subr.bf16.mxu0 0
  %1050 = vmatpush1.bf16.msra.mxu0 %v1025
  %1051 = vmatprep.subr.bf16.mxu0 0
  %1052 = vmatpush1.bf16.msra.mxu0 %v1024
  %1053 = vmatprep.subr.bf16.mxu0 0
  %1054 = vmatpush1.bf16.msra.mxu0 %v1023
  %1055 = vmatprep.subr.bf16.mxu0 0
  %1056 = vmatpush2.bf16.msra.mxu0 0
  %1057 = vmatprep.subr.bf16.mxu0 0
  %1058 = vmatpush2.bf16.msra.mxu0 0
  %1059 = vmatprep.subr.bf16.mxu0 0
  %1060 = vmatpush2.bf16.msra.mxu0 0
  %1061 = vmatprep.subr.bf16.mxu0 0
  %1062 = vmatpush2.bf16.msra.mxu0 0
  %1063 = vmatprep.subr.bf16.mxu0 0
  %1064 = vmatpush2.bf16.msra.mxu0 0
  %1065 = vmatprep.subr.bf16.mxu0 0
  %1066 = vmatpush2.bf16.msra.mxu0 0
  %1067 = vmatprep.subr.bf16.mxu0 0
  %1068 = vmatpush2.bf16.msra.mxu0 0
  %1069 = vmatprep.subr.bf16.mxu0 0
  %1070 = vmatpush2.bf16.msra.mxu0 0
  %1071 = vmatprep.mubr.bf16.mxu0 0
  %1072 = vmatmul.mubr.bf16.gmra.mxu0 %v866
  %v1073 = vpop.f32.mrf.mxu0
  %v1074 = vadd.f32 0.0, %v1073
  %v1075 = vpop.f32.mrf.mxu0
  %v1076 = vpop.f32.mrf.mxu0
  %v1077 = vpop.f32.mrf.mxu0
  %1078 = vdwg.mxu0
  %v1079 = vpack.c.bf16 %v1074, %v1074
  %s1080 = scalar_lea.vmem %s4, 8
  %v1081 = vld [vmem:[%s1080] sm:$0xf]
  %v1082 = vld [vmem:[%s1080 + $0x4] sm:$0xf]
  %v1085 = vunpack.c.l.b16 %v1081
  %v1086 = vunpack.c.l.b16 %v1082
  %v1087 = vpack.c.b16 %v1086, %v1085
  %vm1088 = vcmask 64512
  %v1090 = vsel %vm1088, %v1087, 0
  %vm1092 = vcmask 1043456
  %v1094 = vsel %vm1092, %v1079, 0
  %1096 = vmatprep.subr.bf16.mxu0 0
  %1097 = vmatpush1.bf16.msra.mxu0 0
  %1098 = vmatprep.subr.bf16.mxu0 0
  %1099 = vmatpush1.bf16.msra.mxu0 0
  %1100 = vmatprep.subr.bf16.mxu0 0
  %1101 = vmatpush1.bf16.msra.mxu0 0
  %1102 = vmatprep.subr.bf16.mxu0 0
  %1103 = vmatpush1.bf16.msra.mxu0 0
  %1104 = vmatprep.subr.bf16.mxu0 0
  %1105 = vmatpush1.bf16.msra.mxu0 0
  %1106 = vmatprep.subr.bf16.mxu0 0
  %1107 = vmatpush1.bf16.msra.mxu0 0
  %1108 = vmatprep.subr.bf16.mxu0 0
  %1109 = vmatpush1.bf16.msra.mxu0 0
  %1110 = vmatprep.subr.bf16.mxu0 0
  %1111 = vmatpush1.bf16.msra.mxu0 %v1094
  %1112 = vmatprep.subr.bf16.mxu0 0
  %1113 = vmatpush2.bf16.msra.mxu0 0
  %1114 = vmatprep.subr.bf16.mxu0 0
  %1115 = vmatpush2.bf16.msra.mxu0 0
  %1116 = vmatprep.subr.bf16.mxu0 0
  %1117 = vmatpush2.bf16.msra.mxu0 0
  %1118 = vmatprep.subr.bf16.mxu0 0
  %1119 = vmatpush2.bf16.msra.mxu0 0
  %1120 = vmatprep.subr.bf16.mxu0 0
  %1121 = vmatpush2.bf16.msra.mxu0 0
  %1122 = vmatprep.subr.bf16.mxu0 0
  %1123 = vmatpush2.bf16.msra.mxu0 0
  %1124 = vmatprep.subr.bf16.mxu0 0
  %1125 = vmatpush2.bf16.msra.mxu0 0
  %1126 = vmatprep.subr.bf16.mxu0 0
  %1127 = vmatpush2.bf16.msra.mxu0 0
  %1128 = vmatprep.mubr.bf16.mxu0 0
  %1129 = vmatmul.mubr.bf16.gmra.mxu0 %v1090
  %v1130 = vpop.f32.mrf.mxu0
  %v1131 = vadd.f32 0.0, %v1130
  %v1132 = vpop.f32.mrf.mxu0
  %v1133 = vpop.f32.mrf.mxu0
  %v1134 = vadd.f32 0.0, %v1133
  %v1135 = vpop.f32.mrf.mxu0
  %1136 = vdwg.mxu0
  %v1139 = vunpack.c.l.b16 %v972
  %v1140 = vunpack.c.l.b16 %v973
  %v1141 = vpack.c.b16 %v1140, %v1139
  %v1143 = vsel %vm1088, %v1141, 0
  %v1146 = vsel %vm1092, %v971, 0
  %1148 = vmatprep.subr.bf16.mxu0 0
  %1149 = vmatpush1.bf16.msra.mxu0 0
  %1150 = vmatprep.subr.bf16.mxu0 0
  %1151 = vmatpush1.bf16.msra.mxu0 0
  %1152 = vmatprep.subr.bf16.mxu0 0
  %1153 = vmatpush1.bf16.msra.mxu0 0
  %1154 = vmatprep.subr.bf16.mxu0 0
  %1155 = vmatpush1.bf16.msra.mxu0 0
  %1156 = vmatprep.subr.bf16.mxu0 0
  %1157 = vmatpush1.bf16.msra.mxu0 0
  %1158 = vmatprep.subr.bf16.mxu0 0
  %1159 = vmatpush1.bf16.msra.mxu0 0
  %1160 = vmatprep.subr.bf16.mxu0 0
  %1161 = vmatpush1.bf16.msra.mxu0 0
  %1162 = vmatprep.subr.bf16.mxu0 0
  %1163 = vmatpush1.bf16.msra.mxu0 %v1146
  %1164 = vmatprep.subr.bf16.mxu0 0
  %1165 = vmatpush2.bf16.msra.mxu0 0
  %1166 = vmatprep.subr.bf16.mxu0 0
  %1167 = vmatpush2.bf16.msra.mxu0 0
  %1168 = vmatprep.subr.bf16.mxu0 0
  %1169 = vmatpush2.bf16.msra.mxu0 0
  %1170 = vmatprep.subr.bf16.mxu0 0
  %1171 = vmatpush2.bf16.msra.mxu0 0
  %1172 = vmatprep.subr.bf16.mxu0 0
  %1173 = vmatpush2.bf16.msra.mxu0 0
  %1174 = vmatprep.subr.bf16.mxu0 0
  %1175 = vmatpush2.bf16.msra.mxu0 0
  %1176 = vmatprep.subr.bf16.mxu0 0
  %1177 = vmatpush2.bf16.msra.mxu0 0
  %1178 = vmatprep.subr.bf16.mxu0 0
  %1179 = vmatpush2.bf16.msra.mxu0 0
  %1180 = vmatprep.mubr.bf16.mxu0 0
  %1181 = vmatmul.mubr.bf16.gmra.mxu0 %v1143
  %v1182 = vpop.f32.mrf.mxu0
  %v1183 = vadd.f32 %v1131, %v1182
  %v1184 = vpop.f32.mrf.mxu0
  %v1185 = vpop.f32.mrf.mxu0
  %v1186 = vadd.f32 %v1134, %v1185
  %v1187 = vpop.f32.mrf.mxu0
  %1188 = vdwg.mxu0
  %s1189 = scalar_lea.vmem %s3, 128
  %v1190 = vld [vmem:[%s1189] sm:$0xf]
  %v1191 = vld [vmem:[%s1189 + $0x4] sm:$0xf]
  %v1192 = vld [vmem:[%s1189 + $0x8] sm:$0xf]
  %v1193 = vld [vmem:[%s1189 + $0xc] sm:$0xf]
  %v1194 = vld [vmem:[%s1189 + $0x10] sm:$0xf]
  %v1195 = vld [vmem:[%s1189 + $0x14] sm:$0xf]
  %v1196 = vld [vmem:[%s1189 + $0x18] sm:$0xf]
  %v1197 = vld [vmem:[%s1189 + $0x1c] sm:$0xf]
  %v1198 = vld [vmem:[%s1189 + $0x20] sm:$0xf]
  %v1199 = vld [vmem:[%s1189 + $0x24] sm:$0xf]
  %v1200 = vld [vmem:[%s1189 + $0x28] sm:$0xf]
  %v1201 = vld [vmem:[%s1189 + $0x2c] sm:$0xf]
  %v1202 = vld [vmem:[%s1189 + $0x30] sm:$0xf]
  %v1203 = vld [vmem:[%s1189 + $0x34] sm:$0xf]
  %v1204 = vld [vmem:[%s1189 + $0x38] sm:$0xf]
  %v1205 = vld [vmem:[%s1189 + $0x3c] sm:$0xf]
  %v1222 = vunpack.c.l.b16 %v1190
  %v1223 = vunpack.c.l.b16 %v1191
  %v1224 = vunpack.c.l.b16 %v1192
  %v1225 = vunpack.c.l.b16 %v1193
  %v1226 = vunpack.c.l.b16 %v1194
  %v1227 = vunpack.c.l.b16 %v1195
  %v1228 = vunpack.c.l.b16 %v1196
  %v1229 = vunpack.c.l.b16 %v1197
  %v1230 = vunpack.c.l.b16 %v1198
  %v1231 = vunpack.c.l.b16 %v1199
  %v1232 = vunpack.c.l.b16 %v1200
  %v1233 = vunpack.c.l.b16 %v1201
  %v1234 = vunpack.c.l.b16 %v1202
  %v1235 = vunpack.c.l.b16 %v1203
  %v1236 = vunpack.c.l.b16 %v1204
  %v1237 = vunpack.c.l.b16 %v1205
  %v1238 = vpack.c.b16 %v1223, %v1222
  %v1239 = vpack.c.b16 %v1225, %v1224
  %v1240 = vpack.c.b16 %v1227, %v1226
  %v1241 = vpack.c.b16 %v1229, %v1228
  %v1242 = vpack.c.b16 %v1231, %v1230
  %v1243 = vpack.c.b16 %v1233, %v1232
  %v1244 = vpack.c.b16 %v1235, %v1234
  %v1245 = vpack.c.b16 %v1237, %v1236
  %1254 = vmatprep.subr.bf16.mxu0 0
  %1255 = vmatpush1.bf16.msra.mxu0 %v1245
  %1256 = vmatprep.subr.bf16.mxu0 0
  %1257 = vmatpush1.bf16.msra.mxu0 %v1244
  %1258 = vmatprep.subr.bf16.mxu0 0
  %1259 = vmatpush1.bf16.msra.mxu0 %v1243
  %1260 = vmatprep.subr.bf16.mxu0 0
  %1261 = vmatpush1.bf16.msra.mxu0 %v1242
  %1262 = vmatprep.subr.bf16.mxu0 0
  %1263 = vmatpush1.bf16.msra.mxu0 %v1241
  %1264 = vmatprep.subr.bf16.mxu0 0
  %1265 = vmatpush1.bf16.msra.mxu0 %v1240
  %1266 = vmatprep.subr.bf16.mxu0 0
  %1267 = vmatpush1.bf16.msra.mxu0 %v1239
  %1268 = vmatprep.subr.bf16.mxu0 0
  %1269 = vmatpush1.bf16.msra.mxu0 %v1238
  %1270 = vmatprep.subr.bf16.mxu0 0
  %1271 = vmatpush2.bf16.msra.mxu0 0
  %1272 = vmatprep.subr.bf16.mxu0 0
  %1273 = vmatpush2.bf16.msra.mxu0 0
  %1274 = vmatprep.subr.bf16.mxu0 0
  %1275 = vmatpush2.bf16.msra.mxu0 0
  %1276 = vmatprep.subr.bf16.mxu0 0
  %1277 = vmatpush2.bf16.msra.mxu0 0
  %1278 = vmatprep.subr.bf16.mxu0 0
  %1279 = vmatpush2.bf16.msra.mxu0 0
  %1280 = vmatprep.subr.bf16.mxu0 0
  %1281 = vmatpush2.bf16.msra.mxu0 0
  %1282 = vmatprep.subr.bf16.mxu0 0
  %1283 = vmatpush2.bf16.msra.mxu0 0
  %1284 = vmatprep.subr.bf16.mxu0 0
  %1285 = vmatpush2.bf16.msra.mxu0 0
  %1286 = vmatprep.mubr.bf16.mxu0 0
  %1287 = vmatmul.mubr.bf16.gmra.mxu0 %v866
  %v1288 = vpop.f32.mrf.mxu0
  %v1289 = vadd.f32 0.0, %v1288
  %v1290 = vpop.f32.mrf.mxu0
  %v1291 = vpop.f32.mrf.mxu0
  %v1292 = vpop.f32.mrf.mxu0
  %1293 = vdwg.mxu0
  %v1294 = vpack.c.bf16 %v1289, %v1289
  %s1295 = scalar_lea.vmem %s4, 16
  %v1296 = vld [vmem:[%s1295] sm:$0xf]
  %v1297 = vld [vmem:[%s1295 + $0x4] sm:$0xf]
  %v1300 = vunpack.c.l.b16 %v1296
  %v1301 = vunpack.c.l.b16 %v1297
  %v1302 = vpack.c.b16 %v1301, %v1300
  %v1304 = vsel %vm1088, %v1302, 0
  %v1307 = vsel %vm1092, %v1294, 0
  %1309 = vmatprep.subr.bf16.mxu0 0
  %1310 = vmatpush1.bf16.msra.mxu0 0
  %1311 = vmatprep.subr.bf16.mxu0 0
  %1312 = vmatpush1.bf16.msra.mxu0 0
  %1313 = vmatprep.subr.bf16.mxu0 0
  %1314 = vmatpush1.bf16.msra.mxu0 0
  %1315 = vmatprep.subr.bf16.mxu0 0
  %1316 = vmatpush1.bf16.msra.mxu0 0
  %1317 = vmatprep.subr.bf16.mxu0 0
  %1318 = vmatpush1.bf16.msra.mxu0 0
  %1319 = vmatprep.subr.bf16.mxu0 0
  %1320 = vmatpush1.bf16.msra.mxu0 0
  %1321 = vmatprep.subr.bf16.mxu0 0
  %1322 = vmatpush1.bf16.msra.mxu0 0
  %1323 = vmatprep.subr.bf16.mxu0 0
  %1324 = vmatpush1.bf16.msra.mxu0 %v1307
  %1325 = vmatprep.subr.bf16.mxu0 0
  %1326 = vmatpush2.bf16.msra.mxu0 0
  %1327 = vmatprep.subr.bf16.mxu0 0
  %1328 = vmatpush2.bf16.msra.mxu0 0
  %1329 = vmatprep.subr.bf16.mxu0 0
  %1330 = vmatpush2.bf16.msra.mxu0 0
  %1331 = vmatprep.subr.bf16.mxu0 0
  %1332 = vmatpush2.bf16.msra.mxu0 0
  %1333 = vmatprep.subr.bf16.mxu0 0
  %1334 = vmatpush2.bf16.msra.mxu0 0
  %1335 = vmatprep.subr.bf16.mxu0 0
  %1336 = vmatpush2.bf16.msra.mxu0 0
  %1337 = vmatprep.subr.bf16.mxu0 0
  %1338 = vmatpush2.bf16.msra.mxu0 0
  %1339 = vmatprep.subr.bf16.mxu0 0
  %1340 = vmatpush2.bf16.msra.mxu0 0
  %1341 = vmatprep.mubr.bf16.mxu0 0
  %1342 = vmatmul.mubr.bf16.gmra.mxu0 %v1304
  %v1343 = vpop.f32.mrf.mxu0
  %v1344 = vadd.f32 0.0, %v1343
  %v1345 = vpop.f32.mrf.mxu0
  %v1346 = vpop.f32.mrf.mxu0
  %v1347 = vadd.f32 0.0, %v1346
  %v1348 = vpop.f32.mrf.mxu0
  %1349 = vdwg.mxu0
  %v1350 = vadd.f32 %v1183, %v1344
  %v1351 = vadd.f32 %v1186, %v1347
  %s1352 = scalar_lea.vmem %s3, 192
  %v1353 = vld [vmem:[%s1352] sm:$0xf]
  %v1354 = vld [vmem:[%s1352 + $0x4] sm:$0xf]
  %v1355 = vld [vmem:[%s1352 + $0x8] sm:$0xf]
  %v1356 = vld [vmem:[%s1352 + $0xc] sm:$0xf]
  %v1357 = vld [vmem:[%s1352 + $0x10] sm:$0xf]
  %v1358 = vld [vmem:[%s1352 + $0x14] sm:$0xf]
  %v1359 = vld [vmem:[%s1352 + $0x18] sm:$0xf]
  %v1360 = vld [vmem:[%s1352 + $0x1c] sm:$0xf]
  %v1361 = vld [vmem:[%s1352 + $0x20] sm:$0xf]
  %v1362 = vld [vmem:[%s1352 + $0x24] sm:$0xf]
  %v1363 = vld [vmem:[%s1352 + $0x28] sm:$0xf]
  %v1364 = vld [vmem:[%s1352 + $0x2c] sm:$0xf]
  %v1365 = vld [vmem:[%s1352 + $0x30] sm:$0xf]
  %v1366 = vld [vmem:[%s1352 + $0x34] sm:$0xf]
  %v1367 = vld [vmem:[%s1352 + $0x38] sm:$0xf]
  %v1368 = vld [vmem:[%s1352 + $0x3c] sm:$0xf]
  %v1385 = vunpack.c.l.b16 %v1353
  %v1386 = vunpack.c.l.b16 %v1354
  %v1387 = vunpack.c.l.b16 %v1355
  %v1388 = vunpack.c.l.b16 %v1356
  %v1389 = vunpack.c.l.b16 %v1357
  %v1390 = vunpack.c.l.b16 %v1358
  %v1391 = vunpack.c.l.b16 %v1359
  %v1392 = vunpack.c.l.b16 %v1360
  %v1393 = vunpack.c.l.b16 %v1361
  %v1394 = vunpack.c.l.b16 %v1362
  %v1395 = vunpack.c.l.b16 %v1363
  %v1396 = vunpack.c.l.b16 %v1364
  %v1397 = vunpack.c.l.b16 %v1365
  %v1398 = vunpack.c.l.b16 %v1366
  %v1399 = vunpack.c.l.b16 %v1367
  %v1400 = vunpack.c.l.b16 %v1368
  %v1401 = vpack.c.b16 %v1386, %v1385
  %v1402 = vpack.c.b16 %v1388, %v1387
  %v1403 = vpack.c.b16 %v1390, %v1389
  %v1404 = vpack.c.b16 %v1392, %v1391
  %v1405 = vpack.c.b16 %v1394, %v1393
  %v1406 = vpack.c.b16 %v1396, %v1395
  %v1407 = vpack.c.b16 %v1398, %v1397
  %v1408 = vpack.c.b16 %v1400, %v1399
  %1417 = vmatprep.subr.bf16.mxu0 0
  %1418 = vmatpush1.bf16.msra.mxu0 %v1408
  %1419 = vmatprep.subr.bf16.mxu0 0
  %1420 = vmatpush1.bf16.msra.mxu0 %v1407
  %1421 = vmatprep.subr.bf16.mxu0 0
  %1422 = vmatpush1.bf16.msra.mxu0 %v1406
  %1423 = vmatprep.subr.bf16.mxu0 0
  %1424 = vmatpush1.bf16.msra.mxu0 %v1405
  %1425 = vmatprep.subr.bf16.mxu0 0
  %1426 = vmatpush1.bf16.msra.mxu0 %v1404
  %1427 = vmatprep.subr.bf16.mxu0 0
  %1428 = vmatpush1.bf16.msra.mxu0 %v1403
  %1429 = vmatprep.subr.bf16.mxu0 0
  %1430 = vmatpush1.bf16.msra.mxu0 %v1402
  %1431 = vmatprep.subr.bf16.mxu0 0
  %1432 = vmatpush1.bf16.msra.mxu0 %v1401
  %1433 = vmatprep.subr.bf16.mxu0 0
  %1434 = vmatpush2.bf16.msra.mxu0 0
  %1435 = vmatprep.subr.bf16.mxu0 0
  %1436 = vmatpush2.bf16.msra.mxu0 0
  %1437 = vmatprep.subr.bf16.mxu0 0
  %1438 = vmatpush2.bf16.msra.mxu0 0
  %1439 = vmatprep.subr.bf16.mxu0 0
  %1440 = vmatpush2.bf16.msra.mxu0 0
  %1441 = vmatprep.subr.bf16.mxu0 0
  %1442 = vmatpush2.bf16.msra.mxu0 0
  %1443 = vmatprep.subr.bf16.mxu0 0
  %1444 = vmatpush2.bf16.msra.mxu0 0
  %1445 = vmatprep.subr.bf16.mxu0 0
  %1446 = vmatpush2.bf16.msra.mxu0 0
  %1447 = vmatprep.subr.bf16.mxu0 0
  %1448 = vmatpush2.bf16.msra.mxu0 0
  %1449 = vmatprep.mubr.bf16.mxu0 0
  %1450 = vmatmul.mubr.bf16.gmra.mxu0 %v866
  %v1451 = vpop.f32.mrf.mxu0
  %v1452 = vadd.f32 0.0, %v1451
  %v1453 = vpop.f32.mrf.mxu0
  %v1454 = vpop.f32.mrf.mxu0
  %v1455 = vpop.f32.mrf.mxu0
  %1456 = vdwg.mxu0
  %v1457 = vpack.c.bf16 %v1452, %v1452
  %s1458 = scalar_lea.vmem %s4, 24
  %v1459 = vld [vmem:[%s1458] sm:$0xf]
  %v1460 = vld [vmem:[%s1458 + $0x4] sm:$0xf]
  %v1463 = vunpack.c.l.b16 %v1459
  %v1464 = vunpack.c.l.b16 %v1460
  %v1465 = vpack.c.b16 %v1464, %v1463
  %v1467 = vsel %vm1088, %v1465, 0
  %v1470 = vsel %vm1092, %v1457, 0
  %1472 = vmatprep.subr.bf16.mxu0 0
  %1473 = vmatpush1.bf16.msra.mxu0 0
  %1474 = vmatprep.subr.bf16.mxu0 0
  %1475 = vmatpush1.bf16.msra.mxu0 0
  %1476 = vmatprep.subr.bf16.mxu0 0
  %1477 = vmatpush1.bf16.msra.mxu0 0
  %1478 = vmatprep.subr.bf16.mxu0 0
  %1479 = vmatpush1.bf16.msra.mxu0 0
  %1480 = vmatprep.subr.bf16.mxu0 0
  %1481 = vmatpush1.bf16.msra.mxu0 0
  %1482 = vmatprep.subr.bf16.mxu0 0
  %1483 = vmatpush1.bf16.msra.mxu0 0
  %1484 = vmatprep.subr.bf16.mxu0 0
  %1485 = vmatpush1.bf16.msra.mxu0 0
  %1486 = vmatprep.subr.bf16.mxu0 0
  %1487 = vmatpush1.bf16.msra.mxu0 %v1470
  %1488 = vmatprep.subr.bf16.mxu0 0
  %1489 = vmatpush2.bf16.msra.mxu0 0
  %1490 = vmatprep.subr.bf16.mxu0 0
  %1491 = vmatpush2.bf16.msra.mxu0 0
  %1492 = vmatprep.subr.bf16.mxu0 0
  %1493 = vmatpush2.bf16.msra.mxu0 0
  %1494 = vmatprep.subr.bf16.mxu0 0
  %1495 = vmatpush2.bf16.msra.mxu0 0
  %1496 = vmatprep.subr.bf16.mxu0 0
  %1497 = vmatpush2.bf16.msra.mxu0 0
  %1498 = vmatprep.subr.bf16.mxu0 0
  %1499 = vmatpush2.bf16.msra.mxu0 0
  %1500 = vmatprep.subr.bf16.mxu0 0
  %1501 = vmatpush2.bf16.msra.mxu0 0
  %1502 = vmatprep.subr.bf16.mxu0 0
  %1503 = vmatpush2.bf16.msra.mxu0 0
  %1504 = vmatprep.mubr.bf16.mxu0 0
  %1505 = vmatmul.mubr.bf16.gmra.mxu0 %v1467
  %v1506 = vpop.f32.mrf.mxu0
  %v1507 = vadd.f32 0.0, %v1506
  %v1508 = vpop.f32.mrf.mxu0
  %v1509 = vpop.f32.mrf.mxu0
  %v1510 = vadd.f32 0.0, %v1509
  %v1511 = vpop.f32.mrf.mxu0
  %1512 = vdwg.mxu0
  %v1513 = vadd.f32 %v1350, %v1507
  %v1514 = vadd.f32 %v1351, %v1510
  %s1515 = scalar_lea.vmem %s3, 256
  %v1516 = vld [vmem:[%s1515] sm:$0xf]
  %v1517 = vld [vmem:[%s1515 + $0x4] sm:$0xf]
  %v1518 = vld [vmem:[%s1515 + $0x8] sm:$0xf]
  %v1519 = vld [vmem:[%s1515 + $0xc] sm:$0xf]
  %v1520 = vld [vmem:[%s1515 + $0x10] sm:$0xf]
  %v1521 = vld [vmem:[%s1515 + $0x14] sm:$0xf]
  %v1522 = vld [vmem:[%s1515 + $0x18] sm:$0xf]
  %v1523 = vld [vmem:[%s1515 + $0x1c] sm:$0xf]
  %v1524 = vld [vmem:[%s1515 + $0x20] sm:$0xf]
  %v1525 = vld [vmem:[%s1515 + $0x24] sm:$0xf]
  %v1526 = vld [vmem:[%s1515 + $0x28] sm:$0xf]
  %v1527 = vld [vmem:[%s1515 + $0x2c] sm:$0xf]
  %v1528 = vld [vmem:[%s1515 + $0x30] sm:$0xf]
  %v1529 = vld [vmem:[%s1515 + $0x34] sm:$0xf]
  %v1530 = vld [vmem:[%s1515 + $0x38] sm:$0xf]
  %v1531 = vld [vmem:[%s1515 + $0x3c] sm:$0xf]
  %v1548 = vunpack.c.l.b16 %v1516
  %v1549 = vunpack.c.l.b16 %v1517
  %v1550 = vunpack.c.l.b16 %v1518
  %v1551 = vunpack.c.l.b16 %v1519
  %v1552 = vunpack.c.l.b16 %v1520
  %v1553 = vunpack.c.l.b16 %v1521
  %v1554 = vunpack.c.l.b16 %v1522
  %v1555 = vunpack.c.l.b16 %v1523
  %v1556 = vunpack.c.l.b16 %v1524
  %v1557 = vunpack.c.l.b16 %v1525
  %v1558 = vunpack.c.l.b16 %v1526
  %v1559 = vunpack.c.l.b16 %v1527
  %v1560 = vunpack.c.l.b16 %v1528
  %v1561 = vunpack.c.l.b16 %v1529
  %v1562 = vunpack.c.l.b16 %v1530
  %v1563 = vunpack.c.l.b16 %v1531
  %v1564 = vpack.c.b16 %v1549, %v1548
  %v1565 = vpack.c.b16 %v1551, %v1550
  %v1566 = vpack.c.b16 %v1553, %v1552
  %v1567 = vpack.c.b16 %v1555, %v1554
  %v1568 = vpack.c.b16 %v1557, %v1556
  %v1569 = vpack.c.b16 %v1559, %v1558
  %v1570 = vpack.c.b16 %v1561, %v1560
  %v1571 = vpack.c.b16 %v1563, %v1562
  %1580 = vmatprep.subr.bf16.mxu0 0
  %1581 = vmatpush1.bf16.msra.mxu0 %v1571
  %1582 = vmatprep.subr.bf16.mxu0 0
  %1583 = vmatpush1.bf16.msra.mxu0 %v1570
  %1584 = vmatprep.subr.bf16.mxu0 0
  %1585 = vmatpush1.bf16.msra.mxu0 %v1569
  %1586 = vmatprep.subr.bf16.mxu0 0
  %1587 = vmatpush1.bf16.msra.mxu0 %v1568
  %1588 = vmatprep.subr.bf16.mxu0 0
  %1589 = vmatpush1.bf16.msra.mxu0 %v1567
  %1590 = vmatprep.subr.bf16.mxu0 0
  %1591 = vmatpush1.bf16.msra.mxu0 %v1566
  %1592 = vmatprep.subr.bf16.mxu0 0
  %1593 = vmatpush1.bf16.msra.mxu0 %v1565
  %1594 = vmatprep.subr.bf16.mxu0 0
  %1595 = vmatpush1.bf16.msra.mxu0 %v1564
  %1596 = vmatprep.subr.bf16.mxu0 0
  %1597 = vmatpush2.bf16.msra.mxu0 0
  %1598 = vmatprep.subr.bf16.mxu0 0
  %1599 = vmatpush2.bf16.msra.mxu0 0
  %1600 = vmatprep.subr.bf16.mxu0 0
  %1601 = vmatpush2.bf16.msra.mxu0 0
  %1602 = vmatprep.subr.bf16.mxu0 0
  %1603 = vmatpush2.bf16.msra.mxu0 0
  %1604 = vmatprep.subr.bf16.mxu0 0
  %1605 = vmatpush2.bf16.msra.mxu0 0
  %1606 = vmatprep.subr.bf16.mxu0 0
  %1607 = vmatpush2.bf16.msra.mxu0 0
  %1608 = vmatprep.subr.bf16.mxu0 0
  %1609 = vmatpush2.bf16.msra.mxu0 0
  %1610 = vmatprep.subr.bf16.mxu0 0
  %1611 = vmatpush2.bf16.msra.mxu0 0
  %1612 = vmatprep.mubr.bf16.mxu0 0
  %1613 = vmatmul.mubr.bf16.gmra.mxu0 %v866
  %v1614 = vpop.f32.mrf.mxu0
  %v1615 = vadd.f32 0.0, %v1614
  %v1616 = vpop.f32.mrf.mxu0
  %v1617 = vpop.f32.mrf.mxu0
  %v1618 = vpop.f32.mrf.mxu0
  %1619 = vdwg.mxu0
  %v1620 = vpack.c.bf16 %v1615, %v1615
  %s1621 = scalar_lea.vmem %s4, 32
  %v1622 = vld [vmem:[%s1621] sm:$0xf]
  %v1623 = vld [vmem:[%s1621 + $0x4] sm:$0xf]
  %v1626 = vunpack.c.l.b16 %v1622
  %v1627 = vunpack.c.l.b16 %v1623
  %v1628 = vpack.c.b16 %v1627, %v1626
  %v1630 = vsel %vm1088, %v1628, 0
  %v1633 = vsel %vm1092, %v1620, 0
  %1635 = vmatprep.subr.bf16.mxu0 0
  %1636 = vmatpush1.bf16.msra.mxu0 0
  %1637 = vmatprep.subr.bf16.mxu0 0
  %1638 = vmatpush1.bf16.msra.mxu0 0
  %1639 = vmatprep.subr.bf16.mxu0 0
  %1640 = vmatpush1.bf16.msra.mxu0 0
  %1641 = vmatprep.subr.bf16.mxu0 0
  %1642 = vmatpush1.bf16.msra.mxu0 0
  %1643 = vmatprep.subr.bf16.mxu0 0
  %1644 = vmatpush1.bf16.msra.mxu0 0
  %1645 = vmatprep.subr.bf16.mxu0 0
  %1646 = vmatpush1.bf16.msra.mxu0 0
  %1647 = vmatprep.subr.bf16.mxu0 0
  %1648 = vmatpush1.bf16.msra.mxu0 0
  %1649 = vmatprep.subr.bf16.mxu0 0
  %1650 = vmatpush1.bf16.msra.mxu0 %v1633
  %1651 = vmatprep.subr.bf16.mxu0 0
  %1652 = vmatpush2.bf16.msra.mxu0 0
  %1653 = vmatprep.subr.bf16.mxu0 0
  %1654 = vmatpush2.bf16.msra.mxu0 0
  %1655 = vmatprep.subr.bf16.mxu0 0
  %1656 = vmatpush2.bf16.msra.mxu0 0
  %1657 = vmatprep.subr.bf16.mxu0 0
  %1658 = vmatpush2.bf16.msra.mxu0 0
  %1659 = vmatprep.subr.bf16.mxu0 0
  %1660 = vmatpush2.bf16.msra.mxu0 0
  %1661 = vmatprep.subr.bf16.mxu0 0
  %1662 = vmatpush2.bf16.msra.mxu0 0
  %1663 = vmatprep.subr.bf16.mxu0 0
  %1664 = vmatpush2.bf16.msra.mxu0 0
  %1665 = vmatprep.subr.bf16.mxu0 0
  %1666 = vmatpush2.bf16.msra.mxu0 0
  %1667 = vmatprep.mubr.bf16.mxu0 0
  %1668 = vmatmul.mubr.bf16.gmra.mxu0 %v1630
  %v1669 = vpop.f32.mrf.mxu0
  %v1670 = vadd.f32 0.0, %v1669
  %v1671 = vpop.f32.mrf.mxu0
  %v1672 = vpop.f32.mrf.mxu0
  %v1673 = vadd.f32 0.0, %v1672
  %v1674 = vpop.f32.mrf.mxu0
  %1675 = vdwg.mxu0
  %v1676 = vadd.f32 %v1513, %v1670
  %v1677 = vadd.f32 %v1514, %v1673
  %s1678 = scalar_lea.vmem %s3, 320
  %v1679 = vld [vmem:[%s1678] sm:$0xf]
  %v1680 = vld [vmem:[%s1678 + $0x4] sm:$0xf]
  %v1681 = vld [vmem:[%s1678 + $0x8] sm:$0xf]
  %v1682 = vld [vmem:[%s1678 + $0xc] sm:$0xf]
  %v1683 = vld [vmem:[%s1678 + $0x10] sm:$0xf]
  %v1684 = vld [vmem:[%s1678 + $0x14] sm:$0xf]
  %v1685 = vld [vmem:[%s1678 + $0x18] sm:$0xf]
  %v1686 = vld [vmem:[%s1678 + $0x1c] sm:$0xf]
  %v1687 = vld [vmem:[%s1678 + $0x20] sm:$0xf]
  %v1688 = vld [vmem:[%s1678 + $0x24] sm:$0xf]
  %v1689 = vld [vmem:[%s1678 + $0x28] sm:$0xf]
  %v1690 = vld [vmem:[%s1678 + $0x2c] sm:$0xf]
  %v1691 = vld [vmem:[%s1678 + $0x30] sm:$0xf]
  %v1692 = vld [vmem:[%s1678 + $0x34] sm:$0xf]
  %v1693 = vld [vmem:[%s1678 + $0x38] sm:$0xf]
  %v1694 = vld [vmem:[%s1678 + $0x3c] sm:$0xf]
  %v1711 = vunpack.c.l.b16 %v1679
  %v1712 = vunpack.c.l.b16 %v1680
  %v1713 = vunpack.c.l.b16 %v1681
  %v1714 = vunpack.c.l.b16 %v1682
  %v1715 = vunpack.c.l.b16 %v1683
  %v1716 = vunpack.c.l.b16 %v1684
  %v1717 = vunpack.c.l.b16 %v1685
  %v1718 = vunpack.c.l.b16 %v1686
  %v1719 = vunpack.c.l.b16 %v1687
  %v1720 = vunpack.c.l.b16 %v1688
  %v1721 = vunpack.c.l.b16 %v1689
  %v1722 = vunpack.c.l.b16 %v1690
  %v1723 = vunpack.c.l.b16 %v1691
  %v1724 = vunpack.c.l.b16 %v1692
  %v1725 = vunpack.c.l.b16 %v1693
  %v1726 = vunpack.c.l.b16 %v1694
  %v1727 = vpack.c.b16 %v1712, %v1711
  %v1728 = vpack.c.b16 %v1714, %v1713
  %v1729 = vpack.c.b16 %v1716, %v1715
  %v1730 = vpack.c.b16 %v1718, %v1717
  %v1731 = vpack.c.b16 %v1720, %v1719
  %v1732 = vpack.c.b16 %v1722, %v1721
  %v1733 = vpack.c.b16 %v1724, %v1723
  %v1734 = vpack.c.b16 %v1726, %v1725
  %1743 = vmatprep.subr.bf16.mxu0 0
  %1744 = vmatpush1.bf16.msra.mxu0 %v1734
  %1745 = vmatprep.subr.bf16.mxu0 0
  %1746 = vmatpush1.bf16.msra.mxu0 %v1733
  %1747 = vmatprep.subr.bf16.mxu0 0
  %1748 = vmatpush1.bf16.msra.mxu0 %v1732
  %1749 = vmatprep.subr.bf16.mxu0 0
  %1750 = vmatpush1.bf16.msra.mxu0 %v1731
  %1751 = vmatprep.subr.bf16.mxu0 0
  %1752 = vmatpush1.bf16.msra.mxu0 %v1730
  %1753 = vmatprep.subr.bf16.mxu0 0
  %1754 = vmatpush1.bf16.msra.mxu0 %v1729
  %1755 = vmatprep.subr.bf16.mxu0 0
  %1756 = vmatpush1.bf16.msra.mxu0 %v1728
  %1757 = vmatprep.subr.bf16.mxu0 0
  %1758 = vmatpush1.bf16.msra.mxu0 %v1727
  %1759 = vmatprep.subr.bf16.mxu0 0
  %1760 = vmatpush2.bf16.msra.mxu0 0
  %1761 = vmatprep.subr.bf16.mxu0 0
  %1762 = vmatpush2.bf16.msra.mxu0 0
  %1763 = vmatprep.subr.bf16.mxu0 0
  %1764 = vmatpush2.bf16.msra.mxu0 0
  %1765 = vmatprep.subr.bf16.mxu0 0
  %1766 = vmatpush2.bf16.msra.mxu0 0
  %1767 = vmatprep.subr.bf16.mxu0 0
  %1768 = vmatpush2.bf16.msra.mxu0 0
  %1769 = vmatprep.subr.bf16.mxu0 0
  %1770 = vmatpush2.bf16.msra.mxu0 0
  %1771 = vmatprep.subr.bf16.mxu0 0
  %1772 = vmatpush2.bf16.msra.mxu0 0
  %1773 = vmatprep.subr.bf16.mxu0 0
  %1774 = vmatpush2.bf16.msra.mxu0 0
  %1775 = vmatprep.mubr.bf16.mxu0 0
  %1776 = vmatmul.mubr.bf16.gmra.mxu0 %v866
  %v1777 = vpop.f32.mrf.mxu0
  %v1778 = vadd.f32 0.0, %v1777
  %v1779 = vpop.f32.mrf.mxu0
  %v1780 = vpop.f32.mrf.mxu0
  %v1781 = vpop.f32.mrf.mxu0
  %1782 = vdwg.mxu0
  %v1783 = vpack.c.bf16 %v1778, %v1778
  %s1784 = scalar_lea.vmem %s4, 40
  %v1785 = vld [vmem:[%s1784] sm:$0xf]
  %v1786 = vld [vmem:[%s1784 + $0x4] sm:$0xf]
  %v1789 = vunpack.c.l.b16 %v1785
  %v1790 = vunpack.c.l.b16 %v1786
  %v1791 = vpack.c.b16 %v1790, %v1789
  %v1793 = vsel %vm1088, %v1791, 0
  %v1796 = vsel %vm1092, %v1783, 0
  %1798 = vmatprep.subr.bf16.mxu0 0
  %1799 = vmatpush1.bf16.msra.mxu0 0
  %1800 = vmatprep.subr.bf16.mxu0 0
  %1801 = vmatpush1.bf16.msra.mxu0 0
  %1802 = vmatprep.subr.bf16.mxu0 0
  %1803 = vmatpush1.bf16.msra.mxu0 0
  %1804 = vmatprep.subr.bf16.mxu0 0
  %1805 = vmatpush1.bf16.msra.mxu0 0
  %1806 = vmatprep.subr.bf16.mxu0 0
  %1807 = vmatpush1.bf16.msra.mxu0 0
  %1808 = vmatprep.subr.bf16.mxu0 0
  %1809 = vmatpush1.bf16.msra.mxu0 0
  %1810 = vmatprep.subr.bf16.mxu0 0
  %1811 = vmatpush1.bf16.msra.mxu0 0
  %1812 = vmatprep.subr.bf16.mxu0 0
  %1813 = vmatpush1.bf16.msra.mxu0 %v1796
  %1814 = vmatprep.subr.bf16.mxu0 0
  %1815 = vmatpush2.bf16.msra.mxu0 0
  %1816 = vmatprep.subr.bf16.mxu0 0
  %1817 = vmatpush2.bf16.msra.mxu0 0
  %1818 = vmatprep.subr.bf16.mxu0 0
  %1819 = vmatpush2.bf16.msra.mxu0 0
  %1820 = vmatprep.subr.bf16.mxu0 0
  %1821 = vmatpush2.bf16.msra.mxu0 0
  %1822 = vmatprep.subr.bf16.mxu0 0
  %1823 = vmatpush2.bf16.msra.mxu0 0
  %1824 = vmatprep.subr.bf16.mxu0 0
  %1825 = vmatpush2.bf16.msra.mxu0 0
  %1826 = vmatprep.subr.bf16.mxu0 0
  %1827 = vmatpush2.bf16.msra.mxu0 0
  %1828 = vmatprep.subr.bf16.mxu0 0
  %1829 = vmatpush2.bf16.msra.mxu0 0
  %1830 = vmatprep.mubr.bf16.mxu0 0
  %1831 = vmatmul.mubr.bf16.gmra.mxu0 %v1793
  %v1832 = vpop.f32.mrf.mxu0
  %v1833 = vadd.f32 0.0, %v1832
  %v1834 = vpop.f32.mrf.mxu0
  %v1835 = vpop.f32.mrf.mxu0
  %v1836 = vadd.f32 0.0, %v1835
  %v1837 = vpop.f32.mrf.mxu0
  %1838 = vdwg.mxu0
  %v1839 = vadd.f32 %v1676, %v1833
  %v1840 = vadd.f32 %v1677, %v1836
  %s1841 = scalar_lea.vmem %s3, 384
  %v1842 = vld [vmem:[%s1841] sm:$0xf]
  %v1843 = vld [vmem:[%s1841 + $0x4] sm:$0xf]
  %v1844 = vld [vmem:[%s1841 + $0x8] sm:$0xf]
  %v1845 = vld [vmem:[%s1841 + $0xc] sm:$0xf]
  %v1846 = vld [vmem:[%s1841 + $0x10] sm:$0xf]
  %v1847 = vld [vmem:[%s1841 + $0x14] sm:$0xf]
  %v1848 = vld [vmem:[%s1841 + $0x18] sm:$0xf]
  %v1849 = vld [vmem:[%s1841 + $0x1c] sm:$0xf]
  %v1850 = vld [vmem:[%s1841 + $0x20] sm:$0xf]
  %v1851 = vld [vmem:[%s1841 + $0x24] sm:$0xf]
  %v1852 = vld [vmem:[%s1841 + $0x28] sm:$0xf]
  %v1853 = vld [vmem:[%s1841 + $0x2c] sm:$0xf]
  %v1854 = vld [vmem:[%s1841 + $0x30] sm:$0xf]
  %v1855 = vld [vmem:[%s1841 + $0x34] sm:$0xf]
  %v1856 = vld [vmem:[%s1841 + $0x38] sm:$0xf]
  %v1857 = vld [vmem:[%s1841 + $0x3c] sm:$0xf]
  %v1874 = vunpack.c.l.b16 %v1842
  %v1875 = vunpack.c.l.b16 %v1843
  %v1876 = vunpack.c.l.b16 %v1844
  %v1877 = vunpack.c.l.b16 %v1845
  %v1878 = vunpack.c.l.b16 %v1846
  %v1879 = vunpack.c.l.b16 %v1847
  %v1880 = vunpack.c.l.b16 %v1848
  %v1881 = vunpack.c.l.b16 %v1849
  %v1882 = vunpack.c.l.b16 %v1850
  %v1883 = vunpack.c.l.b16 %v1851
  %v1884 = vunpack.c.l.b16 %v1852
  %v1885 = vunpack.c.l.b16 %v1853
  %v1886 = vunpack.c.l.b16 %v1854
  %v1887 = vunpack.c.l.b16 %v1855
  %v1888 = vunpack.c.l.b16 %v1856
  %v1889 = vunpack.c.l.b16 %v1857
  %v1890 = vpack.c.b16 %v1875, %v1874
  %v1891 = vpack.c.b16 %v1877, %v1876
  %v1892 = vpack.c.b16 %v1879, %v1878
  %v1893 = vpack.c.b16 %v1881, %v1880
  %v1894 = vpack.c.b16 %v1883, %v1882
  %v1895 = vpack.c.b16 %v1885, %v1884
  %v1896 = vpack.c.b16 %v1887, %v1886
  %v1897 = vpack.c.b16 %v1889, %v1888
  %1906 = vmatprep.subr.bf16.mxu0 0
  %1907 = vmatpush1.bf16.msra.mxu0 %v1897
  %1908 = vmatprep.subr.bf16.mxu0 0
  %1909 = vmatpush1.bf16.msra.mxu0 %v1896
  %1910 = vmatprep.subr.bf16.mxu0 0
  %1911 = vmatpush1.bf16.msra.mxu0 %v1895
  %1912 = vmatprep.subr.bf16.mxu0 0
  %1913 = vmatpush1.bf16.msra.mxu0 %v1894
  %1914 = vmatprep.subr.bf16.mxu0 0
  %1915 = vmatpush1.bf16.msra.mxu0 %v1893
  %1916 = vmatprep.subr.bf16.mxu0 0
  %1917 = vmatpush1.bf16.msra.mxu0 %v1892
  %1918 = vmatprep.subr.bf16.mxu0 0
  %1919 = vmatpush1.bf16.msra.mxu0 %v1891
  %1920 = vmatprep.subr.bf16.mxu0 0
  %1921 = vmatpush1.bf16.msra.mxu0 %v1890
  %1922 = vmatprep.subr.bf16.mxu0 0
  %1923 = vmatpush2.bf16.msra.mxu0 0
  %1924 = vmatprep.subr.bf16.mxu0 0
  %1925 = vmatpush2.bf16.msra.mxu0 0
  %1926 = vmatprep.subr.bf16.mxu0 0
  %1927 = vmatpush2.bf16.msra.mxu0 0
  %1928 = vmatprep.subr.bf16.mxu0 0
  %1929 = vmatpush2.bf16.msra.mxu0 0
  %1930 = vmatprep.subr.bf16.mxu0 0
  %1931 = vmatpush2.bf16.msra.mxu0 0
  %1932 = vmatprep.subr.bf16.mxu0 0
  %1933 = vmatpush2.bf16.msra.mxu0 0
  %1934 = vmatprep.subr.bf16.mxu0 0
  %1935 = vmatpush2.bf16.msra.mxu0 0
  %1936 = vmatprep.subr.bf16.mxu0 0
  %1937 = vmatpush2.bf16.msra.mxu0 0
  %1938 = vmatprep.mubr.bf16.mxu0 0
  %1939 = vmatmul.mubr.bf16.gmra.mxu0 %v866
  %v1940 = vpop.f32.mrf.mxu0
  %v1941 = vadd.f32 0.0, %v1940
  %v1942 = vpop.f32.mrf.mxu0
  %v1943 = vpop.f32.mrf.mxu0
  %v1944 = vpop.f32.mrf.mxu0
  %1945 = vdwg.mxu0
  %v1946 = vpack.c.bf16 %v1941, %v1941
  %s1947 = scalar_lea.vmem %s4, 48
  %v1948 = vld [vmem:[%s1947] sm:$0xf]
  %v1949 = vld [vmem:[%s1947 + $0x4] sm:$0xf]
  %v1952 = vunpack.c.l.b16 %v1948
  %v1953 = vunpack.c.l.b16 %v1949
  %v1954 = vpack.c.b16 %v1953, %v1952
  %v1956 = vsel %vm1088, %v1954, 0
  %v1959 = vsel %vm1092, %v1946, 0
  %1961 = vmatprep.subr.bf16.mxu0 0
  %1962 = vmatpush1.bf16.msra.mxu0 0
  %1963 = vmatprep.subr.bf16.mxu0 0
  %1964 = vmatpush1.bf16.msra.mxu0 0
  %1965 = vmatprep.subr.bf16.mxu0 0
  %1966 = vmatpush1.bf16.msra.mxu0 0
  %1967 = vmatprep.subr.bf16.mxu0 0
  %1968 = vmatpush1.bf16.msra.mxu0 0
  %1969 = vmatprep.subr.bf16.mxu0 0
  %1970 = vmatpush1.bf16.msra.mxu0 0
  %1971 = vmatprep.subr.bf16.mxu0 0
  %1972 = vmatpush1.bf16.msra.mxu0 0
  %1973 = vmatprep.subr.bf16.mxu0 0
  %1974 = vmatpush1.bf16.msra.mxu0 0
  %1975 = vmatprep.subr.bf16.mxu0 0
  %1976 = vmatpush1.bf16.msra.mxu0 %v1959
  %1977 = vmatprep.subr.bf16.mxu0 0
  %1978 = vmatpush2.bf16.msra.mxu0 0
  %1979 = vmatprep.subr.bf16.mxu0 0
  %1980 = vmatpush2.bf16.msra.mxu0 0
  %1981 = vmatprep.subr.bf16.mxu0 0
  %1982 = vmatpush2.bf16.msra.mxu0 0
  %1983 = vmatprep.subr.bf16.mxu0 0
  %1984 = vmatpush2.bf16.msra.mxu0 0
  %1985 = vmatprep.subr.bf16.mxu0 0
  %1986 = vmatpush2.bf16.msra.mxu0 0
  %1987 = vmatprep.subr.bf16.mxu0 0
  %1988 = vmatpush2.bf16.msra.mxu0 0
  %1989 = vmatprep.subr.bf16.mxu0 0
  %1990 = vmatpush2.bf16.msra.mxu0 0
  %1991 = vmatprep.subr.bf16.mxu0 0
  %1992 = vmatpush2.bf16.msra.mxu0 0
  %1993 = vmatprep.mubr.bf16.mxu0 0
  %1994 = vmatmul.mubr.bf16.gmra.mxu0 %v1956
  %v1995 = vpop.f32.mrf.mxu0
  %v1996 = vadd.f32 0.0, %v1995
  %v1997 = vpop.f32.mrf.mxu0
  %v1998 = vpop.f32.mrf.mxu0
  %v1999 = vadd.f32 0.0, %v1998
  %v2000 = vpop.f32.mrf.mxu0
  %2001 = vdwg.mxu0
  %v2002 = vadd.f32 %v1839, %v1996
  %v2003 = vadd.f32 %v1840, %v1999
  %s2004 = scalar_lea.vmem %s3, 448
  %v2005 = vld [vmem:[%s2004] sm:$0xf]
  %v2006 = vld [vmem:[%s2004 + $0x4] sm:$0xf]
  %v2007 = vld [vmem:[%s2004 + $0x8] sm:$0xf]
  %v2008 = vld [vmem:[%s2004 + $0xc] sm:$0xf]
  %v2009 = vld [vmem:[%s2004 + $0x10] sm:$0xf]
  %v2010 = vld [vmem:[%s2004 + $0x14] sm:$0xf]
  %v2011 = vld [vmem:[%s2004 + $0x18] sm:$0xf]
  %v2012 = vld [vmem:[%s2004 + $0x1c] sm:$0xf]
  %v2013 = vld [vmem:[%s2004 + $0x20] sm:$0xf]
  %v2014 = vld [vmem:[%s2004 + $0x24] sm:$0xf]
  %v2015 = vld [vmem:[%s2004 + $0x28] sm:$0xf]
  %v2016 = vld [vmem:[%s2004 + $0x2c] sm:$0xf]
  %v2017 = vld [vmem:[%s2004 + $0x30] sm:$0xf]
  %v2018 = vld [vmem:[%s2004 + $0x34] sm:$0xf]
  %v2019 = vld [vmem:[%s2004 + $0x38] sm:$0xf]
  %v2020 = vld [vmem:[%s2004 + $0x3c] sm:$0xf]
  %v2037 = vunpack.c.l.b16 %v2005
  %v2038 = vunpack.c.l.b16 %v2006
  %v2039 = vunpack.c.l.b16 %v2007
  %v2040 = vunpack.c.l.b16 %v2008
  %v2041 = vunpack.c.l.b16 %v2009
  %v2042 = vunpack.c.l.b16 %v2010
  %v2043 = vunpack.c.l.b16 %v2011
  %v2044 = vunpack.c.l.b16 %v2012
  %v2045 = vunpack.c.l.b16 %v2013
  %v2046 = vunpack.c.l.b16 %v2014
  %v2047 = vunpack.c.l.b16 %v2015
  %v2048 = vunpack.c.l.b16 %v2016
  %v2049 = vunpack.c.l.b16 %v2017
  %v2050 = vunpack.c.l.b16 %v2018
  %v2051 = vunpack.c.l.b16 %v2019
  %v2052 = vunpack.c.l.b16 %v2020
  %v2053 = vpack.c.b16 %v2038, %v2037
  %v2054 = vpack.c.b16 %v2040, %v2039
  %v2055 = vpack.c.b16 %v2042, %v2041
  %v2056 = vpack.c.b16 %v2044, %v2043
  %v2057 = vpack.c.b16 %v2046, %v2045
  %v2058 = vpack.c.b16 %v2048, %v2047
  %v2059 = vpack.c.b16 %v2050, %v2049
  %v2060 = vpack.c.b16 %v2052, %v2051
  %2069 = vmatprep.subr.bf16.mxu0 0
  %2070 = vmatpush1.bf16.msra.mxu0 %v2060
  %2071 = vmatprep.subr.bf16.mxu0 0
  %2072 = vmatpush1.bf16.msra.mxu0 %v2059
  %2073 = vmatprep.subr.bf16.mxu0 0
  %2074 = vmatpush1.bf16.msra.mxu0 %v2058
  %2075 = vmatprep.subr.bf16.mxu0 0
  %2076 = vmatpush1.bf16.msra.mxu0 %v2057
  %2077 = vmatprep.subr.bf16.mxu0 0
  %2078 = vmatpush1.bf16.msra.mxu0 %v2056
  %2079 = vmatprep.subr.bf16.mxu0 0
  %2080 = vmatpush1.bf16.msra.mxu0 %v2055
  %2081 = vmatprep.subr.bf16.mxu0 0
  %2082 = vmatpush1.bf16.msra.mxu0 %v2054
  %2083 = vmatprep.subr.bf16.mxu0 0
  %2084 = vmatpush1.bf16.msra.mxu0 %v2053
  %2085 = vmatprep.subr.bf16.mxu0 0
  %2086 = vmatpush2.bf16.msra.mxu0 0
  %2087 = vmatprep.subr.bf16.mxu0 0
  %2088 = vmatpush2.bf16.msra.mxu0 0
  %2089 = vmatprep.subr.bf16.mxu0 0
  %2090 = vmatpush2.bf16.msra.mxu0 0
  %2091 = vmatprep.subr.bf16.mxu0 0
  %2092 = vmatpush2.bf16.msra.mxu0 0
  %2093 = vmatprep.subr.bf16.mxu0 0
  %2094 = vmatpush2.bf16.msra.mxu0 0
  %2095 = vmatprep.subr.bf16.mxu0 0
  %2096 = vmatpush2.bf16.msra.mxu0 0
  %2097 = vmatprep.subr.bf16.mxu0 0
  %2098 = vmatpush2.bf16.msra.mxu0 0
  %2099 = vmatprep.subr.bf16.mxu0 0
  %2100 = vmatpush2.bf16.msra.mxu0 0
  %2101 = vmatprep.mubr.bf16.mxu0 0
  %2102 = vmatmul.mubr.bf16.gmra.mxu0 %v866
  %v2103 = vpop.f32.mrf.mxu0
  %v2104 = vadd.f32 0.0, %v2103
  %v2105 = vpop.f32.mrf.mxu0
  %v2106 = vpop.f32.mrf.mxu0
  %v2107 = vpop.f32.mrf.mxu0
  %2108 = vdwg.mxu0
  %v2109 = vpack.c.bf16 %v2104, %v2104
  %s2110 = scalar_lea.vmem %s4, 56
  %v2111 = vld [vmem:[%s2110] sm:$0xf]
  %v2112 = vld [vmem:[%s2110 + $0x4] sm:$0xf]
  %v2115 = vunpack.c.l.b16 %v2111
  %v2116 = vunpack.c.l.b16 %v2112
  %v2117 = vpack.c.b16 %v2116, %v2115
  %v2119 = vsel %vm1088, %v2117, 0
  %v2122 = vsel %vm1092, %v2109, 0
  %2124 = vmatprep.subr.bf16.mxu0 0
  %2125 = vmatpush1.bf16.msra.mxu0 0
  %2126 = vmatprep.subr.bf16.mxu0 0
  %2127 = vmatpush1.bf16.msra.mxu0 0
  %2128 = vmatprep.subr.bf16.mxu0 0
  %2129 = vmatpush1.bf16.msra.mxu0 0
  %2130 = vmatprep.subr.bf16.mxu0 0
  %2131 = vmatpush1.bf16.msra.mxu0 0
  %2132 = vmatprep.subr.bf16.mxu0 0
  %2133 = vmatpush1.bf16.msra.mxu0 0
  %2134 = vmatprep.subr.bf16.mxu0 0
  %2135 = vmatpush1.bf16.msra.mxu0 0
  %2136 = vmatprep.subr.bf16.mxu0 0
  %2137 = vmatpush1.bf16.msra.mxu0 0
  %2138 = vmatprep.subr.bf16.mxu0 0
  %2139 = vmatpush1.bf16.msra.mxu0 %v2122
  %2140 = vmatprep.subr.bf16.mxu0 0
  %2141 = vmatpush2.bf16.msra.mxu0 0
  %2142 = vmatprep.subr.bf16.mxu0 0
  %2143 = vmatpush2.bf16.msra.mxu0 0
  %2144 = vmatprep.subr.bf16.mxu0 0
  %2145 = vmatpush2.bf16.msra.mxu0 0
  %2146 = vmatprep.subr.bf16.mxu0 0
  %2147 = vmatpush2.bf16.msra.mxu0 0
  %2148 = vmatprep.subr.bf16.mxu0 0
  %2149 = vmatpush2.bf16.msra.mxu0 0
  %2150 = vmatprep.subr.bf16.mxu0 0
  %2151 = vmatpush2.bf16.msra.mxu0 0
  %2152 = vmatprep.subr.bf16.mxu0 0
  %2153 = vmatpush2.bf16.msra.mxu0 0
  %2154 = vmatprep.subr.bf16.mxu0 0
  %2155 = vmatpush2.bf16.msra.mxu0 0
  %2156 = vmatprep.mubr.bf16.mxu0 0
  %2157 = vmatmul.mubr.bf16.gmra.mxu0 %v2119
  %v2158 = vpop.f32.mrf.mxu0
  %v2159 = vadd.f32 0.0, %v2158
  %v2160 = vpop.f32.mrf.mxu0
  %v2161 = vpop.f32.mrf.mxu0
  %v2162 = vadd.f32 0.0, %v2161
  %v2163 = vpop.f32.mrf.mxu0
  %2164 = vdwg.mxu0
  %v2165 = vadd.f32 %v2002, %v2159
  %v2166 = vadd.f32 %v2003, %v2162
  %s2167 = scalar_lea.vmem %s3, 512
  %v2168 = vld [vmem:[%s2167] sm:$0xf]
  %v2169 = vld [vmem:[%s2167 + $0x4] sm:$0xf]
  %v2170 = vld [vmem:[%s2167 + $0x8] sm:$0xf]
  %v2171 = vld [vmem:[%s2167 + $0xc] sm:$0xf]
  %v2172 = vld [vmem:[%s2167 + $0x10] sm:$0xf]
  %v2173 = vld [vmem:[%s2167 + $0x14] sm:$0xf]
  %v2174 = vld [vmem:[%s2167 + $0x18] sm:$0xf]
  %v2175 = vld [vmem:[%s2167 + $0x1c] sm:$0xf]
  %v2176 = vld [vmem:[%s2167 + $0x20] sm:$0xf]
  %v2177 = vld [vmem:[%s2167 + $0x24] sm:$0xf]
  %v2178 = vld [vmem:[%s2167 + $0x28] sm:$0xf]
  %v2179 = vld [vmem:[%s2167 + $0x2c] sm:$0xf]
  %v2180 = vld [vmem:[%s2167 + $0x30] sm:$0xf]
  %v2181 = vld [vmem:[%s2167 + $0x34] sm:$0xf]
  %v2182 = vld [vmem:[%s2167 + $0x38] sm:$0xf]
  %v2183 = vld [vmem:[%s2167 + $0x3c] sm:$0xf]
  %v2200 = vunpack.c.l.b16 %v2168
  %v2201 = vunpack.c.l.b16 %v2169
  %v2202 = vunpack.c.l.b16 %v2170
  %v2203 = vunpack.c.l.b16 %v2171
  %v2204 = vunpack.c.l.b16 %v2172
  %v2205 = vunpack.c.l.b16 %v2173
  %v2206 = vunpack.c.l.b16 %v2174
  %v2207 = vunpack.c.l.b16 %v2175
  %v2208 = vunpack.c.l.b16 %v2176
  %v2209 = vunpack.c.l.b16 %v2177
  %v2210 = vunpack.c.l.b16 %v2178
  %v2211 = vunpack.c.l.b16 %v2179
  %v2212 = vunpack.c.l.b16 %v2180
  %v2213 = vunpack.c.l.b16 %v2181
  %v2214 = vunpack.c.l.b16 %v2182
  %v2215 = vunpack.c.l.b16 %v2183
  %v2216 = vpack.c.b16 %v2201, %v2200
  %v2217 = vpack.c.b16 %v2203, %v2202
  %v2218 = vpack.c.b16 %v2205, %v2204
  %v2219 = vpack.c.b16 %v2207, %v2206
  %v2220 = vpack.c.b16 %v2209, %v2208
  %v2221 = vpack.c.b16 %v2211, %v2210
  %v2222 = vpack.c.b16 %v2213, %v2212
  %v2223 = vpack.c.b16 %v2215, %v2214
  %2232 = vmatprep.subr.bf16.mxu0 0
  %2233 = vmatpush1.bf16.msra.mxu0 %v2223
  %2234 = vmatprep.subr.bf16.mxu0 0
  %2235 = vmatpush1.bf16.msra.mxu0 %v2222
  %2236 = vmatprep.subr.bf16.mxu0 0
  %2237 = vmatpush1.bf16.msra.mxu0 %v2221
  %2238 = vmatprep.subr.bf16.mxu0 0
  %2239 = vmatpush1.bf16.msra.mxu0 %v2220
  %2240 = vmatprep.subr.bf16.mxu0 0
  %2241 = vmatpush1.bf16.msra.mxu0 %v2219
  %2242 = vmatprep.subr.bf16.mxu0 0
  %2243 = vmatpush1.bf16.msra.mxu0 %v2218
  %2244 = vmatprep.subr.bf16.mxu0 0
  %2245 = vmatpush1.bf16.msra.mxu0 %v2217
  %2246 = vmatprep.subr.bf16.mxu0 0
  %2247 = vmatpush1.bf16.msra.mxu0 %v2216
  %2248 = vmatprep.subr.bf16.mxu0 0
  %2249 = vmatpush2.bf16.msra.mxu0 0
  %2250 = vmatprep.subr.bf16.mxu0 0
  %2251 = vmatpush2.bf16.msra.mxu0 0
  %2252 = vmatprep.subr.bf16.mxu0 0
  %2253 = vmatpush2.bf16.msra.mxu0 0
  %2254 = vmatprep.subr.bf16.mxu0 0
  %2255 = vmatpush2.bf16.msra.mxu0 0
  %2256 = vmatprep.subr.bf16.mxu0 0
  %2257 = vmatpush2.bf16.msra.mxu0 0
  %2258 = vmatprep.subr.bf16.mxu0 0
  %2259 = vmatpush2.bf16.msra.mxu0 0
  %2260 = vmatprep.subr.bf16.mxu0 0
  %2261 = vmatpush2.bf16.msra.mxu0 0
  %2262 = vmatprep.subr.bf16.mxu0 0
  %2263 = vmatpush2.bf16.msra.mxu0 0
  %2264 = vmatprep.mubr.bf16.mxu0 0
  %2265 = vmatmul.mubr.bf16.gmra.mxu0 %v866
  %v2266 = vpop.f32.mrf.mxu0
  %v2267 = vadd.f32 0.0, %v2266
  %v2268 = vpop.f32.mrf.mxu0
  %v2269 = vpop.f32.mrf.mxu0
  %v2270 = vpop.f32.mrf.mxu0
  %2271 = vdwg.mxu0
  %v2272 = vpack.c.bf16 %v2267, %v2267
  %s2273 = scalar_lea.vmem %s4, 64
  %v2274 = vld [vmem:[%s2273] sm:$0xf]
  %v2275 = vld [vmem:[%s2273 + $0x4] sm:$0xf]
  %v2278 = vunpack.c.l.b16 %v2274
  %v2279 = vunpack.c.l.b16 %v2275
  %v2280 = vpack.c.b16 %v2279, %v2278
  %v2282 = vsel %vm1088, %v2280, 0
  %v2285 = vsel %vm1092, %v2272, 0
  %2287 = vmatprep.subr.bf16.mxu0 0
  %2288 = vmatpush1.bf16.msra.mxu0 0
  %2289 = vmatprep.subr.bf16.mxu0 0
  %2290 = vmatpush1.bf16.msra.mxu0 0
  %2291 = vmatprep.subr.bf16.mxu0 0
  %2292 = vmatpush1.bf16.msra.mxu0 0
  %2293 = vmatprep.subr.bf16.mxu0 0
  %2294 = vmatpush1.bf16.msra.mxu0 0
  %2295 = vmatprep.subr.bf16.mxu0 0
  %2296 = vmatpush1.bf16.msra.mxu0 0
  %2297 = vmatprep.subr.bf16.mxu0 0
  %2298 = vmatpush1.bf16.msra.mxu0 0
  %2299 = vmatprep.subr.bf16.mxu0 0
  %2300 = vmatpush1.bf16.msra.mxu0 0
  %2301 = vmatprep.subr.bf16.mxu0 0
  %2302 = vmatpush1.bf16.msra.mxu0 %v2285
  %2303 = vmatprep.subr.bf16.mxu0 0
  %2304 = vmatpush2.bf16.msra.mxu0 0
  %2305 = vmatprep.subr.bf16.mxu0 0
  %2306 = vmatpush2.bf16.msra.mxu0 0
  %2307 = vmatprep.subr.bf16.mxu0 0
  %2308 = vmatpush2.bf16.msra.mxu0 0
  %2309 = vmatprep.subr.bf16.mxu0 0
  %2310 = vmatpush2.bf16.msra.mxu0 0
  %2311 = vmatprep.subr.bf16.mxu0 0
  %2312 = vmatpush2.bf16.msra.mxu0 0
  %2313 = vmatprep.subr.bf16.mxu0 0
  %2314 = vmatpush2.bf16.msra.mxu0 0
  %2315 = vmatprep.subr.bf16.mxu0 0
  %2316 = vmatpush2.bf16.msra.mxu0 0
  %2317 = vmatprep.subr.bf16.mxu0 0
  %2318 = vmatpush2.bf16.msra.mxu0 0
  %2319 = vmatprep.mubr.bf16.mxu0 0
  %2320 = vmatmul.mubr.bf16.gmra.mxu0 %v2282
  %v2321 = vpop.f32.mrf.mxu0
  %v2322 = vadd.f32 0.0, %v2321
  %v2323 = vpop.f32.mrf.mxu0
  %v2324 = vpop.f32.mrf.mxu0
  %v2325 = vadd.f32 0.0, %v2324
  %v2326 = vpop.f32.mrf.mxu0
  %2327 = vdwg.mxu0
  %v2328 = vadd.f32 %v2165, %v2322
  %v2329 = vadd.f32 %v2166, %v2325
  %s2330 = scalar_lea.vmem %s3, 576
  %v2331 = vld [vmem:[%s2330] sm:$0xf]
  %v2332 = vld [vmem:[%s2330 + $0x4] sm:$0xf]
  %v2333 = vld [vmem:[%s2330 + $0x8] sm:$0xf]
  %v2334 = vld [vmem:[%s2330 + $0xc] sm:$0xf]
  %v2335 = vld [vmem:[%s2330 + $0x10] sm:$0xf]
  %v2336 = vld [vmem:[%s2330 + $0x14] sm:$0xf]
  %v2337 = vld [vmem:[%s2330 + $0x18] sm:$0xf]
  %v2338 = vld [vmem:[%s2330 + $0x1c] sm:$0xf]
  %v2339 = vld [vmem:[%s2330 + $0x20] sm:$0xf]
  %v2340 = vld [vmem:[%s2330 + $0x24] sm:$0xf]
  %v2341 = vld [vmem:[%s2330 + $0x28] sm:$0xf]
  %v2342 = vld [vmem:[%s2330 + $0x2c] sm:$0xf]
  %v2343 = vld [vmem:[%s2330 + $0x30] sm:$0xf]
  %v2344 = vld [vmem:[%s2330 + $0x34] sm:$0xf]
  %v2345 = vld [vmem:[%s2330 + $0x38] sm:$0xf]
  %v2346 = vld [vmem:[%s2330 + $0x3c] sm:$0xf]
  %v2363 = vunpack.c.l.b16 %v2331
  %v2364 = vunpack.c.l.b16 %v2332
  %v2365 = vunpack.c.l.b16 %v2333
  %v2366 = vunpack.c.l.b16 %v2334
  %v2367 = vunpack.c.l.b16 %v2335
  %v2368 = vunpack.c.l.b16 %v2336
  %v2369 = vunpack.c.l.b16 %v2337
  %v2370 = vunpack.c.l.b16 %v2338
  %v2371 = vunpack.c.l.b16 %v2339
  %v2372 = vunpack.c.l.b16 %v2340
  %v2373 = vunpack.c.l.b16 %v2341
  %v2374 = vunpack.c.l.b16 %v2342
  %v2375 = vunpack.c.l.b16 %v2343
  %v2376 = vunpack.c.l.b16 %v2344
  %v2377 = vunpack.c.l.b16 %v2345
  %v2378 = vunpack.c.l.b16 %v2346
  %v2379 = vpack.c.b16 %v2364, %v2363
  %v2380 = vpack.c.b16 %v2366, %v2365
  %v2381 = vpack.c.b16 %v2368, %v2367
  %v2382 = vpack.c.b16 %v2370, %v2369
  %v2383 = vpack.c.b16 %v2372, %v2371
  %v2384 = vpack.c.b16 %v2374, %v2373
  %v2385 = vpack.c.b16 %v2376, %v2375
  %v2386 = vpack.c.b16 %v2378, %v2377
  %2395 = vmatprep.subr.bf16.mxu0 0
  %2396 = vmatpush1.bf16.msra.mxu0 %v2386
  %2397 = vmatprep.subr.bf16.mxu0 0
  %2398 = vmatpush1.bf16.msra.mxu0 %v2385
  %2399 = vmatprep.subr.bf16.mxu0 0
  %2400 = vmatpush1.bf16.msra.mxu0 %v2384
  %2401 = vmatprep.subr.bf16.mxu0 0
  %2402 = vmatpush1.bf16.msra.mxu0 %v2383
  %2403 = vmatprep.subr.bf16.mxu0 0
  %2404 = vmatpush1.bf16.msra.mxu0 %v2382
  %2405 = vmatprep.subr.bf16.mxu0 0
  %2406 = vmatpush1.bf16.msra.mxu0 %v2381
  %2407 = vmatprep.subr.bf16.mxu0 0
  %2408 = vmatpush1.bf16.msra.mxu0 %v2380
  %2409 = vmatprep.subr.bf16.mxu0 0
  %2410 = vmatpush1.bf16.msra.mxu0 %v2379
  %2411 = vmatprep.subr.bf16.mxu0 0
  %2412 = vmatpush2.bf16.msra.mxu0 0
  %2413 = vmatprep.subr.bf16.mxu0 0
  %2414 = vmatpush2.bf16.msra.mxu0 0
  %2415 = vmatprep.subr.bf16.mxu0 0
  %2416 = vmatpush2.bf16.msra.mxu0 0
  %2417 = vmatprep.subr.bf16.mxu0 0
  %2418 = vmatpush2.bf16.msra.mxu0 0
  %2419 = vmatprep.subr.bf16.mxu0 0
  %2420 = vmatpush2.bf16.msra.mxu0 0
  %2421 = vmatprep.subr.bf16.mxu0 0
  %2422 = vmatpush2.bf16.msra.mxu0 0
  %2423 = vmatprep.subr.bf16.mxu0 0
  %2424 = vmatpush2.bf16.msra.mxu0 0
  %2425 = vmatprep.subr.bf16.mxu0 0
  %2426 = vmatpush2.bf16.msra.mxu0 0
  %2427 = vmatprep.mubr.bf16.mxu0 0
  %2428 = vmatmul.mubr.bf16.gmra.mxu0 %v866
  %v2429 = vpop.f32.mrf.mxu0
  %v2430 = vadd.f32 0.0, %v2429
  %v2431 = vpop.f32.mrf.mxu0
  %v2432 = vpop.f32.mrf.mxu0
  %v2433 = vpop.f32.mrf.mxu0
  %2434 = vdwg.mxu0
  %v2435 = vpack.c.bf16 %v2430, %v2430
  %s2436 = scalar_lea.vmem %s4, 72
  %v2437 = vld [vmem:[%s2436] sm:$0xf]
  %v2438 = vld [vmem:[%s2436 + $0x4] sm:$0xf]
  %v2441 = vunpack.c.l.b16 %v2437
  %v2442 = vunpack.c.l.b16 %v2438
  %v2443 = vpack.c.b16 %v2442, %v2441
  %v2445 = vsel %vm1088, %v2443, 0
  %v2448 = vsel %vm1092, %v2435, 0
  %2450 = vmatprep.subr.bf16.mxu0 0
  %2451 = vmatpush1.bf16.msra.mxu0 0
  %2452 = vmatprep.subr.bf16.mxu0 0
  %2453 = vmatpush1.bf16.msra.mxu0 0
  %2454 = vmatprep.subr.bf16.mxu0 0
  %2455 = vmatpush1.bf16.msra.mxu0 0
  %2456 = vmatprep.subr.bf16.mxu0 0
  %2457 = vmatpush1.bf16.msra.mxu0 0
  %2458 = vmatprep.subr.bf16.mxu0 0
  %2459 = vmatpush1.bf16.msra.mxu0 0
  %2460 = vmatprep.subr.bf16.mxu0 0
  %2461 = vmatpush1.bf16.msra.mxu0 0
  %2462 = vmatprep.subr.bf16.mxu0 0
  %2463 = vmatpush1.bf16.msra.mxu0 0
  %2464 = vmatprep.subr.bf16.mxu0 0
  %2465 = vmatpush1.bf16.msra.mxu0 %v2448
  %2466 = vmatprep.subr.bf16.mxu0 0
  %2467 = vmatpush2.bf16.msra.mxu0 0
  %2468 = vmatprep.subr.bf16.mxu0 0
  %2469 = vmatpush2.bf16.msra.mxu0 0
  %2470 = vmatprep.subr.bf16.mxu0 0
  %2471 = vmatpush2.bf16.msra.mxu0 0
  %2472 = vmatprep.subr.bf16.mxu0 0
  %2473 = vmatpush2.bf16.msra.mxu0 0
  %2474 = vmatprep.subr.bf16.mxu0 0
  %2475 = vmatpush2.bf16.msra.mxu0 0
  %2476 = vmatprep.subr.bf16.mxu0 0
  %2477 = vmatpush2.bf16.msra.mxu0 0
  %2478 = vmatprep.subr.bf16.mxu0 0
  %2479 = vmatpush2.bf16.msra.mxu0 0
  %2480 = vmatprep.subr.bf16.mxu0 0
  %2481 = vmatpush2.bf16.msra.mxu0 0
  %2482 = vmatprep.mubr.bf16.mxu0 0
  %2483 = vmatmul.mubr.bf16.gmra.mxu0 %v2445
  %v2484 = vpop.f32.mrf.mxu0
  %v2485 = vadd.f32 0.0, %v2484
  %v2486 = vpop.f32.mrf.mxu0
  %v2487 = vpop.f32.mrf.mxu0
  %v2488 = vadd.f32 0.0, %v2487
  %v2489 = vpop.f32.mrf.mxu0
  %2490 = vdwg.mxu0
  %v2491 = vadd.f32 %v2328, %v2485
  %v2492 = vadd.f32 %v2329, %v2488
  %s2493 = scalar_lea.vmem %s3, 640
  %v2494 = vld [vmem:[%s2493] sm:$0xf]
  %v2495 = vld [vmem:[%s2493 + $0x4] sm:$0xf]
  %v2496 = vld [vmem:[%s2493 + $0x8] sm:$0xf]
  %v2497 = vld [vmem:[%s2493 + $0xc] sm:$0xf]
  %v2498 = vld [vmem:[%s2493 + $0x10] sm:$0xf]
  %v2499 = vld [vmem:[%s2493 + $0x14] sm:$0xf]
  %v2500 = vld [vmem:[%s2493 + $0x18] sm:$0xf]
  %v2501 = vld [vmem:[%s2493 + $0x1c] sm:$0xf]
  %v2502 = vld [vmem:[%s2493 + $0x20] sm:$0xf]
  %v2503 = vld [vmem:[%s2493 + $0x24] sm:$0xf]
  %v2504 = vld [vmem:[%s2493 + $0x28] sm:$0xf]
  %v2505 = vld [vmem:[%s2493 + $0x2c] sm:$0xf]
  %v2506 = vld [vmem:[%s2493 + $0x30] sm:$0xf]
  %v2507 = vld [vmem:[%s2493 + $0x34] sm:$0xf]
  %v2508 = vld [vmem:[%s2493 + $0x38] sm:$0xf]
  %v2509 = vld [vmem:[%s2493 + $0x3c] sm:$0xf]
  %v2526 = vunpack.c.l.b16 %v2494
  %v2527 = vunpack.c.l.b16 %v2495
  %v2528 = vunpack.c.l.b16 %v2496
  %v2529 = vunpack.c.l.b16 %v2497
  %v2530 = vunpack.c.l.b16 %v2498
  %v2531 = vunpack.c.l.b16 %v2499
  %v2532 = vunpack.c.l.b16 %v2500
  %v2533 = vunpack.c.l.b16 %v2501
  %v2534 = vunpack.c.l.b16 %v2502
  %v2535 = vunpack.c.l.b16 %v2503
  %v2536 = vunpack.c.l.b16 %v2504
  %v2537 = vunpack.c.l.b16 %v2505
  %v2538 = vunpack.c.l.b16 %v2506
  %v2539 = vunpack.c.l.b16 %v2507
  %v2540 = vunpack.c.l.b16 %v2508
  %v2541 = vunpack.c.l.b16 %v2509
  %v2542 = vpack.c.b16 %v2527, %v2526
  %v2543 = vpack.c.b16 %v2529, %v2528
  %v2544 = vpack.c.b16 %v2531, %v2530
  %v2545 = vpack.c.b16 %v2533, %v2532
  %v2546 = vpack.c.b16 %v2535, %v2534
  %v2547 = vpack.c.b16 %v2537, %v2536
  %v2548 = vpack.c.b16 %v2539, %v2538
  %v2549 = vpack.c.b16 %v2541, %v2540
  %2558 = vmatprep.subr.bf16.mxu0 0
  %2559 = vmatpush1.bf16.msra.mxu0 %v2549
  %2560 = vmatprep.subr.bf16.mxu0 0
  %2561 = vmatpush1.bf16.msra.mxu0 %v2548
  %2562 = vmatprep.subr.bf16.mxu0 0
  %2563 = vmatpush1.bf16.msra.mxu0 %v2547
  %2564 = vmatprep.subr.bf16.mxu0 0
  %2565 = vmatpush1.bf16.msra.mxu0 %v2546
  %2566 = vmatprep.subr.bf16.mxu0 0
  %2567 = vmatpush1.bf16.msra.mxu0 %v2545
  %2568 = vmatprep.subr.bf16.mxu0 0
  %2569 = vmatpush1.bf16.msra.mxu0 %v2544
  %2570 = vmatprep.subr.bf16.mxu0 0
  %2571 = vmatpush1.bf16.msra.mxu0 %v2543
  %2572 = vmatprep.subr.bf16.mxu0 0
  %2573 = vmatpush1.bf16.msra.mxu0 %v2542
  %2574 = vmatprep.subr.bf16.mxu0 0
  %2575 = vmatpush2.bf16.msra.mxu0 0
  %2576 = vmatprep.subr.bf16.mxu0 0
  %2577 = vmatpush2.bf16.msra.mxu0 0
  %2578 = vmatprep.subr.bf16.mxu0 0
  %2579 = vmatpush2.bf16.msra.mxu0 0
  %2580 = vmatprep.subr.bf16.mxu0 0
  %2581 = vmatpush2.bf16.msra.mxu0 0
  %2582 = vmatprep.subr.bf16.mxu0 0
  %2583 = vmatpush2.bf16.msra.mxu0 0
  %2584 = vmatprep.subr.bf16.mxu0 0
  %2585 = vmatpush2.bf16.msra.mxu0 0
  %2586 = vmatprep.subr.bf16.mxu0 0
  %2587 = vmatpush2.bf16.msra.mxu0 0
  %2588 = vmatprep.subr.bf16.mxu0 0
  %2589 = vmatpush2.bf16.msra.mxu0 0
  %2590 = vmatprep.mubr.bf16.mxu0 0
  %2591 = vmatmul.mubr.bf16.gmra.mxu0 %v866
  %v2592 = vpop.f32.mrf.mxu0
  %v2593 = vadd.f32 0.0, %v2592
  %v2594 = vpop.f32.mrf.mxu0
  %v2595 = vpop.f32.mrf.mxu0
  %v2596 = vpop.f32.mrf.mxu0
  %2597 = vdwg.mxu0
  %v2598 = vpack.c.bf16 %v2593, %v2593
  %s2599 = scalar_lea.vmem %s4, 80
  %v2600 = vld [vmem:[%s2599] sm:$0xf]
  %v2601 = vld [vmem:[%s2599 + $0x4] sm:$0xf]
  %v2604 = vunpack.c.l.b16 %v2600
  %v2605 = vunpack.c.l.b16 %v2601
  %v2606 = vpack.c.b16 %v2605, %v2604
  %v2608 = vsel %vm1088, %v2606, 0
  %v2611 = vsel %vm1092, %v2598, 0
  %2613 = vmatprep.subr.bf16.mxu0 0
  %2614 = vmatpush1.bf16.msra.mxu0 0
  %2615 = vmatprep.subr.bf16.mxu0 0
  %2616 = vmatpush1.bf16.msra.mxu0 0
  %2617 = vmatprep.subr.bf16.mxu0 0
  %2618 = vmatpush1.bf16.msra.mxu0 0
  %2619 = vmatprep.subr.bf16.mxu0 0
  %2620 = vmatpush1.bf16.msra.mxu0 0
  %2621 = vmatprep.subr.bf16.mxu0 0
  %2622 = vmatpush1.bf16.msra.mxu0 0
  %2623 = vmatprep.subr.bf16.mxu0 0
  %2624 = vmatpush1.bf16.msra.mxu0 0
  %2625 = vmatprep.subr.bf16.mxu0 0
  %2626 = vmatpush1.bf16.msra.mxu0 0
  %2627 = vmatprep.subr.bf16.mxu0 0
  %2628 = vmatpush1.bf16.msra.mxu0 %v2611
  %2629 = vmatprep.subr.bf16.mxu0 0
  %2630 = vmatpush2.bf16.msra.mxu0 0
  %2631 = vmatprep.subr.bf16.mxu0 0
  %2632 = vmatpush2.bf16.msra.mxu0 0
  %2633 = vmatprep.subr.bf16.mxu0 0
  %2634 = vmatpush2.bf16.msra.mxu0 0
  %2635 = vmatprep.subr.bf16.mxu0 0
  %2636 = vmatpush2.bf16.msra.mxu0 0
  %2637 = vmatprep.subr.bf16.mxu0 0
  %2638 = vmatpush2.bf16.msra.mxu0 0
  %2639 = vmatprep.subr.bf16.mxu0 0
  %2640 = vmatpush2.bf16.msra.mxu0 0
  %2641 = vmatprep.subr.bf16.mxu0 0
  %2642 = vmatpush2.bf16.msra.mxu0 0
  %2643 = vmatprep.subr.bf16.mxu0 0
  %2644 = vmatpush2.bf16.msra.mxu0 0
  %2645 = vmatprep.mubr.bf16.mxu0 0
  %2646 = vmatmul.mubr.bf16.gmra.mxu0 %v2608
  %v2647 = vpop.f32.mrf.mxu0
  %v2648 = vadd.f32 0.0, %v2647
  %v2649 = vpop.f32.mrf.mxu0
  %v2650 = vpop.f32.mrf.mxu0
  %v2651 = vadd.f32 0.0, %v2650
  %v2652 = vpop.f32.mrf.mxu0
  %2653 = vdwg.mxu0
  %v2654 = vadd.f32 %v2491, %v2648
  %v2655 = vadd.f32 %v2492, %v2651
  %s2656 = scalar_lea.vmem %s3, 704
  %v2657 = vld [vmem:[%s2656] sm:$0xf]
  %v2658 = vld [vmem:[%s2656 + $0x4] sm:$0xf]
  %v2659 = vld [vmem:[%s2656 + $0x8] sm:$0xf]
  %v2660 = vld [vmem:[%s2656 + $0xc] sm:$0xf]
  %v2661 = vld [vmem:[%s2656 + $0x10] sm:$0xf]
  %v2662 = vld [vmem:[%s2656 + $0x14] sm:$0xf]
  %v2663 = vld [vmem:[%s2656 + $0x18] sm:$0xf]
  %v2664 = vld [vmem:[%s2656 + $0x1c] sm:$0xf]
  %v2665 = vld [vmem:[%s2656 + $0x20] sm:$0xf]
  %v2666 = vld [vmem:[%s2656 + $0x24] sm:$0xf]
  %v2667 = vld [vmem:[%s2656 + $0x28] sm:$0xf]
  %v2668 = vld [vmem:[%s2656 + $0x2c] sm:$0xf]
  %v2669 = vld [vmem:[%s2656 + $0x30] sm:$0xf]
  %v2670 = vld [vmem:[%s2656 + $0x34] sm:$0xf]
  %v2671 = vld [vmem:[%s2656 + $0x38] sm:$0xf]
  %v2672 = vld [vmem:[%s2656 + $0x3c] sm:$0xf]
  %v2689 = vunpack.c.l.b16 %v2657
  %v2690 = vunpack.c.l.b16 %v2658
  %v2691 = vunpack.c.l.b16 %v2659
  %v2692 = vunpack.c.l.b16 %v2660
  %v2693 = vunpack.c.l.b16 %v2661
  %v2694 = vunpack.c.l.b16 %v2662
  %v2695 = vunpack.c.l.b16 %v2663
  %v2696 = vunpack.c.l.b16 %v2664
  %v2697 = vunpack.c.l.b16 %v2665
  %v2698 = vunpack.c.l.b16 %v2666
  %v2699 = vunpack.c.l.b16 %v2667
  %v2700 = vunpack.c.l.b16 %v2668
  %v2701 = vunpack.c.l.b16 %v2669
  %v2702 = vunpack.c.l.b16 %v2670
  %v2703 = vunpack.c.l.b16 %v2671
  %v2704 = vunpack.c.l.b16 %v2672
  %v2705 = vpack.c.b16 %v2690, %v2689
  %v2706 = vpack.c.b16 %v2692, %v2691
  %v2707 = vpack.c.b16 %v2694, %v2693
  %v2708 = vpack.c.b16 %v2696, %v2695
  %v2709 = vpack.c.b16 %v2698, %v2697
  %v2710 = vpack.c.b16 %v2700, %v2699
  %v2711 = vpack.c.b16 %v2702, %v2701
  %v2712 = vpack.c.b16 %v2704, %v2703
  %2721 = vmatprep.subr.bf16.mxu0 0
  %2722 = vmatpush1.bf16.msra.mxu0 %v2712
  %2723 = vmatprep.subr.bf16.mxu0 0
  %2724 = vmatpush1.bf16.msra.mxu0 %v2711
  %2725 = vmatprep.subr.bf16.mxu0 0
  %2726 = vmatpush1.bf16.msra.mxu0 %v2710
  %2727 = vmatprep.subr.bf16.mxu0 0
  %2728 = vmatpush1.bf16.msra.mxu0 %v2709
  %2729 = vmatprep.subr.bf16.mxu0 0
  %2730 = vmatpush1.bf16.msra.mxu0 %v2708
  %2731 = vmatprep.subr.bf16.mxu0 0
  %2732 = vmatpush1.bf16.msra.mxu0 %v2707
  %2733 = vmatprep.subr.bf16.mxu0 0
  %2734 = vmatpush1.bf16.msra.mxu0 %v2706
  %2735 = vmatprep.subr.bf16.mxu0 0
  %2736 = vmatpush1.bf16.msra.mxu0 %v2705
  %2737 = vmatprep.subr.bf16.mxu0 0
  %2738 = vmatpush2.bf16.msra.mxu0 0
  %2739 = vmatprep.subr.bf16.mxu0 0
  %2740 = vmatpush2.bf16.msra.mxu0 0
  %2741 = vmatprep.subr.bf16.mxu0 0
  %2742 = vmatpush2.bf16.msra.mxu0 0
  %2743 = vmatprep.subr.bf16.mxu0 0
  %2744 = vmatpush2.bf16.msra.mxu0 0
  %2745 = vmatprep.subr.bf16.mxu0 0
  %2746 = vmatpush2.bf16.msra.mxu0 0
  %2747 = vmatprep.subr.bf16.mxu0 0
  %2748 = vmatpush2.bf16.msra.mxu0 0
  %2749 = vmatprep.subr.bf16.mxu0 0
  %2750 = vmatpush2.bf16.msra.mxu0 0
  %2751 = vmatprep.subr.bf16.mxu0 0
  %2752 = vmatpush2.bf16.msra.mxu0 0
  %2753 = vmatprep.mubr.bf16.mxu0 0
  %2754 = vmatmul.mubr.bf16.gmra.mxu0 %v866
  %v2755 = vpop.f32.mrf.mxu0
  %v2756 = vadd.f32 0.0, %v2755
  %v2757 = vpop.f32.mrf.mxu0
  %v2758 = vpop.f32.mrf.mxu0
  %v2759 = vpop.f32.mrf.mxu0
  %2760 = vdwg.mxu0
  %v2761 = vpack.c.bf16 %v2756, %v2756
  %s2762 = scalar_lea.vmem %s4, 88
  %v2763 = vld [vmem:[%s2762] sm:$0xf]
  %v2764 = vld [vmem:[%s2762 + $0x4] sm:$0xf]
  %v2767 = vunpack.c.l.b16 %v2763
  %v2768 = vunpack.c.l.b16 %v2764
  %v2769 = vpack.c.b16 %v2768, %v2767
  %v2771 = vsel %vm1088, %v2769, 0
  %v2774 = vsel %vm1092, %v2761, 0
  %2776 = vmatprep.subr.bf16.mxu0 0
  %2777 = vmatpush1.bf16.msra.mxu0 0
  %2778 = vmatprep.subr.bf16.mxu0 0
  %2779 = vmatpush1.bf16.msra.mxu0 0
  %2780 = vmatprep.subr.bf16.mxu0 0
  %2781 = vmatpush1.bf16.msra.mxu0 0
  %2782 = vmatprep.subr.bf16.mxu0 0
  %2783 = vmatpush1.bf16.msra.mxu0 0
  %2784 = vmatprep.subr.bf16.mxu0 0
  %2785 = vmatpush1.bf16.msra.mxu0 0
  %2786 = vmatprep.subr.bf16.mxu0 0
  %2787 = vmatpush1.bf16.msra.mxu0 0
  %2788 = vmatprep.subr.bf16.mxu0 0
  %2789 = vmatpush1.bf16.msra.mxu0 0
  %2790 = vmatprep.subr.bf16.mxu0 0
  %2791 = vmatpush1.bf16.msra.mxu0 %v2774
  %2792 = vmatprep.subr.bf16.mxu0 0
  %2793 = vmatpush2.bf16.msra.mxu0 0
  %2794 = vmatprep.subr.bf16.mxu0 0
  %2795 = vmatpush2.bf16.msra.mxu0 0
  %2796 = vmatprep.subr.bf16.mxu0 0
  %2797 = vmatpush2.bf16.msra.mxu0 0
  %2798 = vmatprep.subr.bf16.mxu0 0
  %2799 = vmatpush2.bf16.msra.mxu0 0
  %2800 = vmatprep.subr.bf16.mxu0 0
  %2801 = vmatpush2.bf16.msra.mxu0 0
  %2802 = vmatprep.subr.bf16.mxu0 0
  %2803 = vmatpush2.bf16.msra.mxu0 0
  %2804 = vmatprep.subr.bf16.mxu0 0
  %2805 = vmatpush2.bf16.msra.mxu0 0
  %2806 = vmatprep.subr.bf16.mxu0 0
  %2807 = vmatpush2.bf16.msra.mxu0 0
  %2808 = vmatprep.mubr.bf16.mxu0 0
  %2809 = vmatmul.mubr.bf16.gmra.mxu0 %v2771
  %v2810 = vpop.f32.mrf.mxu0
  %v2811 = vadd.f32 0.0, %v2810
  %v2812 = vpop.f32.mrf.mxu0
  %v2813 = vpop.f32.mrf.mxu0
  %v2814 = vadd.f32 0.0, %v2813
  %v2815 = vpop.f32.mrf.mxu0
  %2816 = vdwg.mxu0
  %v2817 = vadd.f32 %v2654, %v2811
  %v2818 = vadd.f32 %v2655, %v2814
  %s2819 = scalar_lea.vmem %s3, 768
  %v2820 = vld [vmem:[%s2819] sm:$0xf]
  %v2821 = vld [vmem:[%s2819 + $0x4] sm:$0xf]
  %v2822 = vld [vmem:[%s2819 + $0x8] sm:$0xf]
  %v2823 = vld [vmem:[%s2819 + $0xc] sm:$0xf]
  %v2824 = vld [vmem:[%s2819 + $0x10] sm:$0xf]
  %v2825 = vld [vmem:[%s2819 + $0x14] sm:$0xf]
  %v2826 = vld [vmem:[%s2819 + $0x18] sm:$0xf]
  %v2827 = vld [vmem:[%s2819 + $0x1c] sm:$0xf]
  %v2828 = vld [vmem:[%s2819 + $0x20] sm:$0xf]
  %v2829 = vld [vmem:[%s2819 + $0x24] sm:$0xf]
  %v2830 = vld [vmem:[%s2819 + $0x28] sm:$0xf]
  %v2831 = vld [vmem:[%s2819 + $0x2c] sm:$0xf]
  %v2832 = vld [vmem:[%s2819 + $0x30] sm:$0xf]
  %v2833 = vld [vmem:[%s2819 + $0x34] sm:$0xf]
  %v2834 = vld [vmem:[%s2819 + $0x38] sm:$0xf]
  %v2835 = vld [vmem:[%s2819 + $0x3c] sm:$0xf]
  %v2852 = vunpack.c.l.b16 %v2820
  %v2853 = vunpack.c.l.b16 %v2821
  %v2854 = vunpack.c.l.b16 %v2822
  %v2855 = vunpack.c.l.b16 %v2823
  %v2856 = vunpack.c.l.b16 %v2824
  %v2857 = vunpack.c.l.b16 %v2825
  %v2858 = vunpack.c.l.b16 %v2826
  %v2859 = vunpack.c.l.b16 %v2827
  %v2860 = vunpack.c.l.b16 %v2828
  %v2861 = vunpack.c.l.b16 %v2829
  %v2862 = vunpack.c.l.b16 %v2830
  %v2863 = vunpack.c.l.b16 %v2831
  %v2864 = vunpack.c.l.b16 %v2832
  %v2865 = vunpack.c.l.b16 %v2833
  %v2866 = vunpack.c.l.b16 %v2834
  %v2867 = vunpack.c.l.b16 %v2835
  %v2868 = vpack.c.b16 %v2853, %v2852
  %v2869 = vpack.c.b16 %v2855, %v2854
  %v2870 = vpack.c.b16 %v2857, %v2856
  %v2871 = vpack.c.b16 %v2859, %v2858
  %v2872 = vpack.c.b16 %v2861, %v2860
  %v2873 = vpack.c.b16 %v2863, %v2862
  %v2874 = vpack.c.b16 %v2865, %v2864
  %v2875 = vpack.c.b16 %v2867, %v2866
  %2884 = vmatprep.subr.bf16.mxu0 0
  %2885 = vmatpush1.bf16.msra.mxu0 %v2875
  %2886 = vmatprep.subr.bf16.mxu0 0
  %2887 = vmatpush1.bf16.msra.mxu0 %v2874
  %2888 = vmatprep.subr.bf16.mxu0 0
  %2889 = vmatpush1.bf16.msra.mxu0 %v2873
  %2890 = vmatprep.subr.bf16.mxu0 0
  %2891 = vmatpush1.bf16.msra.mxu0 %v2872
  %2892 = vmatprep.subr.bf16.mxu0 0
  %2893 = vmatpush1.bf16.msra.mxu0 %v2871
  %2894 = vmatprep.subr.bf16.mxu0 0
  %2895 = vmatpush1.bf16.msra.mxu0 %v2870
  %2896 = vmatprep.subr.bf16.mxu0 0
  %2897 = vmatpush1.bf16.msra.mxu0 %v2869
  %2898 = vmatprep.subr.bf16.mxu0 0
  %2899 = vmatpush1.bf16.msra.mxu0 %v2868
  %2900 = vmatprep.subr.bf16.mxu0 0
  %2901 = vmatpush2.bf16.msra.mxu0 0
  %2902 = vmatprep.subr.bf16.mxu0 0
  %2903 = vmatpush2.bf16.msra.mxu0 0
  %2904 = vmatprep.subr.bf16.mxu0 0
  %2905 = vmatpush2.bf16.msra.mxu0 0
  %2906 = vmatprep.subr.bf16.mxu0 0
  %2907 = vmatpush2.bf16.msra.mxu0 0
  %2908 = vmatprep.subr.bf16.mxu0 0
  %2909 = vmatpush2.bf16.msra.mxu0 0
  %2910 = vmatprep.subr.bf16.mxu0 0
  %2911 = vmatpush2.bf16.msra.mxu0 0
  %2912 = vmatprep.subr.bf16.mxu0 0
  %2913 = vmatpush2.bf16.msra.mxu0 0
  %2914 = vmatprep.subr.bf16.mxu0 0
  %2915 = vmatpush2.bf16.msra.mxu0 0
  %2916 = vmatprep.mubr.bf16.mxu0 0
  %2917 = vmatmul.mubr.bf16.gmra.mxu0 %v866
  %v2918 = vpop.f32.mrf.mxu0
  %v2919 = vadd.f32 0.0, %v2918
  %v2920 = vpop.f32.mrf.mxu0
  %v2921 = vpop.f32.mrf.mxu0
  %v2922 = vpop.f32.mrf.mxu0
  %2923 = vdwg.mxu0
  %v2924 = vpack.c.bf16 %v2919, %v2919
  %s2925 = scalar_lea.vmem %s4, 96
  %v2926 = vld [vmem:[%s2925] sm:$0xf]
  %v2927 = vld [vmem:[%s2925 + $0x4] sm:$0xf]
  %v2930 = vunpack.c.l.b16 %v2926
  %v2931 = vunpack.c.l.b16 %v2927
  %v2932 = vpack.c.b16 %v2931, %v2930
  %v2934 = vsel %vm1088, %v2932, 0
  %v2937 = vsel %vm1092, %v2924, 0
  %2939 = vmatprep.subr.bf16.mxu0 0
  %2940 = vmatpush1.bf16.msra.mxu0 0
  %2941 = vmatprep.subr.bf16.mxu0 0
  %2942 = vmatpush1.bf16.msra.mxu0 0
  %2943 = vmatprep.subr.bf16.mxu0 0
  %2944 = vmatpush1.bf16.msra.mxu0 0
  %2945 = vmatprep.subr.bf16.mxu0 0
  %2946 = vmatpush1.bf16.msra.mxu0 0
  %2947 = vmatprep.subr.bf16.mxu0 0
  %2948 = vmatpush1.bf16.msra.mxu0 0
  %2949 = vmatprep.subr.bf16.mxu0 0
  %2950 = vmatpush1.bf16.msra.mxu0 0
  %2951 = vmatprep.subr.bf16.mxu0 0
  %2952 = vmatpush1.bf16.msra.mxu0 0
  %2953 = vmatprep.subr.bf16.mxu0 0
  %2954 = vmatpush1.bf16.msra.mxu0 %v2937
  %2955 = vmatprep.subr.bf16.mxu0 0
  %2956 = vmatpush2.bf16.msra.mxu0 0
  %2957 = vmatprep.subr.bf16.mxu0 0
  %2958 = vmatpush2.bf16.msra.mxu0 0
  %2959 = vmatprep.subr.bf16.mxu0 0
  %2960 = vmatpush2.bf16.msra.mxu0 0
  %2961 = vmatprep.subr.bf16.mxu0 0
  %2962 = vmatpush2.bf16.msra.mxu0 0
  %2963 = vmatprep.subr.bf16.mxu0 0
  %2964 = vmatpush2.bf16.msra.mxu0 0
  %2965 = vmatprep.subr.bf16.mxu0 0
  %2966 = vmatpush2.bf16.msra.mxu0 0
  %2967 = vmatprep.subr.bf16.mxu0 0
  %2968 = vmatpush2.bf16.msra.mxu0 0
  %2969 = vmatprep.subr.bf16.mxu0 0
  %2970 = vmatpush2.bf16.msra.mxu0 0
  %2971 = vmatprep.mubr.bf16.mxu0 0
  %2972 = vmatmul.mubr.bf16.gmra.mxu0 %v2934
  %v2973 = vpop.f32.mrf.mxu0
  %v2974 = vadd.f32 0.0, %v2973
  %v2975 = vpop.f32.mrf.mxu0
  %v2976 = vpop.f32.mrf.mxu0
  %v2977 = vadd.f32 0.0, %v2976
  %v2978 = vpop.f32.mrf.mxu0
  %2979 = vdwg.mxu0
  %v2980 = vadd.f32 %v2817, %v2974
  %v2981 = vadd.f32 %v2818, %v2977
  %s2982 = scalar_lea.vmem %s3, 832
  %v2983 = vld [vmem:[%s2982] sm:$0xf]
  %v2984 = vld [vmem:[%s2982 + $0x4] sm:$0xf]
  %v2985 = vld [vmem:[%s2982 + $0x8] sm:$0xf]
  %v2986 = vld [vmem:[%s2982 + $0xc] sm:$0xf]
  %v2987 = vld [vmem:[%s2982 + $0x10] sm:$0xf]
  %v2988 = vld [vmem:[%s2982 + $0x14] sm:$0xf]
  %v2989 = vld [vmem:[%s2982 + $0x18] sm:$0xf]
  %v2990 = vld [vmem:[%s2982 + $0x1c] sm:$0xf]
  %v2991 = vld [vmem:[%s2982 + $0x20] sm:$0xf]
  %v2992 = vld [vmem:[%s2982 + $0x24] sm:$0xf]
  %v2993 = vld [vmem:[%s2982 + $0x28] sm:$0xf]
  %v2994 = vld [vmem:[%s2982 + $0x2c] sm:$0xf]
  %v2995 = vld [vmem:[%s2982 + $0x30] sm:$0xf]
  %v2996 = vld [vmem:[%s2982 + $0x34] sm:$0xf]
  %v2997 = vld [vmem:[%s2982 + $0x38] sm:$0xf]
  %v2998 = vld [vmem:[%s2982 + $0x3c] sm:$0xf]
  %v3015 = vunpack.c.l.b16 %v2983
  %v3016 = vunpack.c.l.b16 %v2984
  %v3017 = vunpack.c.l.b16 %v2985
  %v3018 = vunpack.c.l.b16 %v2986
  %v3019 = vunpack.c.l.b16 %v2987
  %v3020 = vunpack.c.l.b16 %v2988
  %v3021 = vunpack.c.l.b16 %v2989
  %v3022 = vunpack.c.l.b16 %v2990
  %v3023 = vunpack.c.l.b16 %v2991
  %v3024 = vunpack.c.l.b16 %v2992
  %v3025 = vunpack.c.l.b16 %v2993
  %v3026 = vunpack.c.l.b16 %v2994
  %v3027 = vunpack.c.l.b16 %v2995
  %v3028 = vunpack.c.l.b16 %v2996
  %v3029 = vunpack.c.l.b16 %v2997
  %v3030 = vunpack.c.l.b16 %v2998
  %v3031 = vpack.c.b16 %v3016, %v3015
  %v3032 = vpack.c.b16 %v3018, %v3017
  %v3033 = vpack.c.b16 %v3020, %v3019
  %v3034 = vpack.c.b16 %v3022, %v3021
  %v3035 = vpack.c.b16 %v3024, %v3023
  %v3036 = vpack.c.b16 %v3026, %v3025
  %v3037 = vpack.c.b16 %v3028, %v3027
  %v3038 = vpack.c.b16 %v3030, %v3029
  %3047 = vmatprep.subr.bf16.mxu0 0
  %3048 = vmatpush1.bf16.msra.mxu0 %v3038
  %3049 = vmatprep.subr.bf16.mxu0 0
  %3050 = vmatpush1.bf16.msra.mxu0 %v3037
  %3051 = vmatprep.subr.bf16.mxu0 0
  %3052 = vmatpush1.bf16.msra.mxu0 %v3036
  %3053 = vmatprep.subr.bf16.mxu0 0
  %3054 = vmatpush1.bf16.msra.mxu0 %v3035
  %3055 = vmatprep.subr.bf16.mxu0 0
  %3056 = vmatpush1.bf16.msra.mxu0 %v3034
  %3057 = vmatprep.subr.bf16.mxu0 0
  %3058 = vmatpush1.bf16.msra.mxu0 %v3033
  %3059 = vmatprep.subr.bf16.mxu0 0
  %3060 = vmatpush1.bf16.msra.mxu0 %v3032
  %3061 = vmatprep.subr.bf16.mxu0 0
  %3062 = vmatpush1.bf16.msra.mxu0 %v3031
  %3063 = vmatprep.subr.bf16.mxu0 0
  %3064 = vmatpush2.bf16.msra.mxu0 0
  %3065 = vmatprep.subr.bf16.mxu0 0
  %3066 = vmatpush2.bf16.msra.mxu0 0
  %3067 = vmatprep.subr.bf16.mxu0 0
  %3068 = vmatpush2.bf16.msra.mxu0 0
  %3069 = vmatprep.subr.bf16.mxu0 0
  %3070 = vmatpush2.bf16.msra.mxu0 0
  %3071 = vmatprep.subr.bf16.mxu0 0
  %3072 = vmatpush2.bf16.msra.mxu0 0
  %3073 = vmatprep.subr.bf16.mxu0 0
  %3074 = vmatpush2.bf16.msra.mxu0 0
  %3075 = vmatprep.subr.bf16.mxu0 0
  %3076 = vmatpush2.bf16.msra.mxu0 0
  %3077 = vmatprep.subr.bf16.mxu0 0
  %3078 = vmatpush2.bf16.msra.mxu0 0
  %3079 = vmatprep.mubr.bf16.mxu0 0
  %3080 = vmatmul.mubr.bf16.gmra.mxu0 %v866
  %v3081 = vpop.f32.mrf.mxu0
  %v3082 = vadd.f32 0.0, %v3081
  %v3083 = vpop.f32.mrf.mxu0
  %v3084 = vpop.f32.mrf.mxu0
  %v3085 = vpop.f32.mrf.mxu0
  %3086 = vdwg.mxu0
  %v3087 = vpack.c.bf16 %v3082, %v3082
  %s3088 = scalar_lea.vmem %s4, 104
  %v3089 = vld [vmem:[%s3088] sm:$0xf]
  %v3090 = vld [vmem:[%s3088 + $0x4] sm:$0xf]
  %v3093 = vunpack.c.l.b16 %v3089
  %v3094 = vunpack.c.l.b16 %v3090
  %v3095 = vpack.c.b16 %v3094, %v3093
  %v3097 = vsel %vm1088, %v3095, 0
  %v3100 = vsel %vm1092, %v3087, 0
  %3102 = vmatprep.subr.bf16.mxu0 0
  %3103 = vmatpush1.bf16.msra.mxu0 0
  %3104 = vmatprep.subr.bf16.mxu0 0
  %3105 = vmatpush1.bf16.msra.mxu0 0
  %3106 = vmatprep.subr.bf16.mxu0 0
  %3107 = vmatpush1.bf16.msra.mxu0 0
  %3108 = vmatprep.subr.bf16.mxu0 0
  %3109 = vmatpush1.bf16.msra.mxu0 0
  %3110 = vmatprep.subr.bf16.mxu0 0
  %3111 = vmatpush1.bf16.msra.mxu0 0
  %3112 = vmatprep.subr.bf16.mxu0 0
  %3113 = vmatpush1.bf16.msra.mxu0 0
  %3114 = vmatprep.subr.bf16.mxu0 0
  %3115 = vmatpush1.bf16.msra.mxu0 0
  %3116 = vmatprep.subr.bf16.mxu0 0
  %3117 = vmatpush1.bf16.msra.mxu0 %v3100
  %3118 = vmatprep.subr.bf16.mxu0 0
  %3119 = vmatpush2.bf16.msra.mxu0 0
  %3120 = vmatprep.subr.bf16.mxu0 0
  %3121 = vmatpush2.bf16.msra.mxu0 0
  %3122 = vmatprep.subr.bf16.mxu0 0
  %3123 = vmatpush2.bf16.msra.mxu0 0
  %3124 = vmatprep.subr.bf16.mxu0 0
  %3125 = vmatpush2.bf16.msra.mxu0 0
  %3126 = vmatprep.subr.bf16.mxu0 0
  %3127 = vmatpush2.bf16.msra.mxu0 0
  %3128 = vmatprep.subr.bf16.mxu0 0
  %3129 = vmatpush2.bf16.msra.mxu0 0
  %3130 = vmatprep.subr.bf16.mxu0 0
  %3131 = vmatpush2.bf16.msra.mxu0 0
  %3132 = vmatprep.subr.bf16.mxu0 0
  %3133 = vmatpush2.bf16.msra.mxu0 0
  %3134 = vmatprep.mubr.bf16.mxu0 0
  %3135 = vmatmul.mubr.bf16.gmra.mxu0 %v3097
  %v3136 = vpop.f32.mrf.mxu0
  %v3137 = vadd.f32 0.0, %v3136
  %v3138 = vpop.f32.mrf.mxu0
  %v3139 = vpop.f32.mrf.mxu0
  %v3140 = vadd.f32 0.0, %v3139
  %v3141 = vpop.f32.mrf.mxu0
  %3142 = vdwg.mxu0
  %v3143 = vadd.f32 %v2980, %v3137
  %v3144 = vadd.f32 %v2981, %v3140
  %s3145 = scalar_lea.vmem %s3, 896
  %v3146 = vld [vmem:[%s3145] sm:$0xf]
  %v3147 = vld [vmem:[%s3145 + $0x4] sm:$0xf]
  %v3148 = vld [vmem:[%s3145 + $0x8] sm:$0xf]
  %v3149 = vld [vmem:[%s3145 + $0xc] sm:$0xf]
  %v3150 = vld [vmem:[%s3145 + $0x10] sm:$0xf]
  %v3151 = vld [vmem:[%s3145 + $0x14] sm:$0xf]
  %v3152 = vld [vmem:[%s3145 + $0x18] sm:$0xf]
  %v3153 = vld [vmem:[%s3145 + $0x1c] sm:$0xf]
  %v3154 = vld [vmem:[%s3145 + $0x20] sm:$0xf]
  %v3155 = vld [vmem:[%s3145 + $0x24] sm:$0xf]
  %v3156 = vld [vmem:[%s3145 + $0x28] sm:$0xf]
  %v3157 = vld [vmem:[%s3145 + $0x2c] sm:$0xf]
  %v3158 = vld [vmem:[%s3145 + $0x30] sm:$0xf]
  %v3159 = vld [vmem:[%s3145 + $0x34] sm:$0xf]
  %v3160 = vld [vmem:[%s3145 + $0x38] sm:$0xf]
  %v3161 = vld [vmem:[%s3145 + $0x3c] sm:$0xf]
  %v3178 = vunpack.c.l.b16 %v3146
  %v3179 = vunpack.c.l.b16 %v3147
  %v3180 = vunpack.c.l.b16 %v3148
  %v3181 = vunpack.c.l.b16 %v3149
  %v3182 = vunpack.c.l.b16 %v3150
  %v3183 = vunpack.c.l.b16 %v3151
  %v3184 = vunpack.c.l.b16 %v3152
  %v3185 = vunpack.c.l.b16 %v3153
  %v3186 = vunpack.c.l.b16 %v3154
  %v3187 = vunpack.c.l.b16 %v3155
  %v3188 = vunpack.c.l.b16 %v3156
  %v3189 = vunpack.c.l.b16 %v3157
  %v3190 = vunpack.c.l.b16 %v3158
  %v3191 = vunpack.c.l.b16 %v3159
  %v3192 = vunpack.c.l.b16 %v3160
  %v3193 = vunpack.c.l.b16 %v3161
  %v3194 = vpack.c.b16 %v3179, %v3178
  %v3195 = vpack.c.b16 %v3181, %v3180
  %v3196 = vpack.c.b16 %v3183, %v3182
  %v3197 = vpack.c.b16 %v3185, %v3184
  %v3198 = vpack.c.b16 %v3187, %v3186
  %v3199 = vpack.c.b16 %v3189, %v3188
  %v3200 = vpack.c.b16 %v3191, %v3190
  %v3201 = vpack.c.b16 %v3193, %v3192
  %3210 = vmatprep.subr.bf16.mxu0 0
  %3211 = vmatpush1.bf16.msra.mxu0 %v3201
  %3212 = vmatprep.subr.bf16.mxu0 0
  %3213 = vmatpush1.bf16.msra.mxu0 %v3200
  %3214 = vmatprep.subr.bf16.mxu0 0
  %3215 = vmatpush1.bf16.msra.mxu0 %v3199
  %3216 = vmatprep.subr.bf16.mxu0 0
  %3217 = vmatpush1.bf16.msra.mxu0 %v3198
  %3218 = vmatprep.subr.bf16.mxu0 0
  %3219 = vmatpush1.bf16.msra.mxu0 %v3197
  %3220 = vmatprep.subr.bf16.mxu0 0
  %3221 = vmatpush1.bf16.msra.mxu0 %v3196
  %3222 = vmatprep.subr.bf16.mxu0 0
  %3223 = vmatpush1.bf16.msra.mxu0 %v3195
  %3224 = vmatprep.subr.bf16.mxu0 0
  %3225 = vmatpush1.bf16.msra.mxu0 %v3194
  %3226 = vmatprep.subr.bf16.mxu0 0
  %3227 = vmatpush2.bf16.msra.mxu0 0
  %3228 = vmatprep.subr.bf16.mxu0 0
  %3229 = vmatpush2.bf16.msra.mxu0 0
  %3230 = vmatprep.subr.bf16.mxu0 0
  %3231 = vmatpush2.bf16.msra.mxu0 0
  %3232 = vmatprep.subr.bf16.mxu0 0
  %3233 = vmatpush2.bf16.msra.mxu0 0
  %3234 = vmatprep.subr.bf16.mxu0 0
  %3235 = vmatpush2.bf16.msra.mxu0 0
  %3236 = vmatprep.subr.bf16.mxu0 0
  %3237 = vmatpush2.bf16.msra.mxu0 0
  %3238 = vmatprep.subr.bf16.mxu0 0
  %3239 = vmatpush2.bf16.msra.mxu0 0
  %3240 = vmatprep.subr.bf16.mxu0 0
  %3241 = vmatpush2.bf16.msra.mxu0 0
  %3242 = vmatprep.mubr.bf16.mxu0 0
  %3243 = vmatmul.mubr.bf16.gmra.mxu0 %v866
  %v3244 = vpop.f32.mrf.mxu0
  %v3245 = vadd.f32 0.0, %v3244
  %v3246 = vpop.f32.mrf.mxu0
  %v3247 = vpop.f32.mrf.mxu0
  %v3248 = vpop.f32.mrf.mxu0
  %3249 = vdwg.mxu0
  %v3250 = vpack.c.bf16 %v3245, %v3245
  %s3251 = scalar_lea.vmem %s4, 112
  %v3252 = vld [vmem:[%s3251] sm:$0xf]
  %v3253 = vld [vmem:[%s3251 + $0x4] sm:$0xf]
  %v3256 = vunpack.c.l.b16 %v3252
  %v3257 = vunpack.c.l.b16 %v3253
  %v3258 = vpack.c.b16 %v3257, %v3256
  %v3260 = vsel %vm1088, %v3258, 0
  %v3263 = vsel %vm1092, %v3250, 0
  %3265 = vmatprep.subr.bf16.mxu0 0
  %3266 = vmatpush1.bf16.msra.mxu0 0
  %3267 = vmatprep.subr.bf16.mxu0 0
  %3268 = vmatpush1.bf16.msra.mxu0 0
  %3269 = vmatprep.subr.bf16.mxu0 0
  %3270 = vmatpush1.bf16.msra.mxu0 0
  %3271 = vmatprep.subr.bf16.mxu0 0
  %3272 = vmatpush1.bf16.msra.mxu0 0
  %3273 = vmatprep.subr.bf16.mxu0 0
  %3274 = vmatpush1.bf16.msra.mxu0 0
  %3275 = vmatprep.subr.bf16.mxu0 0
  %3276 = vmatpush1.bf16.msra.mxu0 0
  %3277 = vmatprep.subr.bf16.mxu0 0
  %3278 = vmatpush1.bf16.msra.mxu0 0
  %3279 = vmatprep.subr.bf16.mxu0 0
  %3280 = vmatpush1.bf16.msra.mxu0 %v3263
  %3281 = vmatprep.subr.bf16.mxu0 0
  %3282 = vmatpush2.bf16.msra.mxu0 0
  %3283 = vmatprep.subr.bf16.mxu0 0
  %3284 = vmatpush2.bf16.msra.mxu0 0
  %3285 = vmatprep.subr.bf16.mxu0 0
  %3286 = vmatpush2.bf16.msra.mxu0 0
  %3287 = vmatprep.subr.bf16.mxu0 0
  %3288 = vmatpush2.bf16.msra.mxu0 0
  %3289 = vmatprep.subr.bf16.mxu0 0
  %3290 = vmatpush2.bf16.msra.mxu0 0
  %3291 = vmatprep.subr.bf16.mxu0 0
  %3292 = vmatpush2.bf16.msra.mxu0 0
  %3293 = vmatprep.subr.bf16.mxu0 0
  %3294 = vmatpush2.bf16.msra.mxu0 0
  %3295 = vmatprep.subr.bf16.mxu0 0
  %3296 = vmatpush2.bf16.msra.mxu0 0
  %3297 = vmatprep.mubr.bf16.mxu0 0
  %3298 = vmatmul.mubr.bf16.gmra.mxu0 %v3260
  %v3299 = vpop.f32.mrf.mxu0
  %v3300 = vadd.f32 0.0, %v3299
  %v3301 = vpop.f32.mrf.mxu0
  %v3302 = vpop.f32.mrf.mxu0
  %v3303 = vadd.f32 0.0, %v3302
  %v3304 = vpop.f32.mrf.mxu0
  %3305 = vdwg.mxu0
  %v3306 = vadd.f32 %v3143, %v3300
  %v3307 = vadd.f32 %v3144, %v3303
  %s3308 = scalar_lea.vmem %s3, 960
  %v3309 = vld [vmem:[%s3308] sm:$0xf]
  %v3310 = vld [vmem:[%s3308 + $0x4] sm:$0xf]
  %v3311 = vld [vmem:[%s3308 + $0x8] sm:$0xf]
  %v3312 = vld [vmem:[%s3308 + $0xc] sm:$0xf]
  %v3313 = vld [vmem:[%s3308 + $0x10] sm:$0xf]
  %v3314 = vld [vmem:[%s3308 + $0x14] sm:$0xf]
  %v3315 = vld [vmem:[%s3308 + $0x18] sm:$0xf]
  %v3316 = vld [vmem:[%s3308 + $0x1c] sm:$0xf]
  %v3317 = vld [vmem:[%s3308 + $0x20] sm:$0xf]
  %v3318 = vld [vmem:[%s3308 + $0x24] sm:$0xf]
  %v3319 = vld [vmem:[%s3308 + $0x28] sm:$0xf]
  %v3320 = vld [vmem:[%s3308 + $0x2c] sm:$0xf]
  %v3321 = vld [vmem:[%s3308 + $0x30] sm:$0xf]
  %v3322 = vld [vmem:[%s3308 + $0x34] sm:$0xf]
  %v3323 = vld [vmem:[%s3308 + $0x38] sm:$0xf]
  %v3324 = vld [vmem:[%s3308 + $0x3c] sm:$0xf]
  %v3341 = vunpack.c.l.b16 %v3309
  %v3342 = vunpack.c.l.b16 %v3310
  %v3343 = vunpack.c.l.b16 %v3311
  %v3344 = vunpack.c.l.b16 %v3312
  %v3345 = vunpack.c.l.b16 %v3313
  %v3346 = vunpack.c.l.b16 %v3314
  %v3347 = vunpack.c.l.b16 %v3315
  %v3348 = vunpack.c.l.b16 %v3316
  %v3349 = vunpack.c.l.b16 %v3317
  %v3350 = vunpack.c.l.b16 %v3318
  %v3351 = vunpack.c.l.b16 %v3319
  %v3352 = vunpack.c.l.b16 %v3320
  %v3353 = vunpack.c.l.b16 %v3321
  %v3354 = vunpack.c.l.b16 %v3322
  %v3355 = vunpack.c.l.b16 %v3323
  %v3356 = vunpack.c.l.b16 %v3324
  %v3357 = vpack.c.b16 %v3342, %v3341
  %v3358 = vpack.c.b16 %v3344, %v3343
  %v3359 = vpack.c.b16 %v3346, %v3345
  %v3360 = vpack.c.b16 %v3348, %v3347
  %v3361 = vpack.c.b16 %v3350, %v3349
  %v3362 = vpack.c.b16 %v3352, %v3351
  %v3363 = vpack.c.b16 %v3354, %v3353
  %v3364 = vpack.c.b16 %v3356, %v3355
  %3373 = vmatprep.subr.bf16.mxu0 0
  %3374 = vmatpush1.bf16.msra.mxu0 %v3364
  %3375 = vmatprep.subr.bf16.mxu0 0
  %3376 = vmatpush1.bf16.msra.mxu0 %v3363
  %3377 = vmatprep.subr.bf16.mxu0 0
  %3378 = vmatpush1.bf16.msra.mxu0 %v3362
  %3379 = vmatprep.subr.bf16.mxu0 0
  %3380 = vmatpush1.bf16.msra.mxu0 %v3361
  %3381 = vmatprep.subr.bf16.mxu0 0
  %3382 = vmatpush1.bf16.msra.mxu0 %v3360
  %3383 = vmatprep.subr.bf16.mxu0 0
  %3384 = vmatpush1.bf16.msra.mxu0 %v3359
  %3385 = vmatprep.subr.bf16.mxu0 0
  %3386 = vmatpush1.bf16.msra.mxu0 %v3358
  %3387 = vmatprep.subr.bf16.mxu0 0
  %3388 = vmatpush1.bf16.msra.mxu0 %v3357
  %3389 = vmatprep.subr.bf16.mxu0 0
  %3390 = vmatpush2.bf16.msra.mxu0 0
  %3391 = vmatprep.subr.bf16.mxu0 0
  %3392 = vmatpush2.bf16.msra.mxu0 0
  %3393 = vmatprep.subr.bf16.mxu0 0
  %3394 = vmatpush2.bf16.msra.mxu0 0
  %3395 = vmatprep.subr.bf16.mxu0 0
  %3396 = vmatpush2.bf16.msra.mxu0 0
  %3397 = vmatprep.subr.bf16.mxu0 0
  %3398 = vmatpush2.bf16.msra.mxu0 0
  %3399 = vmatprep.subr.bf16.mxu0 0
  %3400 = vmatpush2.bf16.msra.mxu0 0
  %3401 = vmatprep.subr.bf16.mxu0 0
  %3402 = vmatpush2.bf16.msra.mxu0 0
  %3403 = vmatprep.subr.bf16.mxu0 0
  %3404 = vmatpush2.bf16.msra.mxu0 0
  %3405 = vmatprep.mubr.bf16.mxu0 0
  %3406 = vmatmul.mubr.bf16.gmra.mxu0 %v866
  %v3407 = vpop.f32.mrf.mxu0
  %v3408 = vadd.f32 0.0, %v3407
  %v3409 = vpop.f32.mrf.mxu0
  %v3410 = vpop.f32.mrf.mxu0
  %v3411 = vpop.f32.mrf.mxu0
  %3412 = vdwg.mxu0
  %v3413 = vpack.c.bf16 %v3408, %v3408
  %s3414 = scalar_lea.vmem %s4, 120
  %v3415 = vld [vmem:[%s3414] sm:$0xf]
  %v3416 = vld [vmem:[%s3414 + $0x4] sm:$0xf]
  %v3419 = vunpack.c.l.b16 %v3415
  %v3420 = vunpack.c.l.b16 %v3416
  %v3421 = vpack.c.b16 %v3420, %v3419
  %v3423 = vsel %vm1088, %v3421, 0
  %v3426 = vsel %vm1092, %v3413, 0
  %3428 = vmatprep.subr.bf16.mxu0 0
  %3429 = vmatpush1.bf16.msra.mxu0 0
  %3430 = vmatprep.subr.bf16.mxu0 0
  %3431 = vmatpush1.bf16.msra.mxu0 0
  %3432 = vmatprep.subr.bf16.mxu0 0
  %3433 = vmatpush1.bf16.msra.mxu0 0
  %3434 = vmatprep.subr.bf16.mxu0 0
  %3435 = vmatpush1.bf16.msra.mxu0 0
  %3436 = vmatprep.subr.bf16.mxu0 0
  %3437 = vmatpush1.bf16.msra.mxu0 0
  %3438 = vmatprep.subr.bf16.mxu0 0
  %3439 = vmatpush1.bf16.msra.mxu0 0
  %3440 = vmatprep.subr.bf16.mxu0 0
  %3441 = vmatpush1.bf16.msra.mxu0 0
  %3442 = vmatprep.subr.bf16.mxu0 0
  %3443 = vmatpush1.bf16.msra.mxu0 %v3426
  %3444 = vmatprep.subr.bf16.mxu0 0
  %3445 = vmatpush2.bf16.msra.mxu0 0
  %3446 = vmatprep.subr.bf16.mxu0 0
  %3447 = vmatpush2.bf16.msra.mxu0 0
  %3448 = vmatprep.subr.bf16.mxu0 0
  %3449 = vmatpush2.bf16.msra.mxu0 0
  %3450 = vmatprep.subr.bf16.mxu0 0
  %3451 = vmatpush2.bf16.msra.mxu0 0
  %3452 = vmatprep.subr.bf16.mxu0 0
  %3453 = vmatpush2.bf16.msra.mxu0 0
  %3454 = vmatprep.subr.bf16.mxu0 0
  %3455 = vmatpush2.bf16.msra.mxu0 0
  %3456 = vmatprep.subr.bf16.mxu0 0
  %3457 = vmatpush2.bf16.msra.mxu0 0
  %3458 = vmatprep.subr.bf16.mxu0 0
  %3459 = vmatpush2.bf16.msra.mxu0 0
  %3460 = vmatprep.mubr.bf16.mxu0 0
  %3461 = vmatmul.mubr.bf16.gmra.mxu0 %v3423
  %v3462 = vpop.f32.mrf.mxu0
  %v3463 = vadd.f32 0.0, %v3462
  %v3464 = vpop.f32.mrf.mxu0
  %v3465 = vpop.f32.mrf.mxu0
  %v3466 = vadd.f32 0.0, %v3465
  %v3467 = vpop.f32.mrf.mxu0
  %3468 = vdwg.mxu0
  %v3469 = vadd.f32 %v3306, %v3463
  %v3470 = vadd.f32 %v3307, %v3466
  %v3471 = vld [vmem:[%s5] sm:$0xff]
  %v3472 = vld [vmem:[%s5 + $0x8] sm:$0xff]
  %3474 = vset.pattern.permute.xlu0 0
  %3475 = vperm.xlu0 %3474, %v3471
  %v3476 = vpop.permute.xlu0 %3475
  %3479 = vset.pattern.permute.xlu0 0
  %3480 = vperm.xlu0 %3479, %v3472
  %v3481 = vpop.permute.xlu0 %3480
  %v3483 = vadd.f32 %v3469, %v3476
  %v3484 = vadd.f32 %v3470, %v3481
  %vm3485 = vcmp.ge.f32.partialorder %v3483, 0.0
  %vm3486 = vcmp.ge.f32.partialorder %v3484, 0.0
  %v3487 = vmul.f32 %v3483, 0.01
  %v3488 = vmul.f32 %v3484, 0.01
  %v3489 = vsel %vm3485, %v3483, %v3487
  %v3490 = vsel %vm3486, %v3484, %v3488
  %v3491 = vpack.c.bf16 %v3490, %v3489
  %v3492 = vld [vmem:[%s6] sm:$0xf]
  %v3493 = vld [vmem:[%s6 + $0x4] sm:$0xf]
  %v3494 = vld [vmem:[%s6 + $0x8] sm:$0xf]
  %v3495 = vld [vmem:[%s6 + $0xc] sm:$0xf]
  %v3500 = vunpack.c.l.b16 %v3492
  %v3501 = vunpack.c.l.b16 %v3493
  %v3502 = vunpack.c.l.b16 %v3494
  %v3503 = vunpack.c.l.b16 %v3495
  %v3504 = vpack.c.b16 %v3501, %v3500
  %v3505 = vpack.c.b16 %v3503, %v3502
  %vm3508 = vcmask 261120
  %v3510 = vsel %vm3508, %v3491, 0
  %3512 = vmatprep.subr.bf16.mxu0 0
  %3513 = vmatpush1.bf16.msra.mxu0 0
  %3514 = vmatprep.subr.bf16.mxu0 0
  %3515 = vmatpush1.bf16.msra.mxu0 0
  %3516 = vmatprep.subr.bf16.mxu0 0
  %3517 = vmatpush1.bf16.msra.mxu0 0
  %3518 = vmatprep.subr.bf16.mxu0 0
  %3519 = vmatpush1.bf16.msra.mxu0 0
  %3520 = vmatprep.subr.bf16.mxu0 0
  %3521 = vmatpush1.bf16.msra.mxu0 0
  %3522 = vmatprep.subr.bf16.mxu0 0
  %3523 = vmatpush1.bf16.msra.mxu0 0
  %3524 = vmatprep.subr.bf16.mxu0 0
  %3525 = vmatpush1.bf16.msra.mxu0 %v3505
  %3526 = vmatprep.subr.bf16.mxu0 0
  %3527 = vmatpush1.bf16.msra.mxu0 %v3504
  %3528 = vmatprep.subr.bf16.mxu0 0
  %3529 = vmatpush2.bf16.msra.mxu0 0
  %3530 = vmatprep.subr.bf16.mxu0 0
  %3531 = vmatpush2.bf16.msra.mxu0 0
  %3532 = vmatprep.subr.bf16.mxu0 0
  %3533 = vmatpush2.bf16.msra.mxu0 0
  %3534 = vmatprep.subr.bf16.mxu0 0
  %3535 = vmatpush2.bf16.msra.mxu0 0
  %3536 = vmatprep.subr.bf16.mxu0 0
  %3537 = vmatpush2.bf16.msra.mxu0 0
  %3538 = vmatprep.subr.bf16.mxu0 0
  %3539 = vmatpush2.bf16.msra.mxu0 0
  %3540 = vmatprep.subr.bf16.mxu0 0
  %3541 = vmatpush2.bf16.msra.mxu0 0
  %3542 = vmatprep.subr.bf16.mxu0 0
  %3543 = vmatpush2.bf16.msra.mxu0 0
  %3544 = vmatprep.mubr.bf16.mxu0 0
  %3545 = vmatmul.mubr.bf16.gmra.mxu0 %v3510
  %v3546 = vpop.f32.mrf.mxu0
  %v3547 = vadd.f32 0.0, %v3546
  %v3548 = vpop.f32.mrf.mxu0
  %v3549 = vpop.f32.mrf.mxu0
  %v3550 = vadd.f32 0.0, %v3549
  %v3551 = vpop.f32.mrf.mxu0
  %3552 = vdwg.mxu0
  %v3553 = vpack.c.bf16 %v3550, %v3547
  %v3554 = vld [vmem:[%s7] sm:$0xf]
  %v3555 = vld [vmem:[%s7 + $0x4] sm:$0xf]
  %v3556 = vld [vmem:[%s7 + $0x8] sm:$0xf]
  %v3557 = vld [vmem:[%s7 + $0xc] sm:$0xf]
  %s3558 = scalar_lea.vmem %s6, 16
  %v3559 = vld [vmem:[%s3558] sm:$0xf]
  %v3560 = vld [vmem:[%s3558 + $0x4] sm:$0xf]
  %v3561 = vld [vmem:[%s3558 + $0x8] sm:$0xf]
  %v3562 = vld [vmem:[%s3558 + $0xc] sm:$0xf]
  %v3567 = vunpack.c.l.b16 %v3559
  %v3568 = vunpack.c.l.b16 %v3560
  %v3569 = vunpack.c.l.b16 %v3561
  %v3570 = vunpack.c.l.b16 %v3562
  %v3571 = vpack.c.b16 %v3568, %v3567
  %v3572 = vpack.c.b16 %v3570, %v3569
  %3575 = vmatprep.subr.bf16.mxu0 0
  %3576 = vmatpush1.bf16.msra.mxu0 0
  %3577 = vmatprep.subr.bf16.mxu0 0
  %3578 = vmatpush1.bf16.msra.mxu0 0
  %3579 = vmatprep.subr.bf16.mxu0 0
  %3580 = vmatpush1.bf16.msra.mxu0 0
  %3581 = vmatprep.subr.bf16.mxu0 0
  %3582 = vmatpush1.bf16.msra.mxu0 0
  %3583 = vmatprep.subr.bf16.mxu0 0
  %3584 = vmatpush1.bf16.msra.mxu0 0
  %3585 = vmatprep.subr.bf16.mxu0 0
  %3586 = vmatpush1.bf16.msra.mxu0 0
  %3587 = vmatprep.subr.bf16.mxu0 0
  %3588 = vmatpush1.bf16.msra.mxu0 %v3572
  %3589 = vmatprep.subr.bf16.mxu0 0
  %3590 = vmatpush1.bf16.msra.mxu0 %v3571
  %3591 = vmatprep.subr.bf16.mxu0 0
  %3592 = vmatpush2.bf16.msra.mxu0 0
  %3593 = vmatprep.subr.bf16.mxu0 0
  %3594 = vmatpush2.bf16.msra.mxu0 0
  %3595 = vmatprep.subr.bf16.mxu0 0
  %3596 = vmatpush2.bf16.msra.mxu0 0
  %3597 = vmatprep.subr.bf16.mxu0 0
  %3598 = vmatpush2.bf16.msra.mxu0 0
  %3599 = vmatprep.subr.bf16.mxu0 0
  %3600 = vmatpush2.bf16.msra.mxu0 0
  %3601 = vmatprep.subr.bf16.mxu0 0
  %3602 = vmatpush2.bf16.msra.mxu0 0
  %3603 = vmatprep.subr.bf16.mxu0 0
  %3604 = vmatpush2.bf16.msra.mxu0 0
  %3605 = vmatprep.subr.bf16.mxu0 0
  %3606 = vmatpush2.bf16.msra.mxu0 0
  %3607 = vmatprep.mubr.bf16.mxu0 0
  %3608 = vmatmul.mubr.bf16.gmra.mxu0 %v3510
  %v3609 = vpop.f32.mrf.mxu0
  %v3610 = vadd.f32 0.0, %v3609
  %v3611 = vpop.f32.mrf.mxu0
  %v3612 = vpop.f32.mrf.mxu0
  %v3613 = vadd.f32 0.0, %v3612
  %v3614 = vpop.f32.mrf.mxu0
  %3615 = vdwg.mxu0
  %v3616 = vpack.c.bf16 %v3613, %v3610
  %s3617 = scalar_lea.vmem %s7, 16
  %v3618 = vld [vmem:[%s3617] sm:$0xf]
  %v3619 = vld [vmem:[%s3617 + $0x4] sm:$0xf]
  %v3620 = vld [vmem:[%s3617 + $0x8] sm:$0xf]
  %v3621 = vld [vmem:[%s3617 + $0xc] sm:$0xf]
  %v3626 = vunpack.c.l.b16 %v3618
  %v3627 = vunpack.c.l.b16 %v3619
  %v3628 = vunpack.c.l.b16 %v3620
  %v3629 = vunpack.c.l.b16 %v3621
  %v3630 = vpack.c.b16 %v3627, %v3626
  %v3631 = vpack.c.b16 %v3629, %v3628
  %vm3632 = vcmask 130048
  %v3634 = vsel %vm3632, %v3630, 0
  %v3637 = vsel %vm3632, %v3631, 0
  %3639 = vmatprep.subr.bf16.mxu0 0
  %3640 = vmatpush1.bf16.msra.mxu0 0
  %3641 = vmatprep.subr.bf16.mxu0 0
  %3642 = vmatpush1.bf16.msra.mxu0 0
  %3643 = vmatprep.subr.bf16.mxu0 0
  %3644 = vmatpush1.bf16.msra.mxu0 0
  %3645 = vmatprep.subr.bf16.mxu0 0
  %3646 = vmatpush1.bf16.msra.mxu0 0
  %3647 = vmatprep.subr.bf16.mxu0 0
  %3648 = vmatpush1.bf16.msra.mxu0 0
  %3649 = vmatprep.subr.bf16.mxu0 0
  %3650 = vmatpush1.bf16.msra.mxu0 0
  %3651 = vmatprep.subr.bf16.mxu0 0
  %3652 = vmatpush1.bf16.msra.mxu0 0
  %3653 = vmatprep.subr.bf16.mxu0 0
  %3654 = vmatpush1.bf16.msra.mxu0 %v3616
  %3655 = vmatprep.subr.bf16.mxu0 0
  %3656 = vmatpush2.bf16.msra.mxu0 0
  %3657 = vmatprep.subr.bf16.mxu0 0
  %3658 = vmatpush2.bf16.msra.mxu0 0
  %3659 = vmatprep.subr.bf16.mxu0 0
  %3660 = vmatpush2.bf16.msra.mxu0 0
  %3661 = vmatprep.subr.bf16.mxu0 0
  %3662 = vmatpush2.bf16.msra.mxu0 0
  %3663 = vmatprep.subr.bf16.mxu0 0
  %3664 = vmatpush2.bf16.msra.mxu0 0
  %3665 = vmatprep.subr.bf16.mxu0 0
  %3666 = vmatpush2.bf16.msra.mxu0 0
  %3667 = vmatprep.subr.bf16.mxu0 0
  %3668 = vmatpush2.bf16.msra.mxu0 0
  %3669 = vmatprep.subr.bf16.mxu0 0
  %3670 = vmatpush2.bf16.msra.mxu0 0
  %3671 = vmatprep.mubr.bf16.mxu0 0
  %3672 = vmatmul.mubr.bf16.gmra.mxu0 %v3634
  %v3673 = vpop.f32.mrf.mxu0
  %v3674 = vadd.f32 0.0, %v3673
  %v3675 = vpop.f32.mrf.mxu0
  %v3676 = vpop.f32.mrf.mxu0
  %v3677 = vadd.f32 0.0, %v3676
  %v3678 = vpop.f32.mrf.mxu0
  %3679 = vmatprep.mubr.bf16.mxu0 0
  %3680 = vmatmul.mubr.bf16.gmra.mxu0 %v3637
  %v3681 = vpop.f32.mrf.mxu0
  %v3682 = vadd.f32 0.0, %v3681
  %v3683 = vpop.f32.mrf.mxu0
  %v3684 = vpop.f32.mrf.mxu0
  %v3685 = vadd.f32 0.0, %v3684
  %v3686 = vpop.f32.mrf.mxu0
  %3687 = vdwg.mxu0
  %v3692 = vunpack.c.l.b16 %v3554
  %v3693 = vunpack.c.l.b16 %v3555
  %v3694 = vunpack.c.l.b16 %v3556
  %v3695 = vunpack.c.l.b16 %v3557
  %v3696 = vpack.c.b16 %v3693, %v3692
  %v3697 = vpack.c.b16 %v3695, %v3694
  %v3699 = vsel %vm3632, %v3696, 0
  %v3702 = vsel %vm3632, %v3697, 0
  %3704 = vmatprep.subr.bf16.mxu0 0
  %3705 = vmatpush1.bf16.msra.mxu0 0
  %3706 = vmatprep.subr.bf16.mxu0 0
  %3707 = vmatpush1.bf16.msra.mxu0 0
  %3708 = vmatprep.subr.bf16.mxu0 0
  %3709 = vmatpush1.bf16.msra.mxu0 0
  %3710 = vmatprep.subr.bf16.mxu0 0
  %3711 = vmatpush1.bf16.msra.mxu0 0
  %3712 = vmatprep.subr.bf16.mxu0 0
  %3713 = vmatpush1.bf16.msra.mxu0 0
  %3714 = vmatprep.subr.bf16.mxu0 0
  %3715 = vmatpush1.bf16.msra.mxu0 0
  %3716 = vmatprep.subr.bf16.mxu0 0
  %3717 = vmatpush1.bf16.msra.mxu0 0
  %3718 = vmatprep.subr.bf16.mxu0 0
  %3719 = vmatpush1.bf16.msra.mxu0 %v3553
  %3720 = vmatprep.subr.bf16.mxu0 0
  %3721 = vmatpush2.bf16.msra.mxu0 0
  %3722 = vmatprep.subr.bf16.mxu0 0
  %3723 = vmatpush2.bf16.msra.mxu0 0
  %3724 = vmatprep.subr.bf16.mxu0 0
  %3725 = vmatpush2.bf16.msra.mxu0 0
  %3726 = vmatprep.subr.bf16.mxu0 0
  %3727 = vmatpush2.bf16.msra.mxu0 0
  %3728 = vmatprep.subr.bf16.mxu0 0
  %3729 = vmatpush2.bf16.msra.mxu0 0
  %3730 = vmatprep.subr.bf16.mxu0 0
  %3731 = vmatpush2.bf16.msra.mxu0 0
  %3732 = vmatprep.subr.bf16.mxu0 0
  %3733 = vmatpush2.bf16.msra.mxu0 0
  %3734 = vmatprep.subr.bf16.mxu0 0
  %3735 = vmatpush2.bf16.msra.mxu0 0
  %3736 = vmatprep.mubr.bf16.mxu0 0
  %3737 = vmatmul.mubr.bf16.gmra.mxu0 %v3699
  %v3738 = vpop.f32.mrf.mxu0
  %v3739 = vadd.f32 %v3674, %v3738
  %v3740 = vpop.f32.mrf.mxu0
  %v3741 = vpop.f32.mrf.mxu0
  %v3742 = vadd.f32 %v3677, %v3741
  %v3743 = vpop.f32.mrf.mxu0
  %3744 = vmatprep.mubr.bf16.mxu0 0
  %3745 = vmatmul.mubr.bf16.gmra.mxu0 %v3702
  %v3746 = vpop.f32.mrf.mxu0
  %v3747 = vadd.f32 %v3682, %v3746
  %v3748 = vpop.f32.mrf.mxu0
  %v3749 = vpop.f32.mrf.mxu0
  %v3750 = vadd.f32 %v3685, %v3749
  %v3751 = vpop.f32.mrf.mxu0
  %3752 = vdwg.mxu0
  %s3753 = scalar_lea.vmem %s6, 32
  %v3754 = vld [vmem:[%s3753] sm:$0xf]
  %v3755 = vld [vmem:[%s3753 + $0x4] sm:$0xf]
  %v3756 = vld [vmem:[%s3753 + $0x8] sm:$0xf]
  %v3757 = vld [vmem:[%s3753 + $0xc] sm:$0xf]
  %v3762 = vunpack.c.l.b16 %v3754
  %v3763 = vunpack.c.l.b16 %v3755
  %v3764 = vunpack.c.l.b16 %v3756
  %v3765 = vunpack.c.l.b16 %v3757
  %v3766 = vpack.c.b16 %v3763, %v3762
  %v3767 = vpack.c.b16 %v3765, %v3764
  %3770 = vmatprep.subr.bf16.mxu0 0
  %3771 = vmatpush1.bf16.msra.mxu0 0
  %3772 = vmatprep.subr.bf16.mxu0 0
  %3773 = vmatpush1.bf16.msra.mxu0 0
  %3774 = vmatprep.subr.bf16.mxu0 0
  %3775 = vmatpush1.bf16.msra.mxu0 0
  %3776 = vmatprep.subr.bf16.mxu0 0
  %3777 = vmatpush1.bf16.msra.mxu0 0
  %3778 = vmatprep.subr.bf16.mxu0 0
  %3779 = vmatpush1.bf16.msra.mxu0 0
  %3780 = vmatprep.subr.bf16.mxu0 0
  %3781 = vmatpush1.bf16.msra.mxu0 0
  %3782 = vmatprep.subr.bf16.mxu0 0
  %3783 = vmatpush1.bf16.msra.mxu0 %v3767
  %3784 = vmatprep.subr.bf16.mxu0 0
  %3785 = vmatpush1.bf16.msra.mxu0 %v3766
  %3786 = vmatprep.subr.bf16.mxu0 0
  %3787 = vmatpush2.bf16.msra.mxu0 0
  %3788 = vmatprep.subr.bf16.mxu0 0
  %3789 = vmatpush2.bf16.msra.mxu0 0
  %3790 = vmatprep.subr.bf16.mxu0 0
  %3791 = vmatpush2.bf16.msra.mxu0 0
  %3792 = vmatprep.subr.bf16.mxu0 0
  %3793 = vmatpush2.bf16.msra.mxu0 0
  %3794 = vmatprep.subr.bf16.mxu0 0
  %3795 = vmatpush2.bf16.msra.mxu0 0
  %3796 = vmatprep.subr.bf16.mxu0 0
  %3797 = vmatpush2.bf16.msra.mxu0 0
  %3798 = vmatprep.subr.bf16.mxu0 0
  %3799 = vmatpush2.bf16.msra.mxu0 0
  %3800 = vmatprep.subr.bf16.mxu0 0
  %3801 = vmatpush2.bf16.msra.mxu0 0
  %3802 = vmatprep.mubr.bf16.mxu0 0
  %3803 = vmatmul.mubr.bf16.gmra.mxu0 %v3510
  %v3804 = vpop.f32.mrf.mxu0
  %v3805 = vadd.f32 0.0, %v3804
  %v3806 = vpop.f32.mrf.mxu0
  %v3807 = vpop.f32.mrf.mxu0
  %v3808 = vadd.f32 0.0, %v3807
  %v3809 = vpop.f32.mrf.mxu0
  %3810 = vdwg.mxu0
  %v3811 = vpack.c.bf16 %v3808, %v3805
  %s3812 = scalar_lea.vmem %s7, 32
  %v3813 = vld [vmem:[%s3812] sm:$0xf]
  %v3814 = vld [vmem:[%s3812 + $0x4] sm:$0xf]
  %v3815 = vld [vmem:[%s3812 + $0x8] sm:$0xf]
  %v3816 = vld [vmem:[%s3812 + $0xc] sm:$0xf]
  %v3821 = vunpack.c.l.b16 %v3813
  %v3822 = vunpack.c.l.b16 %v3814
  %v3823 = vunpack.c.l.b16 %v3815
  %v3824 = vunpack.c.l.b16 %v3816
  %v3825 = vpack.c.b16 %v3822, %v3821
  %v3826 = vpack.c.b16 %v3824, %v3823
  %v3828 = vsel %vm3632, %v3825, 0
  %v3831 = vsel %vm3632, %v3826, 0
  %3833 = vmatprep.subr.bf16.mxu0 0
  %3834 = vmatpush1.bf16.msra.mxu0 0
  %3835 = vmatprep.subr.bf16.mxu0 0
  %3836 = vmatpush1.bf16.msra.mxu0 0
  %3837 = vmatprep.subr.bf16.mxu0 0
  %3838 = vmatpush1.bf16.msra.mxu0 0
  %3839 = vmatprep.subr.bf16.mxu0 0
  %3840 = vmatpush1.bf16.msra.mxu0 0
  %3841 = vmatprep.subr.bf16.mxu0 0
  %3842 = vmatpush1.bf16.msra.mxu0 0
  %3843 = vmatprep.subr.bf16.mxu0 0
  %3844 = vmatpush1.bf16.msra.mxu0 0
  %3845 = vmatprep.subr.bf16.mxu0 0
  %3846 = vmatpush1.bf16.msra.mxu0 0
  %3847 = vmatprep.subr.bf16.mxu0 0
  %3848 = vmatpush1.bf16.msra.mxu0 %v3811
  %3849 = vmatprep.subr.bf16.mxu0 0
  %3850 = vmatpush2.bf16.msra.mxu0 0
  %3851 = vmatprep.subr.bf16.mxu0 0
  %3852 = vmatpush2.bf16.msra.mxu0 0
  %3853 = vmatprep.subr.bf16.mxu0 0
  %3854 = vmatpush2.bf16.msra.mxu0 0
  %3855 = vmatprep.subr.bf16.mxu0 0
  %3856 = vmatpush2.bf16.msra.mxu0 0
  %3857 = vmatprep.subr.bf16.mxu0 0
  %3858 = vmatpush2.bf16.msra.mxu0 0
  %3859 = vmatprep.subr.bf16.mxu0 0
  %3860 = vmatpush2.bf16.msra.mxu0 0
  %3861 = vmatprep.subr.bf16.mxu0 0
  %3862 = vmatpush2.bf16.msra.mxu0 0
  %3863 = vmatprep.subr.bf16.mxu0 0
  %3864 = vmatpush2.bf16.msra.mxu0 0
  %3865 = vmatprep.mubr.bf16.mxu0 0
  %3866 = vmatmul.mubr.bf16.gmra.mxu0 %v3828
  %v3867 = vpop.f32.mrf.mxu0
  %v3868 = vadd.f32 0.0, %v3867
  %v3869 = vpop.f32.mrf.mxu0
  %v3870 = vpop.f32.mrf.mxu0
  %v3871 = vadd.f32 0.0, %v3870
  %v3872 = vpop.f32.mrf.mxu0
  %3873 = vmatprep.mubr.bf16.mxu0 0
  %3874 = vmatmul.mubr.bf16.gmra.mxu0 %v3831
  %v3875 = vpop.f32.mrf.mxu0
  %v3876 = vadd.f32 0.0, %v3875
  %v3877 = vpop.f32.mrf.mxu0
  %v3878 = vpop.f32.mrf.mxu0
  %v3879 = vadd.f32 0.0, %v3878
  %v3880 = vpop.f32.mrf.mxu0
  %3881 = vdwg.mxu0
  %v3882 = vadd.f32 %v3739, %v3868
  %v3883 = vadd.f32 %v3742, %v3871
  %v3884 = vadd.f32 %v3747, %v3876
  %v3885 = vadd.f32 %v3750, %v3879
  %s3886 = scalar_lea.vmem %s6, 48
  %v3887 = vld [vmem:[%s3886] sm:$0xf]
  %v3888 = vld [vmem:[%s3886 + $0x4] sm:$0xf]
  %v3889 = vld [vmem:[%s3886 + $0x8] sm:$0xf]
  %v3890 = vld [vmem:[%s3886 + $0xc] sm:$0xf]
  %v3895 = vunpack.c.l.b16 %v3887
  %v3896 = vunpack.c.l.b16 %v3888
  %v3897 = vunpack.c.l.b16 %v3889
  %v3898 = vunpack.c.l.b16 %v3890
  %v3899 = vpack.c.b16 %v3896, %v3895
  %v3900 = vpack.c.b16 %v3898, %v3897
  %3903 = vmatprep.subr.bf16.mxu0 0
  %3904 = vmatpush1.bf16.msra.mxu0 0
  %3905 = vmatprep.subr.bf16.mxu0 0
  %3906 = vmatpush1.bf16.msra.mxu0 0
  %3907 = vmatprep.subr.bf16.mxu0 0
  %3908 = vmatpush1.bf16.msra.mxu0 0
  %3909 = vmatprep.subr.bf16.mxu0 0
  %3910 = vmatpush1.bf16.msra.mxu0 0
  %3911 = vmatprep.subr.bf16.mxu0 0
  %3912 = vmatpush1.bf16.msra.mxu0 0
  %3913 = vmatprep.subr.bf16.mxu0 0
  %3914 = vmatpush1.bf16.msra.mxu0 0
  %3915 = vmatprep.subr.bf16.mxu0 0
  %3916 = vmatpush1.bf16.msra.mxu0 %v3900
  %3917 = vmatprep.subr.bf16.mxu0 0
  %3918 = vmatpush1.bf16.msra.mxu0 %v3899
  %3919 = vmatprep.subr.bf16.mxu0 0
  %3920 = vmatpush2.bf16.msra.mxu0 0
  %3921 = vmatprep.subr.bf16.mxu0 0
  %3922 = vmatpush2.bf16.msra.mxu0 0
  %3923 = vmatprep.subr.bf16.mxu0 0
  %3924 = vmatpush2.bf16.msra.mxu0 0
  %3925 = vmatprep.subr.bf16.mxu0 0
  %3926 = vmatpush2.bf16.msra.mxu0 0
  %3927 = vmatprep.subr.bf16.mxu0 0
  %3928 = vmatpush2.bf16.msra.mxu0 0
  %3929 = vmatprep.subr.bf16.mxu0 0
  %3930 = vmatpush2.bf16.msra.mxu0 0
  %3931 = vmatprep.subr.bf16.mxu0 0
  %3932 = vmatpush2.bf16.msra.mxu0 0
  %3933 = vmatprep.subr.bf16.mxu0 0
  %3934 = vmatpush2.bf16.msra.mxu0 0
  %3935 = vmatprep.mubr.bf16.mxu0 0
  %3936 = vmatmul.mubr.bf16.gmra.mxu0 %v3510
  %v3937 = vpop.f32.mrf.mxu0
  %v3938 = vadd.f32 0.0, %v3937
  %v3939 = vpop.f32.mrf.mxu0
  %v3940 = vpop.f32.mrf.mxu0
  %v3941 = vadd.f32 0.0, %v3940
  %v3942 = vpop.f32.mrf.mxu0
  %3943 = vdwg.mxu0
  %v3944 = vpack.c.bf16 %v3941, %v3938
  %s3945 = scalar_lea.vmem %s7, 48
  %v3946 = vld [vmem:[%s3945] sm:$0xf]
  %v3947 = vld [vmem:[%s3945 + $0x4] sm:$0xf]
  %v3948 = vld [vmem:[%s3945 + $0x8] sm:$0xf]
  %v3949 = vld [vmem:[%s3945 + $0xc] sm:$0xf]
  %v3954 = vunpack.c.l.b16 %v3946
  %v3955 = vunpack.c.l.b16 %v3947
  %v3956 = vunpack.c.l.b16 %v3948
  %v3957 = vunpack.c.l.b16 %v3949
  %v3958 = vpack.c.b16 %v3955, %v3954
  %v3959 = vpack.c.b16 %v3957, %v3956
  %v3961 = vsel %vm3632, %v3958, 0
  %v3964 = vsel %vm3632, %v3959, 0
  %3966 = vmatprep.subr.bf16.mxu0 0
  %3967 = vmatpush1.bf16.msra.mxu0 0
  %3968 = vmatprep.subr.bf16.mxu0 0
  %3969 = vmatpush1.bf16.msra.mxu0 0
  %3970 = vmatprep.subr.bf16.mxu0 0
  %3971 = vmatpush1.bf16.msra.mxu0 0
  %3972 = vmatprep.subr.bf16.mxu0 0
  %3973 = vmatpush1.bf16.msra.mxu0 0
  %3974 = vmatprep.subr.bf16.mxu0 0
  %3975 = vmatpush1.bf16.msra.mxu0 0
  %3976 = vmatprep.subr.bf16.mxu0 0
  %3977 = vmatpush1.bf16.msra.mxu0 0
  %3978 = vmatprep.subr.bf16.mxu0 0
  %3979 = vmatpush1.bf16.msra.mxu0 0
  %3980 = vmatprep.subr.bf16.mxu0 0
  %3981 = vmatpush1.bf16.msra.mxu0 %v3944
  %3982 = vmatprep.subr.bf16.mxu0 0
  %3983 = vmatpush2.bf16.msra.mxu0 0
  %3984 = vmatprep.subr.bf16.mxu0 0
  %3985 = vmatpush2.bf16.msra.mxu0 0
  %3986 = vmatprep.subr.bf16.mxu0 0
  %3987 = vmatpush2.bf16.msra.mxu0 0
  %3988 = vmatprep.subr.bf16.mxu0 0
  %3989 = vmatpush2.bf16.msra.mxu0 0
  %3990 = vmatprep.subr.bf16.mxu0 0
  %3991 = vmatpush2.bf16.msra.mxu0 0
  %3992 = vmatprep.subr.bf16.mxu0 0
  %3993 = vmatpush2.bf16.msra.mxu0 0
  %3994 = vmatprep.subr.bf16.mxu0 0
  %3995 = vmatpush2.bf16.msra.mxu0 0
  %3996 = vmatprep.subr.bf16.mxu0 0
  %3997 = vmatpush2.bf16.msra.mxu0 0
  %3998 = vmatprep.mubr.bf16.mxu0 0
  %3999 = vmatmul.mubr.bf16.gmra.mxu0 %v3961
  %v4000 = vpop.f32.mrf.mxu0
  %v4001 = vadd.f32 0.0, %v4000
  %v4002 = vpop.f32.mrf.mxu0
  %v4003 = vpop.f32.mrf.mxu0
  %v4004 = vadd.f32 0.0, %v4003
  %v4005 = vpop.f32.mrf.mxu0
  %4006 = vmatprep.mubr.bf16.mxu0 0
  %4007 = vmatmul.mubr.bf16.gmra.mxu0 %v3964
  %v4008 = vpop.f32.mrf.mxu0
  %v4009 = vadd.f32 0.0, %v4008
  %v4010 = vpop.f32.mrf.mxu0
  %v4011 = vpop.f32.mrf.mxu0
  %v4012 = vadd.f32 0.0, %v4011
  %v4013 = vpop.f32.mrf.mxu0
  %4014 = vdwg.mxu0
  %v4015 = vadd.f32 %v3882, %v4001
  %v4016 = vadd.f32 %v3883, %v4004
  %v4017 = vadd.f32 %v3884, %v4009
  %v4018 = vadd.f32 %v3885, %v4012
  %s4019 = scalar_lea.vmem %s6, 64
  %v4020 = vld [vmem:[%s4019] sm:$0xf]
  %v4021 = vld [vmem:[%s4019 + $0x4] sm:$0xf]
  %v4022 = vld [vmem:[%s4019 + $0x8] sm:$0xf]
  %v4023 = vld [vmem:[%s4019 + $0xc] sm:$0xf]
  %v4028 = vunpack.c.l.b16 %v4020
  %v4029 = vunpack.c.l.b16 %v4021
  %v4030 = vunpack.c.l.b16 %v4022
  %v4031 = vunpack.c.l.b16 %v4023
  %v4032 = vpack.c.b16 %v4029, %v4028
  %v4033 = vpack.c.b16 %v4031, %v4030
  %4036 = vmatprep.subr.bf16.mxu0 0
  %4037 = vmatpush1.bf16.msra.mxu0 0
  %4038 = vmatprep.subr.bf16.mxu0 0
  %4039 = vmatpush1.bf16.msra.mxu0 0
  %4040 = vmatprep.subr.bf16.mxu0 0
  %4041 = vmatpush1.bf16.msra.mxu0 0
  %4042 = vmatprep.subr.bf16.mxu0 0
  %4043 = vmatpush1.bf16.msra.mxu0 0
  %4044 = vmatprep.subr.bf16.mxu0 0
  %4045 = vmatpush1.bf16.msra.mxu0 0
  %4046 = vmatprep.subr.bf16.mxu0 0
  %4047 = vmatpush1.bf16.msra.mxu0 0
  %4048 = vmatprep.subr.bf16.mxu0 0
  %4049 = vmatpush1.bf16.msra.mxu0 %v4033
  %4050 = vmatprep.subr.bf16.mxu0 0
  %4051 = vmatpush1.bf16.msra.mxu0 %v4032
  %4052 = vmatprep.subr.bf16.mxu0 0
  %4053 = vmatpush2.bf16.msra.mxu0 0
  %4054 = vmatprep.subr.bf16.mxu0 0
  %4055 = vmatpush2.bf16.msra.mxu0 0
  %4056 = vmatprep.subr.bf16.mxu0 0
  %4057 = vmatpush2.bf16.msra.mxu0 0
  %4058 = vmatprep.subr.bf16.mxu0 0
  %4059 = vmatpush2.bf16.msra.mxu0 0
  %4060 = vmatprep.subr.bf16.mxu0 0
  %4061 = vmatpush2.bf16.msra.mxu0 0
  %4062 = vmatprep.subr.bf16.mxu0 0
  %4063 = vmatpush2.bf16.msra.mxu0 0
  %4064 = vmatprep.subr.bf16.mxu0 0
  %4065 = vmatpush2.bf16.msra.mxu0 0
  %4066 = vmatprep.subr.bf16.mxu0 0
  %4067 = vmatpush2.bf16.msra.mxu0 0
  %4068 = vmatprep.mubr.bf16.mxu0 0
  %4069 = vmatmul.mubr.bf16.gmra.mxu0 %v3510
  %v4070 = vpop.f32.mrf.mxu0
  %v4071 = vadd.f32 0.0, %v4070
  %v4072 = vpop.f32.mrf.mxu0
  %v4073 = vpop.f32.mrf.mxu0
  %v4074 = vadd.f32 0.0, %v4073
  %v4075 = vpop.f32.mrf.mxu0
  %4076 = vdwg.mxu0
  %v4077 = vpack.c.bf16 %v4074, %v4071
  %s4078 = scalar_lea.vmem %s7, 64
  %v4079 = vld [vmem:[%s4078] sm:$0xf]
  %v4080 = vld [vmem:[%s4078 + $0x4] sm:$0xf]
  %v4081 = vld [vmem:[%s4078 + $0x8] sm:$0xf]
  %v4082 = vld [vmem:[%s4078 + $0xc] sm:$0xf]
  %v4087 = vunpack.c.l.b16 %v4079
  %v4088 = vunpack.c.l.b16 %v4080
  %v4089 = vunpack.c.l.b16 %v4081
  %v4090 = vunpack.c.l.b16 %v4082
  %v4091 = vpack.c.b16 %v4088, %v4087
  %v4092 = vpack.c.b16 %v4090, %v4089
  %v4094 = vsel %vm3632, %v4091, 0
  %v4097 = vsel %vm3632, %v4092, 0
  %4099 = vmatprep.subr.bf16.mxu0 0
  %4100 = vmatpush1.bf16.msra.mxu0 0
  %4101 = vmatprep.subr.bf16.mxu0 0
  %4102 = vmatpush1.bf16.msra.mxu0 0
  %4103 = vmatprep.subr.bf16.mxu0 0
  %4104 = vmatpush1.bf16.msra.mxu0 0
  %4105 = vmatprep.subr.bf16.mxu0 0
  %4106 = vmatpush1.bf16.msra.mxu0 0
  %4107 = vmatprep.subr.bf16.mxu0 0
  %4108 = vmatpush1.bf16.msra.mxu0 0
  %4109 = vmatprep.subr.bf16.mxu0 0
  %4110 = vmatpush1.bf16.msra.mxu0 0
  %4111 = vmatprep.subr.bf16.mxu0 0
  %4112 = vmatpush1.bf16.msra.mxu0 0
  %4113 = vmatprep.subr.bf16.mxu0 0
  %4114 = vmatpush1.bf16.msra.mxu0 %v4077
  %4115 = vmatprep.subr.bf16.mxu0 0
  %4116 = vmatpush2.bf16.msra.mxu0 0
  %4117 = vmatprep.subr.bf16.mxu0 0
  %4118 = vmatpush2.bf16.msra.mxu0 0
  %4119 = vmatprep.subr.bf16.mxu0 0
  %4120 = vmatpush2.bf16.msra.mxu0 0
  %4121 = vmatprep.subr.bf16.mxu0 0
  %4122 = vmatpush2.bf16.msra.mxu0 0
  %4123 = vmatprep.subr.bf16.mxu0 0
  %4124 = vmatpush2.bf16.msra.mxu0 0
  %4125 = vmatprep.subr.bf16.mxu0 0
  %4126 = vmatpush2.bf16.msra.mxu0 0
  %4127 = vmatprep.subr.bf16.mxu0 0
  %4128 = vmatpush2.bf16.msra.mxu0 0
  %4129 = vmatprep.subr.bf16.mxu0 0
  %4130 = vmatpush2.bf16.msra.mxu0 0
  %4131 = vmatprep.mubr.bf16.mxu0 0
  %4132 = vmatmul.mubr.bf16.gmra.mxu0 %v4094
  %v4133 = vpop.f32.mrf.mxu0
  %v4134 = vadd.f32 0.0, %v4133
  %v4135 = vpop.f32.mrf.mxu0
  %v4136 = vpop.f32.mrf.mxu0
  %v4137 = vadd.f32 0.0, %v4136
  %v4138 = vpop.f32.mrf.mxu0
  %4139 = vmatprep.mubr.bf16.mxu0 0
  %4140 = vmatmul.mubr.bf16.gmra.mxu0 %v4097
  %v4141 = vpop.f32.mrf.mxu0
  %v4142 = vadd.f32 0.0, %v4141
  %v4143 = vpop.f32.mrf.mxu0
  %v4144 = vpop.f32.mrf.mxu0
  %v4145 = vadd.f32 0.0, %v4144
  %v4146 = vpop.f32.mrf.mxu0
  %4147 = vdwg.mxu0
  %v4148 = vadd.f32 %v4015, %v4134
  %v4149 = vadd.f32 %v4016, %v4137
  %v4150 = vadd.f32 %v4017, %v4142
  %v4151 = vadd.f32 %v4018, %v4145
  %s4152 = scalar_lea.vmem %s6, 80
  %v4153 = vld [vmem:[%s4152] sm:$0xf]
  %v4154 = vld [vmem:[%s4152 + $0x4] sm:$0xf]
  %v4155 = vld [vmem:[%s4152 + $0x8] sm:$0xf]
  %v4156 = vld [vmem:[%s4152 + $0xc] sm:$0xf]
  %v4161 = vunpack.c.l.b16 %v4153
  %v4162 = vunpack.c.l.b16 %v4154
  %v4163 = vunpack.c.l.b16 %v4155
  %v4164 = vunpack.c.l.b16 %v4156
  %v4165 = vpack.c.b16 %v4162, %v4161
  %v4166 = vpack.c.b16 %v4164, %v4163
  %4169 = vmatprep.subr.bf16.mxu0 0
  %4170 = vmatpush1.bf16.msra.mxu0 0
  %4171 = vmatprep.subr.bf16.mxu0 0
  %4172 = vmatpush1.bf16.msra.mxu0 0
  %4173 = vmatprep.subr.bf16.mxu0 0
  %4174 = vmatpush1.bf16.msra.mxu0 0
  %4175 = vmatprep.subr.bf16.mxu0 0
  %4176 = vmatpush1.bf16.msra.mxu0 0
  %4177 = vmatprep.subr.bf16.mxu0 0
  %4178 = vmatpush1.bf16.msra.mxu0 0
  %4179 = vmatprep.subr.bf16.mxu0 0
  %4180 = vmatpush1.bf16.msra.mxu0 0
  %4181 = vmatprep.subr.bf16.mxu0 0
  %4182 = vmatpush1.bf16.msra.mxu0 %v4166
  %4183 = vmatprep.subr.bf16.mxu0 0
  %4184 = vmatpush1.bf16.msra.mxu0 %v4165
  %4185 = vmatprep.subr.bf16.mxu0 0
  %4186 = vmatpush2.bf16.msra.mxu0 0
  %4187 = vmatprep.subr.bf16.mxu0 0
  %4188 = vmatpush2.bf16.msra.mxu0 0
  %4189 = vmatprep.subr.bf16.mxu0 0
  %4190 = vmatpush2.bf16.msra.mxu0 0
  %4191 = vmatprep.subr.bf16.mxu0 0
  %4192 = vmatpush2.bf16.msra.mxu0 0
  %4193 = vmatprep.subr.bf16.mxu0 0
  %4194 = vmatpush2.bf16.msra.mxu0 0
  %4195 = vmatprep.subr.bf16.mxu0 0
  %4196 = vmatpush2.bf16.msra.mxu0 0
  %4197 = vmatprep.subr.bf16.mxu0 0
  %4198 = vmatpush2.bf16.msra.mxu0 0
  %4199 = vmatprep.subr.bf16.mxu0 0
  %4200 = vmatpush2.bf16.msra.mxu0 0
  %4201 = vmatprep.mubr.bf16.mxu0 0
  %4202 = vmatmul.mubr.bf16.gmra.mxu0 %v3510
  %v4203 = vpop.f32.mrf.mxu0
  %v4204 = vadd.f32 0.0, %v4203
  %v4205 = vpop.f32.mrf.mxu0
  %v4206 = vpop.f32.mrf.mxu0
  %v4207 = vadd.f32 0.0, %v4206
  %v4208 = vpop.f32.mrf.mxu0
  %4209 = vdwg.mxu0
  %v4210 = vpack.c.bf16 %v4207, %v4204
  %s4211 = scalar_lea.vmem %s7, 80
  %v4212 = vld [vmem:[%s4211] sm:$0xf]
  %v4213 = vld [vmem:[%s4211 + $0x4] sm:$0xf]
  %v4214 = vld [vmem:[%s4211 + $0x8] sm:$0xf]
  %v4215 = vld [vmem:[%s4211 + $0xc] sm:$0xf]
  %v4220 = vunpack.c.l.b16 %v4212
  %v4221 = vunpack.c.l.b16 %v4213
  %v4222 = vunpack.c.l.b16 %v4214
  %v4223 = vunpack.c.l.b16 %v4215
  %v4224 = vpack.c.b16 %v4221, %v4220
  %v4225 = vpack.c.b16 %v4223, %v4222
  %v4227 = vsel %vm3632, %v4224, 0
  %v4230 = vsel %vm3632, %v4225, 0
  %4232 = vmatprep.subr.bf16.mxu0 0
  %4233 = vmatpush1.bf16.msra.mxu0 0
  %4234 = vmatprep.subr.bf16.mxu0 0
  %4235 = vmatpush1.bf16.msra.mxu0 0
  %4236 = vmatprep.subr.bf16.mxu0 0
  %4237 = vmatpush1.bf16.msra.mxu0 0
  %4238 = vmatprep.subr.bf16.mxu0 0
  %4239 = vmatpush1.bf16.msra.mxu0 0
  %4240 = vmatprep.subr.bf16.mxu0 0
  %4241 = vmatpush1.bf16.msra.mxu0 0
  %4242 = vmatprep.subr.bf16.mxu0 0
  %4243 = vmatpush1.bf16.msra.mxu0 0
  %4244 = vmatprep.subr.bf16.mxu0 0
  %4245 = vmatpush1.bf16.msra.mxu0 0
  %4246 = vmatprep.subr.bf16.mxu0 0
  %4247 = vmatpush1.bf16.msra.mxu0 %v4210
  %4248 = vmatprep.subr.bf16.mxu0 0
  %4249 = vmatpush2.bf16.msra.mxu0 0
  %4250 = vmatprep.subr.bf16.mxu0 0
  %4251 = vmatpush2.bf16.msra.mxu0 0
  %4252 = vmatprep.subr.bf16.mxu0 0
  %4253 = vmatpush2.bf16.msra.mxu0 0
  %4254 = vmatprep.subr.bf16.mxu0 0
  %4255 = vmatpush2.bf16.msra.mxu0 0
  %4256 = vmatprep.subr.bf16.mxu0 0
  %4257 = vmatpush2.bf16.msra.mxu0 0
  %4258 = vmatprep.subr.bf16.mxu0 0
  %4259 = vmatpush2.bf16.msra.mxu0 0
  %4260 = vmatprep.subr.bf16.mxu0 0
  %4261 = vmatpush2.bf16.msra.mxu0 0
  %4262 = vmatprep.subr.bf16.mxu0 0
  %4263 = vmatpush2.bf16.msra.mxu0 0
  %4264 = vmatprep.mubr.bf16.mxu0 0
  %4265 = vmatmul.mubr.bf16.gmra.mxu0 %v4227
  %v4266 = vpop.f32.mrf.mxu0
  %v4267 = vadd.f32 0.0, %v4266
  %v4268 = vpop.f32.mrf.mxu0
  %v4269 = vpop.f32.mrf.mxu0
  %v4270 = vadd.f32 0.0, %v4269
  %v4271 = vpop.f32.mrf.mxu0
  %4272 = vmatprep.mubr.bf16.mxu0 0
  %4273 = vmatmul.mubr.bf16.gmra.mxu0 %v4230
  %v4274 = vpop.f32.mrf.mxu0
  %v4275 = vadd.f32 0.0, %v4274
  %v4276 = vpop.f32.mrf.mxu0
  %v4277 = vpop.f32.mrf.mxu0
  %v4278 = vadd.f32 0.0, %v4277
  %v4279 = vpop.f32.mrf.mxu0
  %4280 = vdwg.mxu0
  %v4281 = vadd.f32 %v4148, %v4267
  %v4282 = vadd.f32 %v4149, %v4270
  %v4283 = vadd.f32 %v4150, %v4275
  %v4284 = vadd.f32 %v4151, %v4278
  %s4285 = scalar_lea.vmem %s6, 96
  %v4286 = vld [vmem:[%s4285] sm:$0xf]
  %v4287 = vld [vmem:[%s4285 + $0x4] sm:$0xf]
  %v4288 = vld [vmem:[%s4285 + $0x8] sm:$0xf]
  %v4289 = vld [vmem:[%s4285 + $0xc] sm:$0xf]
  %v4294 = vunpack.c.l.b16 %v4286
  %v4295 = vunpack.c.l.b16 %v4287
  %v4296 = vunpack.c.l.b16 %v4288
  %v4297 = vunpack.c.l.b16 %v4289
  %v4298 = vpack.c.b16 %v4295, %v4294
  %v4299 = vpack.c.b16 %v4297, %v4296
  %4302 = vmatprep.subr.bf16.mxu0 0
  %4303 = vmatpush1.bf16.msra.mxu0 0
  %4304 = vmatprep.subr.bf16.mxu0 0
  %4305 = vmatpush1.bf16.msra.mxu0 0
  %4306 = vmatprep.subr.bf16.mxu0 0
  %4307 = vmatpush1.bf16.msra.mxu0 0
  %4308 = vmatprep.subr.bf16.mxu0 0
  %4309 = vmatpush1.bf16.msra.mxu0 0
  %4310 = vmatprep.subr.bf16.mxu0 0
  %4311 = vmatpush1.bf16.msra.mxu0 0
  %4312 = vmatprep.subr.bf16.mxu0 0
  %4313 = vmatpush1.bf16.msra.mxu0 0
  %4314 = vmatprep.subr.bf16.mxu0 0
  %4315 = vmatpush1.bf16.msra.mxu0 %v4299
  %4316 = vmatprep.subr.bf16.mxu0 0
  %4317 = vmatpush1.bf16.msra.mxu0 %v4298
  %4318 = vmatprep.subr.bf16.mxu0 0
  %4319 = vmatpush2.bf16.msra.mxu0 0
  %4320 = vmatprep.subr.bf16.mxu0 0
  %4321 = vmatpush2.bf16.msra.mxu0 0
  %4322 = vmatprep.subr.bf16.mxu0 0
  %4323 = vmatpush2.bf16.msra.mxu0 0
  %4324 = vmatprep.subr.bf16.mxu0 0
  %4325 = vmatpush2.bf16.msra.mxu0 0
  %4326 = vmatprep.subr.bf16.mxu0 0
  %4327 = vmatpush2.bf16.msra.mxu0 0
  %4328 = vmatprep.subr.bf16.mxu0 0
  %4329 = vmatpush2.bf16.msra.mxu0 0
  %4330 = vmatprep.subr.bf16.mxu0 0
  %4331 = vmatpush2.bf16.msra.mxu0 0
  %4332 = vmatprep.subr.bf16.mxu0 0
  %4333 = vmatpush2.bf16.msra.mxu0 0
  %4334 = vmatprep.mubr.bf16.mxu0 0
  %4335 = vmatmul.mubr.bf16.gmra.mxu0 %v3510
  %v4336 = vpop.f32.mrf.mxu0
  %v4337 = vadd.f32 0.0, %v4336
  %v4338 = vpop.f32.mrf.mxu0
  %v4339 = vpop.f32.mrf.mxu0
  %v4340 = vadd.f32 0.0, %v4339
  %v4341 = vpop.f32.mrf.mxu0
  %4342 = vdwg.mxu0
  %v4343 = vpack.c.bf16 %v4340, %v4337
  %s4344 = scalar_lea.vmem %s7, 96
  %v4345 = vld [vmem:[%s4344] sm:$0xf]
  %v4346 = vld [vmem:[%s4344 + $0x4] sm:$0xf]
  %v4347 = vld [vmem:[%s4344 + $0x8] sm:$0xf]
  %v4348 = vld [vmem:[%s4344 + $0xc] sm:$0xf]
  %v4353 = vunpack.c.l.b16 %v4345
  %v4354 = vunpack.c.l.b16 %v4346
  %v4355 = vunpack.c.l.b16 %v4347
  %v4356 = vunpack.c.l.b16 %v4348
  %v4357 = vpack.c.b16 %v4354, %v4353
  %v4358 = vpack.c.b16 %v4356, %v4355
  %v4360 = vsel %vm3632, %v4357, 0
  %v4363 = vsel %vm3632, %v4358, 0
  %4365 = vmatprep.subr.bf16.mxu0 0
  %4366 = vmatpush1.bf16.msra.mxu0 0
  %4367 = vmatprep.subr.bf16.mxu0 0
  %4368 = vmatpush1.bf16.msra.mxu0 0
  %4369 = vmatprep.subr.bf16.mxu0 0
  %4370 = vmatpush1.bf16.msra.mxu0 0
  %4371 = vmatprep.subr.bf16.mxu0 0
  %4372 = vmatpush1.bf16.msra.mxu0 0
  %4373 = vmatprep.subr.bf16.mxu0 0
  %4374 = vmatpush1.bf16.msra.mxu0 0
  %4375 = vmatprep.subr.bf16.mxu0 0
  %4376 = vmatpush1.bf16.msra.mxu0 0
  %4377 = vmatprep.subr.bf16.mxu0 0
  %4378 = vmatpush1.bf16.msra.mxu0 0
  %4379 = vmatprep.subr.bf16.mxu0 0
  %4380 = vmatpush1.bf16.msra.mxu0 %v4343
  %4381 = vmatprep.subr.bf16.mxu0 0
  %4382 = vmatpush2.bf16.msra.mxu0 0
  %4383 = vmatprep.subr.bf16.mxu0 0
  %4384 = vmatpush2.bf16.msra.mxu0 0
  %4385 = vmatprep.subr.bf16.mxu0 0
  %4386 = vmatpush2.bf16.msra.mxu0 0
  %4387 = vmatprep.subr.bf16.mxu0 0
  %4388 = vmatpush2.bf16.msra.mxu0 0
  %4389 = vmatprep.subr.bf16.mxu0 0
  %4390 = vmatpush2.bf16.msra.mxu0 0
  %4391 = vmatprep.subr.bf16.mxu0 0
  %4392 = vmatpush2.bf16.msra.mxu0 0
  %4393 = vmatprep.subr.bf16.mxu0 0
  %4394 = vmatpush2.bf16.msra.mxu0 0
  %4395 = vmatprep.subr.bf16.mxu0 0
  %4396 = vmatpush2.bf16.msra.mxu0 0
  %4397 = vmatprep.mubr.bf16.mxu0 0
  %4398 = vmatmul.mubr.bf16.gmra.mxu0 %v4360
  %v4399 = vpop.f32.mrf.mxu0
  %v4400 = vadd.f32 0.0, %v4399
  %v4401 = vpop.f32.mrf.mxu0
  %v4402 = vpop.f32.mrf.mxu0
  %v4403 = vadd.f32 0.0, %v4402
  %v4404 = vpop.f32.mrf.mxu0
  %4405 = vmatprep.mubr.bf16.mxu0 0
  %4406 = vmatmul.mubr.bf16.gmra.mxu0 %v4363
  %v4407 = vpop.f32.mrf.mxu0
  %v4408 = vadd.f32 0.0, %v4407
  %v4409 = vpop.f32.mrf.mxu0
  %v4410 = vpop.f32.mrf.mxu0
  %v4411 = vadd.f32 0.0, %v4410
  %v4412 = vpop.f32.mrf.mxu0
  %4413 = vdwg.mxu0
  %v4414 = vadd.f32 %v4281, %v4400
  %v4415 = vadd.f32 %v4282, %v4403
  %v4416 = vadd.f32 %v4283, %v4408
  %v4417 = vadd.f32 %v4284, %v4411
  %s4418 = scalar_lea.vmem %s6, 112
  %v4419 = vld [vmem:[%s4418] sm:$0xf]
  %v4420 = vld [vmem:[%s4418 + $0x4] sm:$0xf]
  %v4421 = vld [vmem:[%s4418 + $0x8] sm:$0xf]
  %v4422 = vld [vmem:[%s4418 + $0xc] sm:$0xf]
  %v4427 = vunpack.c.l.b16 %v4419
  %v4428 = vunpack.c.l.b16 %v4420
  %v4429 = vunpack.c.l.b16 %v4421
  %v4430 = vunpack.c.l.b16 %v4422
  %v4431 = vpack.c.b16 %v4428, %v4427
  %v4432 = vpack.c.b16 %v4430, %v4429
  %4435 = vmatprep.subr.bf16.mxu0 0
  %4436 = vmatpush1.bf16.msra.mxu0 0
  %4437 = vmatprep.subr.bf16.mxu0 0
  %4438 = vmatpush1.bf16.msra.mxu0 0
  %4439 = vmatprep.subr.bf16.mxu0 0
  %4440 = vmatpush1.bf16.msra.mxu0 0
  %4441 = vmatprep.subr.bf16.mxu0 0
  %4442 = vmatpush1.bf16.msra.mxu0 0
  %4443 = vmatprep.subr.bf16.mxu0 0
  %4444 = vmatpush1.bf16.msra.mxu0 0
  %4445 = vmatprep.subr.bf16.mxu0 0
  %4446 = vmatpush1.bf16.msra.mxu0 0
  %4447 = vmatprep.subr.bf16.mxu0 0
  %4448 = vmatpush1.bf16.msra.mxu0 %v4432
  %4449 = vmatprep.subr.bf16.mxu0 0
  %4450 = vmatpush1.bf16.msra.mxu0 %v4431
  %4451 = vmatprep.subr.bf16.mxu0 0
  %4452 = vmatpush2.bf16.msra.mxu0 0
  %4453 = vmatprep.subr.bf16.mxu0 0
  %4454 = vmatpush2.bf16.msra.mxu0 0
  %4455 = vmatprep.subr.bf16.mxu0 0
  %4456 = vmatpush2.bf16.msra.mxu0 0
  %4457 = vmatprep.subr.bf16.mxu0 0
  %4458 = vmatpush2.bf16.msra.mxu0 0
  %4459 = vmatprep.subr.bf16.mxu0 0
  %4460 = vmatpush2.bf16.msra.mxu0 0
  %4461 = vmatprep.subr.bf16.mxu0 0
  %4462 = vmatpush2.bf16.msra.mxu0 0
  %4463 = vmatprep.subr.bf16.mxu0 0
  %4464 = vmatpush2.bf16.msra.mxu0 0
  %4465 = vmatprep.subr.bf16.mxu0 0
  %4466 = vmatpush2.bf16.msra.mxu0 0
  %4467 = vmatprep.mubr.bf16.mxu0 0
  %4468 = vmatmul.mubr.bf16.gmra.mxu0 %v3510
  %v4469 = vpop.f32.mrf.mxu0
  %v4470 = vadd.f32 0.0, %v4469
  %v4471 = vpop.f32.mrf.mxu0
  %v4472 = vpop.f32.mrf.mxu0
  %v4473 = vadd.f32 0.0, %v4472
  %v4474 = vpop.f32.mrf.mxu0
  %4475 = vdwg.mxu0
  %v4476 = vpack.c.bf16 %v4473, %v4470
  %s4477 = scalar_lea.vmem %s7, 112
  %v4478 = vld [vmem:[%s4477] sm:$0xf]
  %v4479 = vld [vmem:[%s4477 + $0x4] sm:$0xf]
  %v4480 = vld [vmem:[%s4477 + $0x8] sm:$0xf]
  %v4481 = vld [vmem:[%s4477 + $0xc] sm:$0xf]
  %v4486 = vunpack.c.l.b16 %v4478
  %v4487 = vunpack.c.l.b16 %v4479
  %v4488 = vunpack.c.l.b16 %v4480
  %v4489 = vunpack.c.l.b16 %v4481
  %v4490 = vpack.c.b16 %v4487, %v4486
  %v4491 = vpack.c.b16 %v4489, %v4488
  %v4493 = vsel %vm3632, %v4490, 0
  %v4496 = vsel %vm3632, %v4491, 0
  %4498 = vmatprep.subr.bf16.mxu0 0
  %4499 = vmatpush1.bf16.msra.mxu0 0
  %4500 = vmatprep.subr.bf16.mxu0 0
  %4501 = vmatpush1.bf16.msra.mxu0 0
  %4502 = vmatprep.subr.bf16.mxu0 0
  %4503 = vmatpush1.bf16.msra.mxu0 0
  %4504 = vmatprep.subr.bf16.mxu0 0
  %4505 = vmatpush1.bf16.msra.mxu0 0
  %4506 = vmatprep.subr.bf16.mxu0 0
  %4507 = vmatpush1.bf16.msra.mxu0 0
  %4508 = vmatprep.subr.bf16.mxu0 0
  %4509 = vmatpush1.bf16.msra.mxu0 0
  %4510 = vmatprep.subr.bf16.mxu0 0
  %4511 = vmatpush1.bf16.msra.mxu0 0
  %4512 = vmatprep.subr.bf16.mxu0 0
  %4513 = vmatpush1.bf16.msra.mxu0 %v4476
  %4514 = vmatprep.subr.bf16.mxu0 0
  %4515 = vmatpush2.bf16.msra.mxu0 0
  %4516 = vmatprep.subr.bf16.mxu0 0
  %4517 = vmatpush2.bf16.msra.mxu0 0
  %4518 = vmatprep.subr.bf16.mxu0 0
  %4519 = vmatpush2.bf16.msra.mxu0 0
  %4520 = vmatprep.subr.bf16.mxu0 0
  %4521 = vmatpush2.bf16.msra.mxu0 0
  %4522 = vmatprep.subr.bf16.mxu0 0
  %4523 = vmatpush2.bf16.msra.mxu0 0
  %4524 = vmatprep.subr.bf16.mxu0 0
  %4525 = vmatpush2.bf16.msra.mxu0 0
  %4526 = vmatprep.subr.bf16.mxu0 0
  %4527 = vmatpush2.bf16.msra.mxu0 0
  %4528 = vmatprep.subr.bf16.mxu0 0
  %4529 = vmatpush2.bf16.msra.mxu0 0
  %4530 = vmatprep.mubr.bf16.mxu0 0
  %4531 = vmatmul.mubr.bf16.gmra.mxu0 %v4493
  %v4532 = vpop.f32.mrf.mxu0
  %v4533 = vadd.f32 0.0, %v4532
  %v4534 = vpop.f32.mrf.mxu0
  %v4535 = vpop.f32.mrf.mxu0
  %v4536 = vadd.f32 0.0, %v4535
  %v4537 = vpop.f32.mrf.mxu0
  %4538 = vmatprep.mubr.bf16.mxu0 0
  %4539 = vmatmul.mubr.bf16.gmra.mxu0 %v4496
  %v4540 = vpop.f32.mrf.mxu0
  %v4541 = vadd.f32 0.0, %v4540
  %v4542 = vpop.f32.mrf.mxu0
  %v4543 = vpop.f32.mrf.mxu0
  %v4544 = vadd.f32 0.0, %v4543
  %v4545 = vpop.f32.mrf.mxu0
  %4546 = vdwg.mxu0
  %v4547 = vadd.f32 %v4414, %v4533
  %v4548 = vadd.f32 %v4415, %v4536
  %v4549 = vadd.f32 %v4416, %v4541
  %v4550 = vadd.f32 %v4417, %v4544
  %s4551 = scalar_lea.vmem %s6, 128
  %v4552 = vld [vmem:[%s4551] sm:$0xf]
  %v4553 = vld [vmem:[%s4551 + $0x4] sm:$0xf]
  %v4554 = vld [vmem:[%s4551 + $0x8] sm:$0xf]
  %v4555 = vld [vmem:[%s4551 + $0xc] sm:$0xf]
  %v4560 = vunpack.c.l.b16 %v4552
  %v4561 = vunpack.c.l.b16 %v4553
  %v4562 = vunpack.c.l.b16 %v4554
  %v4563 = vunpack.c.l.b16 %v4555
  %v4564 = vpack.c.b16 %v4561, %v4560
  %v4565 = vpack.c.b16 %v4563, %v4562
  %4568 = vmatprep.subr.bf16.mxu0 0
  %4569 = vmatpush1.bf16.msra.mxu0 0
  %4570 = vmatprep.subr.bf16.mxu0 0
  %4571 = vmatpush1.bf16.msra.mxu0 0
  %4572 = vmatprep.subr.bf16.mxu0 0
  %4573 = vmatpush1.bf16.msra.mxu0 0
  %4574 = vmatprep.subr.bf16.mxu0 0
  %4575 = vmatpush1.bf16.msra.mxu0 0
  %4576 = vmatprep.subr.bf16.mxu0 0
  %4577 = vmatpush1.bf16.msra.mxu0 0
  %4578 = vmatprep.subr.bf16.mxu0 0
  %4579 = vmatpush1.bf16.msra.mxu0 0
  %4580 = vmatprep.subr.bf16.mxu0 0
  %4581 = vmatpush1.bf16.msra.mxu0 %v4565
  %4582 = vmatprep.subr.bf16.mxu0 0
  %4583 = vmatpush1.bf16.msra.mxu0 %v4564
  %4584 = vmatprep.subr.bf16.mxu0 0
  %4585 = vmatpush2.bf16.msra.mxu0 0
  %4586 = vmatprep.subr.bf16.mxu0 0
  %4587 = vmatpush2.bf16.msra.mxu0 0
  %4588 = vmatprep.subr.bf16.mxu0 0
  %4589 = vmatpush2.bf16.msra.mxu0 0
  %4590 = vmatprep.subr.bf16.mxu0 0
  %4591 = vmatpush2.bf16.msra.mxu0 0
  %4592 = vmatprep.subr.bf16.mxu0 0
  %4593 = vmatpush2.bf16.msra.mxu0 0
  %4594 = vmatprep.subr.bf16.mxu0 0
  %4595 = vmatpush2.bf16.msra.mxu0 0
  %4596 = vmatprep.subr.bf16.mxu0 0
  %4597 = vmatpush2.bf16.msra.mxu0 0
  %4598 = vmatprep.subr.bf16.mxu0 0
  %4599 = vmatpush2.bf16.msra.mxu0 0
  %4600 = vmatprep.mubr.bf16.mxu0 0
  %4601 = vmatmul.mubr.bf16.gmra.mxu0 %v3510
  %v4602 = vpop.f32.mrf.mxu0
  %v4603 = vadd.f32 0.0, %v4602
  %v4604 = vpop.f32.mrf.mxu0
  %v4605 = vpop.f32.mrf.mxu0
  %v4606 = vadd.f32 0.0, %v4605
  %v4607 = vpop.f32.mrf.mxu0
  %4608 = vdwg.mxu0
  %v4609 = vpack.c.bf16 %v4606, %v4603
  %s4610 = scalar_lea.vmem %s7, 128
  %v4611 = vld [vmem:[%s4610] sm:$0xf]
  %v4612 = vld [vmem:[%s4610 + $0x4] sm:$0xf]
  %v4613 = vld [vmem:[%s4610 + $0x8] sm:$0xf]
  %v4614 = vld [vmem:[%s4610 + $0xc] sm:$0xf]
  %v4619 = vunpack.c.l.b16 %v4611
  %v4620 = vunpack.c.l.b16 %v4612
  %v4621 = vunpack.c.l.b16 %v4613
  %v4622 = vunpack.c.l.b16 %v4614
  %v4623 = vpack.c.b16 %v4620, %v4619
  %v4624 = vpack.c.b16 %v4622, %v4621
  %v4626 = vsel %vm3632, %v4623, 0
  %v4629 = vsel %vm3632, %v4624, 0
  %4631 = vmatprep.subr.bf16.mxu0 0
  %4632 = vmatpush1.bf16.msra.mxu0 0
  %4633 = vmatprep.subr.bf16.mxu0 0
  %4634 = vmatpush1.bf16.msra.mxu0 0
  %4635 = vmatprep.subr.bf16.mxu0 0
  %4636 = vmatpush1.bf16.msra.mxu0 0
  %4637 = vmatprep.subr.bf16.mxu0 0
  %4638 = vmatpush1.bf16.msra.mxu0 0
  %4639 = vmatprep.subr.bf16.mxu0 0
  %4640 = vmatpush1.bf16.msra.mxu0 0
  %4641 = vmatprep.subr.bf16.mxu0 0
  %4642 = vmatpush1.bf16.msra.mxu0 0
  %4643 = vmatprep.subr.bf16.mxu0 0
  %4644 = vmatpush1.bf16.msra.mxu0 0
  %4645 = vmatprep.subr.bf16.mxu0 0
  %4646 = vmatpush1.bf16.msra.mxu0 %v4609
  %4647 = vmatprep.subr.bf16.mxu0 0
  %4648 = vmatpush2.bf16.msra.mxu0 0
  %4649 = vmatprep.subr.bf16.mxu0 0
  %4650 = vmatpush2.bf16.msra.mxu0 0
  %4651 = vmatprep.subr.bf16.mxu0 0
  %4652 = vmatpush2.bf16.msra.mxu0 0
  %4653 = vmatprep.subr.bf16.mxu0 0
  %4654 = vmatpush2.bf16.msra.mxu0 0
  %4655 = vmatprep.subr.bf16.mxu0 0
  %4656 = vmatpush2.bf16.msra.mxu0 0
  %4657 = vmatprep.subr.bf16.mxu0 0
  %4658 = vmatpush2.bf16.msra.mxu0 0
  %4659 = vmatprep.subr.bf16.mxu0 0
  %4660 = vmatpush2.bf16.msra.mxu0 0
  %4661 = vmatprep.subr.bf16.mxu0 0
  %4662 = vmatpush2.bf16.msra.mxu0 0
  %4663 = vmatprep.mubr.bf16.mxu0 0
  %4664 = vmatmul.mubr.bf16.gmra.mxu0 %v4626
  %v4665 = vpop.f32.mrf.mxu0
  %v4666 = vadd.f32 0.0, %v4665
  %v4667 = vpop.f32.mrf.mxu0
  %v4668 = vpop.f32.mrf.mxu0
  %v4669 = vadd.f32 0.0, %v4668
  %v4670 = vpop.f32.mrf.mxu0
  %4671 = vmatprep.mubr.bf16.mxu0 0
  %4672 = vmatmul.mubr.bf16.gmra.mxu0 %v4629
  %v4673 = vpop.f32.mrf.mxu0
  %v4674 = vadd.f32 0.0, %v4673
  %v4675 = vpop.f32.mrf.mxu0
  %v4676 = vpop.f32.mrf.mxu0
  %v4677 = vadd.f32 0.0, %v4676
  %v4678 = vpop.f32.mrf.mxu0
  %4679 = vdwg.mxu0
  %v4680 = vadd.f32 %v4547, %v4666
  %v4681 = vadd.f32 %v4548, %v4669
  %v4682 = vadd.f32 %v4549, %v4674
  %v4683 = vadd.f32 %v4550, %v4677
  %s4684 = scalar_lea.vmem %s6, 144
  %v4685 = vld [vmem:[%s4684] sm:$0xf]
  %v4686 = vld [vmem:[%s4684 + $0x4] sm:$0xf]
  %v4687 = vld [vmem:[%s4684 + $0x8] sm:$0xf]
  %v4688 = vld [vmem:[%s4684 + $0xc] sm:$0xf]
  %v4693 = vunpack.c.l.b16 %v4685
  %v4694 = vunpack.c.l.b16 %v4686
  %v4695 = vunpack.c.l.b16 %v4687
  %v4696 = vunpack.c.l.b16 %v4688
  %v4697 = vpack.c.b16 %v4694, %v4693
  %v4698 = vpack.c.b16 %v4696, %v4695
  %4701 = vmatprep.subr.bf16.mxu0 0
  %4702 = vmatpush1.bf16.msra.mxu0 0
  %4703 = vmatprep.subr.bf16.mxu0 0
  %4704 = vmatpush1.bf16.msra.mxu0 0
  %4705 = vmatprep.subr.bf16.mxu0 0
  %4706 = vmatpush1.bf16.msra.mxu0 0
  %4707 = vmatprep.subr.bf16.mxu0 0
  %4708 = vmatpush1.bf16.msra.mxu0 0
  %4709 = vmatprep.subr.bf16.mxu0 0
  %4710 = vmatpush1.bf16.msra.mxu0 0
  %4711 = vmatprep.subr.bf16.mxu0 0
  %4712 = vmatpush1.bf16.msra.mxu0 0
  %4713 = vmatprep.subr.bf16.mxu0 0
  %4714 = vmatpush1.bf16.msra.mxu0 %v4698
  %4715 = vmatprep.subr.bf16.mxu0 0
  %4716 = vmatpush1.bf16.msra.mxu0 %v4697
  %4717 = vmatprep.subr.bf16.mxu0 0
  %4718 = vmatpush2.bf16.msra.mxu0 0
  %4719 = vmatprep.subr.bf16.mxu0 0
  %4720 = vmatpush2.bf16.msra.mxu0 0
  %4721 = vmatprep.subr.bf16.mxu0 0
  %4722 = vmatpush2.bf16.msra.mxu0 0
  %4723 = vmatprep.subr.bf16.mxu0 0
  %4724 = vmatpush2.bf16.msra.mxu0 0
  %4725 = vmatprep.subr.bf16.mxu0 0
  %4726 = vmatpush2.bf16.msra.mxu0 0
  %4727 = vmatprep.subr.bf16.mxu0 0
  %4728 = vmatpush2.bf16.msra.mxu0 0
  %4729 = vmatprep.subr.bf16.mxu0 0
  %4730 = vmatpush2.bf16.msra.mxu0 0
  %4731 = vmatprep.subr.bf16.mxu0 0
  %4732 = vmatpush2.bf16.msra.mxu0 0
  %4733 = vmatprep.mubr.bf16.mxu0 0
  %4734 = vmatmul.mubr.bf16.gmra.mxu0 %v3510
  %v4735 = vpop.f32.mrf.mxu0
  %v4736 = vadd.f32 0.0, %v4735
  %v4737 = vpop.f32.mrf.mxu0
  %v4738 = vpop.f32.mrf.mxu0
  %v4739 = vadd.f32 0.0, %v4738
  %v4740 = vpop.f32.mrf.mxu0
  %4741 = vdwg.mxu0
  %v4742 = vpack.c.bf16 %v4739, %v4736
  %s4743 = scalar_lea.vmem %s7, 144
  %v4744 = vld [vmem:[%s4743] sm:$0xf]
  %v4745 = vld [vmem:[%s4743 + $0x4] sm:$0xf]
  %v4746 = vld [vmem:[%s4743 + $0x8] sm:$0xf]
  %v4747 = vld [vmem:[%s4743 + $0xc] sm:$0xf]
  %v4752 = vunpack.c.l.b16 %v4744
  %v4753 = vunpack.c.l.b16 %v4745
  %v4754 = vunpack.c.l.b16 %v4746
  %v4755 = vunpack.c.l.b16 %v4747
  %v4756 = vpack.c.b16 %v4753, %v4752
  %v4757 = vpack.c.b16 %v4755, %v4754
  %v4759 = vsel %vm3632, %v4756, 0
  %v4762 = vsel %vm3632, %v4757, 0
  %4764 = vmatprep.subr.bf16.mxu0 0
  %4765 = vmatpush1.bf16.msra.mxu0 0
  %4766 = vmatprep.subr.bf16.mxu0 0
  %4767 = vmatpush1.bf16.msra.mxu0 0
  %4768 = vmatprep.subr.bf16.mxu0 0
  %4769 = vmatpush1.bf16.msra.mxu0 0
  %4770 = vmatprep.subr.bf16.mxu0 0
  %4771 = vmatpush1.bf16.msra.mxu0 0
  %4772 = vmatprep.subr.bf16.mxu0 0
  %4773 = vmatpush1.bf16.msra.mxu0 0
  %4774 = vmatprep.subr.bf16.mxu0 0
  %4775 = vmatpush1.bf16.msra.mxu0 0
  %4776 = vmatprep.subr.bf16.mxu0 0
  %4777 = vmatpush1.bf16.msra.mxu0 0
  %4778 = vmatprep.subr.bf16.mxu0 0
  %4779 = vmatpush1.bf16.msra.mxu0 %v4742
  %4780 = vmatprep.subr.bf16.mxu0 0
  %4781 = vmatpush2.bf16.msra.mxu0 0
  %4782 = vmatprep.subr.bf16.mxu0 0
  %4783 = vmatpush2.bf16.msra.mxu0 0
  %4784 = vmatprep.subr.bf16.mxu0 0
  %4785 = vmatpush2.bf16.msra.mxu0 0
  %4786 = vmatprep.subr.bf16.mxu0 0
  %4787 = vmatpush2.bf16.msra.mxu0 0
  %4788 = vmatprep.subr.bf16.mxu0 0
  %4789 = vmatpush2.bf16.msra.mxu0 0
  %4790 = vmatprep.subr.bf16.mxu0 0
  %4791 = vmatpush2.bf16.msra.mxu0 0
  %4792 = vmatprep.subr.bf16.mxu0 0
  %4793 = vmatpush2.bf16.msra.mxu0 0
  %4794 = vmatprep.subr.bf16.mxu0 0
  %4795 = vmatpush2.bf16.msra.mxu0 0
  %4796 = vmatprep.mubr.bf16.mxu0 0
  %4797 = vmatmul.mubr.bf16.gmra.mxu0 %v4759
  %v4798 = vpop.f32.mrf.mxu0
  %v4799 = vadd.f32 0.0, %v4798
  %v4800 = vpop.f32.mrf.mxu0
  %v4801 = vpop.f32.mrf.mxu0
  %v4802 = vadd.f32 0.0, %v4801
  %v4803 = vpop.f32.mrf.mxu0
  %4804 = vmatprep.mubr.bf16.mxu0 0
  %4805 = vmatmul.mubr.bf16.gmra.mxu0 %v4762
  %v4806 = vpop.f32.mrf.mxu0
  %v4807 = vadd.f32 0.0, %v4806
  %v4808 = vpop.f32.mrf.mxu0
  %v4809 = vpop.f32.mrf.mxu0
  %v4810 = vadd.f32 0.0, %v4809
  %v4811 = vpop.f32.mrf.mxu0
  %4812 = vdwg.mxu0
  %v4813 = vadd.f32 %v4680, %v4799
  %v4814 = vadd.f32 %v4681, %v4802
  %v4815 = vadd.f32 %v4682, %v4807
  %v4816 = vadd.f32 %v4683, %v4810
  %s4817 = scalar_lea.vmem %s6, 160
  %v4818 = vld [vmem:[%s4817] sm:$0xf]
  %v4819 = vld [vmem:[%s4817 + $0x4] sm:$0xf]
  %v4820 = vld [vmem:[%s4817 + $0x8] sm:$0xf]
  %v4821 = vld [vmem:[%s4817 + $0xc] sm:$0xf]
  %v4826 = vunpack.c.l.b16 %v4818
  %v4827 = vunpack.c.l.b16 %v4819
  %v4828 = vunpack.c.l.b16 %v4820
  %v4829 = vunpack.c.l.b16 %v4821
  %v4830 = vpack.c.b16 %v4827, %v4826
  %v4831 = vpack.c.b16 %v4829, %v4828
  %4834 = vmatprep.subr.bf16.mxu0 0
  %4835 = vmatpush1.bf16.msra.mxu0 0
  %4836 = vmatprep.subr.bf16.mxu0 0
  %4837 = vmatpush1.bf16.msra.mxu0 0
  %4838 = vmatprep.subr.bf16.mxu0 0
  %4839 = vmatpush1.bf16.msra.mxu0 0
  %4840 = vmatprep.subr.bf16.mxu0 0
  %4841 = vmatpush1.bf16.msra.mxu0 0
  %4842 = vmatprep.subr.bf16.mxu0 0
  %4843 = vmatpush1.bf16.msra.mxu0 0
  %4844 = vmatprep.subr.bf16.mxu0 0
  %4845 = vmatpush1.bf16.msra.mxu0 0
  %4846 = vmatprep.subr.bf16.mxu0 0
  %4847 = vmatpush1.bf16.msra.mxu0 %v4831
  %4848 = vmatprep.subr.bf16.mxu0 0
  %4849 = vmatpush1.bf16.msra.mxu0 %v4830
  %4850 = vmatprep.subr.bf16.mxu0 0
  %4851 = vmatpush2.bf16.msra.mxu0 0
  %4852 = vmatprep.subr.bf16.mxu0 0
  %4853 = vmatpush2.bf16.msra.mxu0 0
  %4854 = vmatprep.subr.bf16.mxu0 0
  %4855 = vmatpush2.bf16.msra.mxu0 0
  %4856 = vmatprep.subr.bf16.mxu0 0
  %4857 = vmatpush2.bf16.msra.mxu0 0
  %4858 = vmatprep.subr.bf16.mxu0 0
  %4859 = vmatpush2.bf16.msra.mxu0 0
  %4860 = vmatprep.subr.bf16.mxu0 0
  %4861 = vmatpush2.bf16.msra.mxu0 0
  %4862 = vmatprep.subr.bf16.mxu0 0
  %4863 = vmatpush2.bf16.msra.mxu0 0
  %4864 = vmatprep.subr.bf16.mxu0 0
  %4865 = vmatpush2.bf16.msra.mxu0 0
  %4866 = vmatprep.mubr.bf16.mxu0 0
  %4867 = vmatmul.mubr.bf16.gmra.mxu0 %v3510
  %v4868 = vpop.f32.mrf.mxu0
  %v4869 = vadd.f32 0.0, %v4868
  %v4870 = vpop.f32.mrf.mxu0
  %v4871 = vpop.f32.mrf.mxu0
  %v4872 = vadd.f32 0.0, %v4871
  %v4873 = vpop.f32.mrf.mxu0
  %4874 = vdwg.mxu0
  %v4875 = vpack.c.bf16 %v4872, %v4869
  %s4876 = scalar_lea.vmem %s7, 160
  %v4877 = vld [vmem:[%s4876] sm:$0xf]
  %v4878 = vld [vmem:[%s4876 + $0x4] sm:$0xf]
  %v4879 = vld [vmem:[%s4876 + $0x8] sm:$0xf]
  %v4880 = vld [vmem:[%s4876 + $0xc] sm:$0xf]
  %v4885 = vunpack.c.l.b16 %v4877
  %v4886 = vunpack.c.l.b16 %v4878
  %v4887 = vunpack.c.l.b16 %v4879
  %v4888 = vunpack.c.l.b16 %v4880
  %v4889 = vpack.c.b16 %v4886, %v4885
  %v4890 = vpack.c.b16 %v4888, %v4887
  %v4892 = vsel %vm3632, %v4889, 0
  %v4895 = vsel %vm3632, %v4890, 0
  %4897 = vmatprep.subr.bf16.mxu0 0
  %4898 = vmatpush1.bf16.msra.mxu0 0
  %4899 = vmatprep.subr.bf16.mxu0 0
  %4900 = vmatpush1.bf16.msra.mxu0 0
  %4901 = vmatprep.subr.bf16.mxu0 0
  %4902 = vmatpush1.bf16.msra.mxu0 0
  %4903 = vmatprep.subr.bf16.mxu0 0
  %4904 = vmatpush1.bf16.msra.mxu0 0
  %4905 = vmatprep.subr.bf16.mxu0 0
  %4906 = vmatpush1.bf16.msra.mxu0 0
  %4907 = vmatprep.subr.bf16.mxu0 0
  %4908 = vmatpush1.bf16.msra.mxu0 0
  %4909 = vmatprep.subr.bf16.mxu0 0
  %4910 = vmatpush1.bf16.msra.mxu0 0
  %4911 = vmatprep.subr.bf16.mxu0 0
  %4912 = vmatpush1.bf16.msra.mxu0 %v4875
  %4913 = vmatprep.subr.bf16.mxu0 0
  %4914 = vmatpush2.bf16.msra.mxu0 0
  %4915 = vmatprep.subr.bf16.mxu0 0
  %4916 = vmatpush2.bf16.msra.mxu0 0
  %4917 = vmatprep.subr.bf16.mxu0 0
  %4918 = vmatpush2.bf16.msra.mxu0 0
  %4919 = vmatprep.subr.bf16.mxu0 0
  %4920 = vmatpush2.bf16.msra.mxu0 0
  %4921 = vmatprep.subr.bf16.mxu0 0
  %4922 = vmatpush2.bf16.msra.mxu0 0
  %4923 = vmatprep.subr.bf16.mxu0 0
  %4924 = vmatpush2.bf16.msra.mxu0 0
  %4925 = vmatprep.subr.bf16.mxu0 0
  %4926 = vmatpush2.bf16.msra.mxu0 0
  %4927 = vmatprep.subr.bf16.mxu0 0
  %4928 = vmatpush2.bf16.msra.mxu0 0
  %4929 = vmatprep.mubr.bf16.mxu0 0
  %4930 = vmatmul.mubr.bf16.gmra.mxu0 %v4892
  %v4931 = vpop.f32.mrf.mxu0
  %v4932 = vadd.f32 0.0, %v4931
  %v4933 = vpop.f32.mrf.mxu0
  %v4934 = vpop.f32.mrf.mxu0
  %v4935 = vadd.f32 0.0, %v4934
  %v4936 = vpop.f32.mrf.mxu0
  %4937 = vmatprep.mubr.bf16.mxu0 0
  %4938 = vmatmul.mubr.bf16.gmra.mxu0 %v4895
  %v4939 = vpop.f32.mrf.mxu0
  %v4940 = vadd.f32 0.0, %v4939
  %v4941 = vpop.f32.mrf.mxu0
  %v4942 = vpop.f32.mrf.mxu0
  %v4943 = vadd.f32 0.0, %v4942
  %v4944 = vpop.f32.mrf.mxu0
  %4945 = vdwg.mxu0
  %v4946 = vadd.f32 %v4813, %v4932
  %v4947 = vadd.f32 %v4814, %v4935
  %v4948 = vadd.f32 %v4815, %v4940
  %v4949 = vadd.f32 %v4816, %v4943
  %s4950 = scalar_lea.vmem %s6, 176
  %v4951 = vld [vmem:[%s4950] sm:$0xf]
  %v4952 = vld [vmem:[%s4950 + $0x4] sm:$0xf]
  %v4953 = vld [vmem:[%s4950 + $0x8] sm:$0xf]
  %v4954 = vld [vmem:[%s4950 + $0xc] sm:$0xf]
  %v4959 = vunpack.c.l.b16 %v4951
  %v4960 = vunpack.c.l.b16 %v4952
  %v4961 = vunpack.c.l.b16 %v4953
  %v4962 = vunpack.c.l.b16 %v4954
  %v4963 = vpack.c.b16 %v4960, %v4959
  %v4964 = vpack.c.b16 %v4962, %v4961
  %4967 = vmatprep.subr.bf16.mxu0 0
  %4968 = vmatpush1.bf16.msra.mxu0 0
  %4969 = vmatprep.subr.bf16.mxu0 0
  %4970 = vmatpush1.bf16.msra.mxu0 0
  %4971 = vmatprep.subr.bf16.mxu0 0
  %4972 = vmatpush1.bf16.msra.mxu0 0
  %4973 = vmatprep.subr.bf16.mxu0 0
  %4974 = vmatpush1.bf16.msra.mxu0 0
  %4975 = vmatprep.subr.bf16.mxu0 0
  %4976 = vmatpush1.bf16.msra.mxu0 0
  %4977 = vmatprep.subr.bf16.mxu0 0
  %4978 = vmatpush1.bf16.msra.mxu0 0
  %4979 = vmatprep.subr.bf16.mxu0 0
  %4980 = vmatpush1.bf16.msra.mxu0 %v4964
  %4981 = vmatprep.subr.bf16.mxu0 0
  %4982 = vmatpush1.bf16.msra.mxu0 %v4963
  %4983 = vmatprep.subr.bf16.mxu0 0
  %4984 = vmatpush2.bf16.msra.mxu0 0
  %4985 = vmatprep.subr.bf16.mxu0 0
  %4986 = vmatpush2.bf16.msra.mxu0 0
  %4987 = vmatprep.subr.bf16.mxu0 0
  %4988 = vmatpush2.bf16.msra.mxu0 0
  %4989 = vmatprep.subr.bf16.mxu0 0
  %4990 = vmatpush2.bf16.msra.mxu0 0
  %4991 = vmatprep.subr.bf16.mxu0 0
  %4992 = vmatpush2.bf16.msra.mxu0 0
  %4993 = vmatprep.subr.bf16.mxu0 0
  %4994 = vmatpush2.bf16.msra.mxu0 0
  %4995 = vmatprep.subr.bf16.mxu0 0
  %4996 = vmatpush2.bf16.msra.mxu0 0
  %4997 = vmatprep.subr.bf16.mxu0 0
  %4998 = vmatpush2.bf16.msra.mxu0 0
  %4999 = vmatprep.mubr.bf16.mxu0 0
  %5000 = vmatmul.mubr.bf16.gmra.mxu0 %v3510
  %v5001 = vpop.f32.mrf.mxu0
  %v5002 = vadd.f32 0.0, %v5001
  %v5003 = vpop.f32.mrf.mxu0
  %v5004 = vpop.f32.mrf.mxu0
  %v5005 = vadd.f32 0.0, %v5004
  %v5006 = vpop.f32.mrf.mxu0
  %5007 = vdwg.mxu0
  %v5008 = vpack.c.bf16 %v5005, %v5002
  %s5009 = scalar_lea.vmem %s7, 176
  %v5010 = vld [vmem:[%s5009] sm:$0xf]
  %v5011 = vld [vmem:[%s5009 + $0x4] sm:$0xf]
  %v5012 = vld [vmem:[%s5009 + $0x8] sm:$0xf]
  %v5013 = vld [vmem:[%s5009 + $0xc] sm:$0xf]
  %v5018 = vunpack.c.l.b16 %v5010
  %v5019 = vunpack.c.l.b16 %v5011
  %v5020 = vunpack.c.l.b16 %v5012
  %v5021 = vunpack.c.l.b16 %v5013
  %v5022 = vpack.c.b16 %v5019, %v5018
  %v5023 = vpack.c.b16 %v5021, %v5020
  %v5025 = vsel %vm3632, %v5022, 0
  %v5028 = vsel %vm3632, %v5023, 0
  %5030 = vmatprep.subr.bf16.mxu0 0
  %5031 = vmatpush1.bf16.msra.mxu0 0
  %5032 = vmatprep.subr.bf16.mxu0 0
  %5033 = vmatpush1.bf16.msra.mxu0 0
  %5034 = vmatprep.subr.bf16.mxu0 0
  %5035 = vmatpush1.bf16.msra.mxu0 0
  %5036 = vmatprep.subr.bf16.mxu0 0
  %5037 = vmatpush1.bf16.msra.mxu0 0
  %5038 = vmatprep.subr.bf16.mxu0 0
  %5039 = vmatpush1.bf16.msra.mxu0 0
  %5040 = vmatprep.subr.bf16.mxu0 0
  %5041 = vmatpush1.bf16.msra.mxu0 0
  %5042 = vmatprep.subr.bf16.mxu0 0
  %5043 = vmatpush1.bf16.msra.mxu0 0
  %5044 = vmatprep.subr.bf16.mxu0 0
  %5045 = vmatpush1.bf16.msra.mxu0 %v5008
  %5046 = vmatprep.subr.bf16.mxu0 0
  %5047 = vmatpush2.bf16.msra.mxu0 0
  %5048 = vmatprep.subr.bf16.mxu0 0
  %5049 = vmatpush2.bf16.msra.mxu0 0
  %5050 = vmatprep.subr.bf16.mxu0 0
  %5051 = vmatpush2.bf16.msra.mxu0 0
  %5052 = vmatprep.subr.bf16.mxu0 0
  %5053 = vmatpush2.bf16.msra.mxu0 0
  %5054 = vmatprep.subr.bf16.mxu0 0
  %5055 = vmatpush2.bf16.msra.mxu0 0
  %5056 = vmatprep.subr.bf16.mxu0 0
  %5057 = vmatpush2.bf16.msra.mxu0 0
  %5058 = vmatprep.subr.bf16.mxu0 0
  %5059 = vmatpush2.bf16.msra.mxu0 0
  %5060 = vmatprep.subr.bf16.mxu0 0
  %5061 = vmatpush2.bf16.msra.mxu0 0
  %5062 = vmatprep.mubr.bf16.mxu0 0
  %5063 = vmatmul.mubr.bf16.gmra.mxu0 %v5025
  %v5064 = vpop.f32.mrf.mxu0
  %v5065 = vadd.f32 0.0, %v5064
  %v5066 = vpop.f32.mrf.mxu0
  %v5067 = vpop.f32.mrf.mxu0
  %v5068 = vadd.f32 0.0, %v5067
  %v5069 = vpop.f32.mrf.mxu0
  %5070 = vmatprep.mubr.bf16.mxu0 0
  %5071 = vmatmul.mubr.bf16.gmra.mxu0 %v5028
  %v5072 = vpop.f32.mrf.mxu0
  %v5073 = vadd.f32 0.0, %v5072
  %v5074 = vpop.f32.mrf.mxu0
  %v5075 = vpop.f32.mrf.mxu0
  %v5076 = vadd.f32 0.0, %v5075
  %v5077 = vpop.f32.mrf.mxu0
  %5078 = vdwg.mxu0
  %v5079 = vadd.f32 %v4946, %v5065
  %v5080 = vadd.f32 %v4947, %v5068
  %v5081 = vadd.f32 %v4948, %v5073
  %v5082 = vadd.f32 %v4949, %v5076
  %s5083 = scalar_lea.vmem %s6, 192
  %v5084 = vld [vmem:[%s5083] sm:$0xf]
  %v5085 = vld [vmem:[%s5083 + $0x4] sm:$0xf]
  %v5086 = vld [vmem:[%s5083 + $0x8] sm:$0xf]
  %v5087 = vld [vmem:[%s5083 + $0xc] sm:$0xf]
  %v5092 = vunpack.c.l.b16 %v5084
  %v5093 = vunpack.c.l.b16 %v5085
  %v5094 = vunpack.c.l.b16 %v5086
  %v5095 = vunpack.c.l.b16 %v5087
  %v5096 = vpack.c.b16 %v5093, %v5092
  %v5097 = vpack.c.b16 %v5095, %v5094
  %5100 = vmatprep.subr.bf16.mxu0 0
  %5101 = vmatpush1.bf16.msra.mxu0 0
  %5102 = vmatprep.subr.bf16.mxu0 0
  %5103 = vmatpush1.bf16.msra.mxu0 0
  %5104 = vmatprep.subr.bf16.mxu0 0
  %5105 = vmatpush1.bf16.msra.mxu0 0
  %5106 = vmatprep.subr.bf16.mxu0 0
  %5107 = vmatpush1.bf16.msra.mxu0 0
  %5108 = vmatprep.subr.bf16.mxu0 0
  %5109 = vmatpush1.bf16.msra.mxu0 0
  %5110 = vmatprep.subr.bf16.mxu0 0
  %5111 = vmatpush1.bf16.msra.mxu0 0
  %5112 = vmatprep.subr.bf16.mxu0 0
  %5113 = vmatpush1.bf16.msra.mxu0 %v5097
  %5114 = vmatprep.subr.bf16.mxu0 0
  %5115 = vmatpush1.bf16.msra.mxu0 %v5096
  %5116 = vmatprep.subr.bf16.mxu0 0
  %5117 = vmatpush2.bf16.msra.mxu0 0
  %5118 = vmatprep.subr.bf16.mxu0 0
  %5119 = vmatpush2.bf16.msra.mxu0 0
  %5120 = vmatprep.subr.bf16.mxu0 0
  %5121 = vmatpush2.bf16.msra.mxu0 0
  %5122 = vmatprep.subr.bf16.mxu0 0
  %5123 = vmatpush2.bf16.msra.mxu0 0
  %5124 = vmatprep.subr.bf16.mxu0 0
  %5125 = vmatpush2.bf16.msra.mxu0 0
  %5126 = vmatprep.subr.bf16.mxu0 0
  %5127 = vmatpush2.bf16.msra.mxu0 0
  %5128 = vmatprep.subr.bf16.mxu0 0
  %5129 = vmatpush2.bf16.msra.mxu0 0
  %5130 = vmatprep.subr.bf16.mxu0 0
  %5131 = vmatpush2.bf16.msra.mxu0 0
  %5132 = vmatprep.mubr.bf16.mxu0 0
  %5133 = vmatmul.mubr.bf16.gmra.mxu0 %v3510
  %v5134 = vpop.f32.mrf.mxu0
  %v5135 = vadd.f32 0.0, %v5134
  %v5136 = vpop.f32.mrf.mxu0
  %v5137 = vpop.f32.mrf.mxu0
  %v5138 = vadd.f32 0.0, %v5137
  %v5139 = vpop.f32.mrf.mxu0
  %5140 = vdwg.mxu0
  %v5141 = vpack.c.bf16 %v5138, %v5135
  %s5142 = scalar_lea.vmem %s7, 192
  %v5143 = vld [vmem:[%s5142] sm:$0xf]
  %v5144 = vld [vmem:[%s5142 + $0x4] sm:$0xf]
  %v5145 = vld [vmem:[%s5142 + $0x8] sm:$0xf]
  %v5146 = vld [vmem:[%s5142 + $0xc] sm:$0xf]
  %v5151 = vunpack.c.l.b16 %v5143
  %v5152 = vunpack.c.l.b16 %v5144
  %v5153 = vunpack.c.l.b16 %v5145
  %v5154 = vunpack.c.l.b16 %v5146
  %v5155 = vpack.c.b16 %v5152, %v5151
  %v5156 = vpack.c.b16 %v5154, %v5153
  %v5158 = vsel %vm3632, %v5155, 0
  %v5161 = vsel %vm3632, %v5156, 0
  %5163 = vmatprep.subr.bf16.mxu0 0
  %5164 = vmatpush1.bf16.msra.mxu0 0
  %5165 = vmatprep.subr.bf16.mxu0 0
  %5166 = vmatpush1.bf16.msra.mxu0 0
  %5167 = vmatprep.subr.bf16.mxu0 0
  %5168 = vmatpush1.bf16.msra.mxu0 0
  %5169 = vmatprep.subr.bf16.mxu0 0
  %5170 = vmatpush1.bf16.msra.mxu0 0
  %5171 = vmatprep.subr.bf16.mxu0 0
  %5172 = vmatpush1.bf16.msra.mxu0 0
  %5173 = vmatprep.subr.bf16.mxu0 0
  %5174 = vmatpush1.bf16.msra.mxu0 0
  %5175 = vmatprep.subr.bf16.mxu0 0
  %5176 = vmatpush1.bf16.msra.mxu0 0
  %5177 = vmatprep.subr.bf16.mxu0 0
  %5178 = vmatpush1.bf16.msra.mxu0 %v5141
  %5179 = vmatprep.subr.bf16.mxu0 0
  %5180 = vmatpush2.bf16.msra.mxu0 0
  %5181 = vmatprep.subr.bf16.mxu0 0
  %5182 = vmatpush2.bf16.msra.mxu0 0
  %5183 = vmatprep.subr.bf16.mxu0 0
  %5184 = vmatpush2.bf16.msra.mxu0 0
  %5185 = vmatprep.subr.bf16.mxu0 0
  %5186 = vmatpush2.bf16.msra.mxu0 0
  %5187 = vmatprep.subr.bf16.mxu0 0
  %5188 = vmatpush2.bf16.msra.mxu0 0
  %5189 = vmatprep.subr.bf16.mxu0 0
  %5190 = vmatpush2.bf16.msra.mxu0 0
  %5191 = vmatprep.subr.bf16.mxu0 0
  %5192 = vmatpush2.bf16.msra.mxu0 0
  %5193 = vmatprep.subr.bf16.mxu0 0
  %5194 = vmatpush2.bf16.msra.mxu0 0
  %5195 = vmatprep.mubr.bf16.mxu0 0
  %5196 = vmatmul.mubr.bf16.gmra.mxu0 %v5158
  %v5197 = vpop.f32.mrf.mxu0
  %v5198 = vadd.f32 0.0, %v5197
  %v5199 = vpop.f32.mrf.mxu0
  %v5200 = vpop.f32.mrf.mxu0
  %v5201 = vadd.f32 0.0, %v5200
  %v5202 = vpop.f32.mrf.mxu0
  %5203 = vmatprep.mubr.bf16.mxu0 0
  %5204 = vmatmul.mubr.bf16.gmra.mxu0 %v5161
  %v5205 = vpop.f32.mrf.mxu0
  %v5206 = vadd.f32 0.0, %v5205
  %v5207 = vpop.f32.mrf.mxu0
  %v5208 = vpop.f32.mrf.mxu0
  %v5209 = vadd.f32 0.0, %v5208
  %v5210 = vpop.f32.mrf.mxu0
  %5211 = vdwg.mxu0
  %v5212 = vadd.f32 %v5079, %v5198
  %v5213 = vadd.f32 %v5080, %v5201
  %v5214 = vadd.f32 %v5081, %v5206
  %v5215 = vadd.f32 %v5082, %v5209
  %s5216 = scalar_lea.vmem %s6, 208
  %v5217 = vld [vmem:[%s5216] sm:$0xf]
  %v5218 = vld [vmem:[%s5216 + $0x4] sm:$0xf]
  %v5219 = vld [vmem:[%s5216 + $0x8] sm:$0xf]
  %v5220 = vld [vmem:[%s5216 + $0xc] sm:$0xf]
  %v5225 = vunpack.c.l.b16 %v5217
  %v5226 = vunpack.c.l.b16 %v5218
  %v5227 = vunpack.c.l.b16 %v5219
  %v5228 = vunpack.c.l.b16 %v5220
  %v5229 = vpack.c.b16 %v5226, %v5225
  %v5230 = vpack.c.b16 %v5228, %v5227
  %5233 = vmatprep.subr.bf16.mxu0 0
  %5234 = vmatpush1.bf16.msra.mxu0 0
  %5235 = vmatprep.subr.bf16.mxu0 0
  %5236 = vmatpush1.bf16.msra.mxu0 0
  %5237 = vmatprep.subr.bf16.mxu0 0
  %5238 = vmatpush1.bf16.msra.mxu0 0
  %5239 = vmatprep.subr.bf16.mxu0 0
  %5240 = vmatpush1.bf16.msra.mxu0 0
  %5241 = vmatprep.subr.bf16.mxu0 0
  %5242 = vmatpush1.bf16.msra.mxu0 0
  %5243 = vmatprep.subr.bf16.mxu0 0
  %5244 = vmatpush1.bf16.msra.mxu0 0
  %5245 = vmatprep.subr.bf16.mxu0 0
  %5246 = vmatpush1.bf16.msra.mxu0 %v5230
  %5247 = vmatprep.subr.bf16.mxu0 0
  %5248 = vmatpush1.bf16.msra.mxu0 %v5229
  %5249 = vmatprep.subr.bf16.mxu0 0
  %5250 = vmatpush2.bf16.msra.mxu0 0
  %5251 = vmatprep.subr.bf16.mxu0 0
  %5252 = vmatpush2.bf16.msra.mxu0 0
  %5253 = vmatprep.subr.bf16.mxu0 0
  %5254 = vmatpush2.bf16.msra.mxu0 0
  %5255 = vmatprep.subr.bf16.mxu0 0
  %5256 = vmatpush2.bf16.msra.mxu0 0
  %5257 = vmatprep.subr.bf16.mxu0 0
  %5258 = vmatpush2.bf16.msra.mxu0 0
  %5259 = vmatprep.subr.bf16.mxu0 0
  %5260 = vmatpush2.bf16.msra.mxu0 0
  %5261 = vmatprep.subr.bf16.mxu0 0
  %5262 = vmatpush2.bf16.msra.mxu0 0
  %5263 = vmatprep.subr.bf16.mxu0 0
  %5264 = vmatpush2.bf16.msra.mxu0 0
  %5265 = vmatprep.mubr.bf16.mxu0 0
  %5266 = vmatmul.mubr.bf16.gmra.mxu0 %v3510
  %v5267 = vpop.f32.mrf.mxu0
  %v5268 = vadd.f32 0.0, %v5267
  %v5269 = vpop.f32.mrf.mxu0
  %v5270 = vpop.f32.mrf.mxu0
  %v5271 = vadd.f32 0.0, %v5270
  %v5272 = vpop.f32.mrf.mxu0
  %5273 = vdwg.mxu0
  %v5274 = vpack.c.bf16 %v5271, %v5268
  %s5275 = scalar_lea.vmem %s7, 208
  %v5276 = vld [vmem:[%s5275] sm:$0xf]
  %v5277 = vld [vmem:[%s5275 + $0x4] sm:$0xf]
  %v5278 = vld [vmem:[%s5275 + $0x8] sm:$0xf]
  %v5279 = vld [vmem:[%s5275 + $0xc] sm:$0xf]
  %v5284 = vunpack.c.l.b16 %v5276
  %v5285 = vunpack.c.l.b16 %v5277
  %v5286 = vunpack.c.l.b16 %v5278
  %v5287 = vunpack.c.l.b16 %v5279
  %v5288 = vpack.c.b16 %v5285, %v5284
  %v5289 = vpack.c.b16 %v5287, %v5286
  %v5291 = vsel %vm3632, %v5288, 0
  %v5294 = vsel %vm3632, %v5289, 0
  %5296 = vmatprep.subr.bf16.mxu0 0
  %5297 = vmatpush1.bf16.msra.mxu0 0
  %5298 = vmatprep.subr.bf16.mxu0 0
  %5299 = vmatpush1.bf16.msra.mxu0 0
  %5300 = vmatprep.subr.bf16.mxu0 0
  %5301 = vmatpush1.bf16.msra.mxu0 0
  %5302 = vmatprep.subr.bf16.mxu0 0
  %5303 = vmatpush1.bf16.msra.mxu0 0
  %5304 = vmatprep.subr.bf16.mxu0 0
  %5305 = vmatpush1.bf16.msra.mxu0 0
  %5306 = vmatprep.subr.bf16.mxu0 0
  %5307 = vmatpush1.bf16.msra.mxu0 0
  %5308 = vmatprep.subr.bf16.mxu0 0
  %5309 = vmatpush1.bf16.msra.mxu0 0
  %5310 = vmatprep.subr.bf16.mxu0 0
  %5311 = vmatpush1.bf16.msra.mxu0 %v5274
  %5312 = vmatprep.subr.bf16.mxu0 0
  %5313 = vmatpush2.bf16.msra.mxu0 0
  %5314 = vmatprep.subr.bf16.mxu0 0
  %5315 = vmatpush2.bf16.msra.mxu0 0
  %5316 = vmatprep.subr.bf16.mxu0 0
  %5317 = vmatpush2.bf16.msra.mxu0 0
  %5318 = vmatprep.subr.bf16.mxu0 0
  %5319 = vmatpush2.bf16.msra.mxu0 0
  %5320 = vmatprep.subr.bf16.mxu0 0
  %5321 = vmatpush2.bf16.msra.mxu0 0
  %5322 = vmatprep.subr.bf16.mxu0 0
  %5323 = vmatpush2.bf16.msra.mxu0 0
  %5324 = vmatprep.subr.bf16.mxu0 0
  %5325 = vmatpush2.bf16.msra.mxu0 0
  %5326 = vmatprep.subr.bf16.mxu0 0
  %5327 = vmatpush2.bf16.msra.mxu0 0
  %5328 = vmatprep.mubr.bf16.mxu0 0
  %5329 = vmatmul.mubr.bf16.gmra.mxu0 %v5291
  %v5330 = vpop.f32.mrf.mxu0
  %v5331 = vadd.f32 0.0, %v5330
  %v5332 = vpop.f32.mrf.mxu0
  %v5333 = vpop.f32.mrf.mxu0
  %v5334 = vadd.f32 0.0, %v5333
  %v5335 = vpop.f32.mrf.mxu0
  %5336 = vmatprep.mubr.bf16.mxu0 0
  %5337 = vmatmul.mubr.bf16.gmra.mxu0 %v5294
  %v5338 = vpop.f32.mrf.mxu0
  %v5339 = vadd.f32 0.0, %v5338
  %v5340 = vpop.f32.mrf.mxu0
  %v5341 = vpop.f32.mrf.mxu0
  %v5342 = vadd.f32 0.0, %v5341
  %v5343 = vpop.f32.mrf.mxu0
  %5344 = vdwg.mxu0
  %v5345 = vadd.f32 %v5212, %v5331
  %v5346 = vadd.f32 %v5213, %v5334
  %v5347 = vadd.f32 %v5214, %v5339
  %v5348 = vadd.f32 %v5215, %v5342
  %s5349 = scalar_lea.vmem %s6, 224
  %v5350 = vld [vmem:[%s5349] sm:$0xf]
  %v5351 = vld [vmem:[%s5349 + $0x4] sm:$0xf]
  %v5352 = vld [vmem:[%s5349 + $0x8] sm:$0xf]
  %v5353 = vld [vmem:[%s5349 + $0xc] sm:$0xf]
  %v5358 = vunpack.c.l.b16 %v5350
  %v5359 = vunpack.c.l.b16 %v5351
  %v5360 = vunpack.c.l.b16 %v5352
  %v5361 = vunpack.c.l.b16 %v5353
  %v5362 = vpack.c.b16 %v5359, %v5358
  %v5363 = vpack.c.b16 %v5361, %v5360
  %5366 = vmatprep.subr.bf16.mxu0 0
  %5367 = vmatpush1.bf16.msra.mxu0 0
  %5368 = vmatprep.subr.bf16.mxu0 0
  %5369 = vmatpush1.bf16.msra.mxu0 0
  %5370 = vmatprep.subr.bf16.mxu0 0
  %5371 = vmatpush1.bf16.msra.mxu0 0
  %5372 = vmatprep.subr.bf16.mxu0 0
  %5373 = vmatpush1.bf16.msra.mxu0 0
  %5374 = vmatprep.subr.bf16.mxu0 0
  %5375 = vmatpush1.bf16.msra.mxu0 0
  %5376 = vmatprep.subr.bf16.mxu0 0
  %5377 = vmatpush1.bf16.msra.mxu0 0
  %5378 = vmatprep.subr.bf16.mxu0 0
  %5379 = vmatpush1.bf16.msra.mxu0 %v5363
  %5380 = vmatprep.subr.bf16.mxu0 0
  %5381 = vmatpush1.bf16.msra.mxu0 %v5362
  %5382 = vmatprep.subr.bf16.mxu0 0
  %5383 = vmatpush2.bf16.msra.mxu0 0
  %5384 = vmatprep.subr.bf16.mxu0 0
  %5385 = vmatpush2.bf16.msra.mxu0 0
  %5386 = vmatprep.subr.bf16.mxu0 0
  %5387 = vmatpush2.bf16.msra.mxu0 0
  %5388 = vmatprep.subr.bf16.mxu0 0
  %5389 = vmatpush2.bf16.msra.mxu0 0
  %5390 = vmatprep.subr.bf16.mxu0 0
  %5391 = vmatpush2.bf16.msra.mxu0 0
  %5392 = vmatprep.subr.bf16.mxu0 0
  %5393 = vmatpush2.bf16.msra.mxu0 0
  %5394 = vmatprep.subr.bf16.mxu0 0
  %5395 = vmatpush2.bf16.msra.mxu0 0
  %5396 = vmatprep.subr.bf16.mxu0 0
  %5397 = vmatpush2.bf16.msra.mxu0 0
  %5398 = vmatprep.mubr.bf16.mxu0 0
  %5399 = vmatmul.mubr.bf16.gmra.mxu0 %v3510
  %v5400 = vpop.f32.mrf.mxu0
  %v5401 = vadd.f32 0.0, %v5400
  %v5402 = vpop.f32.mrf.mxu0
  %v5403 = vpop.f32.mrf.mxu0
  %v5404 = vadd.f32 0.0, %v5403
  %v5405 = vpop.f32.mrf.mxu0
  %5406 = vdwg.mxu0
  %v5407 = vpack.c.bf16 %v5404, %v5401
  %s5408 = scalar_lea.vmem %s7, 224
  %v5409 = vld [vmem:[%s5408] sm:$0xf]
  %v5410 = vld [vmem:[%s5408 + $0x4] sm:$0xf]
  %v5411 = vld [vmem:[%s5408 + $0x8] sm:$0xf]
  %v5412 = vld [vmem:[%s5408 + $0xc] sm:$0xf]
  %v5417 = vunpack.c.l.b16 %v5409
  %v5418 = vunpack.c.l.b16 %v5410
  %v5419 = vunpack.c.l.b16 %v5411
  %v5420 = vunpack.c.l.b16 %v5412
  %v5421 = vpack.c.b16 %v5418, %v5417
  %v5422 = vpack.c.b16 %v5420, %v5419
  %v5424 = vsel %vm3632, %v5421, 0
  %v5427 = vsel %vm3632, %v5422, 0
  %5429 = vmatprep.subr.bf16.mxu0 0
  %5430 = vmatpush1.bf16.msra.mxu0 0
  %5431 = vmatprep.subr.bf16.mxu0 0
  %5432 = vmatpush1.bf16.msra.mxu0 0
  %5433 = vmatprep.subr.bf16.mxu0 0
  %5434 = vmatpush1.bf16.msra.mxu0 0
  %5435 = vmatprep.subr.bf16.mxu0 0
  %5436 = vmatpush1.bf16.msra.mxu0 0
  %5437 = vmatprep.subr.bf16.mxu0 0
  %5438 = vmatpush1.bf16.msra.mxu0 0
  %5439 = vmatprep.subr.bf16.mxu0 0
  %5440 = vmatpush1.bf16.msra.mxu0 0
  %5441 = vmatprep.subr.bf16.mxu0 0
  %5442 = vmatpush1.bf16.msra.mxu0 0
  %5443 = vmatprep.subr.bf16.mxu0 0
  %5444 = vmatpush1.bf16.msra.mxu0 %v5407
  %5445 = vmatprep.subr.bf16.mxu0 0
  %5446 = vmatpush2.bf16.msra.mxu0 0
  %5447 = vmatprep.subr.bf16.mxu0 0
  %5448 = vmatpush2.bf16.msra.mxu0 0
  %5449 = vmatprep.subr.bf16.mxu0 0
  %5450 = vmatpush2.bf16.msra.mxu0 0
  %5451 = vmatprep.subr.bf16.mxu0 0
  %5452 = vmatpush2.bf16.msra.mxu0 0
  %5453 = vmatprep.subr.bf16.mxu0 0
  %5454 = vmatpush2.bf16.msra.mxu0 0
  %5455 = vmatprep.subr.bf16.mxu0 0
  %5456 = vmatpush2.bf16.msra.mxu0 0
  %5457 = vmatprep.subr.bf16.mxu0 0
  %5458 = vmatpush2.bf16.msra.mxu0 0
  %5459 = vmatprep.subr.bf16.mxu0 0
  %5460 = vmatpush2.bf16.msra.mxu0 0
  %5461 = vmatprep.mubr.bf16.mxu0 0
  %5462 = vmatmul.mubr.bf16.gmra.mxu0 %v5424
  %v5463 = vpop.f32.mrf.mxu0
  %v5464 = vadd.f32 0.0, %v5463
  %v5465 = vpop.f32.mrf.mxu0
  %v5466 = vpop.f32.mrf.mxu0
  %v5467 = vadd.f32 0.0, %v5466
  %v5468 = vpop.f32.mrf.mxu0
  %5469 = vmatprep.mubr.bf16.mxu0 0
  %5470 = vmatmul.mubr.bf16.gmra.mxu0 %v5427
  %v5471 = vpop.f32.mrf.mxu0
  %v5472 = vadd.f32 0.0, %v5471
  %v5473 = vpop.f32.mrf.mxu0
  %v5474 = vpop.f32.mrf.mxu0
  %v5475 = vadd.f32 0.0, %v5474
  %v5476 = vpop.f32.mrf.mxu0
  %5477 = vdwg.mxu0
  %v5478 = vadd.f32 %v5345, %v5464
  %v5479 = vadd.f32 %v5346, %v5467
  %v5480 = vadd.f32 %v5347, %v5472
  %v5481 = vadd.f32 %v5348, %v5475
  %s5482 = scalar_lea.vmem %s6, 240
  %v5483 = vld [vmem:[%s5482] sm:$0xf]
  %v5484 = vld [vmem:[%s5482 + $0x4] sm:$0xf]
  %v5485 = vld [vmem:[%s5482 + $0x8] sm:$0xf]
  %v5486 = vld [vmem:[%s5482 + $0xc] sm:$0xf]
  %v5491 = vunpack.c.l.b16 %v5483
  %v5492 = vunpack.c.l.b16 %v5484
  %v5493 = vunpack.c.l.b16 %v5485
  %v5494 = vunpack.c.l.b16 %v5486
  %v5495 = vpack.c.b16 %v5492, %v5491
  %v5496 = vpack.c.b16 %v5494, %v5493
  %5499 = vmatprep.subr.bf16.mxu0 0
  %5500 = vmatpush1.bf16.msra.mxu0 0
  %5501 = vmatprep.subr.bf16.mxu0 0
  %5502 = vmatpush1.bf16.msra.mxu0 0
  %5503 = vmatprep.subr.bf16.mxu0 0
  %5504 = vmatpush1.bf16.msra.mxu0 0
  %5505 = vmatprep.subr.bf16.mxu0 0
  %5506 = vmatpush1.bf16.msra.mxu0 0
  %5507 = vmatprep.subr.bf16.mxu0 0
  %5508 = vmatpush1.bf16.msra.mxu0 0
  %5509 = vmatprep.subr.bf16.mxu0 0
  %5510 = vmatpush1.bf16.msra.mxu0 0
  %5511 = vmatprep.subr.bf16.mxu0 0
  %5512 = vmatpush1.bf16.msra.mxu0 %v5496
  %5513 = vmatprep.subr.bf16.mxu0 0
  %5514 = vmatpush1.bf16.msra.mxu0 %v5495
  %5515 = vmatprep.subr.bf16.mxu0 0
  %5516 = vmatpush2.bf16.msra.mxu0 0
  %5517 = vmatprep.subr.bf16.mxu0 0
  %5518 = vmatpush2.bf16.msra.mxu0 0
  %5519 = vmatprep.subr.bf16.mxu0 0
  %5520 = vmatpush2.bf16.msra.mxu0 0
  %5521 = vmatprep.subr.bf16.mxu0 0
  %5522 = vmatpush2.bf16.msra.mxu0 0
  %5523 = vmatprep.subr.bf16.mxu0 0
  %5524 = vmatpush2.bf16.msra.mxu0 0
  %5525 = vmatprep.subr.bf16.mxu0 0
  %5526 = vmatpush2.bf16.msra.mxu0 0
  %5527 = vmatprep.subr.bf16.mxu0 0
  %5528 = vmatpush2.bf16.msra.mxu0 0
  %5529 = vmatprep.subr.bf16.mxu0 0
  %5530 = vmatpush2.bf16.msra.mxu0 0
  %5531 = vmatprep.mubr.bf16.mxu0 0
  %5532 = vmatmul.mubr.bf16.gmra.mxu0 %v3510
  %v5533 = vpop.f32.mrf.mxu0
  %v5534 = vadd.f32 0.0, %v5533
  %v5535 = vpop.f32.mrf.mxu0
  %v5536 = vpop.f32.mrf.mxu0
  %v5537 = vadd.f32 0.0, %v5536
  %v5538 = vpop.f32.mrf.mxu0
  %5539 = vdwg.mxu0
  %v5540 = vpack.c.bf16 %v5537, %v5534
  %s5541 = scalar_lea.vmem %s7, 240
  %v5542 = vld [vmem:[%s5541] sm:$0xf]
  %v5543 = vld [vmem:[%s5541 + $0x4] sm:$0xf]
  %v5544 = vld [vmem:[%s5541 + $0x8] sm:$0xf]
  %v5545 = vld [vmem:[%s5541 + $0xc] sm:$0xf]
  %v5550 = vunpack.c.l.b16 %v5542
  %v5551 = vunpack.c.l.b16 %v5543
  %v5552 = vunpack.c.l.b16 %v5544
  %v5553 = vunpack.c.l.b16 %v5545
  %v5554 = vpack.c.b16 %v5551, %v5550
  %v5555 = vpack.c.b16 %v5553, %v5552
  %v5557 = vsel %vm3632, %v5554, 0
  %v5560 = vsel %vm3632, %v5555, 0
  %5562 = vmatprep.subr.bf16.mxu0 0
  %5563 = vmatpush1.bf16.msra.mxu0 0
  %5564 = vmatprep.subr.bf16.mxu0 0
  %5565 = vmatpush1.bf16.msra.mxu0 0
  %5566 = vmatprep.subr.bf16.mxu0 0
  %5567 = vmatpush1.bf16.msra.mxu0 0
  %5568 = vmatprep.subr.bf16.mxu0 0
  %5569 = vmatpush1.bf16.msra.mxu0 0
  %5570 = vmatprep.subr.bf16.mxu0 0
  %5571 = vmatpush1.bf16.msra.mxu0 0
  %5572 = vmatprep.subr.bf16.mxu0 0
  %5573 = vmatpush1.bf16.msra.mxu0 0
  %5574 = vmatprep.subr.bf16.mxu0 0
  %5575 = vmatpush1.bf16.msra.mxu0 0
  %5576 = vmatprep.subr.bf16.mxu0 0
  %5577 = vmatpush1.bf16.msra.mxu0 %v5540
  %5578 = vmatprep.subr.bf16.mxu0 0
  %5579 = vmatpush2.bf16.msra.mxu0 0
  %5580 = vmatprep.subr.bf16.mxu0 0
  %5581 = vmatpush2.bf16.msra.mxu0 0
  %5582 = vmatprep.subr.bf16.mxu0 0
  %5583 = vmatpush2.bf16.msra.mxu0 0
  %5584 = vmatprep.subr.bf16.mxu0 0
  %5585 = vmatpush2.bf16.msra.mxu0 0
  %5586 = vmatprep.subr.bf16.mxu0 0
  %5587 = vmatpush2.bf16.msra.mxu0 0
  %5588 = vmatprep.subr.bf16.mxu0 0
  %5589 = vmatpush2.bf16.msra.mxu0 0
  %5590 = vmatprep.subr.bf16.mxu0 0
  %5591 = vmatpush2.bf16.msra.mxu0 0
  %5592 = vmatprep.subr.bf16.mxu0 0
  %5593 = vmatpush2.bf16.msra.mxu0 0
  %5594 = vmatprep.mubr.bf16.mxu0 0
  %5595 = vmatmul.mubr.bf16.gmra.mxu0 %v5557
  %v5596 = vpop.f32.mrf.mxu0
  %v5597 = vadd.f32 0.0, %v5596
  %v5598 = vpop.f32.mrf.mxu0
  %v5599 = vpop.f32.mrf.mxu0
  %v5600 = vadd.f32 0.0, %v5599
  %v5601 = vpop.f32.mrf.mxu0
  %5602 = vmatprep.mubr.bf16.mxu0 0
  %5603 = vmatmul.mubr.bf16.gmra.mxu0 %v5560
  %v5604 = vpop.f32.mrf.mxu0
  %v5605 = vadd.f32 0.0, %v5604
  %v5606 = vpop.f32.mrf.mxu0
  %v5607 = vpop.f32.mrf.mxu0
  %v5608 = vadd.f32 0.0, %v5607
  %v5609 = vpop.f32.mrf.mxu0
  %5610 = vdwg.mxu0
  %v5611 = vadd.f32 %v5478, %v5597
  %v5612 = vadd.f32 %v5479, %v5600
  %v5613 = vadd.f32 %v5480, %v5605
  %v5614 = vadd.f32 %v5481, %v5608
  %v5615 = vld [vmem:[%s8] sm:$0xff]
  %v5616 = vld [vmem:[%s8 + $0x8] sm:$0xff]
  %v5617 = vld [vmem:[%s8 + $0x10] sm:$0xff]
  %v5618 = vld [vmem:[%s8 + $0x18] sm:$0xff]
  %5620 = vset.pattern.permute.xlu0 0
  %5621 = vperm.xlu0 %5620, %v5615
  %v5622 = vpop.permute.xlu0 %5621
  %5625 = vset.pattern.permute.xlu0 0
  %5626 = vperm.xlu0 %5625, %v5616
  %v5627 = vpop.permute.xlu0 %5626
  %5630 = vset.pattern.permute.xlu0 0
  %5631 = vperm.xlu0 %5630, %v5617
  %v5632 = vpop.permute.xlu0 %5631
  %5635 = vset.pattern.permute.xlu0 0
  %5636 = vperm.xlu0 %5635, %v5618
  %v5637 = vpop.permute.xlu0 %5636
  %v5639 = vadd.f32 %v5611, %v5622
  %v5640 = vadd.f32 %v5612, %v5627
  %v5641 = vadd.f32 %v5613, %v5632
  %v5642 = vadd.f32 %v5614, %v5637
  %vm5643 = vcmp.ge.f32.partialorder %v5639, 0.0
  %vm5644 = vcmp.ge.f32.partialorder %v5640, 0.0
  %vm5645 = vcmp.ge.f32.partialorder %v5641, 0.0
  %vm5646 = vcmp.ge.f32.partialorder %v5642, 0.0
  %v5647 = vmul.f32 %v5639, 0.01
  %v5648 = vmul.f32 %v5640, 0.01
  %v5649 = vmul.f32 %v5641, 0.01
  %v5650 = vmul.f32 %v5642, 0.01
  %v5651 = vsel %vm5643, %v5639, %v5647
  %v5652 = vsel %vm5644, %v5640, %v5648
  %v5653 = vsel %vm5645, %v5641, %v5649
  %v5654 = vsel %vm5646, %v5642, %v5650
  %v5655 = vpack.c.bf16 %v5652, %v5651
  %v5656 = vpack.c.bf16 %v5654, %v5653
  %v5657 = vld [vmem:[%s9] sm:$0xf]
  %v5659 = vsel %vm1088, %v5655, 0
  %v5662 = vsel %vm1088, %v5656, 0
  %v5665 = vsel %vm1092, %v5657, 0
  %5667 = vmatprep.subr.bf16.mxu0 0
  %5668 = vmatpush1.bf16.msra.mxu0 0
  %5669 = vmatprep.subr.bf16.mxu0 0
  %5670 = vmatpush1.bf16.msra.mxu0 0
  %5671 = vmatprep.subr.bf16.mxu0 0
  %5672 = vmatpush1.bf16.msra.mxu0 0
  %5673 = vmatprep.subr.bf16.mxu0 0
  %5674 = vmatpush1.bf16.msra.mxu0 0
  %5675 = vmatprep.subr.bf16.mxu0 0
  %5676 = vmatpush1.bf16.msra.mxu0 0
  %5677 = vmatprep.subr.bf16.mxu0 0
  %5678 = vmatpush1.bf16.msra.mxu0 0
  %5679 = vmatprep.subr.bf16.mxu0 0
  %5680 = vmatpush1.bf16.msra.mxu0 0
  %5681 = vmatprep.subr.bf16.mxu0 0
  %5682 = vmatpush1.bf16.msra.mxu0 %v5665
  %5683 = vmatprep.subr.bf16.mxu0 0
  %5684 = vmatpush2.bf16.msra.mxu0 0
  %5685 = vmatprep.subr.bf16.mxu0 0
  %5686 = vmatpush2.bf16.msra.mxu0 0
  %5687 = vmatprep.subr.bf16.mxu0 0
  %5688 = vmatpush2.bf16.msra.mxu0 0
  %5689 = vmatprep.subr.bf16.mxu0 0
  %5690 = vmatpush2.bf16.msra.mxu0 0
  %5691 = vmatprep.subr.bf16.mxu0 0
  %5692 = vmatpush2.bf16.msra.mxu0 0
  %5693 = vmatprep.subr.bf16.mxu0 0
  %5694 = vmatpush2.bf16.msra.mxu0 0
  %5695 = vmatprep.subr.bf16.mxu0 0
  %5696 = vmatpush2.bf16.msra.mxu0 0
  %5697 = vmatprep.subr.bf16.mxu0 0
  %5698 = vmatpush2.bf16.msra.mxu0 0
  %5699 = vmatprep.mubr.bf16.mxu0 0
  %5700 = vmatmul.mubr.bf16.gmra.mxu0 %v5659
  %v5701 = vpop.f32.mrf.mxu0
  %v5702 = vadd.f32 0.0, %v5701
  %v5703 = vpop.f32.mrf.mxu0
  %v5704 = vpop.f32.mrf.mxu0
  %v5705 = vadd.f32 0.0, %v5704
  %v5706 = vpop.f32.mrf.mxu0
  %5707 = vmatprep.mubr.bf16.mxu0 0
  %5708 = vmatmul.mubr.bf16.gmra.mxu0 %v5662
  %v5709 = vpop.f32.mrf.mxu0
  %v5710 = vadd.f32 0.0, %v5709
  %v5711 = vpop.f32.mrf.mxu0
  %v5712 = vpop.f32.mrf.mxu0
  %v5713 = vadd.f32 0.0, %v5712
  %v5714 = vpop.f32.mrf.mxu0
  %5715 = vdwg.mxu0
  %v5716 = vpack.c.bf16 %v5705, %v5702
  %v5717 = vpack.c.bf16 %v5713, %v5710
  %v5718 = vld [vmem:[%s10] sm:$0x1]
  %s5719 = scalar_lea.vmem %s9, 4
  %v5720 = vld [vmem:[%s5719] sm:$0xf]
  %v5722 = vsel %vm1092, %v5720, 0
  %5724 = vmatprep.subr.bf16.mxu0 0
  %5725 = vmatpush1.bf16.msra.mxu0 0
  %5726 = vmatprep.subr.bf16.mxu0 0
  %5727 = vmatpush1.bf16.msra.mxu0 0
  %5728 = vmatprep.subr.bf16.mxu0 0
  %5729 = vmatpush1.bf16.msra.mxu0 0
  %5730 = vmatprep.subr.bf16.mxu0 0
  %5731 = vmatpush1.bf16.msra.mxu0 0
  %5732 = vmatprep.subr.bf16.mxu0 0
  %5733 = vmatpush1.bf16.msra.mxu0 0
  %5734 = vmatprep.subr.bf16.mxu0 0
  %5735 = vmatpush1.bf16.msra.mxu0 0
  %5736 = vmatprep.subr.bf16.mxu0 0
  %5737 = vmatpush1.bf16.msra.mxu0 0
  %5738 = vmatprep.subr.bf16.mxu0 0
  %5739 = vmatpush1.bf16.msra.mxu0 %v5722
  %5740 = vmatprep.subr.bf16.mxu0 0
  %5741 = vmatpush2.bf16.msra.mxu0 0
  %5742 = vmatprep.subr.bf16.mxu0 0
  %5743 = vmatpush2.bf16.msra.mxu0 0
  %5744 = vmatprep.subr.bf16.mxu0 0
  %5745 = vmatpush2.bf16.msra.mxu0 0
  %5746 = vmatprep.subr.bf16.mxu0 0
  %5747 = vmatpush2.bf16.msra.mxu0 0
  %5748 = vmatprep.subr.bf16.mxu0 0
  %5749 = vmatpush2.bf16.msra.mxu0 0
  %5750 = vmatprep.subr.bf16.mxu0 0
  %5751 = vmatpush2.bf16.msra.mxu0 0
  %5752 = vmatprep.subr.bf16.mxu0 0
  %5753 = vmatpush2.bf16.msra.mxu0 0
  %5754 = vmatprep.subr.bf16.mxu0 0
  %5755 = vmatpush2.bf16.msra.mxu0 0
  %5756 = vmatprep.mubr.bf16.mxu0 0
  %5757 = vmatmul.mubr.bf16.gmra.mxu0 %v5659
  %v5758 = vpop.f32.mrf.mxu0
  %v5759 = vadd.f32 0.0, %v5758
  %v5760 = vpop.f32.mrf.mxu0
  %v5761 = vpop.f32.mrf.mxu0
  %v5762 = vadd.f32 0.0, %v5761
  %v5763 = vpop.f32.mrf.mxu0
  %5764 = vmatprep.mubr.bf16.mxu0 0
  %5765 = vmatmul.mubr.bf16.gmra.mxu0 %v5662
  %v5766 = vpop.f32.mrf.mxu0
  %v5767 = vadd.f32 0.0, %v5766
  %v5768 = vpop.f32.mrf.mxu0
  %v5769 = vpop.f32.mrf.mxu0
  %v5770 = vadd.f32 0.0, %v5769
  %v5771 = vpop.f32.mrf.mxu0
  %5772 = vdwg.mxu0
  %v5773 = vpack.c.bf16 %v5762, %v5759
  %v5774 = vpack.c.bf16 %v5770, %v5767
  %s5775 = scalar_lea.vmem %s10, 1
  %v5776 = vld [vmem:[%s5775] sm:$0x1]
  %v5778 = vsel %vm3508, %v5776, 0
  %5780 = vmatprep.subr.bf16.mxu0 0
  %5781 = vmatpush1.bf16.msra.mxu0 0
  %5782 = vmatprep.subr.bf16.mxu0 0
  %5783 = vmatpush1.bf16.msra.mxu0 0
  %5784 = vmatprep.subr.bf16.mxu0 0
  %5785 = vmatpush1.bf16.msra.mxu0 0
  %5786 = vmatprep.subr.bf16.mxu0 0
  %5787 = vmatpush1.bf16.msra.mxu0 0
  %5788 = vmatprep.subr.bf16.mxu0 0
  %5789 = vmatpush1.bf16.msra.mxu0 0
  %5790 = vmatprep.subr.bf16.mxu0 0
  %5791 = vmatpush1.bf16.msra.mxu0 0
  %5792 = vmatprep.subr.bf16.mxu0 0
  %5793 = vmatpush1.bf16.msra.mxu0 %v5774
  %5794 = vmatprep.subr.bf16.mxu0 0
  %5795 = vmatpush1.bf16.msra.mxu0 %v5773
  %5796 = vmatprep.subr.bf16.mxu0 0
  %5797 = vmatpush2.bf16.msra.mxu0 0
  %5798 = vmatprep.subr.bf16.mxu0 0
  %5799 = vmatpush2.bf16.msra.mxu0 0
  %5800 = vmatprep.subr.bf16.mxu0 0
  %5801 = vmatpush2.bf16.msra.mxu0 0
  %5802 = vmatprep.subr.bf16.mxu0 0
  %5803 = vmatpush2.bf16.msra.mxu0 0
  %5804 = vmatprep.subr.bf16.mxu0 0
  %5805 = vmatpush2.bf16.msra.mxu0 0
  %5806 = vmatprep.subr.bf16.mxu0 0
  %5807 = vmatpush2.bf16.msra.mxu0 0
  %5808 = vmatprep.subr.bf16.mxu0 0
  %5809 = vmatpush2.bf16.msra.mxu0 0
  %5810 = vmatprep.subr.bf16.mxu0 0
  %5811 = vmatpush2.bf16.msra.mxu0 0
  %5812 = vmatprep.mubr.bf16.mxu0 0
  %5813 = vmatmul.mubr.bf16.gmra.mxu0 %v5778
  %v5814 = vpop.f32.mrf.mxu0
  %v5815 = vadd.f32 0.0, %v5814
  %v5816 = vpop.f32.mrf.mxu0
  %v5817 = vpop.f32.mrf.mxu0
  %v5818 = vpop.f32.mrf.mxu0
  %5819 = vdwg.mxu0
  %v5821 = vsel %vm3508, %v5718, 0
  %5823 = vmatprep.subr.bf16.mxu0 0
  %5824 = vmatpush1.bf16.msra.mxu0 0
  %5825 = vmatprep.subr.bf16.mxu0 0
  %5826 = vmatpush1.bf16.msra.mxu0 0
  %5827 = vmatprep.subr.bf16.mxu0 0
  %5828 = vmatpush1.bf16.msra.mxu0 0
  %5829 = vmatprep.subr.bf16.mxu0 0
  %5830 = vmatpush1.bf16.msra.mxu0 0
  %5831 = vmatprep.subr.bf16.mxu0 0
  %5832 = vmatpush1.bf16.msra.mxu0 0
  %5833 = vmatprep.subr.bf16.mxu0 0
  %5834 = vmatpush1.bf16.msra.mxu0 0
  %5835 = vmatprep.subr.bf16.mxu0 0
  %5836 = vmatpush1.bf16.msra.mxu0 %v5717
  %5837 = vmatprep.subr.bf16.mxu0 0
  %5838 = vmatpush1.bf16.msra.mxu0 %v5716
  %5839 = vmatprep.subr.bf16.mxu0 0
  %5840 = vmatpush2.bf16.msra.mxu0 0
  %5841 = vmatprep.subr.bf16.mxu0 0
  %5842 = vmatpush2.bf16.msra.mxu0 0
  %5843 = vmatprep.subr.bf16.mxu0 0
  %5844 = vmatpush2.bf16.msra.mxu0 0
  %5845 = vmatprep.subr.bf16.mxu0 0
  %5846 = vmatpush2.bf16.msra.mxu0 0
  %5847 = vmatprep.subr.bf16.mxu0 0
  %5848 = vmatpush2.bf16.msra.mxu0 0
  %5849 = vmatprep.subr.bf16.mxu0 0
  %5850 = vmatpush2.bf16.msra.mxu0 0
  %5851 = vmatprep.subr.bf16.mxu0 0
  %5852 = vmatpush2.bf16.msra.mxu0 0
  %5853 = vmatprep.subr.bf16.mxu0 0
  %5854 = vmatpush2.bf16.msra.mxu0 0
  %5855 = vmatprep.mubr.bf16.mxu0 0
  %5856 = vmatmul.mubr.bf16.gmra.mxu0 %v5821
  %v5857 = vpop.f32.mrf.mxu0
  %v5858 = vadd.f32 %v5815, %v5857
  %v5859 = vpop.f32.mrf.mxu0
  %v5860 = vpop.f32.mrf.mxu0
  %v5861 = vpop.f32.mrf.mxu0
  %5862 = vdwg.mxu0
  %s5863 = scalar_lea.vmem %s9, 8
  %v5864 = vld [vmem:[%s5863] sm:$0xf]
  %v5866 = vsel %vm1092, %v5864, 0
  %5868 = vmatprep.subr.bf16.mxu0 0
  %5869 = vmatpush1.bf16.msra.mxu0 0
  %5870 = vmatprep.subr.bf16.mxu0 0
  %5871 = vmatpush1.bf16.msra.mxu0 0
  %5872 = vmatprep.subr.bf16.mxu0 0
  %5873 = vmatpush1.bf16.msra.mxu0 0
  %5874 = vmatprep.subr.bf16.mxu0 0
  %5875 = vmatpush1.bf16.msra.mxu0 0
  %5876 = vmatprep.subr.bf16.mxu0 0
  %5877 = vmatpush1.bf16.msra.mxu0 0
  %5878 = vmatprep.subr.bf16.mxu0 0
  %5879 = vmatpush1.bf16.msra.mxu0 0
  %5880 = vmatprep.subr.bf16.mxu0 0
  %5881 = vmatpush1.bf16.msra.mxu0 0
  %5882 = vmatprep.subr.bf16.mxu0 0
  %5883 = vmatpush1.bf16.msra.mxu0 %v5866
  %5884 = vmatprep.subr.bf16.mxu0 0
  %5885 = vmatpush2.bf16.msra.mxu0 0
  %5886 = vmatprep.subr.bf16.mxu0 0
  %5887 = vmatpush2.bf16.msra.mxu0 0
  %5888 = vmatprep.subr.bf16.mxu0 0
  %5889 = vmatpush2.bf16.msra.mxu0 0
  %5890 = vmatprep.subr.bf16.mxu0 0
  %5891 = vmatpush2.bf16.msra.mxu0 0
  %5892 = vmatprep.subr.bf16.mxu0 0
  %5893 = vmatpush2.bf16.msra.mxu0 0
  %5894 = vmatprep.subr.bf16.mxu0 0
  %5895 = vmatpush2.bf16.msra.mxu0 0
  %5896 = vmatprep.subr.bf16.mxu0 0
  %5897 = vmatpush2.bf16.msra.mxu0 0
  %5898 = vmatprep.subr.bf16.mxu0 0
  %5899 = vmatpush2.bf16.msra.mxu0 0
  %5900 = vmatprep.mubr.bf16.mxu0 0
  %5901 = vmatmul.mubr.bf16.gmra.mxu0 %v5659
  %v5902 = vpop.f32.mrf.mxu0
  %v5903 = vadd.f32 0.0, %v5902
  %v5904 = vpop.f32.mrf.mxu0
  %v5905 = vpop.f32.mrf.mxu0
  %v5906 = vadd.f32 0.0, %v5905
  %v5907 = vpop.f32.mrf.mxu0
  %5908 = vmatprep.mubr.bf16.mxu0 0
  %5909 = vmatmul.mubr.bf16.gmra.mxu0 %v5662
  %v5910 = vpop.f32.mrf.mxu0
  %v5911 = vadd.f32 0.0, %v5910
  %v5912 = vpop.f32.mrf.mxu0
  %v5913 = vpop.f32.mrf.mxu0
  %v5914 = vadd.f32 0.0, %v5913
  %v5915 = vpop.f32.mrf.mxu0
  %5916 = vdwg.mxu0
  %v5917 = vpack.c.bf16 %v5906, %v5903
  %v5918 = vpack.c.bf16 %v5914, %v5911
  %s5919 = scalar_lea.vmem %s10, 2
  %v5920 = vld [vmem:[%s5919] sm:$0x1]
  %v5922 = vsel %vm3508, %v5920, 0
  %5924 = vmatprep.subr.bf16.mxu0 0
  %5925 = vmatpush1.bf16.msra.mxu0 0
  %5926 = vmatprep.subr.bf16.mxu0 0
  %5927 = vmatpush1.bf16.msra.mxu0 0
  %5928 = vmatprep.subr.bf16.mxu0 0
  %5929 = vmatpush1.bf16.msra.mxu0 0
  %5930 = vmatprep.subr.bf16.mxu0 0
  %5931 = vmatpush1.bf16.msra.mxu0 0
  %5932 = vmatprep.subr.bf16.mxu0 0
  %5933 = vmatpush1.bf16.msra.mxu0 0
  %5934 = vmatprep.subr.bf16.mxu0 0
  %5935 = vmatpush1.bf16.msra.mxu0 0
  %5936 = vmatprep.subr.bf16.mxu0 0
  %5937 = vmatpush1.bf16.msra.mxu0 %v5918
  %5938 = vmatprep.subr.bf16.mxu0 0
  %5939 = vmatpush1.bf16.msra.mxu0 %v5917
  %5940 = vmatprep.subr.bf16.mxu0 0
  %5941 = vmatpush2.bf16.msra.mxu0 0
  %5942 = vmatprep.subr.bf16.mxu0 0
  %5943 = vmatpush2.bf16.msra.mxu0 0
  %5944 = vmatprep.subr.bf16.mxu0 0
  %5945 = vmatpush2.bf16.msra.mxu0 0
  %5946 = vmatprep.subr.bf16.mxu0 0
  %5947 = vmatpush2.bf16.msra.mxu0 0
  %5948 = vmatprep.subr.bf16.mxu0 0
  %5949 = vmatpush2.bf16.msra.mxu0 0
  %5950 = vmatprep.subr.bf16.mxu0 0
  %5951 = vmatpush2.bf16.msra.mxu0 0
  %5952 = vmatprep.subr.bf16.mxu0 0
  %5953 = vmatpush2.bf16.msra.mxu0 0
  %5954 = vmatprep.subr.bf16.mxu0 0
  %5955 = vmatpush2.bf16.msra.mxu0 0
  %5956 = vmatprep.mubr.bf16.mxu0 0
  %5957 = vmatmul.mubr.bf16.gmra.mxu0 %v5922
  %v5958 = vpop.f32.mrf.mxu0
  %v5959 = vadd.f32 0.0, %v5958
  %v5960 = vpop.f32.mrf.mxu0
  %v5961 = vpop.f32.mrf.mxu0
  %v5962 = vpop.f32.mrf.mxu0
  %5963 = vdwg.mxu0
  %v5964 = vadd.f32 %v5858, %v5959
  %s5965 = scalar_lea.vmem %s9, 12
  %v5966 = vld [vmem:[%s5965] sm:$0xf]
  %v5968 = vsel %vm1092, %v5966, 0
  %5970 = vmatprep.subr.bf16.mxu0 0
  %5971 = vmatpush1.bf16.msra.mxu0 0
  %5972 = vmatprep.subr.bf16.mxu0 0
  %5973 = vmatpush1.bf16.msra.mxu0 0
  %5974 = vmatprep.subr.bf16.mxu0 0
  %5975 = vmatpush1.bf16.msra.mxu0 0
  %5976 = vmatprep.subr.bf16.mxu0 0
  %5977 = vmatpush1.bf16.msra.mxu0 0
  %5978 = vmatprep.subr.bf16.mxu0 0
  %5979 = vmatpush1.bf16.msra.mxu0 0
  %5980 = vmatprep.subr.bf16.mxu0 0
  %5981 = vmatpush1.bf16.msra.mxu0 0
  %5982 = vmatprep.subr.bf16.mxu0 0
  %5983 = vmatpush1.bf16.msra.mxu0 0
  %5984 = vmatprep.subr.bf16.mxu0 0
  %5985 = vmatpush1.bf16.msra.mxu0 %v5968
  %5986 = vmatprep.subr.bf16.mxu0 0
  %5987 = vmatpush2.bf16.msra.mxu0 0
  %5988 = vmatprep.subr.bf16.mxu0 0
  %5989 = vmatpush2.bf16.msra.mxu0 0
  %5990 = vmatprep.subr.bf16.mxu0 0
  %5991 = vmatpush2.bf16.msra.mxu0 0
  %5992 = vmatprep.subr.bf16.mxu0 0
  %5993 = vmatpush2.bf16.msra.mxu0 0
  %5994 = vmatprep.subr.bf16.mxu0 0
  %5995 = vmatpush2.bf16.msra.mxu0 0
  %5996 = vmatprep.subr.bf16.mxu0 0
  %5997 = vmatpush2.bf16.msra.mxu0 0
  %5998 = vmatprep.subr.bf16.mxu0 0
  %5999 = vmatpush2.bf16.msra.mxu0 0
  %6000 = vmatprep.subr.bf16.mxu0 0
  %6001 = vmatpush2.bf16.msra.mxu0 0
  %6002 = vmatprep.mubr.bf16.mxu0 0
  %6003 = vmatmul.mubr.bf16.gmra.mxu0 %v5659
  %v6004 = vpop.f32.mrf.mxu0
  %v6005 = vadd.f32 0.0, %v6004
  %v6006 = vpop.f32.mrf.mxu0
  %v6007 = vpop.f32.mrf.mxu0
  %v6008 = vadd.f32 0.0, %v6007
  %v6009 = vpop.f32.mrf.mxu0
  %6010 = vmatprep.mubr.bf16.mxu0 0
  %6011 = vmatmul.mubr.bf16.gmra.mxu0 %v5662
  %v6012 = vpop.f32.mrf.mxu0
  %v6013 = vadd.f32 0.0, %v6012
  %v6014 = vpop.f32.mrf.mxu0
  %v6015 = vpop.f32.mrf.mxu0
  %v6016 = vadd.f32 0.0, %v6015
  %v6017 = vpop.f32.mrf.mxu0
  %6018 = vdwg.mxu0
  %v6019 = vpack.c.bf16 %v6008, %v6005
  %v6020 = vpack.c.bf16 %v6016, %v6013
  %s6021 = scalar_lea.vmem %s10, 3
  %v6022 = vld [vmem:[%s6021] sm:$0x1]
  %v6024 = vsel %vm3508, %v6022, 0
  %6026 = vmatprep.subr.bf16.mxu0 0
  %6027 = vmatpush1.bf16.msra.mxu0 0
  %6028 = vmatprep.subr.bf16.mxu0 0
  %6029 = vmatpush1.bf16.msra.mxu0 0
  %6030 = vmatprep.subr.bf16.mxu0 0
  %6031 = vmatpush1.bf16.msra.mxu0 0
  %6032 = vmatprep.subr.bf16.mxu0 0
  %6033 = vmatpush1.bf16.msra.mxu0 0
  %6034 = vmatprep.subr.bf16.mxu0 0
  %6035 = vmatpush1.bf16.msra.mxu0 0
  %6036 = vmatprep.subr.bf16.mxu0 0
  %6037 = vmatpush1.bf16.msra.mxu0 0
  %6038 = vmatprep.subr.bf16.mxu0 0
  %6039 = vmatpush1.bf16.msra.mxu0 %v6020
  %6040 = vmatprep.subr.bf16.mxu0 0
  %6041 = vmatpush1.bf16.msra.mxu0 %v6019
  %6042 = vmatprep.subr.bf16.mxu0 0
  %6043 = vmatpush2.bf16.msra.mxu0 0
  %6044 = vmatprep.subr.bf16.mxu0 0
  %6045 = vmatpush2.bf16.msra.mxu0 0
  %6046 = vmatprep.subr.bf16.mxu0 0
  %6047 = vmatpush2.bf16.msra.mxu0 0
  %6048 = vmatprep.subr.bf16.mxu0 0
  %6049 = vmatpush2.bf16.msra.mxu0 0
  %6050 = vmatprep.subr.bf16.mxu0 0
  %6051 = vmatpush2.bf16.msra.mxu0 0
  %6052 = vmatprep.subr.bf16.mxu0 0
  %6053 = vmatpush2.bf16.msra.mxu0 0
  %6054 = vmatprep.subr.bf16.mxu0 0
  %6055 = vmatpush2.bf16.msra.mxu0 0
  %6056 = vmatprep.subr.bf16.mxu0 0
  %6057 = vmatpush2.bf16.msra.mxu0 0
  %6058 = vmatprep.mubr.bf16.mxu0 0
  %6059 = vmatmul.mubr.bf16.gmra.mxu0 %v6024
  %v6060 = vpop.f32.mrf.mxu0
  %v6061 = vadd.f32 0.0, %v6060
  %v6062 = vpop.f32.mrf.mxu0
  %v6063 = vpop.f32.mrf.mxu0
  %v6064 = vpop.f32.mrf.mxu0
  %6065 = vdwg.mxu0
  %v6066 = vadd.f32 %v5964, %v6061
  %s6067 = scalar_lea.vmem %s9, 16
  %v6068 = vld [vmem:[%s6067] sm:$0xf]
  %v6070 = vsel %vm1092, %v6068, 0
  %6072 = vmatprep.subr.bf16.mxu0 0
  %6073 = vmatpush1.bf16.msra.mxu0 0
  %6074 = vmatprep.subr.bf16.mxu0 0
  %6075 = vmatpush1.bf16.msra.mxu0 0
  %6076 = vmatprep.subr.bf16.mxu0 0
  %6077 = vmatpush1.bf16.msra.mxu0 0
  %6078 = vmatprep.subr.bf16.mxu0 0
  %6079 = vmatpush1.bf16.msra.mxu0 0
  %6080 = vmatprep.subr.bf16.mxu0 0
  %6081 = vmatpush1.bf16.msra.mxu0 0
  %6082 = vmatprep.subr.bf16.mxu0 0
  %6083 = vmatpush1.bf16.msra.mxu0 0
  %6084 = vmatprep.subr.bf16.mxu0 0
  %6085 = vmatpush1.bf16.msra.mxu0 0
  %6086 = vmatprep.subr.bf16.mxu0 0
  %6087 = vmatpush1.bf16.msra.mxu0 %v6070
  %6088 = vmatprep.subr.bf16.mxu0 0
  %6089 = vmatpush2.bf16.msra.mxu0 0
  %6090 = vmatprep.subr.bf16.mxu0 0
  %6091 = vmatpush2.bf16.msra.mxu0 0
  %6092 = vmatprep.subr.bf16.mxu0 0
  %6093 = vmatpush2.bf16.msra.mxu0 0
  %6094 = vmatprep.subr.bf16.mxu0 0
  %6095 = vmatpush2.bf16.msra.mxu0 0
  %6096 = vmatprep.subr.bf16.mxu0 0
  %6097 = vmatpush2.bf16.msra.mxu0 0
  %6098 = vmatprep.subr.bf16.mxu0 0
  %6099 = vmatpush2.bf16.msra.mxu0 0
  %6100 = vmatprep.subr.bf16.mxu0 0
  %6101 = vmatpush2.bf16.msra.mxu0 0
  %6102 = vmatprep.subr.bf16.mxu0 0
  %6103 = vmatpush2.bf16.msra.mxu0 0
  %6104 = vmatprep.mubr.bf16.mxu0 0
  %6105 = vmatmul.mubr.bf16.gmra.mxu0 %v5659
  %v6106 = vpop.f32.mrf.mxu0
  %v6107 = vadd.f32 0.0, %v6106
  %v6108 = vpop.f32.mrf.mxu0
  %v6109 = vpop.f32.mrf.mxu0
  %v6110 = vadd.f32 0.0, %v6109
  %v6111 = vpop.f32.mrf.mxu0
  %6112 = vmatprep.mubr.bf16.mxu0 0
  %6113 = vmatmul.mubr.bf16.gmra.mxu0 %v5662
  %v6114 = vpop.f32.mrf.mxu0
  %v6115 = vadd.f32 0.0, %v6114
  %v6116 = vpop.f32.mrf.mxu0
  %v6117 = vpop.f32.mrf.mxu0
  %v6118 = vadd.f32 0.0, %v6117
  %v6119 = vpop.f32.mrf.mxu0
  %6120 = vdwg.mxu0
  %v6121 = vpack.c.bf16 %v6110, %v6107
  %v6122 = vpack.c.bf16 %v6118, %v6115
  %s6123 = scalar_lea.vmem %s10, 4
  %v6124 = vld [vmem:[%s6123] sm:$0x1]
  %v6126 = vsel %vm3508, %v6124, 0
  %6128 = vmatprep.subr.bf16.mxu0 0
  %6129 = vmatpush1.bf16.msra.mxu0 0
  %6130 = vmatprep.subr.bf16.mxu0 0
  %6131 = vmatpush1.bf16.msra.mxu0 0
  %6132 = vmatprep.subr.bf16.mxu0 0
  %6133 = vmatpush1.bf16.msra.mxu0 0
  %6134 = vmatprep.subr.bf16.mxu0 0
  %6135 = vmatpush1.bf16.msra.mxu0 0
  %6136 = vmatprep.subr.bf16.mxu0 0
  %6137 = vmatpush1.bf16.msra.mxu0 0
  %6138 = vmatprep.subr.bf16.mxu0 0
  %6139 = vmatpush1.bf16.msra.mxu0 0
  %6140 = vmatprep.subr.bf16.mxu0 0
  %6141 = vmatpush1.bf16.msra.mxu0 %v6122
  %6142 = vmatprep.subr.bf16.mxu0 0
  %6143 = vmatpush1.bf16.msra.mxu0 %v6121
  %6144 = vmatprep.subr.bf16.mxu0 0
  %6145 = vmatpush2.bf16.msra.mxu0 0
  %6146 = vmatprep.subr.bf16.mxu0 0
  %6147 = vmatpush2.bf16.msra.mxu0 0
  %6148 = vmatprep.subr.bf16.mxu0 0
  %6149 = vmatpush2.bf16.msra.mxu0 0
  %6150 = vmatprep.subr.bf16.mxu0 0
  %6151 = vmatpush2.bf16.msra.mxu0 0
  %6152 = vmatprep.subr.bf16.mxu0 0
  %6153 = vmatpush2.bf16.msra.mxu0 0
  %6154 = vmatprep.subr.bf16.mxu0 0
  %6155 = vmatpush2.bf16.msra.mxu0 0
  %6156 = vmatprep.subr.bf16.mxu0 0
  %6157 = vmatpush2.bf16.msra.mxu0 0
  %6158 = vmatprep.subr.bf16.mxu0 0
  %6159 = vmatpush2.bf16.msra.mxu0 0
  %6160 = vmatprep.mubr.bf16.mxu0 0
  %6161 = vmatmul.mubr.bf16.gmra.mxu0 %v6126
  %v6162 = vpop.f32.mrf.mxu0
  %v6163 = vadd.f32 0.0, %v6162
  %v6164 = vpop.f32.mrf.mxu0
  %v6165 = vpop.f32.mrf.mxu0
  %v6166 = vpop.f32.mrf.mxu0
  %6167 = vdwg.mxu0
  %v6168 = vadd.f32 %v6066, %v6163
  %s6169 = scalar_lea.vmem %s9, 20
  %v6170 = vld [vmem:[%s6169] sm:$0xf]
  %v6172 = vsel %vm1092, %v6170, 0
  %6174 = vmatprep.subr.bf16.mxu0 0
  %6175 = vmatpush1.bf16.msra.mxu0 0
  %6176 = vmatprep.subr.bf16.mxu0 0
  %6177 = vmatpush1.bf16.msra.mxu0 0
  %6178 = vmatprep.subr.bf16.mxu0 0
  %6179 = vmatpush1.bf16.msra.mxu0 0
  %6180 = vmatprep.subr.bf16.mxu0 0
  %6181 = vmatpush1.bf16.msra.mxu0 0
  %6182 = vmatprep.subr.bf16.mxu0 0
  %6183 = vmatpush1.bf16.msra.mxu0 0
  %6184 = vmatprep.subr.bf16.mxu0 0
  %6185 = vmatpush1.bf16.msra.mxu0 0
  %6186 = vmatprep.subr.bf16.mxu0 0
  %6187 = vmatpush1.bf16.msra.mxu0 0
  %6188 = vmatprep.subr.bf16.mxu0 0
  %6189 = vmatpush1.bf16.msra.mxu0 %v6172
  %6190 = vmatprep.subr.bf16.mxu0 0
  %6191 = vmatpush2.bf16.msra.mxu0 0
  %6192 = vmatprep.subr.bf16.mxu0 0
  %6193 = vmatpush2.bf16.msra.mxu0 0
  %6194 = vmatprep.subr.bf16.mxu0 0
  %6195 = vmatpush2.bf16.msra.mxu0 0
  %6196 = vmatprep.subr.bf16.mxu0 0
  %6197 = vmatpush2.bf16.msra.mxu0 0
  %6198 = vmatprep.subr.bf16.mxu0 0
  %6199 = vmatpush2.bf16.msra.mxu0 0
  %6200 = vmatprep.subr.bf16.mxu0 0
  %6201 = vmatpush2.bf16.msra.mxu0 0
  %6202 = vmatprep.subr.bf16.mxu0 0
  %6203 = vmatpush2.bf16.msra.mxu0 0
  %6204 = vmatprep.subr.bf16.mxu0 0
  %6205 = vmatpush2.bf16.msra.mxu0 0
  %6206 = vmatprep.mubr.bf16.mxu0 0
  %6207 = vmatmul.mubr.bf16.gmra.mxu0 %v5659
  %v6208 = vpop.f32.mrf.mxu0
  %v6209 = vadd.f32 0.0, %v6208
  %v6210 = vpop.f32.mrf.mxu0
  %v6211 = vpop.f32.mrf.mxu0
  %v6212 = vadd.f32 0.0, %v6211
  %v6213 = vpop.f32.mrf.mxu0
  %6214 = vmatprep.mubr.bf16.mxu0 0
  %6215 = vmatmul.mubr.bf16.gmra.mxu0 %v5662
  %v6216 = vpop.f32.mrf.mxu0
  %v6217 = vadd.f32 0.0, %v6216
  %v6218 = vpop.f32.mrf.mxu0
  %v6219 = vpop.f32.mrf.mxu0
  %v6220 = vadd.f32 0.0, %v6219
  %v6221 = vpop.f32.mrf.mxu0
  %6222 = vdwg.mxu0
  %v6223 = vpack.c.bf16 %v6212, %v6209
  %v6224 = vpack.c.bf16 %v6220, %v6217
  %s6225 = scalar_lea.vmem %s10, 5
  %v6226 = vld [vmem:[%s6225] sm:$0x1]
  %v6228 = vsel %vm3508, %v6226, 0
  %6230 = vmatprep.subr.bf16.mxu0 0
  %6231 = vmatpush1.bf16.msra.mxu0 0
  %6232 = vmatprep.subr.bf16.mxu0 0
  %6233 = vmatpush1.bf16.msra.mxu0 0
  %6234 = vmatprep.subr.bf16.mxu0 0
  %6235 = vmatpush1.bf16.msra.mxu0 0
  %6236 = vmatprep.subr.bf16.mxu0 0
  %6237 = vmatpush1.bf16.msra.mxu0 0
  %6238 = vmatprep.subr.bf16.mxu0 0
  %6239 = vmatpush1.bf16.msra.mxu0 0
  %6240 = vmatprep.subr.bf16.mxu0 0
  %6241 = vmatpush1.bf16.msra.mxu0 0
  %6242 = vmatprep.subr.bf16.mxu0 0
  %6243 = vmatpush1.bf16.msra.mxu0 %v6224
  %6244 = vmatprep.subr.bf16.mxu0 0
  %6245 = vmatpush1.bf16.msra.mxu0 %v6223
  %6246 = vmatprep.subr.bf16.mxu0 0
  %6247 = vmatpush2.bf16.msra.mxu0 0
  %6248 = vmatprep.subr.bf16.mxu0 0
  %6249 = vmatpush2.bf16.msra.mxu0 0
  %6250 = vmatprep.subr.bf16.mxu0 0
  %6251 = vmatpush2.bf16.msra.mxu0 0
  %6252 = vmatprep.subr.bf16.mxu0 0
  %6253 = vmatpush2.bf16.msra.mxu0 0
  %6254 = vmatprep.subr.bf16.mxu0 0
  %6255 = vmatpush2.bf16.msra.mxu0 0
  %6256 = vmatprep.subr.bf16.mxu0 0
  %6257 = vmatpush2.bf16.msra.mxu0 0
  %6258 = vmatprep.subr.bf16.mxu0 0
  %6259 = vmatpush2.bf16.msra.mxu0 0
  %6260 = vmatprep.subr.bf16.mxu0 0
  %6261 = vmatpush2.bf16.msra.mxu0 0
  %6262 = vmatprep.mubr.bf16.mxu0 0
  %6263 = vmatmul.mubr.bf16.gmra.mxu0 %v6228
  %v6264 = vpop.f32.mrf.mxu0
  %v6265 = vadd.f32 0.0, %v6264
  %v6266 = vpop.f32.mrf.mxu0
  %v6267 = vpop.f32.mrf.mxu0
  %v6268 = vpop.f32.mrf.mxu0
  %6269 = vdwg.mxu0
  %v6270 = vadd.f32 %v6168, %v6265
  %s6271 = scalar_lea.vmem %s9, 24
  %v6272 = vld [vmem:[%s6271] sm:$0xf]
  %v6274 = vsel %vm1092, %v6272, 0
  %6276 = vmatprep.subr.bf16.mxu0 0
  %6277 = vmatpush1.bf16.msra.mxu0 0
  %6278 = vmatprep.subr.bf16.mxu0 0
  %6279 = vmatpush1.bf16.msra.mxu0 0
  %6280 = vmatprep.subr.bf16.mxu0 0
  %6281 = vmatpush1.bf16.msra.mxu0 0
  %6282 = vmatprep.subr.bf16.mxu0 0
  %6283 = vmatpush1.bf16.msra.mxu0 0
  %6284 = vmatprep.subr.bf16.mxu0 0
  %6285 = vmatpush1.bf16.msra.mxu0 0
  %6286 = vmatprep.subr.bf16.mxu0 0
  %6287 = vmatpush1.bf16.msra.mxu0 0
  %6288 = vmatprep.subr.bf16.mxu0 0
  %6289 = vmatpush1.bf16.msra.mxu0 0
  %6290 = vmatprep.subr.bf16.mxu0 0
  %6291 = vmatpush1.bf16.msra.mxu0 %v6274
  %6292 = vmatprep.subr.bf16.mxu0 0
  %6293 = vmatpush2.bf16.msra.mxu0 0
  %6294 = vmatprep.subr.bf16.mxu0 0
  %6295 = vmatpush2.bf16.msra.mxu0 0
  %6296 = vmatprep.subr.bf16.mxu0 0
  %6297 = vmatpush2.bf16.msra.mxu0 0
  %6298 = vmatprep.subr.bf16.mxu0 0
  %6299 = vmatpush2.bf16.msra.mxu0 0
  %6300 = vmatprep.subr.bf16.mxu0 0
  %6301 = vmatpush2.bf16.msra.mxu0 0
  %6302 = vmatprep.subr.bf16.mxu0 0
  %6303 = vmatpush2.bf16.msra.mxu0 0
  %6304 = vmatprep.subr.bf16.mxu0 0
  %6305 = vmatpush2.bf16.msra.mxu0 0
  %6306 = vmatprep.subr.bf16.mxu0 0
  %6307 = vmatpush2.bf16.msra.mxu0 0
  %6308 = vmatprep.mubr.bf16.mxu0 0
  %6309 = vmatmul.mubr.bf16.gmra.mxu0 %v5659
  %v6310 = vpop.f32.mrf.mxu0
  %v6311 = vadd.f32 0.0, %v6310
  %v6312 = vpop.f32.mrf.mxu0
  %v6313 = vpop.f32.mrf.mxu0
  %v6314 = vadd.f32 0.0, %v6313
  %v6315 = vpop.f32.mrf.mxu0
  %6316 = vmatprep.mubr.bf16.mxu0 0
  %6317 = vmatmul.mubr.bf16.gmra.mxu0 %v5662
  %v6318 = vpop.f32.mrf.mxu0
  %v6319 = vadd.f32 0.0, %v6318
  %v6320 = vpop.f32.mrf.mxu0
  %v6321 = vpop.f32.mrf.mxu0
  %v6322 = vadd.f32 0.0, %v6321
  %v6323 = vpop.f32.mrf.mxu0
  %6324 = vdwg.mxu0
  %v6325 = vpack.c.bf16 %v6314, %v6311
  %v6326 = vpack.c.bf16 %v6322, %v6319
  %s6327 = scalar_lea.vmem %s10, 6
  %v6328 = vld [vmem:[%s6327] sm:$0x1]
  %v6330 = vsel %vm3508, %v6328, 0
  %6332 = vmatprep.subr.bf16.mxu0 0
  %6333 = vmatpush1.bf16.msra.mxu0 0
  %6334 = vmatprep.subr.bf16.mxu0 0
  %6335 = vmatpush1.bf16.msra.mxu0 0
  %6336 = vmatprep.subr.bf16.mxu0 0
  %6337 = vmatpush1.bf16.msra.mxu0 0
  %6338 = vmatprep.subr.bf16.mxu0 0
  %6339 = vmatpush1.bf16.msra.mxu0 0
  %6340 = vmatprep.subr.bf16.mxu0 0
  %6341 = vmatpush1.bf16.msra.mxu0 0
  %6342 = vmatprep.subr.bf16.mxu0 0
  %6343 = vmatpush1.bf16.msra.mxu0 0
  %6344 = vmatprep.subr.bf16.mxu0 0
  %6345 = vmatpush1.bf16.msra.mxu0 %v6326
  %6346 = vmatprep.subr.bf16.mxu0 0
  %6347 = vmatpush1.bf16.msra.mxu0 %v6325
  %6348 = vmatprep.subr.bf16.mxu0 0
  %6349 = vmatpush2.bf16.msra.mxu0 0
  %6350 = vmatprep.subr.bf16.mxu0 0
  %6351 = vmatpush2.bf16.msra.mxu0 0
  %6352 = vmatprep.subr.bf16.mxu0 0
  %6353 = vmatpush2.bf16.msra.mxu0 0
  %6354 = vmatprep.subr.bf16.mxu0 0
  %6355 = vmatpush2.bf16.msra.mxu0 0
  %6356 = vmatprep.subr.bf16.mxu0 0
  %6357 = vmatpush2.bf16.msra.mxu0 0
  %6358 = vmatprep.subr.bf16.mxu0 0
  %6359 = vmatpush2.bf16.msra.mxu0 0
  %6360 = vmatprep.subr.bf16.mxu0 0
  %6361 = vmatpush2.bf16.msra.mxu0 0
  %6362 = vmatprep.subr.bf16.mxu0 0
  %6363 = vmatpush2.bf16.msra.mxu0 0
  %6364 = vmatprep.mubr.bf16.mxu0 0
  %6365 = vmatmul.mubr.bf16.gmra.mxu0 %v6330
  %v6366 = vpop.f32.mrf.mxu0
  %v6367 = vadd.f32 0.0, %v6366
  %v6368 = vpop.f32.mrf.mxu0
  %v6369 = vpop.f32.mrf.mxu0
  %v6370 = vpop.f32.mrf.mxu0
  %6371 = vdwg.mxu0
  %v6372 = vadd.f32 %v6270, %v6367
  %s6373 = scalar_lea.vmem %s9, 28
  %v6374 = vld [vmem:[%s6373] sm:$0xf]
  %v6376 = vsel %vm1092, %v6374, 0
  %6378 = vmatprep.subr.bf16.mxu0 0
  %6379 = vmatpush1.bf16.msra.mxu0 0
  %6380 = vmatprep.subr.bf16.mxu0 0
  %6381 = vmatpush1.bf16.msra.mxu0 0
  %6382 = vmatprep.subr.bf16.mxu0 0
  %6383 = vmatpush1.bf16.msra.mxu0 0
  %6384 = vmatprep.subr.bf16.mxu0 0
  %6385 = vmatpush1.bf16.msra.mxu0 0
  %6386 = vmatprep.subr.bf16.mxu0 0
  %6387 = vmatpush1.bf16.msra.mxu0 0
  %6388 = vmatprep.subr.bf16.mxu0 0
  %6389 = vmatpush1.bf16.msra.mxu0 0
  %6390 = vmatprep.subr.bf16.mxu0 0
  %6391 = vmatpush1.bf16.msra.mxu0 0
  %6392 = vmatprep.subr.bf16.mxu0 0
  %6393 = vmatpush1.bf16.msra.mxu0 %v6376
  %6394 = vmatprep.subr.bf16.mxu0 0
  %6395 = vmatpush2.bf16.msra.mxu0 0
  %6396 = vmatprep.subr.bf16.mxu0 0
  %6397 = vmatpush2.bf16.msra.mxu0 0
  %6398 = vmatprep.subr.bf16.mxu0 0
  %6399 = vmatpush2.bf16.msra.mxu0 0
  %6400 = vmatprep.subr.bf16.mxu0 0
  %6401 = vmatpush2.bf16.msra.mxu0 0
  %6402 = vmatprep.subr.bf16.mxu0 0
  %6403 = vmatpush2.bf16.msra.mxu0 0
  %6404 = vmatprep.subr.bf16.mxu0 0
  %6405 = vmatpush2.bf16.msra.mxu0 0
  %6406 = vmatprep.subr.bf16.mxu0 0
  %6407 = vmatpush2.bf16.msra.mxu0 0
  %6408 = vmatprep.subr.bf16.mxu0 0
  %6409 = vmatpush2.bf16.msra.mxu0 0
  %6410 = vmatprep.mubr.bf16.mxu0 0
  %6411 = vmatmul.mubr.bf16.gmra.mxu0 %v5659
  %v6412 = vpop.f32.mrf.mxu0
  %v6413 = vadd.f32 0.0, %v6412
  %v6414 = vpop.f32.mrf.mxu0
  %v6415 = vpop.f32.mrf.mxu0
  %v6416 = vadd.f32 0.0, %v6415
  %v6417 = vpop.f32.mrf.mxu0
  %6418 = vmatprep.mubr.bf16.mxu0 0
  %6419 = vmatmul.mubr.bf16.gmra.mxu0 %v5662
  %v6420 = vpop.f32.mrf.mxu0
  %v6421 = vadd.f32 0.0, %v6420
  %v6422 = vpop.f32.mrf.mxu0
  %v6423 = vpop.f32.mrf.mxu0
  %v6424 = vadd.f32 0.0, %v6423
  %v6425 = vpop.f32.mrf.mxu0
  %6426 = vdwg.mxu0
  %v6427 = vpack.c.bf16 %v6416, %v6413
  %v6428 = vpack.c.bf16 %v6424, %v6421
  %s6429 = scalar_lea.vmem %s10, 7
  %v6430 = vld [vmem:[%s6429] sm:$0x1]
  %v6432 = vsel %vm3508, %v6430, 0
  %6434 = vmatprep.subr.bf16.mxu0 0
  %6435 = vmatpush1.bf16.msra.mxu0 0
  %6436 = vmatprep.subr.bf16.mxu0 0
  %6437 = vmatpush1.bf16.msra.mxu0 0
  %6438 = vmatprep.subr.bf16.mxu0 0
  %6439 = vmatpush1.bf16.msra.mxu0 0
  %6440 = vmatprep.subr.bf16.mxu0 0
  %6441 = vmatpush1.bf16.msra.mxu0 0
  %6442 = vmatprep.subr.bf16.mxu0 0
  %6443 = vmatpush1.bf16.msra.mxu0 0
  %6444 = vmatprep.subr.bf16.mxu0 0
  %6445 = vmatpush1.bf16.msra.mxu0 0
  %6446 = vmatprep.subr.bf16.mxu0 0
  %6447 = vmatpush1.bf16.msra.mxu0 %v6428
  %6448 = vmatprep.subr.bf16.mxu0 0
  %6449 = vmatpush1.bf16.msra.mxu0 %v6427
  %6450 = vmatprep.subr.bf16.mxu0 0
  %6451 = vmatpush2.bf16.msra.mxu0 0
  %6452 = vmatprep.subr.bf16.mxu0 0
  %6453 = vmatpush2.bf16.msra.mxu0 0
  %6454 = vmatprep.subr.bf16.mxu0 0
  %6455 = vmatpush2.bf16.msra.mxu0 0
  %6456 = vmatprep.subr.bf16.mxu0 0
  %6457 = vmatpush2.bf16.msra.mxu0 0
  %6458 = vmatprep.subr.bf16.mxu0 0
  %6459 = vmatpush2.bf16.msra.mxu0 0
  %6460 = vmatprep.subr.bf16.mxu0 0
  %6461 = vmatpush2.bf16.msra.mxu0 0
  %6462 = vmatprep.subr.bf16.mxu0 0
  %6463 = vmatpush2.bf16.msra.mxu0 0
  %6464 = vmatprep.subr.bf16.mxu0 0
  %6465 = vmatpush2.bf16.msra.mxu0 0
  %6466 = vmatprep.mubr.bf16.mxu0 0
  %6467 = vmatmul.mubr.bf16.gmra.mxu0 %v6432
  %v6468 = vpop.f32.mrf.mxu0
  %v6469 = vadd.f32 0.0, %v6468
  %v6470 = vpop.f32.mrf.mxu0
  %v6471 = vpop.f32.mrf.mxu0
  %v6472 = vpop.f32.mrf.mxu0
  %6473 = vdwg.mxu0
  %v6474 = vadd.f32 %v6372, %v6469
  %s6475 = scalar_lea.vmem %s9, 32
  %v6476 = vld [vmem:[%s6475] sm:$0xf]
  %v6478 = vsel %vm1092, %v6476, 0
  %6480 = vmatprep.subr.bf16.mxu0 0
  %6481 = vmatpush1.bf16.msra.mxu0 0
  %6482 = vmatprep.subr.bf16.mxu0 0
  %6483 = vmatpush1.bf16.msra.mxu0 0
  %6484 = vmatprep.subr.bf16.mxu0 0
  %6485 = vmatpush1.bf16.msra.mxu0 0
  %6486 = vmatprep.subr.bf16.mxu0 0
  %6487 = vmatpush1.bf16.msra.mxu0 0
  %6488 = vmatprep.subr.bf16.mxu0 0
  %6489 = vmatpush1.bf16.msra.mxu0 0
  %6490 = vmatprep.subr.bf16.mxu0 0
  %6491 = vmatpush1.bf16.msra.mxu0 0
  %6492 = vmatprep.subr.bf16.mxu0 0
  %6493 = vmatpush1.bf16.msra.mxu0 0
  %6494 = vmatprep.subr.bf16.mxu0 0
  %6495 = vmatpush1.bf16.msra.mxu0 %v6478
  %6496 = vmatprep.subr.bf16.mxu0 0
  %6497 = vmatpush2.bf16.msra.mxu0 0
  %6498 = vmatprep.subr.bf16.mxu0 0
  %6499 = vmatpush2.bf16.msra.mxu0 0
  %6500 = vmatprep.subr.bf16.mxu0 0
  %6501 = vmatpush2.bf16.msra.mxu0 0
  %6502 = vmatprep.subr.bf16.mxu0 0
  %6503 = vmatpush2.bf16.msra.mxu0 0
  %6504 = vmatprep.subr.bf16.mxu0 0
  %6505 = vmatpush2.bf16.msra.mxu0 0
  %6506 = vmatprep.subr.bf16.mxu0 0
  %6507 = vmatpush2.bf16.msra.mxu0 0
  %6508 = vmatprep.subr.bf16.mxu0 0
  %6509 = vmatpush2.bf16.msra.mxu0 0
  %6510 = vmatprep.subr.bf16.mxu0 0
  %6511 = vmatpush2.bf16.msra.mxu0 0
  %6512 = vmatprep.mubr.bf16.mxu0 0
  %6513 = vmatmul.mubr.bf16.gmra.mxu0 %v5659
  %v6514 = vpop.f32.mrf.mxu0
  %v6515 = vadd.f32 0.0, %v6514
  %v6516 = vpop.f32.mrf.mxu0
  %v6517 = vpop.f32.mrf.mxu0
  %v6518 = vadd.f32 0.0, %v6517
  %v6519 = vpop.f32.mrf.mxu0
  %6520 = vmatprep.mubr.bf16.mxu0 0
  %6521 = vmatmul.mubr.bf16.gmra.mxu0 %v5662
  %v6522 = vpop.f32.mrf.mxu0
  %v6523 = vadd.f32 0.0, %v6522
  %v6524 = vpop.f32.mrf.mxu0
  %v6525 = vpop.f32.mrf.mxu0
  %v6526 = vadd.f32 0.0, %v6525
  %v6527 = vpop.f32.mrf.mxu0
  %6528 = vdwg.mxu0
  %v6529 = vpack.c.bf16 %v6518, %v6515
  %v6530 = vpack.c.bf16 %v6526, %v6523
  %s6531 = scalar_lea.vmem %s10, 8
  %v6532 = vld [vmem:[%s6531] sm:$0x1]
  %v6534 = vsel %vm3508, %v6532, 0
  %6536 = vmatprep.subr.bf16.mxu0 0
  %6537 = vmatpush1.bf16.msra.mxu0 0
  %6538 = vmatprep.subr.bf16.mxu0 0
  %6539 = vmatpush1.bf16.msra.mxu0 0
  %6540 = vmatprep.subr.bf16.mxu0 0
  %6541 = vmatpush1.bf16.msra.mxu0 0
  %6542 = vmatprep.subr.bf16.mxu0 0
  %6543 = vmatpush1.bf16.msra.mxu0 0
  %6544 = vmatprep.subr.bf16.mxu0 0
  %6545 = vmatpush1.bf16.msra.mxu0 0
  %6546 = vmatprep.subr.bf16.mxu0 0
  %6547 = vmatpush1.bf16.msra.mxu0 0
  %6548 = vmatprep.subr.bf16.mxu0 0
  %6549 = vmatpush1.bf16.msra.mxu0 %v6530
  %6550 = vmatprep.subr.bf16.mxu0 0
  %6551 = vmatpush1.bf16.msra.mxu0 %v6529
  %6552 = vmatprep.subr.bf16.mxu0 0
  %6553 = vmatpush2.bf16.msra.mxu0 0
  %6554 = vmatprep.subr.bf16.mxu0 0
  %6555 = vmatpush2.bf16.msra.mxu0 0
  %6556 = vmatprep.subr.bf16.mxu0 0
  %6557 = vmatpush2.bf16.msra.mxu0 0
  %6558 = vmatprep.subr.bf16.mxu0 0
  %6559 = vmatpush2.bf16.msra.mxu0 0
  %6560 = vmatprep.subr.bf16.mxu0 0
  %6561 = vmatpush2.bf16.msra.mxu0 0
  %6562 = vmatprep.subr.bf16.mxu0 0
  %6563 = vmatpush2.bf16.msra.mxu0 0
  %6564 = vmatprep.subr.bf16.mxu0 0
  %6565 = vmatpush2.bf16.msra.mxu0 0
  %6566 = vmatprep.subr.bf16.mxu0 0
  %6567 = vmatpush2.bf16.msra.mxu0 0
  %6568 = vmatprep.mubr.bf16.mxu0 0
  %6569 = vmatmul.mubr.bf16.gmra.mxu0 %v6534
  %v6570 = vpop.f32.mrf.mxu0
  %v6571 = vadd.f32 0.0, %v6570
  %v6572 = vpop.f32.mrf.mxu0
  %v6573 = vpop.f32.mrf.mxu0
  %v6574 = vpop.f32.mrf.mxu0
  %6575 = vdwg.mxu0
  %v6576 = vadd.f32 %v6474, %v6571
  %vm6577 = vcmask 57344
  %6578 = vst.msk [vmem:[%s11] sm:$0x1] %vm6577, %v6576
  // Predicated region
  $region46: #{forward.1} parent=0 // pred_check
    _
  $region47: #{forward.1} parent=0 // pred_check_branch
    %6580 = sbr.rel (0) target = $region49
  $region48: #{forward.1} parent=0 // pred_region
    _
  $region49: #{forward.1} parent=0 // pred_fallthru
    _
  // Predicated region
  $region50: #{forward.1} parent=0 // pred_check
    _
  $region51: #{forward.1} parent=0 // pred_check_branch
    %6582 = sbr.rel (0) target = $region53
  $region52: #{forward.1} parent=0 // pred_region
    _
  $region53: #{forward.1} parent=0 // pred_fallthru
    _

</llo_original>
